<compile_context>
chip_gen: v7x
topology: tpu7x:2x2x1
jax: 0.10.0
libtpu: 0.0.40
codegen_flags: <defaults>
</compile_context>

<pallas_src>
import functools

import numpy as np

import jax
import jax.numpy as jnp
from jax.experimental import pallas as pl
from jax.experimental.pallas import tpu as pltpu

_PAD = 128  # lane-aligned zero padding width (>= W + 1 for every layer here)


# ----------------------------- in-kernel helpers ----------------------------

def _conv3x3_relu(x_flat, w_mat, b_col, col_mask, *, H, W):
    """x_flat: (Cin, H*W) -> relu(conv3x3_pad1(x) + b): (Cout, H*W)."""
    Cin, HW = x_flat.shape
    zpad = jnp.zeros((Cin, _PAD), jnp.float32)
    xp = jnp.concatenate([zpad, x_flat, zpad], axis=1)        # (Cin, HW + 2*_PAD)
    acc = None
    for dh in range(3):
        for dw in range(3):
            start = _PAD + (dh - 1) * W + (dw - 1)
            # shifted view; col_mask zeroes the positions that wrapped across rows
            patch = xp[:, start:start + HW] * col_mask[dw:dw + 1, :]
            k = (dh * 3 + dw) * Cin
            term = jnp.dot(w_mat[:, k:k + Cin], patch,
                           preferred_element_type=jnp.float32)
            acc = term if acc is None else acc + term
    return jnp.maximum(acc + b_col, 0.0)                      # (Cout, HW)


def _maxpool2x2(y_flat, select, *, W):
    """y_flat: (C, H*W) -> (C, (H//2)*(W//2)), non-overlapping 2x2 max pool."""
    C, HW = y_flat.shape
    zpad = jnp.zeros((C, _PAD), jnp.float32)
    yp = jnp.concatenate([y_flat, zpad], axis=1)
    m = jnp.maximum(jnp.maximum(yp[:, 0:HW], yp[:, 1:HW + 1]),
                    jnp.maximum(yp[:, W:W + HW], yp[:, W + 1:W + 1 + HW]))
    # compact the window maxima at even (h, w) anchors via a 0/1 selection matmul
    return jnp.dot(m, select, preferred_element_type=jnp.float32)


# --------------------------------- kernel -----------------------------------

def _cnn_kernel(x_ref, w1_ref, b1_ref, m1_ref, s1_ref,
                w2_ref, b2_ref, m2_ref, s2_ref, wl_ref, bl_ref, o_ref,
                *, H1, W1, H2, W2):
    x = x_ref[0]                                                     # (Cin, H1*W1)

    y1 = _conv3x3_relu(x, w1_ref[...], b1_ref[...], m1_ref[...], H=H1, W=W1)
    p1 = _maxpool2x2(y1, s1_ref[...], W=W1)                          # (C1, H2*W2)
    y2 = _conv3x3_relu(p1, w2_ref[...], b2_ref[...], m2_ref[...], H=H2, W=W2)
    p2 = _maxpool2x2(y2, s2_ref[...], W=W2)                          # (C2, H3*W3)

    # Linear over the (c, h, w)-ordered flatten: out = b + sum_c p2[c,:] @ Wl[c]
    out = bl_ref[...]                                                # (1, num_classes)
    C2 = wl_ref.shape[0]
    for c in range(C2):
        full = jnp.dot(p2, wl_ref[c], preferred_element_type=jnp.float32)  # (C2, nc)
        out = out + full[c:c + 1, :]
    o_ref[0] = out


# ---------------------------- host-side constants ----------------------------

def _column_mask(H, W):
    """(3, H*W) f32; row dw in {0,1,2}: 1.0 where column w + dw - 1 is in-range."""
    col = np.arange(H * W) % W
    rows = [((col + dw - 1 >= 0) & (col + dw - 1 <= W - 1)).astype(np.float32)
            for dw in range(3)]
    return jnp.asarray(np.stack(rows, axis=0))


def _pool_selector(H, W):
    """(H*W, (H//2)*(W//2)) 0/1 matrix selecting the even (h, w) anchors."""
    Ho, Wo = H // 2, W // 2
    sel = np.zeros((H * W, Ho * Wo), np.float32)
    for ho in range(Ho):
        for wo in range(Wo):
            sel[(2 * ho) * W + 2 * wo, ho * Wo + wo] = 1.0
    return jnp.asarray(sel)


def prepare_params(params):
    """One-time host-side repack of PyTorch-layout weights (zero runtime cost)."""
    def conv_mat(w):  # (Cout, Cin, kh, kw) -> (Cout, kh*kw*Cin), (dh, dw, cin) order
        cout, cin, kh, kw = w.shape
        return jnp.transpose(w, (0, 2, 3, 1)).reshape(cout, kh * kw * cin)

    c2 = params["conv2_w"].shape[0]
    nc, feat = params["linear_w"].shape
    sp = feat // c2
    return {
        "w1": conv_mat(params["conv1_w"]).astype(jnp.float32),
        "b1": params["conv1_b"].reshape(-1, 1).astype(jnp.float32),
        "w2": conv_mat(params["conv2_w"]).astype(jnp.float32),
        "b2": params["conv2_b"].reshape(-1, 1).astype(jnp.float32),
        # (nc, c2*sp) -> (c2, sp, nc): matches the in-kernel (c, h, w) flatten.
        "wl": jnp.transpose(params["linear_w"].reshape(nc, c2, sp), (1, 2, 0))
              .astype(jnp.float32),
        "bl": params["linear_b"].reshape(1, -1).astype(jnp.float32),
    }


# --------------------------------- forward ----------------------------------

@jax.jit
def cnn_forward(x_nchw, prep):
    B, Cin, H1, W1 = x_nchw.shape
    assert H1 % 4 == 0 and W1 % 4 == 0  # two 2x2 pools
    H2, W2 = H1 // 2, W1 // 2
    H3, W3 = H2 // 2, W2 // 2
    HW1, HW2, HW3 = H1 * W1, H2 * W2, H3 * W3
    nc = prep["bl"].shape[1]

    # contiguous-dims reshape: free in XLA, keeps spatial on the lane axis
    xf = x_nchw.reshape(B, Cin, HW1).astype(jnp.float32)

    m1, s1 = _column_mask(H1, W1), _pool_selector(H1, W1)
    m2, s2 = _column_mask(H2, W2), _pool_selector(H2, W2)

    kernel = functools.partial(_cnn_kernel, H1=H1, W1=W1, H2=H2, W2=W2)
    out = pl.pallas_call(
        kernel,
        out_shape=jax.ShapeDtypeStruct((B, 1, nc), jnp.float32),
        grid=(B,),
        in_specs=[
            pl.BlockSpec((1, Cin, HW1), lambda b: (b, 0, 0)),
            pl.BlockSpec(prep["w1"].shape, lambda b: (0, 0)),
            pl.BlockSpec(prep["b1"].shape, lambda b: (0, 0)),
            pl.BlockSpec((3, HW1), lambda b: (0, 0)),
            pl.BlockSpec((HW1, HW2), lambda b: (0, 0)),
            pl.BlockSpec(prep["w2"].shape, lambda b: (0, 0)),
            pl.BlockSpec(prep["b2"].shape, lambda b: (0, 0)),
            pl.BlockSpec((3, HW2), lambda b: (0, 0)),
            pl.BlockSpec((HW2, HW3), lambda b: (0, 0)),
            pl.BlockSpec(prep["wl"].shape, lambda b: (0, 0, 0)),
            pl.BlockSpec(prep["bl"].shape, lambda b: (0, 0)),
        ],
        out_specs=pl.BlockSpec((1, 1, nc), lambda b: (b, 0, 0)),
        compiler_params=pltpu.CompilerParams(
            dimension_semantics=("parallel",)),
    )(xf, prep["w1"], prep["b1"], m1, s1,
      prep["w2"], prep["b2"], m2, s2, prep["wl"], prep["bl"])
    return out.reshape(B, nc)


# ------------------------------ params / check -------------------------------

def init_params(key, in_channels=3, num_classes=10):
    k1, k2, k3 = jax.random.split(key, 3)
    return {
        "conv1_w": 0.1 * jax.random.normal(k1, (4, in_channels, 3, 3), jnp.float32),
        "conv1_b": jnp.linspace(-0.1, 0.1, 4, dtype=jnp.float32),
        "conv2_w": 0.1 * jax.random.normal(k2, (8, 4, 3, 3), jnp.float32),
        "conv2_b": jnp.linspace(-0.1, 0.1, 8, dtype=jnp.float32),
        "linear_w": 0.05 * jax.random.normal(k3, (num_classes, 8 * 8 * 8), jnp.float32),
        "linear_b": jnp.linspace(-0.1, 0.1, num_classes, dtype=jnp.float32),
    }


def reference_forward(x, params):
    """Plain-XLA reference with the exact PyTorch semantics (for validation)."""
    hi = jax.lax.Precision.HIGHEST
    y = jax.lax.conv_general_dilated(
        x, params["conv1_w"], (1, 1), ((1, 1), (1, 1)),
        dimension_numbers=("NCHW", "OIHW", "NCHW"), precision=hi)
    y = jnp.maximum(y + params["conv1_b"].reshape(1, -1, 1, 1), 0.0)
    y = jax.lax.reduce_window(y, -jnp.inf, jax.lax.max,
                              (1, 1, 2, 2), (1, 1, 2, 2), "VALID")
    z = jax.lax.conv_general_dilated(
        y, params["conv2_w"], (1, 1), ((1, 1), (1, 1)),
        dimension_numbers=("NCHW", "OIHW", "NCHW"), precision=hi)
    z = jnp.maximum(z + params["conv2_b"].reshape(1, -1, 1, 1), 0.0)
    z = jax.lax.reduce_window(z, -jnp.inf, jax.lax.max,
                              (1, 1, 2, 2), (1, 1, 2, 2), "VALID")
    flat = z.reshape(z.shape[0], -1)
    return jnp.dot(flat, params["linear_w"].T, precision=hi) + params["linear_b"]


if __name__ == "__main__":
    key = jax.random.PRNGKey(0)
    kx, kp = jax.random.split(key)

    # nn.Linear(8*8*8, .) after two 2x2 pools implies a 32x32x3 input.
    B, C, H, W = 2, 3, 32, 32
    x = jax.random.normal(kx, (B, C, H, W), jnp.float32)
    params = init_params(kp, in_channels=C, num_classes=10)

    prep = prepare_params(params)               # one-time weight repack
    out = jax.block_until_ready(cnn_forward(x, prep))
    assert out.shape == (B, 10), out.shape
    assert out.dtype == jnp.float32

    ref = jax.block_until_ready(reference_forward(x, params))
    err = float(jnp.max(jnp.abs(out - ref)))
    assert err < 1e-2, f"mismatch vs XLA reference: max |diff| = {err}"
    print("KERNEL_OK")
</pallas_src>

<mosaic_0001>
module attributes {stable_mosaic.version = 11 : i64} {
  func.func @_cnn_kernel(%arg0: i32, %arg1: memref<1x3x1024xf32, #tpu.memory_space<vmem>>, %arg2: memref<4x27xf32, #tpu.memory_space<vmem>>, %arg3: memref<4x1xf32, #tpu.memory_space<vmem>>, %arg4: memref<3x1024xf32, #tpu.memory_space<vmem>>, %arg5: memref<1024x256xf32, #tpu.memory_space<vmem>>, %arg6: memref<8x36xf32, #tpu.memory_space<vmem>>, %arg7: memref<8x1xf32, #tpu.memory_space<vmem>>, %arg8: memref<3x256xf32, #tpu.memory_space<vmem>>, %arg9: memref<256x64xf32, #tpu.memory_space<vmem>>, %arg10: memref<8x64x10xf32, #tpu.memory_space<vmem>>, %arg11: memref<1x10xf32, #tpu.memory_space<vmem>>, %arg12: memref<1x1x10xf32, #tpu.memory_space<vmem>>) attributes {dimension_semantics = [#tpu.dimension_semantics<parallel>], iteration_bounds = array<i64: 2>, scalar_prefetch = 0 : i64, scratch_operands = 0 : i64, tpu.core_type = #tpu.core_type<tc>, window_params = [{transform_indices = @transform_0, window_bounds = array<i64: 1, 3, 1024>}, {pipeline_mode = #tpu.pipeline_mode<synchronous>, transform_indices = @transform_1, window_bounds = array<i64: 4, 27>}, {pipeline_mode = #tpu.pipeline_mode<synchronous>, transform_indices = @transform_2, window_bounds = array<i64: 4, 1>}, {pipeline_mode = #tpu.pipeline_mode<synchronous>, transform_indices = @transform_3, window_bounds = array<i64: 3, 1024>}, {pipeline_mode = #tpu.pipeline_mode<synchronous>, transform_indices = @transform_4, window_bounds = array<i64: 1024, 256>}, {pipeline_mode = #tpu.pipeline_mode<synchronous>, transform_indices = @transform_5, window_bounds = array<i64: 8, 36>}, {pipeline_mode = #tpu.pipeline_mode<synchronous>, transform_indices = @transform_6, window_bounds = array<i64: 8, 1>}, {pipeline_mode = #tpu.pipeline_mode<synchronous>, transform_indices = @transform_7, window_bounds = array<i64: 3, 256>}, {pipeline_mode = #tpu.pipeline_mode<synchronous>, transform_indices = @transform_8, window_bounds = array<i64: 256, 64>}, {pipeline_mode = #tpu.pipeline_mode<synchronous>, transform_indices = @transform_9, window_bounds = array<i64: 8, 64, 10>}, {pipeline_mode = #tpu.pipeline_mode<synchronous>, transform_indices = @transform_10, window_bounds = array<i64: 1, 10>}, {transform_indices = @transform_11, window_bounds = array<i64: 1, 1, 10>}]} {
    %c0 = arith.constant 0 : index
    %c0_0 = arith.constant 0 : index
    %c0_1 = arith.constant 0 : index
    %0 = vector.load %arg1[%c0, %c0_0, %c0_1] : memref<1x3x1024xf32, #tpu.memory_space<vmem>>, vector<1x3x1024xf32>
    %1 = vector.shape_cast %0 : vector<1x3x1024xf32> to vector<3x1024xf32>
    %c0_2 = arith.constant 0 : index
    %c0_3 = arith.constant 0 : index
    %2 = vector.load %arg2[%c0_2, %c0_3] : memref<4x27xf32, #tpu.memory_space<vmem>>, vector<4x27xf32>
    %c0_4 = arith.constant 0 : index
    %c0_5 = arith.constant 0 : index
    %3 = vector.load %arg3[%c0_4, %c0_5] : memref<4x1xf32, #tpu.memory_space<vmem>>, vector<4x1xf32>
    %c0_6 = arith.constant 0 : index
    %c0_7 = arith.constant 0 : index
    %4 = vector.load %arg4[%c0_6, %c0_7] : memref<3x1024xf32, #tpu.memory_space<vmem>>, vector<3x1024xf32>
    %cst = arith.constant 0.000000e+00 : f32
    %5 = vector.broadcast %cst : f32 to vector<3x128xf32>
    %6 = tpu.concatenate %5, %1, %5 in 1 : vector<3x128xf32>, vector<3x1024xf32>, vector<3x128xf32> -> vector<3x1280xf32>
    %7 = vector.extract_strided_slice %6 {offsets = [0, 95], sizes = [3, 1024], strides = [1, 1]} : vector<3x1280xf32> to vector<3x1024xf32>
    %8 = vector.extract_strided_slice %4 {offsets = [0, 0], sizes = [1, 1024], strides = [1, 1]} : vector<3x1024xf32> to vector<1x1024xf32>
    %9 = vector.broadcast %8 : vector<1x1024xf32> to vector<3x1024xf32>
    %10 = arith.mulf %7, %9 : vector<3x1024xf32>
    %11 = vector.extract_strided_slice %2 {offsets = [0, 0], sizes = [4, 3], strides = [1, 1]} : vector<4x27xf32> to vector<4x3xf32>
    %cst_8 = arith.constant dense<0.000000e+00> : vector<4x1024xf32>
    %12 = tpu.matmul %11, %10, %cst_8 {dimension_numbers = #tpu.dot_dimension_numbers<[1], [0], [0], [1], [0, 0, 1, 1], [], []>} : vector<4x3xf32>, vector<3x1024xf32>, vector<4x1024xf32> -> vector<4x1024xf32>
    %13 = vector.extract_strided_slice %6 {offsets = [0, 96], sizes = [3, 1024], strides = [1, 1]} : vector<3x1280xf32> to vector<3x1024xf32>
    %14 = vector.extract_strided_slice %4 {offsets = [1, 0], sizes = [1, 1024], strides = [1, 1]} : vector<3x1024xf32> to vector<1x1024xf32>
    %15 = vector.broadcast %14 : vector<1x1024xf32> to vector<3x1024xf32>
    %16 = arith.mulf %13, %15 : vector<3x1024xf32>
    %17 = vector.extract_strided_slice %2 {offsets = [0, 3], sizes = [4, 3], strides = [1, 1]} : vector<4x27xf32> to vector<4x3xf32>
    %cst_9 = arith.constant dense<0.000000e+00> : vector<4x1024xf32>
    %18 = tpu.matmul %17, %16, %cst_9 {dimension_numbers = #tpu.dot_dimension_numbers<[1], [0], [0], [1], [0, 0, 1, 1], [], []>} : vector<4x3xf32>, vector<3x1024xf32>, vector<4x1024xf32> -> vector<4x1024xf32>
    %19 = arith.addf %12, %18 : vector<4x1024xf32>
    %20 = vector.extract_strided_slice %6 {offsets = [0, 97], sizes = [3, 1024], strides = [1, 1]} : vector<3x1280xf32> to vector<3x1024xf32>
    %21 = vector.extract_strided_slice %4 {offsets = [2, 0], sizes = [1, 1024], strides = [1, 1]} : vector<3x1024xf32> to vector<1x1024xf32>
    %22 = vector.broadcast %21 : vector<1x1024xf32> to vector<3x1024xf32>
    %23 = arith.mulf %20, %22 : vector<3x1024xf32>
    %24 = vector.extract_strided_slice %2 {offsets = [0, 6], sizes = [4, 3], strides = [1, 1]} : vector<4x27xf32> to vector<4x3xf32>
    %cst_10 = arith.constant dense<0.000000e+00> : vector<4x1024xf32>
    %25 = tpu.matmul %24, %23, %cst_10 {dimension_numbers = #tpu.dot_dimension_numbers<[1], [0], [0], [1], [0, 0, 1, 1], [], []>} : vector<4x3xf32>, vector<3x1024xf32>, vector<4x1024xf32> -> vector<4x1024xf32>
    %26 = arith.addf %19, %25 : vector<4x1024xf32>
    %27 = vector.extract_strided_slice %6 {offsets = [0, 127], sizes = [3, 1024], strides = [1, 1]} : vector<3x1280xf32> to vector<3x1024xf32>
    %28 = vector.extract_strided_slice %4 {offsets = [0, 0], sizes = [1, 1024], strides = [1, 1]} : vector<3x1024xf32> to vector<1x1024xf32>
    %29 = vector.broadcast %28 : vector<1x1024xf32> to vector<3x1024xf32>
    %30 = arith.mulf %27, %29 : vector<3x1024xf32>
    %31 = vector.extract_strided_slice %2 {offsets = [0, 9], sizes = [4, 3], strides = [1, 1]} : vector<4x27xf32> to vector<4x3xf32>
    %cst_11 = arith.constant dense<0.000000e+00> : vector<4x1024xf32>
    %32 = tpu.matmul %31, %30, %cst_11 {dimension_numbers = #tpu.dot_dimension_numbers<[1], [0], [0], [1], [0, 0, 1, 1], [], []>} : vector<4x3xf32>, vector<3x1024xf32>, vector<4x1024xf32> -> vector<4x1024xf32>
    %33 = arith.addf %26, %32 : vector<4x1024xf32>
    %34 = vector.extract_strided_slice %6 {offsets = [0, 128], sizes = [3, 1024], strides = [1, 1]} : vector<3x1280xf32> to vector<3x1024xf32>
    %35 = vector.extract_strided_slice %4 {offsets = [1, 0], sizes = [1, 1024], strides = [1, 1]} : vector<3x1024xf32> to vector<1x1024xf32>
    %36 = vector.broadcast %35 : vector<1x1024xf32> to vector<3x1024xf32>
    %37 = arith.mulf %34, %36 : vector<3x1024xf32>
    %38 = vector.extract_strided_slice %2 {offsets = [0, 12], sizes = [4, 3], strides = [1, 1]} : vector<4x27xf32> to vector<4x3xf32>
    %cst_12 = arith.constant dense<0.000000e+00> : vector<4x1024xf32>
    %39 = tpu.matmul %38, %37, %cst_12 {dimension_numbers = #tpu.dot_dimension_numbers<[1], [0], [0], [1], [0, 0, 1, 1], [], []>} : vector<4x3xf32>, vector<3x1024xf32>, vector<4x1024xf32> -> vector<4x1024xf32>
    %40 = arith.addf %33, %39 : vector<4x1024xf32>
    %41 = vector.extract_strided_slice %6 {offsets = [0, 129], sizes = [3, 1024], strides = [1, 1]} : vector<3x1280xf32> to vector<3x1024xf32>
    %42 = vector.extract_strided_slice %4 {offsets = [2, 0], sizes = [1, 1024], strides = [1, 1]} : vector<3x1024xf32> to vector<1x1024xf32>
    %43 = vector.broadcast %42 : vector<1x1024xf32> to vector<3x1024xf32>
    %44 = arith.mulf %41, %43 : vector<3x1024xf32>
    %45 = vector.extract_strided_slice %2 {offsets = [0, 15], sizes = [4, 3], strides = [1, 1]} : vector<4x27xf32> to vector<4x3xf32>
    %cst_13 = arith.constant dense<0.000000e+00> : vector<4x1024xf32>
    %46 = tpu.matmul %45, %44, %cst_13 {dimension_numbers = #tpu.dot_dimension_numbers<[1], [0], [0], [1], [0, 0, 1, 1], [], []>} : vector<4x3xf32>, vector<3x1024xf32>, vector<4x1024xf32> -> vector<4x1024xf32>
    %47 = arith.addf %40, %46 : vector<4x1024xf32>
    %48 = vector.extract_strided_slice %6 {offsets = [0, 159], sizes = [3, 1024], strides = [1, 1]} : vector<3x1280xf32> to vector<3x1024xf32>
    %49 = vector.extract_strided_slice %4 {offsets = [0, 0], sizes = [1, 1024], strides = [1, 1]} : vector<3x1024xf32> to vector<1x1024xf32>
    %50 = vector.broadcast %49 : vector<1x1024xf32> to vector<3x1024xf32>
    %51 = arith.mulf %48, %50 : vector<3x1024xf32>
    %52 = vector.extract_strided_slice %2 {offsets = [0, 18], sizes = [4, 3], strides = [1, 1]} : vector<4x27xf32> to vector<4x3xf32>
    %cst_14 = arith.constant dense<0.000000e+00> : vector<4x1024xf32>
    %53 = tpu.matmul %52, %51, %cst_14 {dimension_numbers = #tpu.dot_dimension_numbers<[1], [0], [0], [1], [0, 0, 1, 1], [], []>} : vector<4x3xf32>, vector<3x1024xf32>, vector<4x1024xf32> -> vector<4x1024xf32>
    %54 = arith.addf %47, %53 : vector<4x1024xf32>
    %55 = vector.extract_strided_slice %6 {offsets = [0, 160], sizes = [3, 1024], strides = [1, 1]} : vector<3x1280xf32> to vector<3x1024xf32>
    %56 = vector.extract_strided_slice %4 {offsets = [1, 0], sizes = [1, 1024], strides = [1, 1]} : vector<3x1024xf32> to vector<1x1024xf32>
    %57 = vector.broadcast %56 : vector<1x1024xf32> to vector<3x1024xf32>
    %58 = arith.mulf %55, %57 : vector<3x1024xf32>
    %59 = vector.extract_strided_slice %2 {offsets = [0, 21], sizes = [4, 3], strides = [1, 1]} : vector<4x27xf32> to vector<4x3xf32>
    %cst_15 = arith.constant dense<0.000000e+00> : vector<4x1024xf32>
    %60 = tpu.matmul %59, %58, %cst_15 {dimension_numbers = #tpu.dot_dimension_numbers<[1], [0], [0], [1], [0, 0, 1, 1], [], []>} : vector<4x3xf32>, vector<3x1024xf32>, vector<4x1024xf32> -> vector<4x1024xf32>
    %61 = arith.addf %54, %60 : vector<4x1024xf32>
    %62 = vector.extract_strided_slice %6 {offsets = [0, 161], sizes = [3, 1024], strides = [1, 1]} : vector<3x1280xf32> to vector<3x1024xf32>
    %63 = vector.extract_strided_slice %4 {offsets = [2, 0], sizes = [1, 1024], strides = [1, 1]} : vector<3x1024xf32> to vector<1x1024xf32>
    %64 = vector.broadcast %63 : vector<1x1024xf32> to vector<3x1024xf32>
    %65 = arith.mulf %62, %64 : vector<3x1024xf32>
    %66 = vector.extract_strided_slice %2 {offsets = [0, 24], sizes = [4, 3], strides = [1, 1]} : vector<4x27xf32> to vector<4x3xf32>
    %cst_16 = arith.constant dense<0.000000e+00> : vector<4x1024xf32>
    %67 = tpu.matmul %66, %65, %cst_16 {dimension_numbers = #tpu.dot_dimension_numbers<[1], [0], [0], [1], [0, 0, 1, 1], [], []>} : vector<4x3xf32>, vector<3x1024xf32>, vector<4x1024xf32> -> vector<4x1024xf32>
    %68 = arith.addf %61, %67 : vector<4x1024xf32>
    %69 = vector.broadcast %3 : vector<4x1xf32> to vector<4x1024xf32>
    %70 = arith.addf %68, %69 : vector<4x1024xf32>
    %cst_17 = arith.constant 0.000000e+00 : f32
    %71 = vector.broadcast %cst_17 : f32 to vector<4x1024xf32>
    %72 = arith.maximumf %70, %71 : vector<4x1024xf32>
    %c0_18 = arith.constant 0 : index
    %c0_19 = arith.constant 0 : index
    %73 = vector.load %arg5[%c0_18, %c0_19] : memref<1024x256xf32, #tpu.memory_space<vmem>>, vector<1024x256xf32>
    %cst_20 = arith.constant 0.000000e+00 : f32
    %74 = vector.broadcast %cst_20 : f32 to vector<4x128xf32>
    %75 = tpu.concatenate %72, %74 in 1 : vector<4x1024xf32>, vector<4x128xf32> -> vector<4x1152xf32>
    %76 = vector.extract_strided_slice %75 {offsets = [0, 0], sizes = [4, 1024], strides = [1, 1]} : vector<4x1152xf32> to vector<4x1024xf32>
    %77 = vector.extract_strided_slice %75 {offsets = [0, 1], sizes = [4, 1024], strides = [1, 1]} : vector<4x1152xf32> to vector<4x1024xf32>
    %78 = arith.maximumf %76, %77 : vector<4x1024xf32>
    %79 = vector.extract_strided_slice %75 {offsets = [0, 32], sizes = [4, 1024], strides = [1, 1]} : vector<4x1152xf32> to vector<4x1024xf32>
    %80 = vector.extract_strided_slice %75 {offsets = [0, 33], sizes = [4, 1024], strides = [1, 1]} : vector<4x1152xf32> to vector<4x1024xf32>
    %81 = arith.maximumf %79, %80 : vector<4x1024xf32>
    %82 = arith.maximumf %78, %81 : vector<4x1024xf32>
    %cst_21 = arith.constant dense<0.000000e+00> : vector<4x256xf32>
    %83 = tpu.matmul %82, %73, %cst_21 {dimension_numbers = #tpu.dot_dimension_numbers<[1], [0], [0], [1], [0, 0, 1, 1], [], []>} : vector<4x1024xf32>, vector<1024x256xf32>, vector<4x256xf32> -> vector<4x256xf32>
    %c0_22 = arith.constant 0 : index
    %c0_23 = arith.constant 0 : index
    %84 = vector.load %arg6[%c0_22, %c0_23] : memref<8x36xf32, #tpu.memory_space<vmem>>, vector<8x36xf32>
    %c0_24 = arith.constant 0 : index
    %c0_25 = arith.constant 0 : index
    %85 = vector.load %arg7[%c0_24, %c0_25] : memref<8x1xf32, #tpu.memory_space<vmem>>, vector<8x1xf32>
    %c0_26 = arith.constant 0 : index
    %c0_27 = arith.constant 0 : index
    %86 = vector.load %arg8[%c0_26, %c0_27] : memref<3x256xf32, #tpu.memory_space<vmem>>, vector<3x256xf32>
    %cst_28 = arith.constant 0.000000e+00 : f32
    %87 = vector.broadcast %cst_28 : f32 to vector<4x128xf32>
    %88 = tpu.concatenate %87, %83, %87 in 1 : vector<4x128xf32>, vector<4x256xf32>, vector<4x128xf32> -> vector<4x512xf32>
    %89 = vector.extract_strided_slice %88 {offsets = [0, 111], sizes = [4, 256], strides = [1, 1]} : vector<4x512xf32> to vector<4x256xf32>
    %90 = vector.extract_strided_slice %86 {offsets = [0, 0], sizes = [1, 256], strides = [1, 1]} : vector<3x256xf32> to vector<1x256xf32>
    %91 = vector.broadcast %90 : vector<1x256xf32> to vector<4x256xf32>
    %92 = arith.mulf %89, %91 : vector<4x256xf32>
    %93 = vector.extract_strided_slice %84 {offsets = [0, 0], sizes = [8, 4], strides = [1, 1]} : vector<8x36xf32> to vector<8x4xf32>
    %cst_29 = arith.constant dense<0.000000e+00> : vector<8x256xf32>
    %94 = tpu.matmul %93, %92, %cst_29 {dimension_numbers = #tpu.dot_dimension_numbers<[1], [0], [0], [1], [0, 0, 1, 1], [], []>} : vector<8x4xf32>, vector<4x256xf32>, vector<8x256xf32> -> vector<8x256xf32>
    %95 = vector.extract_strided_slice %88 {offsets = [0, 112], sizes = [4, 256], strides = [1, 1]} : vector<4x512xf32> to vector<4x256xf32>
    %96 = vector.extract_strided_slice %86 {offsets = [1, 0], sizes = [1, 256], strides = [1, 1]} : vector<3x256xf32> to vector<1x256xf32>
    %97 = vector.broadcast %96 : vector<1x256xf32> to vector<4x256xf32>
    %98 = arith.mulf %95, %97 : vector<4x256xf32>
    %99 = vector.extract_strided_slice %84 {offsets = [0, 4], sizes = [8, 4], strides = [1, 1]} : vector<8x36xf32> to vector<8x4xf32>
    %cst_30 = arith.constant dense<0.000000e+00> : vector<8x256xf32>
    %100 = tpu.matmul %99, %98, %cst_30 {dimension_numbers = #tpu.dot_dimension_numbers<[1], [0], [0], [1], [0, 0, 1, 1], [], []>} : vector<8x4xf32>, vector<4x256xf32>, vector<8x256xf32> -> vector<8x256xf32>
    %101 = arith.addf %94, %100 : vector<8x256xf32>
    %102 = vector.extract_strided_slice %88 {offsets = [0, 113], sizes = [4, 256], strides = [1, 1]} : vector<4x512xf32> to vector<4x256xf32>
    %103 = vector.extract_strided_slice %86 {offsets = [2, 0], sizes = [1, 256], strides = [1, 1]} : vector<3x256xf32> to vector<1x256xf32>
    %104 = vector.broadcast %103 : vector<1x256xf32> to vector<4x256xf32>
    %105 = arith.mulf %102, %104 : vector<4x256xf32>
    %106 = vector.extract_strided_slice %84 {offsets = [0, 8], sizes = [8, 4], strides = [1, 1]} : vector<8x36xf32> to vector<8x4xf32>
    %cst_31 = arith.constant dense<0.000000e+00> : vector<8x256xf32>
    %107 = tpu.matmul %106, %105, %cst_31 {dimension_numbers = #tpu.dot_dimension_numbers<[1], [0], [0], [1], [0, 0, 1, 1], [], []>} : vector<8x4xf32>, vector<4x256xf32>, vector<8x256xf32> -> vector<8x256xf32>
    %108 = arith.addf %101, %107 : vector<8x256xf32>
    %109 = vector.extract_strided_slice %88 {offsets = [0, 127], sizes = [4, 256], strides = [1, 1]} : vector<4x512xf32> to vector<4x256xf32>
    %110 = vector.extract_strided_slice %86 {offsets = [0, 0], sizes = [1, 256], strides = [1, 1]} : vector<3x256xf32> to vector<1x256xf32>
    %111 = vector.broadcast %110 : vector<1x256xf32> to vector<4x256xf32>
    %112 = arith.mulf %109, %111 : vector<4x256xf32>
    %113 = vector.extract_strided_slice %84 {offsets = [0, 12], sizes = [8, 4], strides = [1, 1]} : vector<8x36xf32> to vector<8x4xf32>
    %cst_32 = arith.constant dense<0.000000e+00> : vector<8x256xf32>
    %114 = tpu.matmul %113, %112, %cst_32 {dimension_numbers = #tpu.dot_dimension_numbers<[1], [0], [0], [1], [0, 0, 1, 1], [], []>} : vector<8x4xf32>, vector<4x256xf32>, vector<8x256xf32> -> vector<8x256xf32>
    %115 = arith.addf %108, %114 : vector<8x256xf32>
    %116 = vector.extract_strided_slice %88 {offsets = [0, 128], sizes = [4, 256], strides = [1, 1]} : vector<4x512xf32> to vector<4x256xf32>
    %117 = vector.extract_strided_slice %86 {offsets = [1, 0], sizes = [1, 256], strides = [1, 1]} : vector<3x256xf32> to vector<1x256xf32>
    %118 = vector.broadcast %117 : vector<1x256xf32> to vector<4x256xf32>
    %119 = arith.mulf %116, %118 : vector<4x256xf32>
    %120 = vector.extract_strided_slice %84 {offsets = [0, 16], sizes = [8, 4], strides = [1, 1]} : vector<8x36xf32> to vector<8x4xf32>
    %cst_33 = arith.constant dense<0.000000e+00> : vector<8x256xf32>
    %121 = tpu.matmul %120, %119, %cst_33 {dimension_numbers = #tpu.dot_dimension_numbers<[1], [0], [0], [1], [0, 0, 1, 1], [], []>} : vector<8x4xf32>, vector<4x256xf32>, vector<8x256xf32> -> vector<8x256xf32>
    %122 = arith.addf %115, %121 : vector<8x256xf32>
    %123 = vector.extract_strided_slice %88 {offsets = [0, 129], sizes = [4, 256], strides = [1, 1]} : vector<4x512xf32> to vector<4x256xf32>
    %124 = vector.extract_strided_slice %86 {offsets = [2, 0], sizes = [1, 256], strides = [1, 1]} : vector<3x256xf32> to vector<1x256xf32>
    %125 = vector.broadcast %124 : vector<1x256xf32> to vector<4x256xf32>
    %126 = arith.mulf %123, %125 : vector<4x256xf32>
    %127 = vector.extract_strided_slice %84 {offsets = [0, 20], sizes = [8, 4], strides = [1, 1]} : vector<8x36xf32> to vector<8x4xf32>
    %cst_34 = arith.constant dense<0.000000e+00> : vector<8x256xf32>
    %128 = tpu.matmul %127, %126, %cst_34 {dimension_numbers = #tpu.dot_dimension_numbers<[1], [0], [0], [1], [0, 0, 1, 1], [], []>} : vector<8x4xf32>, vector<4x256xf32>, vector<8x256xf32> -> vector<8x256xf32>
    %129 = arith.addf %122, %128 : vector<8x256xf32>
    %130 = vector.extract_strided_slice %88 {offsets = [0, 143], sizes = [4, 256], strides = [1, 1]} : vector<4x512xf32> to vector<4x256xf32>
    %131 = vector.extract_strided_slice %86 {offsets = [0, 0], sizes = [1, 256], strides = [1, 1]} : vector<3x256xf32> to vector<1x256xf32>
    %132 = vector.broadcast %131 : vector<1x256xf32> to vector<4x256xf32>
    %133 = arith.mulf %130, %132 : vector<4x256xf32>
    %134 = vector.extract_strided_slice %84 {offsets = [0, 24], sizes = [8, 4], strides = [1, 1]} : vector<8x36xf32> to vector<8x4xf32>
    %cst_35 = arith.constant dense<0.000000e+00> : vector<8x256xf32>
    %135 = tpu.matmul %134, %133, %cst_35 {dimension_numbers = #tpu.dot_dimension_numbers<[1], [0], [0], [1], [0, 0, 1, 1], [], []>} : vector<8x4xf32>, vector<4x256xf32>, vector<8x256xf32> -> vector<8x256xf32>
    %136 = arith.addf %129, %135 : vector<8x256xf32>
    %137 = vector.extract_strided_slice %88 {offsets = [0, 144], sizes = [4, 256], strides = [1, 1]} : vector<4x512xf32> to vector<4x256xf32>
    %138 = vector.extract_strided_slice %86 {offsets = [1, 0], sizes = [1, 256], strides = [1, 1]} : vector<3x256xf32> to vector<1x256xf32>
    %139 = vector.broadcast %138 : vector<1x256xf32> to vector<4x256xf32>
    %140 = arith.mulf %137, %139 : vector<4x256xf32>
    %141 = vector.extract_strided_slice %84 {offsets = [0, 28], sizes = [8, 4], strides = [1, 1]} : vector<8x36xf32> to vector<8x4xf32>
    %cst_36 = arith.constant dense<0.000000e+00> : vector<8x256xf32>
    %142 = tpu.matmul %141, %140, %cst_36 {dimension_numbers = #tpu.dot_dimension_numbers<[1], [0], [0], [1], [0, 0, 1, 1], [], []>} : vector<8x4xf32>, vector<4x256xf32>, vector<8x256xf32> -> vector<8x256xf32>
    %143 = arith.addf %136, %142 : vector<8x256xf32>
    %144 = vector.extract_strided_slice %88 {offsets = [0, 145], sizes = [4, 256], strides = [1, 1]} : vector<4x512xf32> to vector<4x256xf32>
    %145 = vector.extract_strided_slice %86 {offsets = [2, 0], sizes = [1, 256], strides = [1, 1]} : vector<3x256xf32> to vector<1x256xf32>
    %146 = vector.broadcast %145 : vector<1x256xf32> to vector<4x256xf32>
    %147 = arith.mulf %144, %146 : vector<4x256xf32>
    %148 = vector.extract_strided_slice %84 {offsets = [0, 32], sizes = [8, 4], strides = [1, 1]} : vector<8x36xf32> to vector<8x4xf32>
    %cst_37 = arith.constant dense<0.000000e+00> : vector<8x256xf32>
    %149 = tpu.matmul %148, %147, %cst_37 {dimension_numbers = #tpu.dot_dimension_numbers<[1], [0], [0], [1], [0, 0, 1, 1], [], []>} : vector<8x4xf32>, vector<4x256xf32>, vector<8x256xf32> -> vector<8x256xf32>
    %150 = arith.addf %143, %149 : vector<8x256xf32>
    %151 = vector.broadcast %85 : vector<8x1xf32> to vector<8x256xf32>
    %152 = arith.addf %150, %151 : vector<8x256xf32>
    %cst_38 = arith.constant 0.000000e+00 : f32
    %153 = vector.broadcast %cst_38 : f32 to vector<8x256xf32>
    %154 = arith.maximumf %152, %153 : vector<8x256xf32>
    %c0_39 = arith.constant 0 : index
    %c0_40 = arith.constant 0 : index
    %155 = vector.load %arg9[%c0_39, %c0_40] : memref<256x64xf32, #tpu.memory_space<vmem>>, vector<256x64xf32>
    %cst_41 = arith.constant 0.000000e+00 : f32
    %156 = vector.broadcast %cst_41 : f32 to vector<8x128xf32>
    %157 = tpu.concatenate %154, %156 in 1 : vector<8x256xf32>, vector<8x128xf32> -> vector<8x384xf32>
    %158 = vector.extract_strided_slice %157 {offsets = [0, 0], sizes = [8, 256], strides = [1, 1]} : vector<8x384xf32> to vector<8x256xf32>
    %159 = vector.extract_strided_slice %157 {offsets = [0, 1], sizes = [8, 256], strides = [1, 1]} : vector<8x384xf32> to vector<8x256xf32>
    %160 = arith.maximumf %158, %159 : vector<8x256xf32>
    %161 = vector.extract_strided_slice %157 {offsets = [0, 16], sizes = [8, 256], strides = [1, 1]} : vector<8x384xf32> to vector<8x256xf32>
    %162 = vector.extract_strided_slice %157 {offsets = [0, 17], sizes = [8, 256], strides = [1, 1]} : vector<8x384xf32> to vector<8x256xf32>
    %163 = arith.maximumf %161, %162 : vector<8x256xf32>
    %164 = arith.maximumf %160, %163 : vector<8x256xf32>
    %cst_42 = arith.constant dense<0.000000e+00> : vector<8x64xf32>
    %165 = tpu.matmul %164, %155, %cst_42 {dimension_numbers = #tpu.dot_dimension_numbers<[1], [0], [0], [1], [0, 0, 1, 1], [], []>} : vector<8x256xf32>, vector<256x64xf32>, vector<8x64xf32> -> vector<8x64xf32>
    %c0_43 = arith.constant 0 : index
    %c0_44 = arith.constant 0 : index
    %166 = vector.load %arg11[%c0_43, %c0_44] : memref<1x10xf32, #tpu.memory_space<vmem>>, vector<1x10xf32>
    %c0_45 = arith.constant 0 : index
    %c0_46 = arith.constant 0 : index
    %c0_47 = arith.constant 0 : index
    %167 = vector.load %arg10[%c0_45, %c0_46, %c0_47] : memref<8x64x10xf32, #tpu.memory_space<vmem>>, vector<1x64x10xf32>
    %168 = vector.shape_cast %167 : vector<1x64x10xf32> to vector<64x10xf32>
    %cst_48 = arith.constant dense<0.000000e+00> : vector<8x10xf32>
    %169 = tpu.matmul %165, %168, %cst_48 {dimension_numbers = #tpu.dot_dimension_numbers<[1], [0], [0], [1], [0, 0, 1, 1], [], []>} : vector<8x64xf32>, vector<64x10xf32>, vector<8x10xf32> -> vector<8x10xf32>
    %170 = vector.extract_strided_slice %169 {offsets = [0, 0], sizes = [1, 10], strides = [1, 1]} : vector<8x10xf32> to vector<1x10xf32>
    %171 = arith.addf %166, %170 : vector<1x10xf32>
    %c1 = arith.constant 1 : index
    %c0_49 = arith.constant 0 : index
    %c0_50 = arith.constant 0 : index
    %172 = vector.load %arg10[%c1, %c0_49, %c0_50] : memref<8x64x10xf32, #tpu.memory_space<vmem>>, vector<1x64x10xf32>
    %173 = vector.shape_cast %172 : vector<1x64x10xf32> to vector<64x10xf32>
    %cst_51 = arith.constant dense<0.000000e+00> : vector<8x10xf32>
    %174 = tpu.matmul %165, %173, %cst_51 {dimension_numbers = #tpu.dot_dimension_numbers<[1], [0], [0], [1], [0, 0, 1, 1], [], []>} : vector<8x64xf32>, vector<64x10xf32>, vector<8x10xf32> -> vector<8x10xf32>
    %175 = vector.extract_strided_slice %174 {offsets = [1, 0], sizes = [1, 10], strides = [1, 1]} : vector<8x10xf32> to vector<1x10xf32>
    %176 = arith.addf %171, %175 : vector<1x10xf32>
    %c2 = arith.constant 2 : index
    %c0_52 = arith.constant 0 : index
    %c0_53 = arith.constant 0 : index
    %177 = vector.load %arg10[%c2, %c0_52, %c0_53] : memref<8x64x10xf32, #tpu.memory_space<vmem>>, vector<1x64x10xf32>
    %178 = vector.shape_cast %177 : vector<1x64x10xf32> to vector<64x10xf32>
    %cst_54 = arith.constant dense<0.000000e+00> : vector<8x10xf32>
    %179 = tpu.matmul %165, %178, %cst_54 {dimension_numbers = #tpu.dot_dimension_numbers<[1], [0], [0], [1], [0, 0, 1, 1], [], []>} : vector<8x64xf32>, vector<64x10xf32>, vector<8x10xf32> -> vector<8x10xf32>
    %180 = vector.extract_strided_slice %179 {offsets = [2, 0], sizes = [1, 10], strides = [1, 1]} : vector<8x10xf32> to vector<1x10xf32>
    %181 = arith.addf %176, %180 : vector<1x10xf32>
    %c3 = arith.constant 3 : index
    %c0_55 = arith.constant 0 : index
    %c0_56 = arith.constant 0 : index
    %182 = vector.load %arg10[%c3, %c0_55, %c0_56] : memref<8x64x10xf32, #tpu.memory_space<vmem>>, vector<1x64x10xf32>
    %183 = vector.shape_cast %182 : vector<1x64x10xf32> to vector<64x10xf32>
    %cst_57 = arith.constant dense<0.000000e+00> : vector<8x10xf32>
    %184 = tpu.matmul %165, %183, %cst_57 {dimension_numbers = #tpu.dot_dimension_numbers<[1], [0], [0], [1], [0, 0, 1, 1], [], []>} : vector<8x64xf32>, vector<64x10xf32>, vector<8x10xf32> -> vector<8x10xf32>
    %185 = vector.extract_strided_slice %184 {offsets = [3, 0], sizes = [1, 10], strides = [1, 1]} : vector<8x10xf32> to vector<1x10xf32>
    %186 = arith.addf %181, %185 : vector<1x10xf32>
    %c4 = arith.constant 4 : index
    %c0_58 = arith.constant 0 : index
    %c0_59 = arith.constant 0 : index
    %187 = vector.load %arg10[%c4, %c0_58, %c0_59] : memref<8x64x10xf32, #tpu.memory_space<vmem>>, vector<1x64x10xf32>
    %188 = vector.shape_cast %187 : vector<1x64x10xf32> to vector<64x10xf32>
    %cst_60 = arith.constant dense<0.000000e+00> : vector<8x10xf32>
    %189 = tpu.matmul %165, %188, %cst_60 {dimension_numbers = #tpu.dot_dimension_numbers<[1], [0], [0], [1], [0, 0, 1, 1], [], []>} : vector<8x64xf32>, vector<64x10xf32>, vector<8x10xf32> -> vector<8x10xf32>
    %190 = vector.extract_strided_slice %189 {offsets = [4, 0], sizes = [1, 10], strides = [1, 1]} : vector<8x10xf32> to vector<1x10xf32>
    %191 = arith.addf %186, %190 : vector<1x10xf32>
    %c5 = arith.constant 5 : index
    %c0_61 = arith.constant 0 : index
    %c0_62 = arith.constant 0 : index
    %192 = vector.load %arg10[%c5, %c0_61, %c0_62] : memref<8x64x10xf32, #tpu.memory_space<vmem>>, vector<1x64x10xf32>
    %193 = vector.shape_cast %192 : vector<1x64x10xf32> to vector<64x10xf32>
    %cst_63 = arith.constant dense<0.000000e+00> : vector<8x10xf32>
    %194 = tpu.matmul %165, %193, %cst_63 {dimension_numbers = #tpu.dot_dimension_numbers<[1], [0], [0], [1], [0, 0, 1, 1], [], []>} : vector<8x64xf32>, vector<64x10xf32>, vector<8x10xf32> -> vector<8x10xf32>
    %195 = vector.extract_strided_slice %194 {offsets = [5, 0], sizes = [1, 10], strides = [1, 1]} : vector<8x10xf32> to vector<1x10xf32>
    %196 = arith.addf %191, %195 : vector<1x10xf32>
    %c6 = arith.constant 6 : index
    %c0_64 = arith.constant 0 : index
    %c0_65 = arith.constant 0 : index
    %197 = vector.load %arg10[%c6, %c0_64, %c0_65] : memref<8x64x10xf32, #tpu.memory_space<vmem>>, vector<1x64x10xf32>
    %198 = vector.shape_cast %197 : vector<1x64x10xf32> to vector<64x10xf32>
    %cst_66 = arith.constant dense<0.000000e+00> : vector<8x10xf32>
    %199 = tpu.matmul %165, %198, %cst_66 {dimension_numbers = #tpu.dot_dimension_numbers<[1], [0], [0], [1], [0, 0, 1, 1], [], []>} : vector<8x64xf32>, vector<64x10xf32>, vector<8x10xf32> -> vector<8x10xf32>
    %200 = vector.extract_strided_slice %199 {offsets = [6, 0], sizes = [1, 10], strides = [1, 1]} : vector<8x10xf32> to vector<1x10xf32>
    %201 = arith.addf %196, %200 : vector<1x10xf32>
    %c7 = arith.constant 7 : index
    %c0_67 = arith.constant 0 : index
    %c0_68 = arith.constant 0 : index
    %202 = vector.load %arg10[%c7, %c0_67, %c0_68] : memref<8x64x10xf32, #tpu.memory_space<vmem>>, vector<1x64x10xf32>
    %203 = vector.shape_cast %202 : vector<1x64x10xf32> to vector<64x10xf32>
    %cst_69 = arith.constant dense<0.000000e+00> : vector<8x10xf32>
    %204 = tpu.matmul %165, %203, %cst_69 {dimension_numbers = #tpu.dot_dimension_numbers<[1], [0], [0], [1], [0, 0, 1, 1], [], []>} : vector<8x64xf32>, vector<64x10xf32>, vector<8x10xf32> -> vector<8x10xf32>
    %205 = vector.extract_strided_slice %204 {offsets = [7, 0], sizes = [1, 10], strides = [1, 1]} : vector<8x10xf32> to vector<1x10xf32>
    %206 = arith.addf %201, %205 : vector<1x10xf32>
    %c0_70 = arith.constant 0 : index
    %c0_71 = arith.constant 0 : index
    %c0_72 = arith.constant 0 : index
    %207 = vector.load %arg12[%c0_70, %c0_71, %c0_72] : memref<1x1x10xf32, #tpu.memory_space<vmem>>, vector<1x1x10xf32>
    %208 = vector.shape_cast %207 : vector<1x1x10xf32> to vector<1x10xf32>
    %209 = vector.shape_cast %206 : vector<1x10xf32> to vector<1x1x10xf32>
    tpu.vector_store %arg12[%c0_70, %c0_71, %c0_72], %209 {strides = array<i32>} : memref<1x1x10xf32, #tpu.memory_space<vmem>>, vector<1x1x10xf32>,
    return
  }
  func.func @transform_0(%arg0: i32) -> (i32, i32, i32) {
    %c0_i32 = arith.constant 0 : i32
    %c0_i32_0 = arith.constant 0 : i32
    %c0_i32_1 = arith.constant 0 : i32
    return %arg0, %c0_i32, %c0_i32_0 : i32, i32, i32
  }
  func.func @transform_1(%arg0: i32) -> (i32, i32) {
    %c0_i32 = arith.constant 0 : i32
    %c0_i32_0 = arith.constant 0 : i32
    %c0_i32_1 = arith.constant 0 : i32
    return %c0_i32, %c0_i32_0 : i32, i32
  }
  func.func @transform_2(%arg0: i32) -> (i32, i32) {
    %c0_i32 = arith.constant 0 : i32
    %c0_i32_0 = arith.constant 0 : i32
    %c0_i32_1 = arith.constant 0 : i32
    return %c0_i32, %c0_i32_0 : i32, i32
  }
  func.func @transform_3(%arg0: i32) -> (i32, i32) {
    %c0_i32 = arith.constant 0 : i32
    %c0_i32_0 = arith.constant 0 : i32
    %c0_i32_1 = arith.constant 0 : i32
    return %c0_i32, %c0_i32_0 : i32, i32
  }
  func.func @transform_4(%arg0: i32) -> (i32, i32) {
    %c0_i32 = arith.constant 0 : i32
    %c0_i32_0 = arith.constant 0 : i32
    %c0_i32_1 = arith.constant 0 : i32
    return %c0_i32, %c0_i32_0 : i32, i32
  }
  func.func @transform_5(%arg0: i32) -> (i32, i32) {
    %c0_i32 = arith.constant 0 : i32
    %c0_i32_0 = arith.constant 0 : i32
    %c0_i32_1 = arith.constant 0 : i32
    return %c0_i32, %c0_i32_0 : i32, i32
  }
  func.func @transform_6(%arg0: i32) -> (i32, i32) {
    %c0_i32 = arith.constant 0 : i32
    %c0_i32_0 = arith.constant 0 : i32
    %c0_i32_1 = arith.constant 0 : i32
    return %c0_i32, %c0_i32_0 : i32, i32
  }
  func.func @transform_7(%arg0: i32) -> (i32, i32) {
    %c0_i32 = arith.constant 0 : i32
    %c0_i32_0 = arith.constant 0 : i32
    %c0_i32_1 = arith.constant 0 : i32
    return %c0_i32, %c0_i32_0 : i32, i32
  }
  func.func @transform_8(%arg0: i32) -> (i32, i32) {
    %c0_i32 = arith.constant 0 : i32
    %c0_i32_0 = arith.constant 0 : i32
    %c0_i32_1 = arith.constant 0 : i32
    return %c0_i32, %c0_i32_0 : i32, i32
  }
  func.func @transform_9(%arg0: i32) -> (i32, i32, i32) {
    %c0_i32 = arith.constant 0 : i32
    %c0_i32_0 = arith.constant 0 : i32
    %c0_i32_1 = arith.constant 0 : i32
    %c0_i32_2 = arith.constant 0 : i32
    return %c0_i32, %c0_i32_0, %c0_i32_1 : i32, i32, i32
  }
  func.func @transform_10(%arg0: i32) -> (i32, i32) {
    %c0_i32 = arith.constant 0 : i32
    %c0_i32_0 = arith.constant 0 : i32
    %c0_i32_1 = arith.constant 0 : i32
    return %c0_i32, %c0_i32_0 : i32, i32
  }
  func.func @transform_11(%arg0: i32) -> (i32, i32, i32) {
    %c0_i32 = arith.constant 0 : i32
    %c0_i32_0 = arith.constant 0 : i32
    %c0_i32_1 = arith.constant 0 : i32
    return %arg0, %c0_i32, %c0_i32_0 : i32, i32, i32
  }
}

</mosaic_0001>

<llo_original>
// kernel: cnn_forward.1
$region0: #{cnn_forward.1}
  #allocation0 [shape = 'u32[]', space=smem, size = 0x4, offset = 0x4, fixed_abs, tag = 'smem constant byte address 0x4 - core index']
  #allocation1 [shape = 'u32[144,128]{1,0:T(1,128)}', space=vmem, size = 0x12000, scoped, tag = 'internal scratch']
  %s0 = inlined_call_operand.vmem [shape: f32[2,3,1024], index: 0, kind: input, shape index: {}]
  %s1 = inlined_call_operand.vmem [shape: f32[4,27], index: 1, kind: input, shape index: {}]
  %s2 = inlined_call_operand.vmem [shape: f32[4,1], index: 2, kind: input, shape index: {}]
  %s3 = inlined_call_operand.vmem [shape: f32[3,1024], index: 3, kind: input, shape index: {}]
  %s4 = inlined_call_operand.hbm [shape: f32[1024,256], index: 4, kind: input, shape index: {}]
  %s5 = inlined_call_operand.vmem [shape: f32[8,36], index: 5, kind: input, shape index: {}]
  %s6 = inlined_call_operand.vmem [shape: f32[8,1], index: 6, kind: input, shape index: {}]
  %s7 = inlined_call_operand.vmem [shape: f32[3,256], index: 7, kind: input, shape index: {}]
  %s8 = inlined_call_operand.vmem [shape: f32[256,64], index: 8, kind: input, shape index: {}]
  %s9 = inlined_call_operand.vmem [shape: f32[8,64,10], index: 9, kind: input, shape index: {}]
  %s10 = inlined_call_operand.vmem [shape: f32[1,10], index: 10, kind: input, shape index: {}]
  %s11 = inlined_call_operand.hbm [shape: f32[2,1,10], index: 11, kind: output, shape index: {}]
  %s12 = sld [smem:[#allocation0]]
  $region81: #{cnn_forward.1} parent=0
    _
  %s14 = ssub.s32 1, %s12
  %s15 = scalar_select 0, %s14, %s12
  $region1: #{cnn_forward.1} parent=0
    #allocation2 [shape = 'u8[1048576]{0}', space=vmem, size = 0x100000, scoped, tag = 'input window, operand 4, single buffered']
    #allocation3 [shape = 's32[2]{0}', space=sflag, size = 0x8, scoped, tag = 'scoped memory for cnn_forward.1']
    #allocation4 [shape = 's32[2]{0}', space=sflag, size = 0x8, scoped, tag = 'scoped memory for cnn_forward.1']
    #allocation5 [shape = 'u8[1024]{0}', space=vmem, size = 0x400, scoped, tag = 'output window, operand 0']
    %16 = vsyncpa [#allocation3], 0
    %17 = vsyncpa [#allocation4], 0
    %s18 = scalar_lea.sflag [#allocation4], 1
    %19 = vsyncpa %s18, 0
    loop: start=0, step=1, limit=4
    $region2: #{cnn_forward.1} parent=1 // loop_pre_header
      _
    $region3: #{cnn_forward.1} parent=1 // loop_header
      %s21 = sphi 0, %s25
      %p22 = scmp.ge.s32.totalorder %s21, 4
      %s31 = sphi 0, %s33
      %s34 = sphi 0, %s31
      %s35 = sphi 0, %s34
      %s51 = sphi 0, %s35
      %s55 = sphi 0, %s55
      %s57 = sphi 0, %s55
      %s58 = sphi 0, %s57
      %s72 = sphi 0, %s58
      %s76 = sphi 0, %s76
      %s78 = sphi 0, %s76
      %s79 = sphi 0, %s78
      %s93 = sphi 0, %s79
      %s97 = sphi 0, %s97
      %s99 = sphi 0, %s97
      %s100 = sphi 0, %s99
      %s114 = sphi 0, %s100
      %s118 = sphi 0, %s118
      %s120 = sphi 0, %s118
      %s121 = sphi 0, %s120
      %s135 = sphi 0, %s121
      %s139 = sphi 0, %s139
      %s141 = sphi 0, %s139
      %s142 = sphi 0, %s141
      %s156 = sphi 0, %s142
      %s160 = sphi 0, %s160
      %s162 = sphi 0, %s160
      %s163 = sphi 0, %s162
      %s177 = sphi 0, %s163
      %s181 = sphi 0, %s181
      %s183 = sphi 0, %s181
      %s184 = sphi 0, %s183
      %s198 = sphi 0, %s184
      %s202 = sphi 0, %s202
      %s204 = sphi 0, %s202
      %s205 = sphi 0, %s204
      %s219 = sphi 0, %s205
      %s223 = sphi 0, %s223
      %s225 = sphi 0, %s223
      %s226 = sphi 0, %s225
      %s240 = sphi 0, %s226
      %s244 = sphi 0, %s244
      %s246 = sphi 0, %s244
      %s247 = sphi 0, %s246
      %s261 = sphi 0, %s247
      %s267 = sphi 0, %s269
      %s270 = sphi 0, %s267
      %s271 = sphi 0, %s270
      %s287 = sphi 0, %s271
    $region4: #{cnn_forward.1} parent=1 // loop_header_branch
      %24 = sbr.rel (%p22) target = $region8
    $region5: #{cnn_forward.1} parent=1 // loop_body
      %s26 = ssub.s32 %s21, 1
      %s27 = ssub.s32 %s21, 2
      %s28 = sadd.s32 %s21, 1
      %s29 = ssub.s32 %s21, %s28
      %p30 = scmp.eq.s32.totalorder %s29, 0
      %s32 = sadd.s32 %s31, 1
      %s33 = scalar_select %p30, %s31, %s32
      %p36 = pneg %p30
      %p37 = scmp.eq.s32.totalorder %s21, 1
      %p38 = por %p36, %p37
      %p39 = scmp.ne.s32.totalorder %s31, %s34
      %p40 = scmp.eq.s32.totalorder %s21, 0
      %p41 = por %p39, %p40
      %p42 = scmp.ne.s32.totalorder %s31, %s34
      %p43 = scmp.eq.s32.totalorder %s26, 1
      %p44 = por %p42, %p43
      %p45 = scmp.ne.s32.totalorder %s34, %s35
      %p46 = scmp.eq.s32.totalorder %s26, 0
      %p47 = por %p45, %p46
      %p48 = scmp.ne.s32.totalorder %s34, %s35
      %p49 = scmp.eq.s32.totalorder %s27, 1
      %p50 = por %p48, %p49
      %p52 = scmp.ne.s32.totalorder %s35, %s51
      %p53 = scmp.eq.s32.totalorder %s27, 0
      %p54 = por %p52, %p53
      %s56 = sadd.s32 %s55, 1
      %p59 = scmp.eq.s32.totalorder %s21, 1
      %p60 = scmp.ne.s32.totalorder %s55, %s57
      %p61 = scmp.eq.s32.totalorder %s21, 0
      %p62 = por %p60, %p61
      %p63 = scmp.ne.s32.totalorder %s55, %s57
      %p64 = scmp.eq.s32.totalorder %s26, 1
      %p65 = por %p63, %p64
      %p66 = scmp.ne.s32.totalorder %s57, %s58
      %p67 = scmp.eq.s32.totalorder %s26, 0
      %p68 = por %p66, %p67
      %p69 = scmp.ne.s32.totalorder %s57, %s58
      %p70 = scmp.eq.s32.totalorder %s27, 1
      %p71 = por %p69, %p70
      %p73 = scmp.ne.s32.totalorder %s58, %s72
      %p74 = scmp.eq.s32.totalorder %s27, 0
      %p75 = por %p73, %p74
      %s77 = sadd.s32 %s76, 1
      %p80 = scmp.eq.s32.totalorder %s21, 1
      %p81 = scmp.ne.s32.totalorder %s76, %s78
      %p82 = scmp.eq.s32.totalorder %s21, 0
      %p83 = por %p81, %p82
      %p84 = scmp.ne.s32.totalorder %s76, %s78
      %p85 = scmp.eq.s32.totalorder %s26, 1
      %p86 = por %p84, %p85
      %p87 = scmp.ne.s32.totalorder %s78, %s79
      %p88 = scmp.eq.s32.totalorder %s26, 0
      %p89 = por %p87, %p88
      %p90 = scmp.ne.s32.totalorder %s78, %s79
      %p91 = scmp.eq.s32.totalorder %s27, 1
      %p92 = por %p90, %p91
      %p94 = scmp.ne.s32.totalorder %s79, %s93
      %p95 = scmp.eq.s32.totalorder %s27, 0
      %p96 = por %p94, %p95
      %s98 = sadd.s32 %s97, 1
      %p101 = scmp.eq.s32.totalorder %s21, 1
      %p102 = scmp.ne.s32.totalorder %s97, %s99
      %p103 = scmp.eq.s32.totalorder %s21, 0
      %p104 = por %p102, %p103
      %p105 = scmp.ne.s32.totalorder %s97, %s99
      %p106 = scmp.eq.s32.totalorder %s26, 1
      %p107 = por %p105, %p106
      %p108 = scmp.ne.s32.totalorder %s99, %s100
      %p109 = scmp.eq.s32.totalorder %s26, 0
      %p110 = por %p108, %p109
      %p111 = scmp.ne.s32.totalorder %s99, %s100
      %p112 = scmp.eq.s32.totalorder %s27, 1
      %p113 = por %p111, %p112
      %p115 = scmp.ne.s32.totalorder %s100, %s114
      %p116 = scmp.eq.s32.totalorder %s27, 0
      %p117 = por %p115, %p116
      %s119 = sadd.s32 %s118, 1
      %p122 = scmp.eq.s32.totalorder %s21, 1
      %p123 = scmp.ne.s32.totalorder %s118, %s120
      %p124 = scmp.eq.s32.totalorder %s21, 0
      %p125 = por %p123, %p124
      %p126 = scmp.ne.s32.totalorder %s118, %s120
      %p127 = scmp.eq.s32.totalorder %s26, 1
      %p128 = por %p126, %p127
      %p129 = scmp.ne.s32.totalorder %s120, %s121
      %p130 = scmp.eq.s32.totalorder %s26, 0
      %p131 = por %p129, %p130
      %p132 = scmp.ne.s32.totalorder %s120, %s121
      %p133 = scmp.eq.s32.totalorder %s27, 1
      %p134 = por %p132, %p133
      %p136 = scmp.ne.s32.totalorder %s121, %s135
      %p137 = scmp.eq.s32.totalorder %s27, 0
      %p138 = por %p136, %p137
      %s140 = sadd.s32 %s139, 1
      %p143 = scmp.eq.s32.totalorder %s21, 1
      %p144 = scmp.ne.s32.totalorder %s139, %s141
      %p145 = scmp.eq.s32.totalorder %s21, 0
      %p146 = por %p144, %p145
      %p147 = scmp.ne.s32.totalorder %s139, %s141
      %p148 = scmp.eq.s32.totalorder %s26, 1
      %p149 = por %p147, %p148
      %p150 = scmp.ne.s32.totalorder %s141, %s142
      %p151 = scmp.eq.s32.totalorder %s26, 0
      %p152 = por %p150, %p151
      %p153 = scmp.ne.s32.totalorder %s141, %s142
      %p154 = scmp.eq.s32.totalorder %s27, 1
      %p155 = por %p153, %p154
      %p157 = scmp.ne.s32.totalorder %s142, %s156
      %p158 = scmp.eq.s32.totalorder %s27, 0
      %p159 = por %p157, %p158
      %s161 = sadd.s32 %s160, 1
      %p164 = scmp.eq.s32.totalorder %s21, 1
      %p165 = scmp.ne.s32.totalorder %s160, %s162
      %p166 = scmp.eq.s32.totalorder %s21, 0
      %p167 = por %p165, %p166
      %p168 = scmp.ne.s32.totalorder %s160, %s162
      %p169 = scmp.eq.s32.totalorder %s26, 1
      %p170 = por %p168, %p169
      %p171 = scmp.ne.s32.totalorder %s162, %s163
      %p172 = scmp.eq.s32.totalorder %s26, 0
      %p173 = por %p171, %p172
      %p174 = scmp.ne.s32.totalorder %s162, %s163
      %p175 = scmp.eq.s32.totalorder %s27, 1
      %p176 = por %p174, %p175
      %p178 = scmp.ne.s32.totalorder %s163, %s177
      %p179 = scmp.eq.s32.totalorder %s27, 0
      %p180 = por %p178, %p179
      %s182 = sadd.s32 %s181, 1
      %p185 = scmp.eq.s32.totalorder %s21, 1
      %p186 = scmp.ne.s32.totalorder %s181, %s183
      %p187 = scmp.eq.s32.totalorder %s21, 0
      %p188 = por %p186, %p187
      %p189 = scmp.ne.s32.totalorder %s181, %s183
      %p190 = scmp.eq.s32.totalorder %s26, 1
      %p191 = por %p189, %p190
      %p192 = scmp.ne.s32.totalorder %s183, %s184
      %p193 = scmp.eq.s32.totalorder %s26, 0
      %p194 = por %p192, %p193
      %p195 = scmp.ne.s32.totalorder %s183, %s184
      %p196 = scmp.eq.s32.totalorder %s27, 1
      %p197 = por %p195, %p196
      %p199 = scmp.ne.s32.totalorder %s184, %s198
      %p200 = scmp.eq.s32.totalorder %s27, 0
      %p201 = por %p199, %p200
      %s203 = sadd.s32 %s202, 1
      %p206 = scmp.eq.s32.totalorder %s21, 1
      %p207 = scmp.ne.s32.totalorder %s202, %s204
      %p208 = scmp.eq.s32.totalorder %s21, 0
      %p209 = por %p207, %p208
      %p210 = scmp.ne.s32.totalorder %s202, %s204
      %p211 = scmp.eq.s32.totalorder %s26, 1
      %p212 = por %p210, %p211
      %p213 = scmp.ne.s32.totalorder %s204, %s205
      %p214 = scmp.eq.s32.totalorder %s26, 0
      %p215 = por %p213, %p214
      %p216 = scmp.ne.s32.totalorder %s204, %s205
      %p217 = scmp.eq.s32.totalorder %s27, 1
      %p218 = por %p216, %p217
      %p220 = scmp.ne.s32.totalorder %s205, %s219
      %p221 = scmp.eq.s32.totalorder %s27, 0
      %p222 = por %p220, %p221
      %s224 = sadd.s32 %s223, 1
      %p227 = scmp.eq.s32.totalorder %s21, 1
      %p228 = scmp.ne.s32.totalorder %s223, %s225
      %p229 = scmp.eq.s32.totalorder %s21, 0
      %p230 = por %p228, %p229
      %p231 = scmp.ne.s32.totalorder %s223, %s225
      %p232 = scmp.eq.s32.totalorder %s26, 1
      %p233 = por %p231, %p232
      %p234 = scmp.ne.s32.totalorder %s225, %s226
      %p235 = scmp.eq.s32.totalorder %s26, 0
      %p236 = por %p234, %p235
      %p237 = scmp.ne.s32.totalorder %s225, %s226
      %p238 = scmp.eq.s32.totalorder %s27, 1
      %p239 = por %p237, %p238
      %p241 = scmp.ne.s32.totalorder %s226, %s240
      %p242 = scmp.eq.s32.totalorder %s27, 0
      %p243 = por %p241, %p242
      %s245 = sadd.s32 %s244, 1
      %p248 = scmp.eq.s32.totalorder %s21, 1
      %p249 = scmp.ne.s32.totalorder %s244, %s246
      %p250 = scmp.eq.s32.totalorder %s21, 0
      %p251 = por %p249, %p250
      %p252 = scmp.ne.s32.totalorder %s244, %s246
      %p253 = scmp.eq.s32.totalorder %s26, 1
      %p254 = por %p252, %p253
      %p255 = scmp.ne.s32.totalorder %s246, %s247
      %p256 = scmp.eq.s32.totalorder %s26, 0
      %p257 = por %p255, %p256
      %p258 = scmp.ne.s32.totalorder %s246, %s247
      %p259 = scmp.eq.s32.totalorder %s27, 1
      %p260 = por %p258, %p259
      %p262 = scmp.ne.s32.totalorder %s247, %s261
      %p263 = scmp.eq.s32.totalorder %s27, 0
      %p264 = por %p262, %p263
      %s265 = ssub.s32 %s21, %s28
      %p266 = scmp.eq.s32.totalorder %s265, 0
      %s268 = sadd.s32 %s267, 1
      %s269 = scalar_select %p266, %s267, %s268
      %p272 = pneg %p266
      %p273 = scmp.eq.s32.totalorder %s21, 1
      %p274 = por %p272, %p273
      %p275 = scmp.ne.s32.totalorder %s267, %s270
      %p276 = scmp.eq.s32.totalorder %s21, 0
      %p277 = por %p275, %p276
      %p278 = scmp.ne.s32.totalorder %s267, %s270
      %p279 = scmp.eq.s32.totalorder %s26, 1
      %p280 = por %p278, %p279
      %p281 = scmp.ne.s32.totalorder %s270, %s271
      %p282 = scmp.eq.s32.totalorder %s26, 0
      %p283 = por %p281, %p282
      %p284 = scmp.ne.s32.totalorder %s270, %s271
      %p285 = scmp.eq.s32.totalorder %s27, 1
      %p286 = por %p284, %p285
      %p288 = scmp.ne.s32.totalorder %s271, %s287
      %p289 = scmp.eq.s32.totalorder %s27, 0
      %p290 = por %p288, %p289
      %p291 = scmp.le.s32.totalorder 1, %s21
      %p292 = scmp.lt.s32.totalorder %s21, 3
      %p293 = pnand %p291, %p292
      %p294 = pneg %p293
      // Predicated region
      $region9: #{cnn_forward.1} parent=5 // pred_check
        _
      $region10: #{cnn_forward.1} parent=5 // pred_check_branch
        %296 = sbr.rel (%p293) target = $region12
      $region11: #{cnn_forward.1} parent=5 // pred_region
        %s297 = ssub.s32 %s21, 1
        // Predicated region
        $region13: #{cnn_forward.1} parent=11 // pred_check
          %p298 = pneg %p68
        $region14: #{cnn_forward.1} parent=11 // pred_check_branch
          %300 = sbr.rel (%p298) target = $region16
        $region15: #{cnn_forward.1} parent=11 // pred_region
          _
        $region16: #{cnn_forward.1} parent=11 // pred_fallthru
          _
        // Predicated region
        $region17: #{cnn_forward.1} parent=11 // pred_check
          %p301 = pneg %p89
        $region18: #{cnn_forward.1} parent=11 // pred_check_branch
          %303 = sbr.rel (%p301) target = $region20
        $region19: #{cnn_forward.1} parent=11 // pred_region
          _
        $region20: #{cnn_forward.1} parent=11 // pred_fallthru
          _
        // Predicated region
        $region21: #{cnn_forward.1} parent=11 // pred_check
          %p304 = pneg %p110
        $region22: #{cnn_forward.1} parent=11 // pred_check_branch
          %306 = sbr.rel (%p304) target = $region24
        $region23: #{cnn_forward.1} parent=11 // pred_region
          _
        $region24: #{cnn_forward.1} parent=11 // pred_fallthru
          _
        // Predicated region
        $region25: #{cnn_forward.1} parent=11 // pred_check
          %p307 = pneg %p131
        $region26: #{cnn_forward.1} parent=11 // pred_check_branch
          %309 = sbr.rel (%p307) target = $region28
        $region27: #{cnn_forward.1} parent=11 // pred_region
          %s311 = ssub.s32 32768, 32768
          %312 = vsyncadd [#allocation3], %s311
          %s313 = sshll.u32 [#allocation2], 4
          %s314 = int_to_ptr.vmem [resolvable:$true] %s313
          %319 = dma.hbm_to_vmem [thread:$0]  %s4, 32768, %s314, [#allocation3], 256, 256, 16
        $region28: #{cnn_forward.1} parent=11 // pred_fallthru
          _
        // Predicated region
        $region29: #{cnn_forward.1} parent=11 // pred_check
          %p320 = pneg %p152
        $region30: #{cnn_forward.1} parent=11 // pred_check_branch
          %322 = sbr.rel (%p320) target = $region32
        $region31: #{cnn_forward.1} parent=11 // pred_region
          _
        $region32: #{cnn_forward.1} parent=11 // pred_fallthru
          _
        // Predicated region
        $region33: #{cnn_forward.1} parent=11 // pred_check
          %p323 = pneg %p173
        $region34: #{cnn_forward.1} parent=11 // pred_check_branch
          %325 = sbr.rel (%p323) target = $region36
        $region35: #{cnn_forward.1} parent=11 // pred_region
          _
        $region36: #{cnn_forward.1} parent=11 // pred_fallthru
          _
        // Predicated region
        $region37: #{cnn_forward.1} parent=11 // pred_check
          %p326 = pneg %p194
        $region38: #{cnn_forward.1} parent=11 // pred_check_branch
          %328 = sbr.rel (%p326) target = $region40
        $region39: #{cnn_forward.1} parent=11 // pred_region
          _
        $region40: #{cnn_forward.1} parent=11 // pred_fallthru
          _
        // Predicated region
        $region41: #{cnn_forward.1} parent=11 // pred_check
          %p329 = pneg %p215
        $region42: #{cnn_forward.1} parent=11 // pred_check_branch
          %331 = sbr.rel (%p329) target = $region44
        $region43: #{cnn_forward.1} parent=11 // pred_region
          _
        $region44: #{cnn_forward.1} parent=11 // pred_fallthru
          _
        // Predicated region
        $region45: #{cnn_forward.1} parent=11 // pred_check
          %p332 = pneg %p236
        $region46: #{cnn_forward.1} parent=11 // pred_check_branch
          %334 = sbr.rel (%p332) target = $region48
        $region47: #{cnn_forward.1} parent=11 // pred_region
          _
        $region48: #{cnn_forward.1} parent=11 // pred_fallthru
          _
        // Predicated region
        $region49: #{cnn_forward.1} parent=11 // pred_check
          %p335 = pneg %p257
        $region50: #{cnn_forward.1} parent=11 // pred_check_branch
          %337 = sbr.rel (%p335) target = $region52
        $region51: #{cnn_forward.1} parent=11 // pred_region
          _
        $region52: #{cnn_forward.1} parent=11 // pred_fallthru
          _
      $region12: #{cnn_forward.1} parent=5 // pred_fallthru
        _
      %p338 = scmp.lt.s32.totalorder %s21, 2
      // Predicated region
      $region53: #{cnn_forward.1} parent=5 // pred_check
        %p339 = pneg %p338
      $region54: #{cnn_forward.1} parent=5 // pred_check_branch
        %341 = sbr.rel (%p339) target = $region56
      $region55: #{cnn_forward.1} parent=5 // pred_region
        // Predicated region
        $region57: #{cnn_forward.1} parent=55 // pred_check
          %p342 = pneg %p41
        $region58: #{cnn_forward.1} parent=55 // pred_check_branch
          %344 = sbr.rel (%p342) target = $region60
        $region59: #{cnn_forward.1} parent=55 // pred_region
          %p345 = scmp.lt.s32.totalorder %s21, 1
          %s346 = scalar_select %p345, %s21, 1
          %s347 = smul.addr %s346, 8
          %s348 = smul.addr %s347, 4
          %s349 = scalar_lea.vmem %s0, %s348
        $region60: #{cnn_forward.1} parent=55 // pred_fallthru
          _
      $region56: #{cnn_forward.1} parent=5 // pred_fallthru
        _
      %p350 = scmp.le.s32.totalorder 1, %s21
      %p351 = scmp.lt.s32.totalorder %s21, 3
      %p352 = pnand %p350, %p351
      %p353 = pneg %p352
      // Predicated region
      $region61: #{cnn_forward.1} parent=5 // pred_check
        _
      $region62: #{cnn_forward.1} parent=5 // pred_check_branch
        %355 = sbr.rel (%p352) target = $region64
      $region63: #{cnn_forward.1} parent=5 // pred_region
        %s356 = ssub.s32 %s21, 1
        // Predicated region
        $region65: #{cnn_forward.1} parent=63 // pred_check
          %p357 = pneg %p131
        $region66: #{cnn_forward.1} parent=63 // pred_check_branch
          %359 = sbr.rel (%p357) target = $region68
        $region67: #{cnn_forward.1} parent=63 // pred_region
          %360 = dma.done [#allocation3], 32768
        $region68: #{cnn_forward.1} parent=63 // pred_fallthru
          _
        %p361 = scmp.lt.s32.totalorder %s26, 1
        %s362 = scalar_select %p361, %s26, 1
        %s363 = smul.addr %s362, 8
        %s364 = smul.addr %s363, 4
        %s365 = scalar_lea.vmem %s0, %s364
        %p366 = pneg %p47
        %p367 = pneg %p44
        %p368 = pneg %p68
        %p369 = pneg %p65
        %p370 = pneg %p89
        %p371 = pneg %p86
        %p372 = pneg %p110
        %p373 = pneg %p107
        %p374 = pneg %p131
        %p375 = pneg %p128
        %p376 = pneg %p152
        %p377 = pneg %p149
        %p378 = pneg %p173
        %p379 = pneg %p170
        %p380 = pneg %p194
        %p381 = pneg %p191
        %p382 = pneg %p215
        %p383 = pneg %p212
        %p384 = pneg %p236
        %p385 = pneg %p233
        %p386 = pneg %p257
        %p387 = pneg %p254
        %p388 = pneg %p283
        %p389 = pneg %p280
        %s390 = sand.u32 %s270, 1
        %s391 = scalar_lea.sflag [#allocation4], %s390
        %s392 = sand.u32 %s270, 1
        %s393 = scalar_lea.vmem [#allocation5], %s392
        %p394 = scmp.lt.s32.totalorder %s26, 1
        %s395 = scalar_select %p394, %s26, 1
        %s396 = smul.addr %s395, 8
        %s397 = smul.addr %s396, 4
        %s398 = scalar_lea.vmem %s0, %s397
        %v399 = vld [vmem:[%s398] sm:$0x77]
        %v400 = vld [vmem:[%s398 + $0x8] sm:$0x77]
        %v401 = vld [vmem:[%s398 + $0x10] sm:$0x77]
        %v402 = vld [vmem:[%s398 + $0x18] sm:$0x77]
        %v403 = vld [vmem:[%s1] sm:$0xf]
        %v404 = vld [vmem:[%s2] sm:$0xf]
        %v405 = vld [vmem:[%s3] sm:$0x77]
        %v406 = vld [vmem:[%s3 + $0x8] sm:$0x77]
        %v407 = vld [vmem:[%s3 + $0x10] sm:$0x77]
        %v408 = vld [vmem:[%s3 + $0x18] sm:$0x77]
        %v413 = vcombine.high %v399, %v399
        %v414 = vcombine.high %v400, %v400
        %v415 = vcombine.high %v401, %v401
        %v416 = vcombine.high %v402, %v402
        %v425 = vlaneseq
        %v426 = vshrl.u32 %v425, 7
        %v427 = vsub.s32 0, %v426
        %v428 = vrot.slane %v405, %v427
        %v429 = vlaneseq
        %v430 = vshrl.u32 %v429, 7
        %v431 = vsub.s32 4, %v430
        %v432 = vrot.slane %v405, %v431
        %v433 = vlaneseq
        %v434 = vshrl.u32 %v433, 7
        %v435 = vsub.s32 0, %v434
        %v436 = vrot.slane %v406, %v435
        %v437 = vlaneseq
        %v438 = vshrl.u32 %v437, 7
        %v439 = vsub.s32 4, %v438
        %v440 = vrot.slane %v406, %v439
        %v441 = vlaneseq
        %v442 = vshrl.u32 %v441, 7
        %v443 = vsub.s32 0, %v442
        %v444 = vrot.slane %v407, %v443
        %v445 = vlaneseq
        %v446 = vshrl.u32 %v445, 7
        %v447 = vsub.s32 4, %v446
        %v448 = vrot.slane %v407, %v447
        %v449 = vlaneseq
        %v450 = vshrl.u32 %v449, 7
        %v451 = vsub.s32 0, %v450
        %v452 = vrot.slane %v408, %v451
        %v453 = vlaneseq
        %v454 = vshrl.u32 %v453, 7
        %v455 = vsub.s32 4, %v454
        %v456 = vrot.slane %v408, %v455
        %v465 = vlaneseq
        %v466 = vshrl.u32 %v465, 7
        %v467 = vsub.s32 0, %v466
        %v468 = vrot.slane %v428, %v467
        %v469 = vlaneseq
        %v470 = vshrl.u32 %v469, 7
        %v471 = vsub.s32 0, %v470
        %v472 = vrot.slane %v432, %v471
        %v473 = vlaneseq
        %v474 = vshrl.u32 %v473, 7
        %v475 = vsub.s32 0, %v474
        %v476 = vrot.slane %v436, %v475
        %v477 = vlaneseq
        %v478 = vshrl.u32 %v477, 7
        %v479 = vsub.s32 0, %v478
        %v480 = vrot.slane %v440, %v479
        %v481 = vlaneseq
        %v482 = vshrl.u32 %v481, 7
        %v483 = vsub.s32 0, %v482
        %v484 = vrot.slane %v444, %v483
        %v485 = vlaneseq
        %v486 = vshrl.u32 %v485, 7
        %v487 = vsub.s32 0, %v486
        %v488 = vrot.slane %v448, %v487
        %v489 = vlaneseq
        %v490 = vshrl.u32 %v489, 7
        %v491 = vsub.s32 0, %v490
        %v492 = vrot.slane %v452, %v491
        %v493 = vlaneseq
        %v494 = vshrl.u32 %v493, 7
        %v495 = vsub.s32 0, %v494
        %v496 = vrot.slane %v456, %v495
        %505 = vrot.lane.b32.xlu0 %v468, 95
        %v506 = vpop.permute.xlu0 %505
        %507 = vrot.lane.b32.xlu0 %v472, 95
        %v508 = vpop.permute.xlu0 %507
        %509 = vrot.lane.b32.xlu0 %v476, 95
        %v510 = vpop.permute.xlu0 %509
        %511 = vrot.lane.b32.xlu0 %v480, 95
        %v512 = vpop.permute.xlu0 %511
        %513 = vrot.lane.b32.xlu0 %v484, 95
        %v514 = vpop.permute.xlu0 %513
        %515 = vrot.lane.b32.xlu0 %v488, 95
        %v516 = vpop.permute.xlu0 %515
        %517 = vrot.lane.b32.xlu0 %v492, 95
        %v518 = vpop.permute.xlu0 %517
        %519 = vrot.lane.b32.xlu0 %v496, 95
        %v520 = vpop.permute.xlu0 %519
        %vm521 = vcmask 777216
        %v522 = vsel %vm521, %v506, %v508
        %v523 = vsel %vm521, %v508, %v510
        %v524 = vsel %vm521, %v510, %v512
        %v525 = vsel %vm521, %v512, %v514
        %v526 = vsel %vm521, %v514, %v516
        %v527 = vsel %vm521, %v516, %v518
        %v528 = vsel %vm521, %v518, %v520
        %v538 = vmul.f32 %v506, 0.0
        %v539 = vmul.f32 %v399, %v522
        %v540 = vmul.f32 %v413, %v523
        %v541 = vmul.f32 %v400, %v524
        %v542 = vmul.f32 %v414, %v525
        %v543 = vmul.f32 %v401, %v526
        %v544 = vmul.f32 %v415, %v527
        %v545 = vmul.f32 %v402, %v528
        %v546 = vmul.f32 %v416, %v520
        %v547 = vlaneseq
        %v548 = vshrl.u32 %v547, 7
        %v549 = vsub.s32 1, %v548
        %v550 = vrot.slane %v405, %v549
        %v551 = vlaneseq
        %v552 = vshrl.u32 %v551, 7
        %v553 = vsub.s32 5, %v552
        %v554 = vrot.slane %v405, %v553
        %v555 = vlaneseq
        %v556 = vshrl.u32 %v555, 7
        %v557 = vsub.s32 1, %v556
        %v558 = vrot.slane %v406, %v557
        %v559 = vlaneseq
        %v560 = vshrl.u32 %v559, 7
        %v561 = vsub.s32 5, %v560
        %v562 = vrot.slane %v406, %v561
        %v563 = vlaneseq
        %v564 = vshrl.u32 %v563, 7
        %v565 = vsub.s32 1, %v564
        %v566 = vrot.slane %v407, %v565
        %v567 = vlaneseq
        %v568 = vshrl.u32 %v567, 7
        %v569 = vsub.s32 5, %v568
        %v570 = vrot.slane %v407, %v569
        %v571 = vlaneseq
        %v572 = vshrl.u32 %v571, 7
        %v573 = vsub.s32 1, %v572
        %v574 = vrot.slane %v408, %v573
        %v575 = vlaneseq
        %v576 = vshrl.u32 %v575, 7
        %v577 = vsub.s32 5, %v576
        %v578 = vrot.slane %v408, %v577
        %v587 = vlaneseq
        %v588 = vshrl.u32 %v587, 7
        %v589 = vsub.s32 1, %v588
        %v590 = vrot.slane %v550, %v589
        %v591 = vlaneseq
        %v592 = vshrl.u32 %v591, 7
        %v593 = vsub.s32 1, %v592
        %v594 = vrot.slane %v554, %v593
        %v595 = vlaneseq
        %v596 = vshrl.u32 %v595, 7
        %v597 = vsub.s32 1, %v596
        %v598 = vrot.slane %v558, %v597
        %v599 = vlaneseq
        %v600 = vshrl.u32 %v599, 7
        %v601 = vsub.s32 1, %v600
        %v602 = vrot.slane %v562, %v601
        %v603 = vlaneseq
        %v604 = vshrl.u32 %v603, 7
        %v605 = vsub.s32 1, %v604
        %v606 = vrot.slane %v566, %v605
        %v607 = vlaneseq
        %v608 = vshrl.u32 %v607, 7
        %v609 = vsub.s32 1, %v608
        %v610 = vrot.slane %v570, %v609
        %v611 = vlaneseq
        %v612 = vshrl.u32 %v611, 7
        %v613 = vsub.s32 1, %v612
        %v614 = vrot.slane %v574, %v613
        %v615 = vlaneseq
        %v616 = vshrl.u32 %v615, 7
        %v617 = vsub.s32 1, %v616
        %v618 = vrot.slane %v578, %v617
        %627 = vrot.lane.b32.xlu0 %v590, 96
        %v628 = vpop.permute.xlu0 %627
        %629 = vrot.lane.b32.xlu0 %v594, 96
        %v630 = vpop.permute.xlu0 %629
        %631 = vrot.lane.b32.xlu0 %v598, 96
        %v632 = vpop.permute.xlu0 %631
        %633 = vrot.lane.b32.xlu0 %v602, 96
        %v634 = vpop.permute.xlu0 %633
        %635 = vrot.lane.b32.xlu0 %v606, 96
        %v636 = vpop.permute.xlu0 %635
        %637 = vrot.lane.b32.xlu0 %v610, 96
        %v638 = vpop.permute.xlu0 %637
        %639 = vrot.lane.b32.xlu0 %v614, 96
        %v640 = vpop.permute.xlu0 %639
        %641 = vrot.lane.b32.xlu0 %v618, 96
        %v642 = vpop.permute.xlu0 %641
        %vm643 = vcmask 785408
        %v644 = vsel %vm643, %v628, %v630
        %v645 = vsel %vm643, %v630, %v632
        %v646 = vsel %vm643, %v632, %v634
        %v647 = vsel %vm643, %v634, %v636
        %v648 = vsel %vm643, %v636, %v638
        %v649 = vsel %vm643, %v638, %v640
        %v650 = vsel %vm643, %v640, %v642
        %v660 = vmul.f32 %v628, 0.0
        %v661 = vmul.f32 %v399, %v644
        %v662 = vmul.f32 %v413, %v645
        %v663 = vmul.f32 %v400, %v646
        %v664 = vmul.f32 %v414, %v647
        %v665 = vmul.f32 %v401, %v648
        %v666 = vmul.f32 %v415, %v649
        %v667 = vmul.f32 %v402, %v650
        %v668 = vmul.f32 %v416, %v642
        %670 = vrot.lane.b32.xlu0 %v403, 125
        %v671 = vpop.permute.xlu0 %670
        %681 = vrot.lane.b32.xlu0 %v660, 32
        %v682 = vpop.permute.xlu0 %681
        %683 = vrot.lane.b32.xlu0 %v661, 32
        %v684 = vpop.permute.xlu0 %683
        %685 = vrot.lane.b32.xlu0 %v662, 32
        %v686 = vpop.permute.xlu0 %685
        %687 = vrot.lane.b32.xlu0 %v663, 32
        %v688 = vpop.permute.xlu0 %687
        %689 = vrot.lane.b32.xlu0 %v664, 32
        %v690 = vpop.permute.xlu0 %689
        %691 = vrot.lane.b32.xlu0 %v665, 32
        %v692 = vpop.permute.xlu0 %691
        %693 = vrot.lane.b32.xlu0 %v666, 32
        %v694 = vpop.permute.xlu0 %693
        %695 = vrot.lane.b32.xlu0 %v667, 32
        %v696 = vpop.permute.xlu0 %695
        %697 = vrot.lane.b32.xlu0 %v668, 32
        %v698 = vpop.permute.xlu0 %697
        %vm699 = vcmask 261120
        %v700 = vsel %vm699, %v682, %v684
        %v701 = vsel %vm699, %v684, %v686
        %v702 = vsel %vm699, %v686, %v688
        %v703 = vsel %vm699, %v688, %v690
        %v704 = vsel %vm699, %v690, %v692
        %v705 = vsel %vm699, %v692, %v694
        %v706 = vsel %vm699, %v694, %v696
        %v707 = vsel %vm699, %v696, %v698
        %vm708 = vcmask 23552
        %v709 = vsel %vm708, %v671, 0
        %vm711 = vcmask 1042432
        %v712 = vsel %vm711, %v700, 0
        %v714 = vsel %vm711, %v701, 0
        %v716 = vsel %vm711, %v702, 0
        %v718 = vsel %vm711, %v703, 0
        %v720 = vsel %vm711, %v704, 0
        %v722 = vsel %vm711, %v705, 0
        %v724 = vsel %vm711, %v706, 0
        %v726 = vsel %vm711, %v707, 0
        %728 = vmatprep.subr.mxu0 %v714
        %729 = vmatpush1.msra.mxu0 %v712
        %730 = vmatprep.subr.mxu0 0.0
        %731 = vmatpush1.msra.mxu0 0.0
        %732 = vmatprep.subr.mxu0 0.0
        %733 = vmatpush1.msra.mxu0 0.0
        %734 = vmatprep.subr.mxu0 0.0
        %735 = vmatpush1.msra.mxu0 0.0
        %736 = vmatprep.subr.mxu0 0.0
        %737 = vmatpush1.msra.mxu0 0.0
        %738 = vmatprep.subr.mxu0 0.0
        %739 = vmatpush1.msra.mxu0 0.0
        %740 = vmatprep.subr.mxu0 0.0
        %741 = vmatpush1.msra.mxu0 0.0
        %742 = vmatprep.subr.mxu0 0.0
        %743 = vmatpush1.msra.mxu0 0.0
        %744 = vmatprep.subr.mxu0 0.0
        %745 = vmatpush1.msra.mxu0 0.0
        %746 = vmatprep.subr.mxu0 0.0
        %747 = vmatpush1.msra.mxu0 0.0
        %748 = vmatprep.subr.mxu0 0.0
        %749 = vmatpush1.msra.mxu0 0.0
        %750 = vmatprep.subr.mxu0 0.0
        %751 = vmatpush1.msra.mxu0 0.0
        %752 = vmatprep.subr.mxu0 0.0
        %753 = vmatpush1.msra.mxu0 0.0
        %754 = vmatprep.subr.mxu0 0.0
        %755 = vmatpush1.msra.mxu0 0.0
        %756 = vmatprep.subr.mxu0 0.0
        %757 = vmatpush1.msra.mxu0 0.0
        %758 = vmatprep.subr.mxu0 0.0
        %759 = vmatpush1.msra.mxu0 0.0
        %760 = vmatprep.subr.mxu0 0.0
        %761 = vmatpush1.msra.mxu0 0.0
        %762 = vmatprep.subr.mxu0 0.0
        %763 = vmatpush1.msra.mxu0 0.0
        %764 = vmatprep.subr.mxu0 0.0
        %765 = vmatpush1.msra.mxu0 0.0
        %766 = vmatprep.subr.mxu0 0.0
        %767 = vmatpush1.msra.mxu0 0.0
        %768 = vmatprep.subr.mxu0 0.0
        %769 = vmatpush1.msra.mxu0 0.0
        %770 = vmatprep.subr.mxu0 0.0
        %771 = vmatpush1.msra.mxu0 0.0
        %772 = vmatprep.subr.mxu0 0.0
        %773 = vmatpush1.msra.mxu0 0.0
        %774 = vmatprep.subr.mxu0 0.0
        %775 = vmatpush1.msra.mxu0 0.0
        %776 = vmatprep.subr.mxu0 0.0
        %777 = vmatpush1.msra.mxu0 0.0
        %778 = vmatprep.subr.mxu0 0.0
        %779 = vmatpush1.msra.mxu0 0.0
        %780 = vmatprep.subr.mxu0 0.0
        %781 = vmatpush1.msra.mxu0 0.0
        %782 = vmatprep.subr.mxu0 0.0
        %783 = vmatpush1.msra.mxu0 0.0
        %784 = vmatprep.subr.mxu0 0.0
        %785 = vmatpush1.msra.mxu0 0.0
        %786 = vmatprep.subr.mxu0 0.0
        %787 = vmatpush1.msra.mxu0 0.0
        %788 = vmatprep.subr.mxu0 0.0
        %789 = vmatpush1.msra.mxu0 0.0
        %790 = vmatprep.subr.mxu0 0.0
        %791 = vmatpush1.msra.mxu0 0.0
        %792 = vmatprep.mubr.f32.mxu0 0.0
        %793 = vmatmul.mubr.f32.gmra.mrb[0].mxu0 %v709
        %v794 = vpop.f32.mrb[0].mxu0
        %v795 = vadd.f32 0.0, %v794
        %v796 = vpop.f32.mrb[0].mxu0
        %v797 = vadd.f32 0.0, %v796
        %798 = vdwg.mxu0
        %799 = vmatprep.subr.mxu0 %v718
        %800 = vmatpush1.msra.mxu0 %v716
        %801 = vmatprep.subr.mxu0 0.0
        %802 = vmatpush1.msra.mxu0 0.0
        %803 = vmatprep.subr.mxu0 0.0
        %804 = vmatpush1.msra.mxu0 0.0
        %805 = vmatprep.subr.mxu0 0.0
        %806 = vmatpush1.msra.mxu0 0.0
        %807 = vmatprep.subr.mxu0 0.0
        %808 = vmatpush1.msra.mxu0 0.0
        %809 = vmatprep.subr.mxu0 0.0
        %810 = vmatpush1.msra.mxu0 0.0
        %811 = vmatprep.subr.mxu0 0.0
        %812 = vmatpush1.msra.mxu0 0.0
        %813 = vmatprep.subr.mxu0 0.0
        %814 = vmatpush1.msra.mxu0 0.0
        %815 = vmatprep.subr.mxu0 0.0
        %816 = vmatpush1.msra.mxu0 0.0
        %817 = vmatprep.subr.mxu0 0.0
        %818 = vmatpush1.msra.mxu0 0.0
        %819 = vmatprep.subr.mxu0 0.0
        %820 = vmatpush1.msra.mxu0 0.0
        %821 = vmatprep.subr.mxu0 0.0
        %822 = vmatpush1.msra.mxu0 0.0
        %823 = vmatprep.subr.mxu0 0.0
        %824 = vmatpush1.msra.mxu0 0.0
        %825 = vmatprep.subr.mxu0 0.0
        %826 = vmatpush1.msra.mxu0 0.0
        %827 = vmatprep.subr.mxu0 0.0
        %828 = vmatpush1.msra.mxu0 0.0
        %829 = vmatprep.subr.mxu0 0.0
        %830 = vmatpush1.msra.mxu0 0.0
        %831 = vmatprep.subr.mxu0 0.0
        %832 = vmatpush1.msra.mxu0 0.0
        %833 = vmatprep.subr.mxu0 0.0
        %834 = vmatpush1.msra.mxu0 0.0
        %835 = vmatprep.subr.mxu0 0.0
        %836 = vmatpush1.msra.mxu0 0.0
        %837 = vmatprep.subr.mxu0 0.0
        %838 = vmatpush1.msra.mxu0 0.0
        %839 = vmatprep.subr.mxu0 0.0
        %840 = vmatpush1.msra.mxu0 0.0
        %841 = vmatprep.subr.mxu0 0.0
        %842 = vmatpush1.msra.mxu0 0.0
        %843 = vmatprep.subr.mxu0 0.0
        %844 = vmatpush1.msra.mxu0 0.0
        %845 = vmatprep.subr.mxu0 0.0
        %846 = vmatpush1.msra.mxu0 0.0
        %847 = vmatprep.subr.mxu0 0.0
        %848 = vmatpush1.msra.mxu0 0.0
        %849 = vmatprep.subr.mxu0 0.0
        %850 = vmatpush1.msra.mxu0 0.0
        %851 = vmatprep.subr.mxu0 0.0
        %852 = vmatpush1.msra.mxu0 0.0
        %853 = vmatprep.subr.mxu0 0.0
        %854 = vmatpush1.msra.mxu0 0.0
        %855 = vmatprep.subr.mxu0 0.0
        %856 = vmatpush1.msra.mxu0 0.0
        %857 = vmatprep.subr.mxu0 0.0
        %858 = vmatpush1.msra.mxu0 0.0
        %859 = vmatprep.subr.mxu0 0.0
        %860 = vmatpush1.msra.mxu0 0.0
        %861 = vmatprep.subr.mxu0 0.0
        %862 = vmatpush1.msra.mxu0 0.0
        %863 = vmatprep.mubr.f32.mxu0 0.0
        %864 = vmatmul.mubr.f32.gmra.mrb[0].mxu0 %v709
        %v865 = vpop.f32.mrb[0].mxu0
        %v866 = vadd.f32 0.0, %v865
        %v867 = vpop.f32.mrb[0].mxu0
        %v868 = vadd.f32 0.0, %v867
        %869 = vdwg.mxu0
        %870 = vmatprep.subr.mxu0 %v722
        %871 = vmatpush1.msra.mxu0 %v720
        %872 = vmatprep.subr.mxu0 0.0
        %873 = vmatpush1.msra.mxu0 0.0
        %874 = vmatprep.subr.mxu0 0.0
        %875 = vmatpush1.msra.mxu0 0.0
        %876 = vmatprep.subr.mxu0 0.0
        %877 = vmatpush1.msra.mxu0 0.0
        %878 = vmatprep.subr.mxu0 0.0
        %879 = vmatpush1.msra.mxu0 0.0
        %880 = vmatprep.subr.mxu0 0.0
        %881 = vmatpush1.msra.mxu0 0.0
        %882 = vmatprep.subr.mxu0 0.0
        %883 = vmatpush1.msra.mxu0 0.0
        %884 = vmatprep.subr.mxu0 0.0
        %885 = vmatpush1.msra.mxu0 0.0
        %886 = vmatprep.subr.mxu0 0.0
        %887 = vmatpush1.msra.mxu0 0.0
        %888 = vmatprep.subr.mxu0 0.0
        %889 = vmatpush1.msra.mxu0 0.0
        %890 = vmatprep.subr.mxu0 0.0
        %891 = vmatpush1.msra.mxu0 0.0
        %892 = vmatprep.subr.mxu0 0.0
        %893 = vmatpush1.msra.mxu0 0.0
        %894 = vmatprep.subr.mxu0 0.0
        %895 = vmatpush1.msra.mxu0 0.0
        %896 = vmatprep.subr.mxu0 0.0
        %897 = vmatpush1.msra.mxu0 0.0
        %898 = vmatprep.subr.mxu0 0.0
        %899 = vmatpush1.msra.mxu0 0.0
        %900 = vmatprep.subr.mxu0 0.0
        %901 = vmatpush1.msra.mxu0 0.0
        %902 = vmatprep.subr.mxu0 0.0
        %903 = vmatpush1.msra.mxu0 0.0
        %904 = vmatprep.subr.mxu0 0.0
        %905 = vmatpush1.msra.mxu0 0.0
        %906 = vmatprep.subr.mxu0 0.0
        %907 = vmatpush1.msra.mxu0 0.0
        %908 = vmatprep.subr.mxu0 0.0
        %909 = vmatpush1.msra.mxu0 0.0
        %910 = vmatprep.subr.mxu0 0.0
        %911 = vmatpush1.msra.mxu0 0.0
        %912 = vmatprep.subr.mxu0 0.0
        %913 = vmatpush1.msra.mxu0 0.0
        %914 = vmatprep.subr.mxu0 0.0
        %915 = vmatpush1.msra.mxu0 0.0
        %916 = vmatprep.subr.mxu0 0.0
        %917 = vmatpush1.msra.mxu0 0.0
        %918 = vmatprep.subr.mxu0 0.0
        %919 = vmatpush1.msra.mxu0 0.0
        %920 = vmatprep.subr.mxu0 0.0
        %921 = vmatpush1.msra.mxu0 0.0
        %922 = vmatprep.subr.mxu0 0.0
        %923 = vmatpush1.msra.mxu0 0.0
        %924 = vmatprep.subr.mxu0 0.0
        %925 = vmatpush1.msra.mxu0 0.0
        %926 = vmatprep.subr.mxu0 0.0
        %927 = vmatpush1.msra.mxu0 0.0
        %928 = vmatprep.subr.mxu0 0.0
        %929 = vmatpush1.msra.mxu0 0.0
        %930 = vmatprep.subr.mxu0 0.0
        %931 = vmatpush1.msra.mxu0 0.0
        %932 = vmatprep.subr.mxu0 0.0
        %933 = vmatpush1.msra.mxu0 0.0
        %934 = vmatprep.mubr.f32.mxu0 0.0
        %935 = vmatmul.mubr.f32.gmra.mrb[0].mxu0 %v709
        %v936 = vpop.f32.mrb[0].mxu0
        %v937 = vadd.f32 0.0, %v936
        %v938 = vpop.f32.mrb[0].mxu0
        %v939 = vadd.f32 0.0, %v938
        %940 = vdwg.mxu0
        %941 = vmatprep.subr.mxu0 %v726
        %942 = vmatpush1.msra.mxu0 %v724
        %943 = vmatprep.subr.mxu0 0.0
        %944 = vmatpush1.msra.mxu0 0.0
        %945 = vmatprep.subr.mxu0 0.0
        %946 = vmatpush1.msra.mxu0 0.0
        %947 = vmatprep.subr.mxu0 0.0
        %948 = vmatpush1.msra.mxu0 0.0
        %949 = vmatprep.subr.mxu0 0.0
        %950 = vmatpush1.msra.mxu0 0.0
        %951 = vmatprep.subr.mxu0 0.0
        %952 = vmatpush1.msra.mxu0 0.0
        %953 = vmatprep.subr.mxu0 0.0
        %954 = vmatpush1.msra.mxu0 0.0
        %955 = vmatprep.subr.mxu0 0.0
        %956 = vmatpush1.msra.mxu0 0.0
        %957 = vmatprep.subr.mxu0 0.0
        %958 = vmatpush1.msra.mxu0 0.0
        %959 = vmatprep.subr.mxu0 0.0
        %960 = vmatpush1.msra.mxu0 0.0
        %961 = vmatprep.subr.mxu0 0.0
        %962 = vmatpush1.msra.mxu0 0.0
        %963 = vmatprep.subr.mxu0 0.0
        %964 = vmatpush1.msra.mxu0 0.0
        %965 = vmatprep.subr.mxu0 0.0
        %966 = vmatpush1.msra.mxu0 0.0
        %967 = vmatprep.subr.mxu0 0.0
        %968 = vmatpush1.msra.mxu0 0.0
        %969 = vmatprep.subr.mxu0 0.0
        %970 = vmatpush1.msra.mxu0 0.0
        %971 = vmatprep.subr.mxu0 0.0
        %972 = vmatpush1.msra.mxu0 0.0
        %973 = vmatprep.subr.mxu0 0.0
        %974 = vmatpush1.msra.mxu0 0.0
        %975 = vmatprep.subr.mxu0 0.0
        %976 = vmatpush1.msra.mxu0 0.0
        %977 = vmatprep.subr.mxu0 0.0
        %978 = vmatpush1.msra.mxu0 0.0
        %979 = vmatprep.subr.mxu0 0.0
        %980 = vmatpush1.msra.mxu0 0.0
        %981 = vmatprep.subr.mxu0 0.0
        %982 = vmatpush1.msra.mxu0 0.0
        %983 = vmatprep.subr.mxu0 0.0
        %984 = vmatpush1.msra.mxu0 0.0
        %985 = vmatprep.subr.mxu0 0.0
        %986 = vmatpush1.msra.mxu0 0.0
        %987 = vmatprep.subr.mxu0 0.0
        %988 = vmatpush1.msra.mxu0 0.0
        %989 = vmatprep.subr.mxu0 0.0
        %990 = vmatpush1.msra.mxu0 0.0
        %991 = vmatprep.subr.mxu0 0.0
        %992 = vmatpush1.msra.mxu0 0.0
        %993 = vmatprep.subr.mxu0 0.0
        %994 = vmatpush1.msra.mxu0 0.0
        %995 = vmatprep.subr.mxu0 0.0
        %996 = vmatpush1.msra.mxu0 0.0
        %997 = vmatprep.subr.mxu0 0.0
        %998 = vmatpush1.msra.mxu0 0.0
        %999 = vmatprep.subr.mxu0 0.0
        %1000 = vmatpush1.msra.mxu0 0.0
        %1001 = vmatprep.subr.mxu0 0.0
        %1002 = vmatpush1.msra.mxu0 0.0
        %1003 = vmatprep.subr.mxu0 0.0
        %1004 = vmatpush1.msra.mxu0 0.0
        %1005 = vmatprep.mubr.f32.mxu0 0.0
        %1006 = vmatmul.mubr.f32.gmra.mrb[0].mxu0 %v709
        %v1007 = vpop.f32.mrb[0].mxu0
        %v1008 = vadd.f32 0.0, %v1007
        %v1009 = vpop.f32.mrb[0].mxu0
        %v1010 = vadd.f32 0.0, %v1009
        %1011 = vdwg.mxu0
        %1021 = vrot.lane.b32.xlu0 %v538, 33
        %v1022 = vpop.permute.xlu0 %1021
        %1023 = vrot.lane.b32.xlu0 %v539, 33
        %v1024 = vpop.permute.xlu0 %1023
        %1025 = vrot.lane.b32.xlu0 %v540, 33
        %v1026 = vpop.permute.xlu0 %1025
        %1027 = vrot.lane.b32.xlu0 %v541, 33
        %v1028 = vpop.permute.xlu0 %1027
        %1029 = vrot.lane.b32.xlu0 %v542, 33
        %v1030 = vpop.permute.xlu0 %1029
        %1031 = vrot.lane.b32.xlu0 %v543, 33
        %v1032 = vpop.permute.xlu0 %1031
        %1033 = vrot.lane.b32.xlu0 %v544, 33
        %v1034 = vpop.permute.xlu0 %1033
        %1035 = vrot.lane.b32.xlu0 %v545, 33
        %v1036 = vpop.permute.xlu0 %1035
        %1037 = vrot.lane.b32.xlu0 %v546, 33
        %v1038 = vpop.permute.xlu0 %1037
        %vm1039 = vcmask 269312
        %v1040 = vsel %vm1039, %v1022, %v1024
        %v1041 = vsel %vm1039, %v1024, %v1026
        %v1042 = vsel %vm1039, %v1026, %v1028
        %v1043 = vsel %vm1039, %v1028, %v1030
        %v1044 = vsel %vm1039, %v1030, %v1032
        %v1045 = vsel %vm1039, %v1032, %v1034
        %v1046 = vsel %vm1039, %v1034, %v1036
        %v1047 = vsel %vm1039, %v1036, %v1038
        %v1048 = vsel %vm708, %v403, 0
        %v1050 = vsel %vm711, %v1040, 0
        %v1052 = vsel %vm711, %v1041, 0
        %v1054 = vsel %vm711, %v1042, 0
        %v1056 = vsel %vm711, %v1043, 0
        %v1058 = vsel %vm711, %v1044, 0
        %v1060 = vsel %vm711, %v1045, 0
        %v1062 = vsel %vm711, %v1046, 0
        %v1064 = vsel %vm711, %v1047, 0
        %1066 = vmatprep.subr.mxu0 %v1052
        %1067 = vmatpush1.msra.mxu0 %v1050
        %1068 = vmatprep.subr.mxu0 0.0
        %1069 = vmatpush1.msra.mxu0 0.0
        %1070 = vmatprep.subr.mxu0 0.0
        %1071 = vmatpush1.msra.mxu0 0.0
        %1072 = vmatprep.subr.mxu0 0.0
        %1073 = vmatpush1.msra.mxu0 0.0
        %1074 = vmatprep.subr.mxu0 0.0
        %1075 = vmatpush1.msra.mxu0 0.0
        %1076 = vmatprep.subr.mxu0 0.0
        %1077 = vmatpush1.msra.mxu0 0.0
        %1078 = vmatprep.subr.mxu0 0.0
        %1079 = vmatpush1.msra.mxu0 0.0
        %1080 = vmatprep.subr.mxu0 0.0
        %1081 = vmatpush1.msra.mxu0 0.0
        %1082 = vmatprep.subr.mxu0 0.0
        %1083 = vmatpush1.msra.mxu0 0.0
        %1084 = vmatprep.subr.mxu0 0.0
        %1085 = vmatpush1.msra.mxu0 0.0
        %1086 = vmatprep.subr.mxu0 0.0
        %1087 = vmatpush1.msra.mxu0 0.0
        %1088 = vmatprep.subr.mxu0 0.0
        %1089 = vmatpush1.msra.mxu0 0.0
        %1090 = vmatprep.subr.mxu0 0.0
        %1091 = vmatpush1.msra.mxu0 0.0
        %1092 = vmatprep.subr.mxu0 0.0
        %1093 = vmatpush1.msra.mxu0 0.0
        %1094 = vmatprep.subr.mxu0 0.0
        %1095 = vmatpush1.msra.mxu0 0.0
        %1096 = vmatprep.subr.mxu0 0.0
        %1097 = vmatpush1.msra.mxu0 0.0
        %1098 = vmatprep.subr.mxu0 0.0
        %1099 = vmatpush1.msra.mxu0 0.0
        %1100 = vmatprep.subr.mxu0 0.0
        %1101 = vmatpush1.msra.mxu0 0.0
        %1102 = vmatprep.subr.mxu0 0.0
        %1103 = vmatpush1.msra.mxu0 0.0
        %1104 = vmatprep.subr.mxu0 0.0
        %1105 = vmatpush1.msra.mxu0 0.0
        %1106 = vmatprep.subr.mxu0 0.0
        %1107 = vmatpush1.msra.mxu0 0.0
        %1108 = vmatprep.subr.mxu0 0.0
        %1109 = vmatpush1.msra.mxu0 0.0
        %1110 = vmatprep.subr.mxu0 0.0
        %1111 = vmatpush1.msra.mxu0 0.0
        %1112 = vmatprep.subr.mxu0 0.0
        %1113 = vmatpush1.msra.mxu0 0.0
        %1114 = vmatprep.subr.mxu0 0.0
        %1115 = vmatpush1.msra.mxu0 0.0
        %1116 = vmatprep.subr.mxu0 0.0
        %1117 = vmatpush1.msra.mxu0 0.0
        %1118 = vmatprep.subr.mxu0 0.0
        %1119 = vmatpush1.msra.mxu0 0.0
        %1120 = vmatprep.subr.mxu0 0.0
        %1121 = vmatpush1.msra.mxu0 0.0
        %1122 = vmatprep.subr.mxu0 0.0
        %1123 = vmatpush1.msra.mxu0 0.0
        %1124 = vmatprep.subr.mxu0 0.0
        %1125 = vmatpush1.msra.mxu0 0.0
        %1126 = vmatprep.subr.mxu0 0.0
        %1127 = vmatpush1.msra.mxu0 0.0
        %1128 = vmatprep.subr.mxu0 0.0
        %1129 = vmatpush1.msra.mxu0 0.0
        %1130 = vmatprep.mubr.f32.mxu0 0.0
        %1131 = vmatmul.mubr.f32.gmra.mrb[0].mxu0 %v1048
        %v1132 = vpop.f32.mrb[0].mxu0
        %v1133 = vadd.f32 %v795, %v1132
        %v1134 = vpop.f32.mrb[0].mxu0
        %v1135 = vadd.f32 %v797, %v1134
        %1136 = vdwg.mxu0
        %1137 = vmatprep.subr.mxu0 %v1056
        %1138 = vmatpush1.msra.mxu0 %v1054
        %1139 = vmatprep.subr.mxu0 0.0
        %1140 = vmatpush1.msra.mxu0 0.0
        %1141 = vmatprep.subr.mxu0 0.0
        %1142 = vmatpush1.msra.mxu0 0.0
        %1143 = vmatprep.subr.mxu0 0.0
        %1144 = vmatpush1.msra.mxu0 0.0
        %1145 = vmatprep.subr.mxu0 0.0
        %1146 = vmatpush1.msra.mxu0 0.0
        %1147 = vmatprep.subr.mxu0 0.0
        %1148 = vmatpush1.msra.mxu0 0.0
        %1149 = vmatprep.subr.mxu0 0.0
        %1150 = vmatpush1.msra.mxu0 0.0
        %1151 = vmatprep.subr.mxu0 0.0
        %1152 = vmatpush1.msra.mxu0 0.0
        %1153 = vmatprep.subr.mxu0 0.0
        %1154 = vmatpush1.msra.mxu0 0.0
        %1155 = vmatprep.subr.mxu0 0.0
        %1156 = vmatpush1.msra.mxu0 0.0
        %1157 = vmatprep.subr.mxu0 0.0
        %1158 = vmatpush1.msra.mxu0 0.0
        %1159 = vmatprep.subr.mxu0 0.0
        %1160 = vmatpush1.msra.mxu0 0.0
        %1161 = vmatprep.subr.mxu0 0.0
        %1162 = vmatpush1.msra.mxu0 0.0
        %1163 = vmatprep.subr.mxu0 0.0
        %1164 = vmatpush1.msra.mxu0 0.0
        %1165 = vmatprep.subr.mxu0 0.0
        %1166 = vmatpush1.msra.mxu0 0.0
        %1167 = vmatprep.subr.mxu0 0.0
        %1168 = vmatpush1.msra.mxu0 0.0
        %1169 = vmatprep.subr.mxu0 0.0
        %1170 = vmatpush1.msra.mxu0 0.0
        %1171 = vmatprep.subr.mxu0 0.0
        %1172 = vmatpush1.msra.mxu0 0.0
        %1173 = vmatprep.subr.mxu0 0.0
        %1174 = vmatpush1.msra.mxu0 0.0
        %1175 = vmatprep.subr.mxu0 0.0
        %1176 = vmatpush1.msra.mxu0 0.0
        %1177 = vmatprep.subr.mxu0 0.0
        %1178 = vmatpush1.msra.mxu0 0.0
        %1179 = vmatprep.subr.mxu0 0.0
        %1180 = vmatpush1.msra.mxu0 0.0
        %1181 = vmatprep.subr.mxu0 0.0
        %1182 = vmatpush1.msra.mxu0 0.0
        %1183 = vmatprep.subr.mxu0 0.0
        %1184 = vmatpush1.msra.mxu0 0.0
        %1185 = vmatprep.subr.mxu0 0.0
        %1186 = vmatpush1.msra.mxu0 0.0
        %1187 = vmatprep.subr.mxu0 0.0
        %1188 = vmatpush1.msra.mxu0 0.0
        %1189 = vmatprep.subr.mxu0 0.0
        %1190 = vmatpush1.msra.mxu0 0.0
        %1191 = vmatprep.subr.mxu0 0.0
        %1192 = vmatpush1.msra.mxu0 0.0
        %1193 = vmatprep.subr.mxu0 0.0
        %1194 = vmatpush1.msra.mxu0 0.0
        %1195 = vmatprep.subr.mxu0 0.0
        %1196 = vmatpush1.msra.mxu0 0.0
        %1197 = vmatprep.subr.mxu0 0.0
        %1198 = vmatpush1.msra.mxu0 0.0
        %1199 = vmatprep.subr.mxu0 0.0
        %1200 = vmatpush1.msra.mxu0 0.0
        %1201 = vmatprep.mubr.f32.mxu0 0.0
        %1202 = vmatmul.mubr.f32.gmra.mrb[0].mxu0 %v1048
        %v1203 = vpop.f32.mrb[0].mxu0
        %v1204 = vadd.f32 %v866, %v1203
        %v1205 = vpop.f32.mrb[0].mxu0
        %v1206 = vadd.f32 %v868, %v1205
        %1207 = vdwg.mxu0
        %1208 = vmatprep.subr.mxu0 %v1060
        %1209 = vmatpush1.msra.mxu0 %v1058
        %1210 = vmatprep.subr.mxu0 0.0
        %1211 = vmatpush1.msra.mxu0 0.0
        %1212 = vmatprep.subr.mxu0 0.0
        %1213 = vmatpush1.msra.mxu0 0.0
        %1214 = vmatprep.subr.mxu0 0.0
        %1215 = vmatpush1.msra.mxu0 0.0
        %1216 = vmatprep.subr.mxu0 0.0
        %1217 = vmatpush1.msra.mxu0 0.0
        %1218 = vmatprep.subr.mxu0 0.0
        %1219 = vmatpush1.msra.mxu0 0.0
        %1220 = vmatprep.subr.mxu0 0.0
        %1221 = vmatpush1.msra.mxu0 0.0
        %1222 = vmatprep.subr.mxu0 0.0
        %1223 = vmatpush1.msra.mxu0 0.0
        %1224 = vmatprep.subr.mxu0 0.0
        %1225 = vmatpush1.msra.mxu0 0.0
        %1226 = vmatprep.subr.mxu0 0.0
        %1227 = vmatpush1.msra.mxu0 0.0
        %1228 = vmatprep.subr.mxu0 0.0
        %1229 = vmatpush1.msra.mxu0 0.0
        %1230 = vmatprep.subr.mxu0 0.0
        %1231 = vmatpush1.msra.mxu0 0.0
        %1232 = vmatprep.subr.mxu0 0.0
        %1233 = vmatpush1.msra.mxu0 0.0
        %1234 = vmatprep.subr.mxu0 0.0
        %1235 = vmatpush1.msra.mxu0 0.0
        %1236 = vmatprep.subr.mxu0 0.0
        %1237 = vmatpush1.msra.mxu0 0.0
        %1238 = vmatprep.subr.mxu0 0.0
        %1239 = vmatpush1.msra.mxu0 0.0
        %1240 = vmatprep.subr.mxu0 0.0
        %1241 = vmatpush1.msra.mxu0 0.0
        %1242 = vmatprep.subr.mxu0 0.0
        %1243 = vmatpush1.msra.mxu0 0.0
        %1244 = vmatprep.subr.mxu0 0.0
        %1245 = vmatpush1.msra.mxu0 0.0
        %1246 = vmatprep.subr.mxu0 0.0
        %1247 = vmatpush1.msra.mxu0 0.0
        %1248 = vmatprep.subr.mxu0 0.0
        %1249 = vmatpush1.msra.mxu0 0.0
        %1250 = vmatprep.subr.mxu0 0.0
        %1251 = vmatpush1.msra.mxu0 0.0
        %1252 = vmatprep.subr.mxu0 0.0
        %1253 = vmatpush1.msra.mxu0 0.0
        %1254 = vmatprep.subr.mxu0 0.0
        %1255 = vmatpush1.msra.mxu0 0.0
        %1256 = vmatprep.subr.mxu0 0.0
        %1257 = vmatpush1.msra.mxu0 0.0
        %1258 = vmatprep.subr.mxu0 0.0
        %1259 = vmatpush1.msra.mxu0 0.0
        %1260 = vmatprep.subr.mxu0 0.0
        %1261 = vmatpush1.msra.mxu0 0.0
        %1262 = vmatprep.subr.mxu0 0.0
        %1263 = vmatpush1.msra.mxu0 0.0
        %1264 = vmatprep.subr.mxu0 0.0
        %1265 = vmatpush1.msra.mxu0 0.0
        %1266 = vmatprep.subr.mxu0 0.0
        %1267 = vmatpush1.msra.mxu0 0.0
        %1268 = vmatprep.subr.mxu0 0.0
        %1269 = vmatpush1.msra.mxu0 0.0
        %1270 = vmatprep.subr.mxu0 0.0
        %1271 = vmatpush1.msra.mxu0 0.0
        %1272 = vmatprep.mubr.f32.mxu0 0.0
        %1273 = vmatmul.mubr.f32.gmra.mrb[0].mxu0 %v1048
        %v1274 = vpop.f32.mrb[0].mxu0
        %v1275 = vadd.f32 %v937, %v1274
        %v1276 = vpop.f32.mrb[0].mxu0
        %v1277 = vadd.f32 %v939, %v1276
        %1278 = vdwg.mxu0
        %1279 = vmatprep.subr.mxu0 %v1064
        %1280 = vmatpush1.msra.mxu0 %v1062
        %1281 = vmatprep.subr.mxu0 0.0
        %1282 = vmatpush1.msra.mxu0 0.0
        %1283 = vmatprep.subr.mxu0 0.0
        %1284 = vmatpush1.msra.mxu0 0.0
        %1285 = vmatprep.subr.mxu0 0.0
        %1286 = vmatpush1.msra.mxu0 0.0
        %1287 = vmatprep.subr.mxu0 0.0
        %1288 = vmatpush1.msra.mxu0 0.0
        %1289 = vmatprep.subr.mxu0 0.0
        %1290 = vmatpush1.msra.mxu0 0.0
        %1291 = vmatprep.subr.mxu0 0.0
        %1292 = vmatpush1.msra.mxu0 0.0
        %1293 = vmatprep.subr.mxu0 0.0
        %1294 = vmatpush1.msra.mxu0 0.0
        %1295 = vmatprep.subr.mxu0 0.0
        %1296 = vmatpush1.msra.mxu0 0.0
        %1297 = vmatprep.subr.mxu0 0.0
        %1298 = vmatpush1.msra.mxu0 0.0
        %1299 = vmatprep.subr.mxu0 0.0
        %1300 = vmatpush1.msra.mxu0 0.0
        %1301 = vmatprep.subr.mxu0 0.0
        %1302 = vmatpush1.msra.mxu0 0.0
        %1303 = vmatprep.subr.mxu0 0.0
        %1304 = vmatpush1.msra.mxu0 0.0
        %1305 = vmatprep.subr.mxu0 0.0
        %1306 = vmatpush1.msra.mxu0 0.0
        %1307 = vmatprep.subr.mxu0 0.0
        %1308 = vmatpush1.msra.mxu0 0.0
        %1309 = vmatprep.subr.mxu0 0.0
        %1310 = vmatpush1.msra.mxu0 0.0
        %1311 = vmatprep.subr.mxu0 0.0
        %1312 = vmatpush1.msra.mxu0 0.0
        %1313 = vmatprep.subr.mxu0 0.0
        %1314 = vmatpush1.msra.mxu0 0.0
        %1315 = vmatprep.subr.mxu0 0.0
        %1316 = vmatpush1.msra.mxu0 0.0
        %1317 = vmatprep.subr.mxu0 0.0
        %1318 = vmatpush1.msra.mxu0 0.0
        %1319 = vmatprep.subr.mxu0 0.0
        %1320 = vmatpush1.msra.mxu0 0.0
        %1321 = vmatprep.subr.mxu0 0.0
        %1322 = vmatpush1.msra.mxu0 0.0
        %1323 = vmatprep.subr.mxu0 0.0
        %1324 = vmatpush1.msra.mxu0 0.0
        %1325 = vmatprep.subr.mxu0 0.0
        %1326 = vmatpush1.msra.mxu0 0.0
        %1327 = vmatprep.subr.mxu0 0.0
        %1328 = vmatpush1.msra.mxu0 0.0
        %1329 = vmatprep.subr.mxu0 0.0
        %1330 = vmatpush1.msra.mxu0 0.0
        %1331 = vmatprep.subr.mxu0 0.0
        %1332 = vmatpush1.msra.mxu0 0.0
        %1333 = vmatprep.subr.mxu0 0.0
        %1334 = vmatpush1.msra.mxu0 0.0
        %1335 = vmatprep.subr.mxu0 0.0
        %1336 = vmatpush1.msra.mxu0 0.0
        %1337 = vmatprep.subr.mxu0 0.0
        %1338 = vmatpush1.msra.mxu0 0.0
        %1339 = vmatprep.subr.mxu0 0.0
        %1340 = vmatpush1.msra.mxu0 0.0
        %1341 = vmatprep.subr.mxu0 0.0
        %1342 = vmatpush1.msra.mxu0 0.0
        %1343 = vmatprep.mubr.f32.mxu0 0.0
        %1344 = vmatmul.mubr.f32.gmra.mrb[0].mxu0 %v1048
        %v1345 = vpop.f32.mrb[0].mxu0
        %v1346 = vadd.f32 %v1008, %v1345
        %v1347 = vpop.f32.mrb[0].mxu0
        %v1348 = vadd.f32 %v1010, %v1347
        %1349 = vdwg.mxu0
        %v1350 = vlaneseq
        %v1351 = vshrl.u32 %v1350, 7
        %v1352 = vsub.s32 2, %v1351
        %v1353 = vrot.slane %v405, %v1352
        %v1354 = vlaneseq
        %v1355 = vshrl.u32 %v1354, 7
        %v1356 = vsub.s32 6, %v1355
        %v1357 = vrot.slane %v405, %v1356
        %v1358 = vlaneseq
        %v1359 = vshrl.u32 %v1358, 7
        %v1360 = vsub.s32 2, %v1359
        %v1361 = vrot.slane %v406, %v1360
        %v1362 = vlaneseq
        %v1363 = vshrl.u32 %v1362, 7
        %v1364 = vsub.s32 6, %v1363
        %v1365 = vrot.slane %v406, %v1364
        %v1366 = vlaneseq
        %v1367 = vshrl.u32 %v1366, 7
        %v1368 = vsub.s32 2, %v1367
        %v1369 = vrot.slane %v407, %v1368
        %v1370 = vlaneseq
        %v1371 = vshrl.u32 %v1370, 7
        %v1372 = vsub.s32 6, %v1371
        %v1373 = vrot.slane %v407, %v1372
        %v1374 = vlaneseq
        %v1375 = vshrl.u32 %v1374, 7
        %v1376 = vsub.s32 2, %v1375
        %v1377 = vrot.slane %v408, %v1376
        %v1378 = vlaneseq
        %v1379 = vshrl.u32 %v1378, 7
        %v1380 = vsub.s32 6, %v1379
        %v1381 = vrot.slane %v408, %v1380
        %v1390 = vlaneseq
        %v1391 = vshrl.u32 %v1390, 7
        %v1392 = vsub.s32 2, %v1391
        %v1393 = vrot.slane %v1353, %v1392
        %v1394 = vlaneseq
        %v1395 = vshrl.u32 %v1394, 7
        %v1396 = vsub.s32 2, %v1395
        %v1397 = vrot.slane %v1357, %v1396
        %v1398 = vlaneseq
        %v1399 = vshrl.u32 %v1398, 7
        %v1400 = vsub.s32 2, %v1399
        %v1401 = vrot.slane %v1361, %v1400
        %v1402 = vlaneseq
        %v1403 = vshrl.u32 %v1402, 7
        %v1404 = vsub.s32 2, %v1403
        %v1405 = vrot.slane %v1365, %v1404
        %v1406 = vlaneseq
        %v1407 = vshrl.u32 %v1406, 7
        %v1408 = vsub.s32 2, %v1407
        %v1409 = vrot.slane %v1369, %v1408
        %v1410 = vlaneseq
        %v1411 = vshrl.u32 %v1410, 7
        %v1412 = vsub.s32 2, %v1411
        %v1413 = vrot.slane %v1373, %v1412
        %v1414 = vlaneseq
        %v1415 = vshrl.u32 %v1414, 7
        %v1416 = vsub.s32 2, %v1415
        %v1417 = vrot.slane %v1377, %v1416
        %v1418 = vlaneseq
        %v1419 = vshrl.u32 %v1418, 7
        %v1420 = vsub.s32 2, %v1419
        %v1421 = vrot.slane %v1381, %v1420
        %1430 = vrot.lane.b32.xlu0 %v1393, 97
        %v1431 = vpop.permute.xlu0 %1430
        %1432 = vrot.lane.b32.xlu0 %v1397, 97
        %v1433 = vpop.permute.xlu0 %1432
        %1434 = vrot.lane.b32.xlu0 %v1401, 97
        %v1435 = vpop.permute.xlu0 %1434
        %1436 = vrot.lane.b32.xlu0 %v1405, 97
        %v1437 = vpop.permute.xlu0 %1436
        %1438 = vrot.lane.b32.xlu0 %v1409, 97
        %v1439 = vpop.permute.xlu0 %1438
        %1440 = vrot.lane.b32.xlu0 %v1413, 97
        %v1441 = vpop.permute.xlu0 %1440
        %1442 = vrot.lane.b32.xlu0 %v1417, 97
        %v1443 = vpop.permute.xlu0 %1442
        %1444 = vrot.lane.b32.xlu0 %v1421, 97
        %v1445 = vpop.permute.xlu0 %1444
        %vm1446 = vcmask 793600
        %v1447 = vsel %vm1446, %v1431, %v1433
        %v1448 = vsel %vm1446, %v1433, %v1435
        %v1449 = vsel %vm1446, %v1435, %v1437
        %v1450 = vsel %vm1446, %v1437, %v1439
        %v1451 = vsel %vm1446, %v1439, %v1441
        %v1452 = vsel %vm1446, %v1441, %v1443
        %v1453 = vsel %vm1446, %v1443, %v1445
        %v1463 = vmul.f32 %v1431, 0.0
        %v1464 = vmul.f32 %v399, %v1447
        %v1465 = vmul.f32 %v413, %v1448
        %v1466 = vmul.f32 %v400, %v1449
        %v1467 = vmul.f32 %v414, %v1450
        %v1468 = vmul.f32 %v401, %v1451
        %v1469 = vmul.f32 %v415, %v1452
        %v1470 = vmul.f32 %v402, %v1453
        %v1471 = vmul.f32 %v416, %v1445
        %1472 = vrot.lane.b32.xlu0 %v403, 122
        %v1473 = vpop.permute.xlu0 %1472
        %1483 = vrot.lane.b32.xlu0 %v1463, 31
        %v1484 = vpop.permute.xlu0 %1483
        %1485 = vrot.lane.b32.xlu0 %v1464, 31
        %v1486 = vpop.permute.xlu0 %1485
        %1487 = vrot.lane.b32.xlu0 %v1465, 31
        %v1488 = vpop.permute.xlu0 %1487
        %1489 = vrot.lane.b32.xlu0 %v1466, 31
        %v1490 = vpop.permute.xlu0 %1489
        %1491 = vrot.lane.b32.xlu0 %v1467, 31
        %v1492 = vpop.permute.xlu0 %1491
        %1493 = vrot.lane.b32.xlu0 %v1468, 31
        %v1494 = vpop.permute.xlu0 %1493
        %1495 = vrot.lane.b32.xlu0 %v1469, 31
        %v1496 = vpop.permute.xlu0 %1495
        %1497 = vrot.lane.b32.xlu0 %v1470, 31
        %v1498 = vpop.permute.xlu0 %1497
        %1499 = vrot.lane.b32.xlu0 %v1471, 31
        %v1500 = vpop.permute.xlu0 %1499
        %vm1501 = vcmask 252928
        %v1502 = vsel %vm1501, %v1484, %v1486
        %v1503 = vsel %vm1501, %v1486, %v1488
        %v1504 = vsel %vm1501, %v1488, %v1490
        %v1505 = vsel %vm1501, %v1490, %v1492
        %v1506 = vsel %vm1501, %v1492, %v1494
        %v1507 = vsel %vm1501, %v1494, %v1496
        %v1508 = vsel %vm1501, %v1496, %v1498
        %v1509 = vsel %vm1501, %v1498, %v1500
        %v1510 = vsel %vm708, %v1473, 0
        %v1512 = vsel %vm711, %v1502, 0
        %v1514 = vsel %vm711, %v1503, 0
        %v1516 = vsel %vm711, %v1504, 0
        %v1518 = vsel %vm711, %v1505, 0
        %v1520 = vsel %vm711, %v1506, 0
        %v1522 = vsel %vm711, %v1507, 0
        %v1524 = vsel %vm711, %v1508, 0
        %v1526 = vsel %vm711, %v1509, 0
        %1528 = vmatprep.subr.mxu0 %v1514
        %1529 = vmatpush1.msra.mxu0 %v1512
        %1530 = vmatprep.subr.mxu0 0.0
        %1531 = vmatpush1.msra.mxu0 0.0
        %1532 = vmatprep.subr.mxu0 0.0
        %1533 = vmatpush1.msra.mxu0 0.0
        %1534 = vmatprep.subr.mxu0 0.0
        %1535 = vmatpush1.msra.mxu0 0.0
        %1536 = vmatprep.subr.mxu0 0.0
        %1537 = vmatpush1.msra.mxu0 0.0
        %1538 = vmatprep.subr.mxu0 0.0
        %1539 = vmatpush1.msra.mxu0 0.0
        %1540 = vmatprep.subr.mxu0 0.0
        %1541 = vmatpush1.msra.mxu0 0.0
        %1542 = vmatprep.subr.mxu0 0.0
        %1543 = vmatpush1.msra.mxu0 0.0
        %1544 = vmatprep.subr.mxu0 0.0
        %1545 = vmatpush1.msra.mxu0 0.0
        %1546 = vmatprep.subr.mxu0 0.0
        %1547 = vmatpush1.msra.mxu0 0.0
        %1548 = vmatprep.subr.mxu0 0.0
        %1549 = vmatpush1.msra.mxu0 0.0
        %1550 = vmatprep.subr.mxu0 0.0
        %1551 = vmatpush1.msra.mxu0 0.0
        %1552 = vmatprep.subr.mxu0 0.0
        %1553 = vmatpush1.msra.mxu0 0.0
        %1554 = vmatprep.subr.mxu0 0.0
        %1555 = vmatpush1.msra.mxu0 0.0
        %1556 = vmatprep.subr.mxu0 0.0
        %1557 = vmatpush1.msra.mxu0 0.0
        %1558 = vmatprep.subr.mxu0 0.0
        %1559 = vmatpush1.msra.mxu0 0.0
        %1560 = vmatprep.subr.mxu0 0.0
        %1561 = vmatpush1.msra.mxu0 0.0
        %1562 = vmatprep.subr.mxu0 0.0
        %1563 = vmatpush1.msra.mxu0 0.0
        %1564 = vmatprep.subr.mxu0 0.0
        %1565 = vmatpush1.msra.mxu0 0.0
        %1566 = vmatprep.subr.mxu0 0.0
        %1567 = vmatpush1.msra.mxu0 0.0
        %1568 = vmatprep.subr.mxu0 0.0
        %1569 = vmatpush1.msra.mxu0 0.0
        %1570 = vmatprep.subr.mxu0 0.0
        %1571 = vmatpush1.msra.mxu0 0.0
        %1572 = vmatprep.subr.mxu0 0.0
        %1573 = vmatpush1.msra.mxu0 0.0
        %1574 = vmatprep.subr.mxu0 0.0
        %1575 = vmatpush1.msra.mxu0 0.0
        %1576 = vmatprep.subr.mxu0 0.0
        %1577 = vmatpush1.msra.mxu0 0.0
        %1578 = vmatprep.subr.mxu0 0.0
        %1579 = vmatpush1.msra.mxu0 0.0
        %1580 = vmatprep.subr.mxu0 0.0
        %1581 = vmatpush1.msra.mxu0 0.0
        %1582 = vmatprep.subr.mxu0 0.0
        %1583 = vmatpush1.msra.mxu0 0.0
        %1584 = vmatprep.subr.mxu0 0.0
        %1585 = vmatpush1.msra.mxu0 0.0
        %1586 = vmatprep.subr.mxu0 0.0
        %1587 = vmatpush1.msra.mxu0 0.0
        %1588 = vmatprep.subr.mxu0 0.0
        %1589 = vmatpush1.msra.mxu0 0.0
        %1590 = vmatprep.subr.mxu0 0.0
        %1591 = vmatpush1.msra.mxu0 0.0
        %1592 = vmatprep.mubr.f32.mxu0 0.0
        %1593 = vmatmul.mubr.f32.gmra.mrb[0].mxu0 %v1510
        %v1594 = vpop.f32.mrb[0].mxu0
        %v1595 = vadd.f32 0.0, %v1594
        %v1596 = vpop.f32.mrb[0].mxu0
        %v1597 = vadd.f32 0.0, %v1596
        %1598 = vdwg.mxu0
        %1599 = vmatprep.subr.mxu0 %v1518
        %1600 = vmatpush1.msra.mxu0 %v1516
        %1601 = vmatprep.subr.mxu0 0.0
        %1602 = vmatpush1.msra.mxu0 0.0
        %1603 = vmatprep.subr.mxu0 0.0
        %1604 = vmatpush1.msra.mxu0 0.0
        %1605 = vmatprep.subr.mxu0 0.0
        %1606 = vmatpush1.msra.mxu0 0.0
        %1607 = vmatprep.subr.mxu0 0.0
        %1608 = vmatpush1.msra.mxu0 0.0
        %1609 = vmatprep.subr.mxu0 0.0
        %1610 = vmatpush1.msra.mxu0 0.0
        %1611 = vmatprep.subr.mxu0 0.0
        %1612 = vmatpush1.msra.mxu0 0.0
        %1613 = vmatprep.subr.mxu0 0.0
        %1614 = vmatpush1.msra.mxu0 0.0
        %1615 = vmatprep.subr.mxu0 0.0
        %1616 = vmatpush1.msra.mxu0 0.0
        %1617 = vmatprep.subr.mxu0 0.0
        %1618 = vmatpush1.msra.mxu0 0.0
        %1619 = vmatprep.subr.mxu0 0.0
        %1620 = vmatpush1.msra.mxu0 0.0
        %1621 = vmatprep.subr.mxu0 0.0
        %1622 = vmatpush1.msra.mxu0 0.0
        %1623 = vmatprep.subr.mxu0 0.0
        %1624 = vmatpush1.msra.mxu0 0.0
        %1625 = vmatprep.subr.mxu0 0.0
        %1626 = vmatpush1.msra.mxu0 0.0
        %1627 = vmatprep.subr.mxu0 0.0
        %1628 = vmatpush1.msra.mxu0 0.0
        %1629 = vmatprep.subr.mxu0 0.0
        %1630 = vmatpush1.msra.mxu0 0.0
        %1631 = vmatprep.subr.mxu0 0.0
        %1632 = vmatpush1.msra.mxu0 0.0
        %1633 = vmatprep.subr.mxu0 0.0
        %1634 = vmatpush1.msra.mxu0 0.0
        %1635 = vmatprep.subr.mxu0 0.0
        %1636 = vmatpush1.msra.mxu0 0.0
        %1637 = vmatprep.subr.mxu0 0.0
        %1638 = vmatpush1.msra.mxu0 0.0
        %1639 = vmatprep.subr.mxu0 0.0
        %1640 = vmatpush1.msra.mxu0 0.0
        %1641 = vmatprep.subr.mxu0 0.0
        %1642 = vmatpush1.msra.mxu0 0.0
        %1643 = vmatprep.subr.mxu0 0.0
        %1644 = vmatpush1.msra.mxu0 0.0
        %1645 = vmatprep.subr.mxu0 0.0
        %1646 = vmatpush1.msra.mxu0 0.0
        %1647 = vmatprep.subr.mxu0 0.0
        %1648 = vmatpush1.msra.mxu0 0.0
        %1649 = vmatprep.subr.mxu0 0.0
        %1650 = vmatpush1.msra.mxu0 0.0
        %1651 = vmatprep.subr.mxu0 0.0
        %1652 = vmatpush1.msra.mxu0 0.0
        %1653 = vmatprep.subr.mxu0 0.0
        %1654 = vmatpush1.msra.mxu0 0.0
        %1655 = vmatprep.subr.mxu0 0.0
        %1656 = vmatpush1.msra.mxu0 0.0
        %1657 = vmatprep.subr.mxu0 0.0
        %1658 = vmatpush1.msra.mxu0 0.0
        %1659 = vmatprep.subr.mxu0 0.0
        %1660 = vmatpush1.msra.mxu0 0.0
        %1661 = vmatprep.subr.mxu0 0.0
        %1662 = vmatpush1.msra.mxu0 0.0
        %1663 = vmatprep.mubr.f32.mxu0 0.0
        %1664 = vmatmul.mubr.f32.gmra.mrb[0].mxu0 %v1510
        %v1665 = vpop.f32.mrb[0].mxu0
        %v1666 = vadd.f32 0.0, %v1665
        %v1667 = vpop.f32.mrb[0].mxu0
        %v1668 = vadd.f32 0.0, %v1667
        %1669 = vdwg.mxu0
        %1670 = vmatprep.subr.mxu0 %v1522
        %1671 = vmatpush1.msra.mxu0 %v1520
        %1672 = vmatprep.subr.mxu0 0.0
        %1673 = vmatpush1.msra.mxu0 0.0
        %1674 = vmatprep.subr.mxu0 0.0
        %1675 = vmatpush1.msra.mxu0 0.0
        %1676 = vmatprep.subr.mxu0 0.0
        %1677 = vmatpush1.msra.mxu0 0.0
        %1678 = vmatprep.subr.mxu0 0.0
        %1679 = vmatpush1.msra.mxu0 0.0
        %1680 = vmatprep.subr.mxu0 0.0
        %1681 = vmatpush1.msra.mxu0 0.0
        %1682 = vmatprep.subr.mxu0 0.0
        %1683 = vmatpush1.msra.mxu0 0.0
        %1684 = vmatprep.subr.mxu0 0.0
        %1685 = vmatpush1.msra.mxu0 0.0
        %1686 = vmatprep.subr.mxu0 0.0
        %1687 = vmatpush1.msra.mxu0 0.0
        %1688 = vmatprep.subr.mxu0 0.0
        %1689 = vmatpush1.msra.mxu0 0.0
        %1690 = vmatprep.subr.mxu0 0.0
        %1691 = vmatpush1.msra.mxu0 0.0
        %1692 = vmatprep.subr.mxu0 0.0
        %1693 = vmatpush1.msra.mxu0 0.0
        %1694 = vmatprep.subr.mxu0 0.0
        %1695 = vmatpush1.msra.mxu0 0.0
        %1696 = vmatprep.subr.mxu0 0.0
        %1697 = vmatpush1.msra.mxu0 0.0
        %1698 = vmatprep.subr.mxu0 0.0
        %1699 = vmatpush1.msra.mxu0 0.0
        %1700 = vmatprep.subr.mxu0 0.0
        %1701 = vmatpush1.msra.mxu0 0.0
        %1702 = vmatprep.subr.mxu0 0.0
        %1703 = vmatpush1.msra.mxu0 0.0
        %1704 = vmatprep.subr.mxu0 0.0
        %1705 = vmatpush1.msra.mxu0 0.0
        %1706 = vmatprep.subr.mxu0 0.0
        %1707 = vmatpush1.msra.mxu0 0.0
        %1708 = vmatprep.subr.mxu0 0.0
        %1709 = vmatpush1.msra.mxu0 0.0
        %1710 = vmatprep.subr.mxu0 0.0
        %1711 = vmatpush1.msra.mxu0 0.0
        %1712 = vmatprep.subr.mxu0 0.0
        %1713 = vmatpush1.msra.mxu0 0.0
        %1714 = vmatprep.subr.mxu0 0.0
        %1715 = vmatpush1.msra.mxu0 0.0
        %1716 = vmatprep.subr.mxu0 0.0
        %1717 = vmatpush1.msra.mxu0 0.0
        %1718 = vmatprep.subr.mxu0 0.0
        %1719 = vmatpush1.msra.mxu0 0.0
        %1720 = vmatprep.subr.mxu0 0.0
        %1721 = vmatpush1.msra.mxu0 0.0
        %1722 = vmatprep.subr.mxu0 0.0
        %1723 = vmatpush1.msra.mxu0 0.0
        %1724 = vmatprep.subr.mxu0 0.0
        %1725 = vmatpush1.msra.mxu0 0.0
        %1726 = vmatprep.subr.mxu0 0.0
        %1727 = vmatpush1.msra.mxu0 0.0
        %1728 = vmatprep.subr.mxu0 0.0
        %1729 = vmatpush1.msra.mxu0 0.0
        %1730 = vmatprep.subr.mxu0 0.0
        %1731 = vmatpush1.msra.mxu0 0.0
        %1732 = vmatprep.subr.mxu0 0.0
        %1733 = vmatpush1.msra.mxu0 0.0
        %1734 = vmatprep.mubr.f32.mxu0 0.0
        %1735 = vmatmul.mubr.f32.gmra.mrb[0].mxu0 %v1510
        %v1736 = vpop.f32.mrb[0].mxu0
        %v1737 = vadd.f32 0.0, %v1736
        %v1738 = vpop.f32.mrb[0].mxu0
        %v1739 = vadd.f32 0.0, %v1738
        %1740 = vdwg.mxu0
        %1741 = vmatprep.subr.mxu0 %v1526
        %1742 = vmatpush1.msra.mxu0 %v1524
        %1743 = vmatprep.subr.mxu0 0.0
        %1744 = vmatpush1.msra.mxu0 0.0
        %1745 = vmatprep.subr.mxu0 0.0
        %1746 = vmatpush1.msra.mxu0 0.0
        %1747 = vmatprep.subr.mxu0 0.0
        %1748 = vmatpush1.msra.mxu0 0.0
        %1749 = vmatprep.subr.mxu0 0.0
        %1750 = vmatpush1.msra.mxu0 0.0
        %1751 = vmatprep.subr.mxu0 0.0
        %1752 = vmatpush1.msra.mxu0 0.0
        %1753 = vmatprep.subr.mxu0 0.0
        %1754 = vmatpush1.msra.mxu0 0.0
        %1755 = vmatprep.subr.mxu0 0.0
        %1756 = vmatpush1.msra.mxu0 0.0
        %1757 = vmatprep.subr.mxu0 0.0
        %1758 = vmatpush1.msra.mxu0 0.0
        %1759 = vmatprep.subr.mxu0 0.0
        %1760 = vmatpush1.msra.mxu0 0.0
        %1761 = vmatprep.subr.mxu0 0.0
        %1762 = vmatpush1.msra.mxu0 0.0
        %1763 = vmatprep.subr.mxu0 0.0
        %1764 = vmatpush1.msra.mxu0 0.0
        %1765 = vmatprep.subr.mxu0 0.0
        %1766 = vmatpush1.msra.mxu0 0.0
        %1767 = vmatprep.subr.mxu0 0.0
        %1768 = vmatpush1.msra.mxu0 0.0
        %1769 = vmatprep.subr.mxu0 0.0
        %1770 = vmatpush1.msra.mxu0 0.0
        %1771 = vmatprep.subr.mxu0 0.0
        %1772 = vmatpush1.msra.mxu0 0.0
        %1773 = vmatprep.subr.mxu0 0.0
        %1774 = vmatpush1.msra.mxu0 0.0
        %1775 = vmatprep.subr.mxu0 0.0
        %1776 = vmatpush1.msra.mxu0 0.0
        %1777 = vmatprep.subr.mxu0 0.0
        %1778 = vmatpush1.msra.mxu0 0.0
        %1779 = vmatprep.subr.mxu0 0.0
        %1780 = vmatpush1.msra.mxu0 0.0
        %1781 = vmatprep.subr.mxu0 0.0
        %1782 = vmatpush1.msra.mxu0 0.0
        %1783 = vmatprep.subr.mxu0 0.0
        %1784 = vmatpush1.msra.mxu0 0.0
        %1785 = vmatprep.subr.mxu0 0.0
        %1786 = vmatpush1.msra.mxu0 0.0
        %1787 = vmatprep.subr.mxu0 0.0
        %1788 = vmatpush1.msra.mxu0 0.0
        %1789 = vmatprep.subr.mxu0 0.0
        %1790 = vmatpush1.msra.mxu0 0.0
        %1791 = vmatprep.subr.mxu0 0.0
        %1792 = vmatpush1.msra.mxu0 0.0
        %1793 = vmatprep.subr.mxu0 0.0
        %1794 = vmatpush1.msra.mxu0 0.0
        %1795 = vmatprep.subr.mxu0 0.0
        %1796 = vmatpush1.msra.mxu0 0.0
        %1797 = vmatprep.subr.mxu0 0.0
        %1798 = vmatpush1.msra.mxu0 0.0
        %1799 = vmatprep.subr.mxu0 0.0
        %1800 = vmatpush1.msra.mxu0 0.0
        %1801 = vmatprep.subr.mxu0 0.0
        %1802 = vmatpush1.msra.mxu0 0.0
        %1803 = vmatprep.subr.mxu0 0.0
        %1804 = vmatpush1.msra.mxu0 0.0
        %1805 = vmatprep.mubr.f32.mxu0 0.0
        %1806 = vmatmul.mubr.f32.gmra.mrb[0].mxu0 %v1510
        %v1807 = vpop.f32.mrb[0].mxu0
        %v1808 = vadd.f32 0.0, %v1807
        %v1809 = vpop.f32.mrb[0].mxu0
        %v1810 = vadd.f32 0.0, %v1809
        %1811 = vdwg.mxu0
        %v1812 = vadd.f32 %v1133, %v1595
        %v1813 = vadd.f32 %v1135, %v1597
        %v1814 = vadd.f32 %v1204, %v1666
        %v1815 = vadd.f32 %v1206, %v1668
        %v1816 = vadd.f32 %v1275, %v1737
        %v1817 = vadd.f32 %v1277, %v1739
        %v1818 = vadd.f32 %v1346, %v1808
        %v1819 = vadd.f32 %v1348, %v1810
        %1820 = vrot.lane.b32.xlu0 %v468, 127
        %v1821 = vpop.permute.xlu0 %1820
        %1822 = vrot.lane.b32.xlu0 %v472, 127
        %v1823 = vpop.permute.xlu0 %1822
        %1824 = vrot.lane.b32.xlu0 %v476, 127
        %v1825 = vpop.permute.xlu0 %1824
        %1826 = vrot.lane.b32.xlu0 %v480, 127
        %v1827 = vpop.permute.xlu0 %1826
        %1828 = vrot.lane.b32.xlu0 %v484, 127
        %v1829 = vpop.permute.xlu0 %1828
        %1830 = vrot.lane.b32.xlu0 %v488, 127
        %v1831 = vpop.permute.xlu0 %1830
        %1832 = vrot.lane.b32.xlu0 %v492, 127
        %v1833 = vpop.permute.xlu0 %1832
        %1834 = vrot.lane.b32.xlu0 %v496, 127
        %v1835 = vpop.permute.xlu0 %1834
        %vm1836 = vcmask 1039360
        %v1837 = vsel %vm1836, %v1821, %v1823
        %v1838 = vsel %vm1836, %v1823, %v1825
        %v1839 = vsel %vm1836, %v1825, %v1827
        %v1840 = vsel %vm1836, %v1827, %v1829
        %v1841 = vsel %vm1836, %v1829, %v1831
        %v1842 = vsel %vm1836, %v1831, %v1833
        %v1843 = vsel %vm1836, %v1833, %v1835
        %v1853 = vmul.f32 %v1821, 0.0
        %v1854 = vmul.f32 %v399, %v1837
        %v1855 = vmul.f32 %v413, %v1838
        %v1856 = vmul.f32 %v400, %v1839
        %v1857 = vmul.f32 %v414, %v1840
        %v1858 = vmul.f32 %v401, %v1841
        %v1859 = vmul.f32 %v415, %v1842
        %v1860 = vmul.f32 %v402, %v1843
        %v1861 = vmul.f32 %v416, %v1835
        %1862 = vrot.lane.b32.xlu0 %v403, 119
        %v1863 = vpop.permute.xlu0 %1862
        %1873 = vrot.lane.b32.xlu0 %v1853, 1
        %v1874 = vpop.permute.xlu0 %1873
        %1875 = vrot.lane.b32.xlu0 %v1854, 1
        %v1876 = vpop.permute.xlu0 %1875
        %1877 = vrot.lane.b32.xlu0 %v1855, 1
        %v1878 = vpop.permute.xlu0 %1877
        %1879 = vrot.lane.b32.xlu0 %v1856, 1
        %v1880 = vpop.permute.xlu0 %1879
        %1881 = vrot.lane.b32.xlu0 %v1857, 1
        %v1882 = vpop.permute.xlu0 %1881
        %1883 = vrot.lane.b32.xlu0 %v1858, 1
        %v1884 = vpop.permute.xlu0 %1883
        %1885 = vrot.lane.b32.xlu0 %v1859, 1
        %v1886 = vpop.permute.xlu0 %1885
        %1887 = vrot.lane.b32.xlu0 %v1860, 1
        %v1888 = vpop.permute.xlu0 %1887
        %1889 = vrot.lane.b32.xlu0 %v1861, 1
        %v1890 = vpop.permute.xlu0 %1889
        %vm1891 = vcmask 7168
        %v1892 = vsel %vm1891, %v1874, %v1876
        %v1893 = vsel %vm1891, %v1876, %v1878
        %v1894 = vsel %vm1891, %v1878, %v1880
        %v1895 = vsel %vm1891, %v1880, %v1882
        %v1896 = vsel %vm1891, %v1882, %v1884
        %v1897 = vsel %vm1891, %v1884, %v1886
        %v1898 = vsel %vm1891, %v1886, %v1888
        %v1899 = vsel %vm1891, %v1888, %v1890
        %v1900 = vsel %vm708, %v1863, 0
        %v1902 = vsel %vm711, %v1892, 0
        %v1904 = vsel %vm711, %v1893, 0
        %v1906 = vsel %vm711, %v1894, 0
        %v1908 = vsel %vm711, %v1895, 0
        %v1910 = vsel %vm711, %v1896, 0
        %v1912 = vsel %vm711, %v1897, 0
        %v1914 = vsel %vm711, %v1898, 0
        %v1916 = vsel %vm711, %v1899, 0
        %1918 = vmatprep.subr.mxu0 %v1904
        %1919 = vmatpush1.msra.mxu0 %v1902
        %1920 = vmatprep.subr.mxu0 0.0
        %1921 = vmatpush1.msra.mxu0 0.0
        %1922 = vmatprep.subr.mxu0 0.0
        %1923 = vmatpush1.msra.mxu0 0.0
        %1924 = vmatprep.subr.mxu0 0.0
        %1925 = vmatpush1.msra.mxu0 0.0
        %1926 = vmatprep.subr.mxu0 0.0
        %1927 = vmatpush1.msra.mxu0 0.0
        %1928 = vmatprep.subr.mxu0 0.0
        %1929 = vmatpush1.msra.mxu0 0.0
        %1930 = vmatprep.subr.mxu0 0.0
        %1931 = vmatpush1.msra.mxu0 0.0
        %1932 = vmatprep.subr.mxu0 0.0
        %1933 = vmatpush1.msra.mxu0 0.0
        %1934 = vmatprep.subr.mxu0 0.0
        %1935 = vmatpush1.msra.mxu0 0.0
        %1936 = vmatprep.subr.mxu0 0.0
        %1937 = vmatpush1.msra.mxu0 0.0
        %1938 = vmatprep.subr.mxu0 0.0
        %1939 = vmatpush1.msra.mxu0 0.0
        %1940 = vmatprep.subr.mxu0 0.0
        %1941 = vmatpush1.msra.mxu0 0.0
        %1942 = vmatprep.subr.mxu0 0.0
        %1943 = vmatpush1.msra.mxu0 0.0
        %1944 = vmatprep.subr.mxu0 0.0
        %1945 = vmatpush1.msra.mxu0 0.0
        %1946 = vmatprep.subr.mxu0 0.0
        %1947 = vmatpush1.msra.mxu0 0.0
        %1948 = vmatprep.subr.mxu0 0.0
        %1949 = vmatpush1.msra.mxu0 0.0
        %1950 = vmatprep.subr.mxu0 0.0
        %1951 = vmatpush1.msra.mxu0 0.0
        %1952 = vmatprep.subr.mxu0 0.0
        %1953 = vmatpush1.msra.mxu0 0.0
        %1954 = vmatprep.subr.mxu0 0.0
        %1955 = vmatpush1.msra.mxu0 0.0
        %1956 = vmatprep.subr.mxu0 0.0
        %1957 = vmatpush1.msra.mxu0 0.0
        %1958 = vmatprep.subr.mxu0 0.0
        %1959 = vmatpush1.msra.mxu0 0.0
        %1960 = vmatprep.subr.mxu0 0.0
        %1961 = vmatpush1.msra.mxu0 0.0
        %1962 = vmatprep.subr.mxu0 0.0
        %1963 = vmatpush1.msra.mxu0 0.0
        %1964 = vmatprep.subr.mxu0 0.0
        %1965 = vmatpush1.msra.mxu0 0.0
        %1966 = vmatprep.subr.mxu0 0.0
        %1967 = vmatpush1.msra.mxu0 0.0
        %1968 = vmatprep.subr.mxu0 0.0
        %1969 = vmatpush1.msra.mxu0 0.0
        %1970 = vmatprep.subr.mxu0 0.0
        %1971 = vmatpush1.msra.mxu0 0.0
        %1972 = vmatprep.subr.mxu0 0.0
        %1973 = vmatpush1.msra.mxu0 0.0
        %1974 = vmatprep.subr.mxu0 0.0
        %1975 = vmatpush1.msra.mxu0 0.0
        %1976 = vmatprep.subr.mxu0 0.0
        %1977 = vmatpush1.msra.mxu0 0.0
        %1978 = vmatprep.subr.mxu0 0.0
        %1979 = vmatpush1.msra.mxu0 0.0
        %1980 = vmatprep.subr.mxu0 0.0
        %1981 = vmatpush1.msra.mxu0 0.0
        %1982 = vmatprep.mubr.f32.mxu0 0.0
        %1983 = vmatmul.mubr.f32.gmra.mrb[0].mxu0 %v1900
        %v1984 = vpop.f32.mrb[0].mxu0
        %v1985 = vadd.f32 0.0, %v1984
        %v1986 = vpop.f32.mrb[0].mxu0
        %v1987 = vadd.f32 0.0, %v1986
        %1988 = vdwg.mxu0
        %1989 = vmatprep.subr.mxu0 %v1908
        %1990 = vmatpush1.msra.mxu0 %v1906
        %1991 = vmatprep.subr.mxu0 0.0
        %1992 = vmatpush1.msra.mxu0 0.0
        %1993 = vmatprep.subr.mxu0 0.0
        %1994 = vmatpush1.msra.mxu0 0.0
        %1995 = vmatprep.subr.mxu0 0.0
        %1996 = vmatpush1.msra.mxu0 0.0
        %1997 = vmatprep.subr.mxu0 0.0
        %1998 = vmatpush1.msra.mxu0 0.0
        %1999 = vmatprep.subr.mxu0 0.0
        %2000 = vmatpush1.msra.mxu0 0.0
        %2001 = vmatprep.subr.mxu0 0.0
        %2002 = vmatpush1.msra.mxu0 0.0
        %2003 = vmatprep.subr.mxu0 0.0
        %2004 = vmatpush1.msra.mxu0 0.0
        %2005 = vmatprep.subr.mxu0 0.0
        %2006 = vmatpush1.msra.mxu0 0.0
        %2007 = vmatprep.subr.mxu0 0.0
        %2008 = vmatpush1.msra.mxu0 0.0
        %2009 = vmatprep.subr.mxu0 0.0
        %2010 = vmatpush1.msra.mxu0 0.0
        %2011 = vmatprep.subr.mxu0 0.0
        %2012 = vmatpush1.msra.mxu0 0.0
        %2013 = vmatprep.subr.mxu0 0.0
        %2014 = vmatpush1.msra.mxu0 0.0
        %2015 = vmatprep.subr.mxu0 0.0
        %2016 = vmatpush1.msra.mxu0 0.0
        %2017 = vmatprep.subr.mxu0 0.0
        %2018 = vmatpush1.msra.mxu0 0.0
        %2019 = vmatprep.subr.mxu0 0.0
        %2020 = vmatpush1.msra.mxu0 0.0
        %2021 = vmatprep.subr.mxu0 0.0
        %2022 = vmatpush1.msra.mxu0 0.0
        %2023 = vmatprep.subr.mxu0 0.0
        %2024 = vmatpush1.msra.mxu0 0.0
        %2025 = vmatprep.subr.mxu0 0.0
        %2026 = vmatpush1.msra.mxu0 0.0
        %2027 = vmatprep.subr.mxu0 0.0
        %2028 = vmatpush1.msra.mxu0 0.0
        %2029 = vmatprep.subr.mxu0 0.0
        %2030 = vmatpush1.msra.mxu0 0.0
        %2031 = vmatprep.subr.mxu0 0.0
        %2032 = vmatpush1.msra.mxu0 0.0
        %2033 = vmatprep.subr.mxu0 0.0
        %2034 = vmatpush1.msra.mxu0 0.0
        %2035 = vmatprep.subr.mxu0 0.0
        %2036 = vmatpush1.msra.mxu0 0.0
        %2037 = vmatprep.subr.mxu0 0.0
        %2038 = vmatpush1.msra.mxu0 0.0
        %2039 = vmatprep.subr.mxu0 0.0
        %2040 = vmatpush1.msra.mxu0 0.0
        %2041 = vmatprep.subr.mxu0 0.0
        %2042 = vmatpush1.msra.mxu0 0.0
        %2043 = vmatprep.subr.mxu0 0.0
        %2044 = vmatpush1.msra.mxu0 0.0
        %2045 = vmatprep.subr.mxu0 0.0
        %2046 = vmatpush1.msra.mxu0 0.0
        %2047 = vmatprep.subr.mxu0 0.0
        %2048 = vmatpush1.msra.mxu0 0.0
        %2049 = vmatprep.subr.mxu0 0.0
        %2050 = vmatpush1.msra.mxu0 0.0
        %2051 = vmatprep.subr.mxu0 0.0
        %2052 = vmatpush1.msra.mxu0 0.0
        %2053 = vmatprep.mubr.f32.mxu0 0.0
        %2054 = vmatmul.mubr.f32.gmra.mrb[0].mxu0 %v1900
        %v2055 = vpop.f32.mrb[0].mxu0
        %v2056 = vadd.f32 0.0, %v2055
        %v2057 = vpop.f32.mrb[0].mxu0
        %v2058 = vadd.f32 0.0, %v2057
        %2059 = vdwg.mxu0
        %2060 = vmatprep.subr.mxu0 %v1912
        %2061 = vmatpush1.msra.mxu0 %v1910
        %2062 = vmatprep.subr.mxu0 0.0
        %2063 = vmatpush1.msra.mxu0 0.0
        %2064 = vmatprep.subr.mxu0 0.0
        %2065 = vmatpush1.msra.mxu0 0.0
        %2066 = vmatprep.subr.mxu0 0.0
        %2067 = vmatpush1.msra.mxu0 0.0
        %2068 = vmatprep.subr.mxu0 0.0
        %2069 = vmatpush1.msra.mxu0 0.0
        %2070 = vmatprep.subr.mxu0 0.0
        %2071 = vmatpush1.msra.mxu0 0.0
        %2072 = vmatprep.subr.mxu0 0.0
        %2073 = vmatpush1.msra.mxu0 0.0
        %2074 = vmatprep.subr.mxu0 0.0
        %2075 = vmatpush1.msra.mxu0 0.0
        %2076 = vmatprep.subr.mxu0 0.0
        %2077 = vmatpush1.msra.mxu0 0.0
        %2078 = vmatprep.subr.mxu0 0.0
        %2079 = vmatpush1.msra.mxu0 0.0
        %2080 = vmatprep.subr.mxu0 0.0
        %2081 = vmatpush1.msra.mxu0 0.0
        %2082 = vmatprep.subr.mxu0 0.0
        %2083 = vmatpush1.msra.mxu0 0.0
        %2084 = vmatprep.subr.mxu0 0.0
        %2085 = vmatpush1.msra.mxu0 0.0
        %2086 = vmatprep.subr.mxu0 0.0
        %2087 = vmatpush1.msra.mxu0 0.0
        %2088 = vmatprep.subr.mxu0 0.0
        %2089 = vmatpush1.msra.mxu0 0.0
        %2090 = vmatprep.subr.mxu0 0.0
        %2091 = vmatpush1.msra.mxu0 0.0
        %2092 = vmatprep.subr.mxu0 0.0
        %2093 = vmatpush1.msra.mxu0 0.0
        %2094 = vmatprep.subr.mxu0 0.0
        %2095 = vmatpush1.msra.mxu0 0.0
        %2096 = vmatprep.subr.mxu0 0.0
        %2097 = vmatpush1.msra.mxu0 0.0
        %2098 = vmatprep.subr.mxu0 0.0
        %2099 = vmatpush1.msra.mxu0 0.0
        %2100 = vmatprep.subr.mxu0 0.0
        %2101 = vmatpush1.msra.mxu0 0.0
        %2102 = vmatprep.subr.mxu0 0.0
        %2103 = vmatpush1.msra.mxu0 0.0
        %2104 = vmatprep.subr.mxu0 0.0
        %2105 = vmatpush1.msra.mxu0 0.0
        %2106 = vmatprep.subr.mxu0 0.0
        %2107 = vmatpush1.msra.mxu0 0.0
        %2108 = vmatprep.subr.mxu0 0.0
        %2109 = vmatpush1.msra.mxu0 0.0
        %2110 = vmatprep.subr.mxu0 0.0
        %2111 = vmatpush1.msra.mxu0 0.0
        %2112 = vmatprep.subr.mxu0 0.0
        %2113 = vmatpush1.msra.mxu0 0.0
        %2114 = vmatprep.subr.mxu0 0.0
        %2115 = vmatpush1.msra.mxu0 0.0
        %2116 = vmatprep.subr.mxu0 0.0
        %2117 = vmatpush1.msra.mxu0 0.0
        %2118 = vmatprep.subr.mxu0 0.0
        %2119 = vmatpush1.msra.mxu0 0.0
        %2120 = vmatprep.subr.mxu0 0.0
        %2121 = vmatpush1.msra.mxu0 0.0
        %2122 = vmatprep.subr.mxu0 0.0
        %2123 = vmatpush1.msra.mxu0 0.0
        %2124 = vmatprep.mubr.f32.mxu0 0.0
        %2125 = vmatmul.mubr.f32.gmra.mrb[0].mxu0 %v1900
        %v2126 = vpop.f32.mrb[0].mxu0
        %v2127 = vadd.f32 0.0, %v2126
        %v2128 = vpop.f32.mrb[0].mxu0
        %v2129 = vadd.f32 0.0, %v2128
        %2130 = vdwg.mxu0
        %2131 = vmatprep.subr.mxu0 %v1916
        %2132 = vmatpush1.msra.mxu0 %v1914
        %2133 = vmatprep.subr.mxu0 0.0
        %2134 = vmatpush1.msra.mxu0 0.0
        %2135 = vmatprep.subr.mxu0 0.0
        %2136 = vmatpush1.msra.mxu0 0.0
        %2137 = vmatprep.subr.mxu0 0.0
        %2138 = vmatpush1.msra.mxu0 0.0
        %2139 = vmatprep.subr.mxu0 0.0
        %2140 = vmatpush1.msra.mxu0 0.0
        %2141 = vmatprep.subr.mxu0 0.0
        %2142 = vmatpush1.msra.mxu0 0.0
        %2143 = vmatprep.subr.mxu0 0.0
        %2144 = vmatpush1.msra.mxu0 0.0
        %2145 = vmatprep.subr.mxu0 0.0
        %2146 = vmatpush1.msra.mxu0 0.0
        %2147 = vmatprep.subr.mxu0 0.0
        %2148 = vmatpush1.msra.mxu0 0.0
        %2149 = vmatprep.subr.mxu0 0.0
        %2150 = vmatpush1.msra.mxu0 0.0
        %2151 = vmatprep.subr.mxu0 0.0
        %2152 = vmatpush1.msra.mxu0 0.0
        %2153 = vmatprep.subr.mxu0 0.0
        %2154 = vmatpush1.msra.mxu0 0.0
        %2155 = vmatprep.subr.mxu0 0.0
        %2156 = vmatpush1.msra.mxu0 0.0
        %2157 = vmatprep.subr.mxu0 0.0
        %2158 = vmatpush1.msra.mxu0 0.0
        %2159 = vmatprep.subr.mxu0 0.0
        %2160 = vmatpush1.msra.mxu0 0.0
        %2161 = vmatprep.subr.mxu0 0.0
        %2162 = vmatpush1.msra.mxu0 0.0
        %2163 = vmatprep.subr.mxu0 0.0
        %2164 = vmatpush1.msra.mxu0 0.0
        %2165 = vmatprep.subr.mxu0 0.0
        %2166 = vmatpush1.msra.mxu0 0.0
        %2167 = vmatprep.subr.mxu0 0.0
        %2168 = vmatpush1.msra.mxu0 0.0
        %2169 = vmatprep.subr.mxu0 0.0
        %2170 = vmatpush1.msra.mxu0 0.0
        %2171 = vmatprep.subr.mxu0 0.0
        %2172 = vmatpush1.msra.mxu0 0.0
        %2173 = vmatprep.subr.mxu0 0.0
        %2174 = vmatpush1.msra.mxu0 0.0
        %2175 = vmatprep.subr.mxu0 0.0
        %2176 = vmatpush1.msra.mxu0 0.0
        %2177 = vmatprep.subr.mxu0 0.0
        %2178 = vmatpush1.msra.mxu0 0.0
        %2179 = vmatprep.subr.mxu0 0.0
        %2180 = vmatpush1.msra.mxu0 0.0
        %2181 = vmatprep.subr.mxu0 0.0
        %2182 = vmatpush1.msra.mxu0 0.0
        %2183 = vmatprep.subr.mxu0 0.0
        %2184 = vmatpush1.msra.mxu0 0.0
        %2185 = vmatprep.subr.mxu0 0.0
        %2186 = vmatpush1.msra.mxu0 0.0
        %2187 = vmatprep.subr.mxu0 0.0
        %2188 = vmatpush1.msra.mxu0 0.0
        %2189 = vmatprep.subr.mxu0 0.0
        %2190 = vmatpush1.msra.mxu0 0.0
        %2191 = vmatprep.subr.mxu0 0.0
        %2192 = vmatpush1.msra.mxu0 0.0
        %2193 = vmatprep.subr.mxu0 0.0
        %2194 = vmatpush1.msra.mxu0 0.0
        %2195 = vmatprep.mubr.f32.mxu0 0.0
        %2196 = vmatmul.mubr.f32.gmra.mrb[0].mxu0 %v1900
        %v2197 = vpop.f32.mrb[0].mxu0
        %v2198 = vadd.f32 0.0, %v2197
        %v2199 = vpop.f32.mrb[0].mxu0
        %v2200 = vadd.f32 0.0, %v2199
        %2201 = vdwg.mxu0
        %v2202 = vadd.f32 %v1812, %v1985
        %v2203 = vadd.f32 %v1813, %v1987
        %v2204 = vadd.f32 %v1814, %v2056
        %v2205 = vadd.f32 %v1815, %v2058
        %v2206 = vadd.f32 %v1816, %v2127
        %v2207 = vadd.f32 %v1817, %v2129
        %v2208 = vadd.f32 %v1818, %v2198
        %v2209 = vadd.f32 %v1819, %v2200
        %v2210 = vmul.f32 %v399, %v590
        %v2211 = vmul.f32 %v413, %v594
        %v2212 = vmul.f32 %v400, %v598
        %v2213 = vmul.f32 %v414, %v602
        %v2214 = vmul.f32 %v401, %v606
        %v2215 = vmul.f32 %v415, %v610
        %v2216 = vmul.f32 %v402, %v614
        %v2217 = vmul.f32 %v416, %v618
        %2218 = vrot.lane.b32.xlu0 %v403, 116
        %v2219 = vpop.permute.xlu0 %2218
        %v2220 = vsel %vm708, %v2219, 0
        %v2223 = vsel %vm711, %v2210, 0
        %v2226 = vsel %vm711, %v2211, 0
        %v2229 = vsel %vm711, %v2212, 0
        %v2232 = vsel %vm711, %v2213, 0
        %v2235 = vsel %vm711, %v2214, 0
        %v2238 = vsel %vm711, %v2215, 0
        %v2241 = vsel %vm711, %v2216, 0
        %v2244 = vsel %vm711, %v2217, 0
        %2246 = vmatprep.subr.mxu0 %v2226
        %2247 = vmatpush1.msra.mxu0 %v2223
        %2248 = vmatprep.subr.mxu0 0.0
        %2249 = vmatpush1.msra.mxu0 0.0
        %2250 = vmatprep.subr.mxu0 0.0
        %2251 = vmatpush1.msra.mxu0 0.0
        %2252 = vmatprep.subr.mxu0 0.0
        %2253 = vmatpush1.msra.mxu0 0.0
        %2254 = vmatprep.subr.mxu0 0.0
        %2255 = vmatpush1.msra.mxu0 0.0
        %2256 = vmatprep.subr.mxu0 0.0
        %2257 = vmatpush1.msra.mxu0 0.0
        %2258 = vmatprep.subr.mxu0 0.0
        %2259 = vmatpush1.msra.mxu0 0.0
        %2260 = vmatprep.subr.mxu0 0.0
        %2261 = vmatpush1.msra.mxu0 0.0
        %2262 = vmatprep.subr.mxu0 0.0
        %2263 = vmatpush1.msra.mxu0 0.0
        %2264 = vmatprep.subr.mxu0 0.0
        %2265 = vmatpush1.msra.mxu0 0.0
        %2266 = vmatprep.subr.mxu0 0.0
        %2267 = vmatpush1.msra.mxu0 0.0
        %2268 = vmatprep.subr.mxu0 0.0
        %2269 = vmatpush1.msra.mxu0 0.0
        %2270 = vmatprep.subr.mxu0 0.0
        %2271 = vmatpush1.msra.mxu0 0.0
        %2272 = vmatprep.subr.mxu0 0.0
        %2273 = vmatpush1.msra.mxu0 0.0
        %2274 = vmatprep.subr.mxu0 0.0
        %2275 = vmatpush1.msra.mxu0 0.0
        %2276 = vmatprep.subr.mxu0 0.0
        %2277 = vmatpush1.msra.mxu0 0.0
        %2278 = vmatprep.subr.mxu0 0.0
        %2279 = vmatpush1.msra.mxu0 0.0
        %2280 = vmatprep.subr.mxu0 0.0
        %2281 = vmatpush1.msra.mxu0 0.0
        %2282 = vmatprep.subr.mxu0 0.0
        %2283 = vmatpush1.msra.mxu0 0.0
        %2284 = vmatprep.subr.mxu0 0.0
        %2285 = vmatpush1.msra.mxu0 0.0
        %2286 = vmatprep.subr.mxu0 0.0
        %2287 = vmatpush1.msra.mxu0 0.0
        %2288 = vmatprep.subr.mxu0 0.0
        %2289 = vmatpush1.msra.mxu0 0.0
        %2290 = vmatprep.subr.mxu0 0.0
        %2291 = vmatpush1.msra.mxu0 0.0
        %2292 = vmatprep.subr.mxu0 0.0
        %2293 = vmatpush1.msra.mxu0 0.0
        %2294 = vmatprep.subr.mxu0 0.0
        %2295 = vmatpush1.msra.mxu0 0.0
        %2296 = vmatprep.subr.mxu0 0.0
        %2297 = vmatpush1.msra.mxu0 0.0
        %2298 = vmatprep.subr.mxu0 0.0
        %2299 = vmatpush1.msra.mxu0 0.0
        %2300 = vmatprep.subr.mxu0 0.0
        %2301 = vmatpush1.msra.mxu0 0.0
        %2302 = vmatprep.subr.mxu0 0.0
        %2303 = vmatpush1.msra.mxu0 0.0
        %2304 = vmatprep.subr.mxu0 0.0
        %2305 = vmatpush1.msra.mxu0 0.0
        %2306 = vmatprep.subr.mxu0 0.0
        %2307 = vmatpush1.msra.mxu0 0.0
        %2308 = vmatprep.subr.mxu0 0.0
        %2309 = vmatpush1.msra.mxu0 0.0
        %2310 = vmatprep.mubr.f32.mxu0 0.0
        %2311 = vmatmul.mubr.f32.gmra.mrb[0].mxu0 %v2220
        %v2312 = vpop.f32.mrb[0].mxu0
        %v2313 = vadd.f32 0.0, %v2312
        %v2314 = vpop.f32.mrb[0].mxu0
        %v2315 = vadd.f32 0.0, %v2314
        %2316 = vdwg.mxu0
        %2317 = vmatprep.subr.mxu0 %v2232
        %2318 = vmatpush1.msra.mxu0 %v2229
        %2319 = vmatprep.subr.mxu0 0.0
        %2320 = vmatpush1.msra.mxu0 0.0
        %2321 = vmatprep.subr.mxu0 0.0
        %2322 = vmatpush1.msra.mxu0 0.0
        %2323 = vmatprep.subr.mxu0 0.0
        %2324 = vmatpush1.msra.mxu0 0.0
        %2325 = vmatprep.subr.mxu0 0.0
        %2326 = vmatpush1.msra.mxu0 0.0
        %2327 = vmatprep.subr.mxu0 0.0
        %2328 = vmatpush1.msra.mxu0 0.0
        %2329 = vmatprep.subr.mxu0 0.0
        %2330 = vmatpush1.msra.mxu0 0.0
        %2331 = vmatprep.subr.mxu0 0.0
        %2332 = vmatpush1.msra.mxu0 0.0
        %2333 = vmatprep.subr.mxu0 0.0
        %2334 = vmatpush1.msra.mxu0 0.0
        %2335 = vmatprep.subr.mxu0 0.0
        %2336 = vmatpush1.msra.mxu0 0.0
        %2337 = vmatprep.subr.mxu0 0.0
        %2338 = vmatpush1.msra.mxu0 0.0
        %2339 = vmatprep.subr.mxu0 0.0
        %2340 = vmatpush1.msra.mxu0 0.0
        %2341 = vmatprep.subr.mxu0 0.0
        %2342 = vmatpush1.msra.mxu0 0.0
        %2343 = vmatprep.subr.mxu0 0.0
        %2344 = vmatpush1.msra.mxu0 0.0
        %2345 = vmatprep.subr.mxu0 0.0
        %2346 = vmatpush1.msra.mxu0 0.0
        %2347 = vmatprep.subr.mxu0 0.0
        %2348 = vmatpush1.msra.mxu0 0.0
        %2349 = vmatprep.subr.mxu0 0.0
        %2350 = vmatpush1.msra.mxu0 0.0
        %2351 = vmatprep.subr.mxu0 0.0
        %2352 = vmatpush1.msra.mxu0 0.0
        %2353 = vmatprep.subr.mxu0 0.0
        %2354 = vmatpush1.msra.mxu0 0.0
        %2355 = vmatprep.subr.mxu0 0.0
        %2356 = vmatpush1.msra.mxu0 0.0
        %2357 = vmatprep.subr.mxu0 0.0
        %2358 = vmatpush1.msra.mxu0 0.0
        %2359 = vmatprep.subr.mxu0 0.0
        %2360 = vmatpush1.msra.mxu0 0.0
        %2361 = vmatprep.subr.mxu0 0.0
        %2362 = vmatpush1.msra.mxu0 0.0
        %2363 = vmatprep.subr.mxu0 0.0
        %2364 = vmatpush1.msra.mxu0 0.0
        %2365 = vmatprep.subr.mxu0 0.0
        %2366 = vmatpush1.msra.mxu0 0.0
        %2367 = vmatprep.subr.mxu0 0.0
        %2368 = vmatpush1.msra.mxu0 0.0
        %2369 = vmatprep.subr.mxu0 0.0
        %2370 = vmatpush1.msra.mxu0 0.0
        %2371 = vmatprep.subr.mxu0 0.0
        %2372 = vmatpush1.msra.mxu0 0.0
        %2373 = vmatprep.subr.mxu0 0.0
        %2374 = vmatpush1.msra.mxu0 0.0
        %2375 = vmatprep.subr.mxu0 0.0
        %2376 = vmatpush1.msra.mxu0 0.0
        %2377 = vmatprep.subr.mxu0 0.0
        %2378 = vmatpush1.msra.mxu0 0.0
        %2379 = vmatprep.subr.mxu0 0.0
        %2380 = vmatpush1.msra.mxu0 0.0
        %2381 = vmatprep.mubr.f32.mxu0 0.0
        %2382 = vmatmul.mubr.f32.gmra.mrb[0].mxu0 %v2220
        %v2383 = vpop.f32.mrb[0].mxu0
        %v2384 = vadd.f32 0.0, %v2383
        %v2385 = vpop.f32.mrb[0].mxu0
        %v2386 = vadd.f32 0.0, %v2385
        %2387 = vdwg.mxu0
        %2388 = vmatprep.subr.mxu0 %v2238
        %2389 = vmatpush1.msra.mxu0 %v2235
        %2390 = vmatprep.subr.mxu0 0.0
        %2391 = vmatpush1.msra.mxu0 0.0
        %2392 = vmatprep.subr.mxu0 0.0
        %2393 = vmatpush1.msra.mxu0 0.0
        %2394 = vmatprep.subr.mxu0 0.0
        %2395 = vmatpush1.msra.mxu0 0.0
        %2396 = vmatprep.subr.mxu0 0.0
        %2397 = vmatpush1.msra.mxu0 0.0
        %2398 = vmatprep.subr.mxu0 0.0
        %2399 = vmatpush1.msra.mxu0 0.0
        %2400 = vmatprep.subr.mxu0 0.0
        %2401 = vmatpush1.msra.mxu0 0.0
        %2402 = vmatprep.subr.mxu0 0.0
        %2403 = vmatpush1.msra.mxu0 0.0
        %2404 = vmatprep.subr.mxu0 0.0
        %2405 = vmatpush1.msra.mxu0 0.0
        %2406 = vmatprep.subr.mxu0 0.0
        %2407 = vmatpush1.msra.mxu0 0.0
        %2408 = vmatprep.subr.mxu0 0.0
        %2409 = vmatpush1.msra.mxu0 0.0
        %2410 = vmatprep.subr.mxu0 0.0
        %2411 = vmatpush1.msra.mxu0 0.0
        %2412 = vmatprep.subr.mxu0 0.0
        %2413 = vmatpush1.msra.mxu0 0.0
        %2414 = vmatprep.subr.mxu0 0.0
        %2415 = vmatpush1.msra.mxu0 0.0
        %2416 = vmatprep.subr.mxu0 0.0
        %2417 = vmatpush1.msra.mxu0 0.0
        %2418 = vmatprep.subr.mxu0 0.0
        %2419 = vmatpush1.msra.mxu0 0.0
        %2420 = vmatprep.subr.mxu0 0.0
        %2421 = vmatpush1.msra.mxu0 0.0
        %2422 = vmatprep.subr.mxu0 0.0
        %2423 = vmatpush1.msra.mxu0 0.0
        %2424 = vmatprep.subr.mxu0 0.0
        %2425 = vmatpush1.msra.mxu0 0.0
        %2426 = vmatprep.subr.mxu0 0.0
        %2427 = vmatpush1.msra.mxu0 0.0
        %2428 = vmatprep.subr.mxu0 0.0
        %2429 = vmatpush1.msra.mxu0 0.0
        %2430 = vmatprep.subr.mxu0 0.0
        %2431 = vmatpush1.msra.mxu0 0.0
        %2432 = vmatprep.subr.mxu0 0.0
        %2433 = vmatpush1.msra.mxu0 0.0
        %2434 = vmatprep.subr.mxu0 0.0
        %2435 = vmatpush1.msra.mxu0 0.0
        %2436 = vmatprep.subr.mxu0 0.0
        %2437 = vmatpush1.msra.mxu0 0.0
        %2438 = vmatprep.subr.mxu0 0.0
        %2439 = vmatpush1.msra.mxu0 0.0
        %2440 = vmatprep.subr.mxu0 0.0
        %2441 = vmatpush1.msra.mxu0 0.0
        %2442 = vmatprep.subr.mxu0 0.0
        %2443 = vmatpush1.msra.mxu0 0.0
        %2444 = vmatprep.subr.mxu0 0.0
        %2445 = vmatpush1.msra.mxu0 0.0
        %2446 = vmatprep.subr.mxu0 0.0
        %2447 = vmatpush1.msra.mxu0 0.0
        %2448 = vmatprep.subr.mxu0 0.0
        %2449 = vmatpush1.msra.mxu0 0.0
        %2450 = vmatprep.subr.mxu0 0.0
        %2451 = vmatpush1.msra.mxu0 0.0
        %2452 = vmatprep.mubr.f32.mxu0 0.0
        %2453 = vmatmul.mubr.f32.gmra.mrb[0].mxu0 %v2220
        %v2454 = vpop.f32.mrb[0].mxu0
        %v2455 = vadd.f32 0.0, %v2454
        %v2456 = vpop.f32.mrb[0].mxu0
        %v2457 = vadd.f32 0.0, %v2456
        %2458 = vdwg.mxu0
        %2459 = vmatprep.subr.mxu0 %v2244
        %2460 = vmatpush1.msra.mxu0 %v2241
        %2461 = vmatprep.subr.mxu0 0.0
        %2462 = vmatpush1.msra.mxu0 0.0
        %2463 = vmatprep.subr.mxu0 0.0
        %2464 = vmatpush1.msra.mxu0 0.0
        %2465 = vmatprep.subr.mxu0 0.0
        %2466 = vmatpush1.msra.mxu0 0.0
        %2467 = vmatprep.subr.mxu0 0.0
        %2468 = vmatpush1.msra.mxu0 0.0
        %2469 = vmatprep.subr.mxu0 0.0
        %2470 = vmatpush1.msra.mxu0 0.0
        %2471 = vmatprep.subr.mxu0 0.0
        %2472 = vmatpush1.msra.mxu0 0.0
        %2473 = vmatprep.subr.mxu0 0.0
        %2474 = vmatpush1.msra.mxu0 0.0
        %2475 = vmatprep.subr.mxu0 0.0
        %2476 = vmatpush1.msra.mxu0 0.0
        %2477 = vmatprep.subr.mxu0 0.0
        %2478 = vmatpush1.msra.mxu0 0.0
        %2479 = vmatprep.subr.mxu0 0.0
        %2480 = vmatpush1.msra.mxu0 0.0
        %2481 = vmatprep.subr.mxu0 0.0
        %2482 = vmatpush1.msra.mxu0 0.0
        %2483 = vmatprep.subr.mxu0 0.0
        %2484 = vmatpush1.msra.mxu0 0.0
        %2485 = vmatprep.subr.mxu0 0.0
        %2486 = vmatpush1.msra.mxu0 0.0
        %2487 = vmatprep.subr.mxu0 0.0
        %2488 = vmatpush1.msra.mxu0 0.0
        %2489 = vmatprep.subr.mxu0 0.0
        %2490 = vmatpush1.msra.mxu0 0.0
        %2491 = vmatprep.subr.mxu0 0.0
        %2492 = vmatpush1.msra.mxu0 0.0
        %2493 = vmatprep.subr.mxu0 0.0
        %2494 = vmatpush1.msra.mxu0 0.0
        %2495 = vmatprep.subr.mxu0 0.0
        %2496 = vmatpush1.msra.mxu0 0.0
        %2497 = vmatprep.subr.mxu0 0.0
        %2498 = vmatpush1.msra.mxu0 0.0
        %2499 = vmatprep.subr.mxu0 0.0
        %2500 = vmatpush1.msra.mxu0 0.0
        %2501 = vmatprep.subr.mxu0 0.0
        %2502 = vmatpush1.msra.mxu0 0.0
        %2503 = vmatprep.subr.mxu0 0.0
        %2504 = vmatpush1.msra.mxu0 0.0
        %2505 = vmatprep.subr.mxu0 0.0
        %2506 = vmatpush1.msra.mxu0 0.0
        %2507 = vmatprep.subr.mxu0 0.0
        %2508 = vmatpush1.msra.mxu0 0.0
        %2509 = vmatprep.subr.mxu0 0.0
        %2510 = vmatpush1.msra.mxu0 0.0
        %2511 = vmatprep.subr.mxu0 0.0
        %2512 = vmatpush1.msra.mxu0 0.0
        %2513 = vmatprep.subr.mxu0 0.0
        %2514 = vmatpush1.msra.mxu0 0.0
        %2515 = vmatprep.subr.mxu0 0.0
        %2516 = vmatpush1.msra.mxu0 0.0
        %2517 = vmatprep.subr.mxu0 0.0
        %2518 = vmatpush1.msra.mxu0 0.0
        %2519 = vmatprep.subr.mxu0 0.0
        %2520 = vmatpush1.msra.mxu0 0.0
        %2521 = vmatprep.subr.mxu0 0.0
        %2522 = vmatpush1.msra.mxu0 0.0
        %2523 = vmatprep.mubr.f32.mxu0 0.0
        %2524 = vmatmul.mubr.f32.gmra.mrb[0].mxu0 %v2220
        %v2525 = vpop.f32.mrb[0].mxu0
        %v2526 = vadd.f32 0.0, %v2525
        %v2527 = vpop.f32.mrb[0].mxu0
        %v2528 = vadd.f32 0.0, %v2527
        %2529 = vdwg.mxu0
        %v2530 = vadd.f32 %v2202, %v2313
        %v2531 = vadd.f32 %v2203, %v2315
        %v2532 = vadd.f32 %v2204, %v2384
        %v2533 = vadd.f32 %v2205, %v2386
        %v2534 = vadd.f32 %v2206, %v2455
        %v2535 = vadd.f32 %v2207, %v2457
        %v2536 = vadd.f32 %v2208, %v2526
        %v2537 = vadd.f32 %v2209, %v2528
        %2538 = vrot.lane.b32.xlu0 %v1393, 1
        %v2539 = vpop.permute.xlu0 %2538
        %2540 = vrot.lane.b32.xlu0 %v1397, 1
        %v2541 = vpop.permute.xlu0 %2540
        %2542 = vrot.lane.b32.xlu0 %v1401, 1
        %v2543 = vpop.permute.xlu0 %2542
        %2544 = vrot.lane.b32.xlu0 %v1405, 1
        %v2545 = vpop.permute.xlu0 %2544
        %2546 = vrot.lane.b32.xlu0 %v1409, 1
        %v2547 = vpop.permute.xlu0 %2546
        %2548 = vrot.lane.b32.xlu0 %v1413, 1
        %v2549 = vpop.permute.xlu0 %2548
        %2550 = vrot.lane.b32.xlu0 %v1417, 1
        %v2551 = vpop.permute.xlu0 %2550
        %2552 = vrot.lane.b32.xlu0 %v1421, 1
        %v2553 = vpop.permute.xlu0 %2552
        %v2554 = vsel %vm1891, %v2539, %v2541
        %v2555 = vsel %vm1891, %v2541, %v2543
        %v2556 = vsel %vm1891, %v2543, %v2545
        %v2557 = vsel %vm1891, %v2545, %v2547
        %v2558 = vsel %vm1891, %v2547, %v2549
        %v2559 = vsel %vm1891, %v2549, %v2551
        %v2560 = vsel %vm1891, %v2551, %v2553
        %v2570 = vmul.f32 %v399, %v2539
        %v2571 = vmul.f32 %v413, %v2554
        %v2572 = vmul.f32 %v400, %v2555
        %v2573 = vmul.f32 %v414, %v2556
        %v2574 = vmul.f32 %v401, %v2557
        %v2575 = vmul.f32 %v415, %v2558
        %v2576 = vmul.f32 %v402, %v2559
        %v2577 = vmul.f32 %v416, %v2560
        %v2578 = vmul.f32 %v2553, 0.0
        %2579 = vrot.lane.b32.xlu0 %v403, 113
        %v2580 = vpop.permute.xlu0 %2579
        %2590 = vrot.lane.b32.xlu0 %v2570, 127
        %v2591 = vpop.permute.xlu0 %2590
        %2592 = vrot.lane.b32.xlu0 %v2571, 127
        %v2593 = vpop.permute.xlu0 %2592
        %2594 = vrot.lane.b32.xlu0 %v2572, 127
        %v2595 = vpop.permute.xlu0 %2594
        %2596 = vrot.lane.b32.xlu0 %v2573, 127
        %v2597 = vpop.permute.xlu0 %2596
        %2598 = vrot.lane.b32.xlu0 %v2574, 127
        %v2599 = vpop.permute.xlu0 %2598
        %2600 = vrot.lane.b32.xlu0 %v2575, 127
        %v2601 = vpop.permute.xlu0 %2600
        %2602 = vrot.lane.b32.xlu0 %v2576, 127
        %v2603 = vpop.permute.xlu0 %2602
        %2604 = vrot.lane.b32.xlu0 %v2577, 127
        %v2605 = vpop.permute.xlu0 %2604
        %2606 = vrot.lane.b32.xlu0 %v2578, 127
        %v2607 = vpop.permute.xlu0 %2606
        %v2608 = vsel %vm1836, %v2591, %v2593
        %v2609 = vsel %vm1836, %v2593, %v2595
        %v2610 = vsel %vm1836, %v2595, %v2597
        %v2611 = vsel %vm1836, %v2597, %v2599
        %v2612 = vsel %vm1836, %v2599, %v2601
        %v2613 = vsel %vm1836, %v2601, %v2603
        %v2614 = vsel %vm1836, %v2603, %v2605
        %v2615 = vsel %vm1836, %v2605, %v2607
        %v2616 = vsel %vm708, %v2580, 0
        %v2618 = vsel %vm711, %v2608, 0
        %v2620 = vsel %vm711, %v2609, 0
        %v2622 = vsel %vm711, %v2610, 0
        %v2624 = vsel %vm711, %v2611, 0
        %v2626 = vsel %vm711, %v2612, 0
        %v2628 = vsel %vm711, %v2613, 0
        %v2630 = vsel %vm711, %v2614, 0
        %v2632 = vsel %vm711, %v2615, 0
        %2634 = vmatprep.subr.mxu0 %v2620
        %2635 = vmatpush1.msra.mxu0 %v2618
        %2636 = vmatprep.subr.mxu0 0.0
        %2637 = vmatpush1.msra.mxu0 0.0
        %2638 = vmatprep.subr.mxu0 0.0
        %2639 = vmatpush1.msra.mxu0 0.0
        %2640 = vmatprep.subr.mxu0 0.0
        %2641 = vmatpush1.msra.mxu0 0.0
        %2642 = vmatprep.subr.mxu0 0.0
        %2643 = vmatpush1.msra.mxu0 0.0
        %2644 = vmatprep.subr.mxu0 0.0
        %2645 = vmatpush1.msra.mxu0 0.0
        %2646 = vmatprep.subr.mxu0 0.0
        %2647 = vmatpush1.msra.mxu0 0.0
        %2648 = vmatprep.subr.mxu0 0.0
        %2649 = vmatpush1.msra.mxu0 0.0
        %2650 = vmatprep.subr.mxu0 0.0
        %2651 = vmatpush1.msra.mxu0 0.0
        %2652 = vmatprep.subr.mxu0 0.0
        %2653 = vmatpush1.msra.mxu0 0.0
        %2654 = vmatprep.subr.mxu0 0.0
        %2655 = vmatpush1.msra.mxu0 0.0
        %2656 = vmatprep.subr.mxu0 0.0
        %2657 = vmatpush1.msra.mxu0 0.0
        %2658 = vmatprep.subr.mxu0 0.0
        %2659 = vmatpush1.msra.mxu0 0.0
        %2660 = vmatprep.subr.mxu0 0.0
        %2661 = vmatpush1.msra.mxu0 0.0
        %2662 = vmatprep.subr.mxu0 0.0
        %2663 = vmatpush1.msra.mxu0 0.0
        %2664 = vmatprep.subr.mxu0 0.0
        %2665 = vmatpush1.msra.mxu0 0.0
        %2666 = vmatprep.subr.mxu0 0.0
        %2667 = vmatpush1.msra.mxu0 0.0
        %2668 = vmatprep.subr.mxu0 0.0
        %2669 = vmatpush1.msra.mxu0 0.0
        %2670 = vmatprep.subr.mxu0 0.0
        %2671 = vmatpush1.msra.mxu0 0.0
        %2672 = vmatprep.subr.mxu0 0.0
        %2673 = vmatpush1.msra.mxu0 0.0
        %2674 = vmatprep.subr.mxu0 0.0
        %2675 = vmatpush1.msra.mxu0 0.0
        %2676 = vmatprep.subr.mxu0 0.0
        %2677 = vmatpush1.msra.mxu0 0.0
        %2678 = vmatprep.subr.mxu0 0.0
        %2679 = vmatpush1.msra.mxu0 0.0
        %2680 = vmatprep.subr.mxu0 0.0
        %2681 = vmatpush1.msra.mxu0 0.0
        %2682 = vmatprep.subr.mxu0 0.0
        %2683 = vmatpush1.msra.mxu0 0.0
        %2684 = vmatprep.subr.mxu0 0.0
        %2685 = vmatpush1.msra.mxu0 0.0
        %2686 = vmatprep.subr.mxu0 0.0
        %2687 = vmatpush1.msra.mxu0 0.0
        %2688 = vmatprep.subr.mxu0 0.0
        %2689 = vmatpush1.msra.mxu0 0.0
        %2690 = vmatprep.subr.mxu0 0.0
        %2691 = vmatpush1.msra.mxu0 0.0
        %2692 = vmatprep.subr.mxu0 0.0
        %2693 = vmatpush1.msra.mxu0 0.0
        %2694 = vmatprep.subr.mxu0 0.0
        %2695 = vmatpush1.msra.mxu0 0.0
        %2696 = vmatprep.subr.mxu0 0.0
        %2697 = vmatpush1.msra.mxu0 0.0
        %2698 = vmatprep.mubr.f32.mxu0 0.0
        %2699 = vmatmul.mubr.f32.gmra.mrb[0].mxu0 %v2616
        %v2700 = vpop.f32.mrb[0].mxu0
        %v2701 = vadd.f32 0.0, %v2700
        %v2702 = vpop.f32.mrb[0].mxu0
        %v2703 = vadd.f32 0.0, %v2702
        %2704 = vdwg.mxu0
        %2705 = vmatprep.subr.mxu0 %v2624
        %2706 = vmatpush1.msra.mxu0 %v2622
        %2707 = vmatprep.subr.mxu0 0.0
        %2708 = vmatpush1.msra.mxu0 0.0
        %2709 = vmatprep.subr.mxu0 0.0
        %2710 = vmatpush1.msra.mxu0 0.0
        %2711 = vmatprep.subr.mxu0 0.0
        %2712 = vmatpush1.msra.mxu0 0.0
        %2713 = vmatprep.subr.mxu0 0.0
        %2714 = vmatpush1.msra.mxu0 0.0
        %2715 = vmatprep.subr.mxu0 0.0
        %2716 = vmatpush1.msra.mxu0 0.0
        %2717 = vmatprep.subr.mxu0 0.0
        %2718 = vmatpush1.msra.mxu0 0.0
        %2719 = vmatprep.subr.mxu0 0.0
        %2720 = vmatpush1.msra.mxu0 0.0
        %2721 = vmatprep.subr.mxu0 0.0
        %2722 = vmatpush1.msra.mxu0 0.0
        %2723 = vmatprep.subr.mxu0 0.0
        %2724 = vmatpush1.msra.mxu0 0.0
        %2725 = vmatprep.subr.mxu0 0.0
        %2726 = vmatpush1.msra.mxu0 0.0
        %2727 = vmatprep.subr.mxu0 0.0
        %2728 = vmatpush1.msra.mxu0 0.0
        %2729 = vmatprep.subr.mxu0 0.0
        %2730 = vmatpush1.msra.mxu0 0.0
        %2731 = vmatprep.subr.mxu0 0.0
        %2732 = vmatpush1.msra.mxu0 0.0
        %2733 = vmatprep.subr.mxu0 0.0
        %2734 = vmatpush1.msra.mxu0 0.0
        %2735 = vmatprep.subr.mxu0 0.0
        %2736 = vmatpush1.msra.mxu0 0.0
        %2737 = vmatprep.subr.mxu0 0.0
        %2738 = vmatpush1.msra.mxu0 0.0
        %2739 = vmatprep.subr.mxu0 0.0
        %2740 = vmatpush1.msra.mxu0 0.0
        %2741 = vmatprep.subr.mxu0 0.0
        %2742 = vmatpush1.msra.mxu0 0.0
        %2743 = vmatprep.subr.mxu0 0.0
        %2744 = vmatpush1.msra.mxu0 0.0
        %2745 = vmatprep.subr.mxu0 0.0
        %2746 = vmatpush1.msra.mxu0 0.0
        %2747 = vmatprep.subr.mxu0 0.0
        %2748 = vmatpush1.msra.mxu0 0.0
        %2749 = vmatprep.subr.mxu0 0.0
        %2750 = vmatpush1.msra.mxu0 0.0
        %2751 = vmatprep.subr.mxu0 0.0
        %2752 = vmatpush1.msra.mxu0 0.0
        %2753 = vmatprep.subr.mxu0 0.0
        %2754 = vmatpush1.msra.mxu0 0.0
        %2755 = vmatprep.subr.mxu0 0.0
        %2756 = vmatpush1.msra.mxu0 0.0
        %2757 = vmatprep.subr.mxu0 0.0
        %2758 = vmatpush1.msra.mxu0 0.0
        %2759 = vmatprep.subr.mxu0 0.0
        %2760 = vmatpush1.msra.mxu0 0.0
        %2761 = vmatprep.subr.mxu0 0.0
        %2762 = vmatpush1.msra.mxu0 0.0
        %2763 = vmatprep.subr.mxu0 0.0
        %2764 = vmatpush1.msra.mxu0 0.0
        %2765 = vmatprep.subr.mxu0 0.0
        %2766 = vmatpush1.msra.mxu0 0.0
        %2767 = vmatprep.subr.mxu0 0.0
        %2768 = vmatpush1.msra.mxu0 0.0
        %2769 = vmatprep.mubr.f32.mxu0 0.0
        %2770 = vmatmul.mubr.f32.gmra.mrb[0].mxu0 %v2616
        %v2771 = vpop.f32.mrb[0].mxu0
        %v2772 = vadd.f32 0.0, %v2771
        %v2773 = vpop.f32.mrb[0].mxu0
        %v2774 = vadd.f32 0.0, %v2773
        %2775 = vdwg.mxu0
        %2776 = vmatprep.subr.mxu0 %v2628
        %2777 = vmatpush1.msra.mxu0 %v2626
        %2778 = vmatprep.subr.mxu0 0.0
        %2779 = vmatpush1.msra.mxu0 0.0
        %2780 = vmatprep.subr.mxu0 0.0
        %2781 = vmatpush1.msra.mxu0 0.0
        %2782 = vmatprep.subr.mxu0 0.0
        %2783 = vmatpush1.msra.mxu0 0.0
        %2784 = vmatprep.subr.mxu0 0.0
        %2785 = vmatpush1.msra.mxu0 0.0
        %2786 = vmatprep.subr.mxu0 0.0
        %2787 = vmatpush1.msra.mxu0 0.0
        %2788 = vmatprep.subr.mxu0 0.0
        %2789 = vmatpush1.msra.mxu0 0.0
        %2790 = vmatprep.subr.mxu0 0.0
        %2791 = vmatpush1.msra.mxu0 0.0
        %2792 = vmatprep.subr.mxu0 0.0
        %2793 = vmatpush1.msra.mxu0 0.0
        %2794 = vmatprep.subr.mxu0 0.0
        %2795 = vmatpush1.msra.mxu0 0.0
        %2796 = vmatprep.subr.mxu0 0.0
        %2797 = vmatpush1.msra.mxu0 0.0
        %2798 = vmatprep.subr.mxu0 0.0
        %2799 = vmatpush1.msra.mxu0 0.0
        %2800 = vmatprep.subr.mxu0 0.0
        %2801 = vmatpush1.msra.mxu0 0.0
        %2802 = vmatprep.subr.mxu0 0.0
        %2803 = vmatpush1.msra.mxu0 0.0
        %2804 = vmatprep.subr.mxu0 0.0
        %2805 = vmatpush1.msra.mxu0 0.0
        %2806 = vmatprep.subr.mxu0 0.0
        %2807 = vmatpush1.msra.mxu0 0.0
        %2808 = vmatprep.subr.mxu0 0.0
        %2809 = vmatpush1.msra.mxu0 0.0
        %2810 = vmatprep.subr.mxu0 0.0
        %2811 = vmatpush1.msra.mxu0 0.0
        %2812 = vmatprep.subr.mxu0 0.0
        %2813 = vmatpush1.msra.mxu0 0.0
        %2814 = vmatprep.subr.mxu0 0.0
        %2815 = vmatpush1.msra.mxu0 0.0
        %2816 = vmatprep.subr.mxu0 0.0
        %2817 = vmatpush1.msra.mxu0 0.0
        %2818 = vmatprep.subr.mxu0 0.0
        %2819 = vmatpush1.msra.mxu0 0.0
        %2820 = vmatprep.subr.mxu0 0.0
        %2821 = vmatpush1.msra.mxu0 0.0
        %2822 = vmatprep.subr.mxu0 0.0
        %2823 = vmatpush1.msra.mxu0 0.0
        %2824 = vmatprep.subr.mxu0 0.0
        %2825 = vmatpush1.msra.mxu0 0.0
        %2826 = vmatprep.subr.mxu0 0.0
        %2827 = vmatpush1.msra.mxu0 0.0
        %2828 = vmatprep.subr.mxu0 0.0
        %2829 = vmatpush1.msra.mxu0 0.0
        %2830 = vmatprep.subr.mxu0 0.0
        %2831 = vmatpush1.msra.mxu0 0.0
        %2832 = vmatprep.subr.mxu0 0.0
        %2833 = vmatpush1.msra.mxu0 0.0
        %2834 = vmatprep.subr.mxu0 0.0
        %2835 = vmatpush1.msra.mxu0 0.0
        %2836 = vmatprep.subr.mxu0 0.0
        %2837 = vmatpush1.msra.mxu0 0.0
        %2838 = vmatprep.subr.mxu0 0.0
        %2839 = vmatpush1.msra.mxu0 0.0
        %2840 = vmatprep.mubr.f32.mxu0 0.0
        %2841 = vmatmul.mubr.f32.gmra.mrb[0].mxu0 %v2616
        %v2842 = vpop.f32.mrb[0].mxu0
        %v2843 = vadd.f32 0.0, %v2842
        %v2844 = vpop.f32.mrb[0].mxu0
        %v2845 = vadd.f32 0.0, %v2844
        %2846 = vdwg.mxu0
        %2847 = vmatprep.subr.mxu0 %v2632
        %2848 = vmatpush1.msra.mxu0 %v2630
        %2849 = vmatprep.subr.mxu0 0.0
        %2850 = vmatpush1.msra.mxu0 0.0
        %2851 = vmatprep.subr.mxu0 0.0
        %2852 = vmatpush1.msra.mxu0 0.0
        %2853 = vmatprep.subr.mxu0 0.0
        %2854 = vmatpush1.msra.mxu0 0.0
        %2855 = vmatprep.subr.mxu0 0.0
        %2856 = vmatpush1.msra.mxu0 0.0
        %2857 = vmatprep.subr.mxu0 0.0
        %2858 = vmatpush1.msra.mxu0 0.0
        %2859 = vmatprep.subr.mxu0 0.0
        %2860 = vmatpush1.msra.mxu0 0.0
        %2861 = vmatprep.subr.mxu0 0.0
        %2862 = vmatpush1.msra.mxu0 0.0
        %2863 = vmatprep.subr.mxu0 0.0
        %2864 = vmatpush1.msra.mxu0 0.0
        %2865 = vmatprep.subr.mxu0 0.0
        %2866 = vmatpush1.msra.mxu0 0.0
        %2867 = vmatprep.subr.mxu0 0.0
        %2868 = vmatpush1.msra.mxu0 0.0
        %2869 = vmatprep.subr.mxu0 0.0
        %2870 = vmatpush1.msra.mxu0 0.0
        %2871 = vmatprep.subr.mxu0 0.0
        %2872 = vmatpush1.msra.mxu0 0.0
        %2873 = vmatprep.subr.mxu0 0.0
        %2874 = vmatpush1.msra.mxu0 0.0
        %2875 = vmatprep.subr.mxu0 0.0
        %2876 = vmatpush1.msra.mxu0 0.0
        %2877 = vmatprep.subr.mxu0 0.0
        %2878 = vmatpush1.msra.mxu0 0.0
        %2879 = vmatprep.subr.mxu0 0.0
        %2880 = vmatpush1.msra.mxu0 0.0
        %2881 = vmatprep.subr.mxu0 0.0
        %2882 = vmatpush1.msra.mxu0 0.0
        %2883 = vmatprep.subr.mxu0 0.0
        %2884 = vmatpush1.msra.mxu0 0.0
        %2885 = vmatprep.subr.mxu0 0.0
        %2886 = vmatpush1.msra.mxu0 0.0
        %2887 = vmatprep.subr.mxu0 0.0
        %2888 = vmatpush1.msra.mxu0 0.0
        %2889 = vmatprep.subr.mxu0 0.0
        %2890 = vmatpush1.msra.mxu0 0.0
        %2891 = vmatprep.subr.mxu0 0.0
        %2892 = vmatpush1.msra.mxu0 0.0
        %2893 = vmatprep.subr.mxu0 0.0
        %2894 = vmatpush1.msra.mxu0 0.0
        %2895 = vmatprep.subr.mxu0 0.0
        %2896 = vmatpush1.msra.mxu0 0.0
        %2897 = vmatprep.subr.mxu0 0.0
        %2898 = vmatpush1.msra.mxu0 0.0
        %2899 = vmatprep.subr.mxu0 0.0
        %2900 = vmatpush1.msra.mxu0 0.0
        %2901 = vmatprep.subr.mxu0 0.0
        %2902 = vmatpush1.msra.mxu0 0.0
        %2903 = vmatprep.subr.mxu0 0.0
        %2904 = vmatpush1.msra.mxu0 0.0
        %2905 = vmatprep.subr.mxu0 0.0
        %2906 = vmatpush1.msra.mxu0 0.0
        %2907 = vmatprep.subr.mxu0 0.0
        %2908 = vmatpush1.msra.mxu0 0.0
        %2909 = vmatprep.subr.mxu0 0.0
        %2910 = vmatpush1.msra.mxu0 0.0
        %2911 = vmatprep.mubr.f32.mxu0 0.0
        %2912 = vmatmul.mubr.f32.gmra.mrb[0].mxu0 %v2616
        %v2913 = vpop.f32.mrb[0].mxu0
        %v2914 = vadd.f32 0.0, %v2913
        %v2915 = vpop.f32.mrb[0].mxu0
        %v2916 = vadd.f32 0.0, %v2915
        %2917 = vdwg.mxu0
        %v2918 = vadd.f32 %v2530, %v2701
        %v2919 = vadd.f32 %v2531, %v2703
        %v2920 = vadd.f32 %v2532, %v2772
        %v2921 = vadd.f32 %v2533, %v2774
        %v2922 = vadd.f32 %v2534, %v2843
        %v2923 = vadd.f32 %v2535, %v2845
        %v2924 = vadd.f32 %v2536, %v2914
        %v2925 = vadd.f32 %v2537, %v2916
        %2926 = vrot.lane.b32.xlu0 %v468, 31
        %v2927 = vpop.permute.xlu0 %2926
        %2928 = vrot.lane.b32.xlu0 %v472, 31
        %v2929 = vpop.permute.xlu0 %2928
        %2930 = vrot.lane.b32.xlu0 %v476, 31
        %v2931 = vpop.permute.xlu0 %2930
        %2932 = vrot.lane.b32.xlu0 %v480, 31
        %v2933 = vpop.permute.xlu0 %2932
        %2934 = vrot.lane.b32.xlu0 %v484, 31
        %v2935 = vpop.permute.xlu0 %2934
        %2936 = vrot.lane.b32.xlu0 %v488, 31
        %v2937 = vpop.permute.xlu0 %2936
        %2938 = vrot.lane.b32.xlu0 %v492, 31
        %v2939 = vpop.permute.xlu0 %2938
        %2940 = vrot.lane.b32.xlu0 %v496, 31
        %v2941 = vpop.permute.xlu0 %2940
        %v2942 = vsel %vm1501, %v2927, %v2929
        %v2943 = vsel %vm1501, %v2929, %v2931
        %v2944 = vsel %vm1501, %v2931, %v2933
        %v2945 = vsel %vm1501, %v2933, %v2935
        %v2946 = vsel %vm1501, %v2935, %v2937
        %v2947 = vsel %vm1501, %v2937, %v2939
        %v2948 = vsel %vm1501, %v2939, %v2941
        %v2958 = vmul.f32 %v399, %v2927
        %v2959 = vmul.f32 %v413, %v2942
        %v2960 = vmul.f32 %v400, %v2943
        %v2961 = vmul.f32 %v414, %v2944
        %v2962 = vmul.f32 %v401, %v2945
        %v2963 = vmul.f32 %v415, %v2946
        %v2964 = vmul.f32 %v402, %v2947
        %v2965 = vmul.f32 %v416, %v2948
        %v2966 = vmul.f32 %v2941, 0.0
        %2967 = vrot.lane.b32.xlu0 %v403, 110
        %v2968 = vpop.permute.xlu0 %2967
        %2978 = vrot.lane.b32.xlu0 %v2958, 97
        %v2979 = vpop.permute.xlu0 %2978
        %2980 = vrot.lane.b32.xlu0 %v2959, 97
        %v2981 = vpop.permute.xlu0 %2980
        %2982 = vrot.lane.b32.xlu0 %v2960, 97
        %v2983 = vpop.permute.xlu0 %2982
        %2984 = vrot.lane.b32.xlu0 %v2961, 97
        %v2985 = vpop.permute.xlu0 %2984
        %2986 = vrot.lane.b32.xlu0 %v2962, 97
        %v2987 = vpop.permute.xlu0 %2986
        %2988 = vrot.lane.b32.xlu0 %v2963, 97
        %v2989 = vpop.permute.xlu0 %2988
        %2990 = vrot.lane.b32.xlu0 %v2964, 97
        %v2991 = vpop.permute.xlu0 %2990
        %2992 = vrot.lane.b32.xlu0 %v2965, 97
        %v2993 = vpop.permute.xlu0 %2992
        %2994 = vrot.lane.b32.xlu0 %v2966, 97
        %v2995 = vpop.permute.xlu0 %2994
        %v2996 = vsel %vm1446, %v2979, %v2981
        %v2997 = vsel %vm1446, %v2981, %v2983
        %v2998 = vsel %vm1446, %v2983, %v2985
        %v2999 = vsel %vm1446, %v2985, %v2987
        %v3000 = vsel %vm1446, %v2987, %v2989
        %v3001 = vsel %vm1446, %v2989, %v2991
        %v3002 = vsel %vm1446, %v2991, %v2993
        %v3003 = vsel %vm1446, %v2993, %v2995
        %v3004 = vsel %vm708, %v2968, 0
        %v3006 = vsel %vm711, %v2996, 0
        %v3008 = vsel %vm711, %v2997, 0
        %v3010 = vsel %vm711, %v2998, 0
        %v3012 = vsel %vm711, %v2999, 0
        %v3014 = vsel %vm711, %v3000, 0
        %v3016 = vsel %vm711, %v3001, 0
        %v3018 = vsel %vm711, %v3002, 0
        %v3020 = vsel %vm711, %v3003, 0
        %3022 = vmatprep.subr.mxu0 %v3008
        %3023 = vmatpush1.msra.mxu0 %v3006
        %3024 = vmatprep.subr.mxu0 0.0
        %3025 = vmatpush1.msra.mxu0 0.0
        %3026 = vmatprep.subr.mxu0 0.0
        %3027 = vmatpush1.msra.mxu0 0.0
        %3028 = vmatprep.subr.mxu0 0.0
        %3029 = vmatpush1.msra.mxu0 0.0
        %3030 = vmatprep.subr.mxu0 0.0
        %3031 = vmatpush1.msra.mxu0 0.0
        %3032 = vmatprep.subr.mxu0 0.0
        %3033 = vmatpush1.msra.mxu0 0.0
        %3034 = vmatprep.subr.mxu0 0.0
        %3035 = vmatpush1.msra.mxu0 0.0
        %3036 = vmatprep.subr.mxu0 0.0
        %3037 = vmatpush1.msra.mxu0 0.0
        %3038 = vmatprep.subr.mxu0 0.0
        %3039 = vmatpush1.msra.mxu0 0.0
        %3040 = vmatprep.subr.mxu0 0.0
        %3041 = vmatpush1.msra.mxu0 0.0
        %3042 = vmatprep.subr.mxu0 0.0
        %3043 = vmatpush1.msra.mxu0 0.0
        %3044 = vmatprep.subr.mxu0 0.0
        %3045 = vmatpush1.msra.mxu0 0.0
        %3046 = vmatprep.subr.mxu0 0.0
        %3047 = vmatpush1.msra.mxu0 0.0
        %3048 = vmatprep.subr.mxu0 0.0
        %3049 = vmatpush1.msra.mxu0 0.0
        %3050 = vmatprep.subr.mxu0 0.0
        %3051 = vmatpush1.msra.mxu0 0.0
        %3052 = vmatprep.subr.mxu0 0.0
        %3053 = vmatpush1.msra.mxu0 0.0
        %3054 = vmatprep.subr.mxu0 0.0
        %3055 = vmatpush1.msra.mxu0 0.0
        %3056 = vmatprep.subr.mxu0 0.0
        %3057 = vmatpush1.msra.mxu0 0.0
        %3058 = vmatprep.subr.mxu0 0.0
        %3059 = vmatpush1.msra.mxu0 0.0
        %3060 = vmatprep.subr.mxu0 0.0
        %3061 = vmatpush1.msra.mxu0 0.0
        %3062 = vmatprep.subr.mxu0 0.0
        %3063 = vmatpush1.msra.mxu0 0.0
        %3064 = vmatprep.subr.mxu0 0.0
        %3065 = vmatpush1.msra.mxu0 0.0
        %3066 = vmatprep.subr.mxu0 0.0
        %3067 = vmatpush1.msra.mxu0 0.0
        %3068 = vmatprep.subr.mxu0 0.0
        %3069 = vmatpush1.msra.mxu0 0.0
        %3070 = vmatprep.subr.mxu0 0.0
        %3071 = vmatpush1.msra.mxu0 0.0
        %3072 = vmatprep.subr.mxu0 0.0
        %3073 = vmatpush1.msra.mxu0 0.0
        %3074 = vmatprep.subr.mxu0 0.0
        %3075 = vmatpush1.msra.mxu0 0.0
        %3076 = vmatprep.subr.mxu0 0.0
        %3077 = vmatpush1.msra.mxu0 0.0
        %3078 = vmatprep.subr.mxu0 0.0
        %3079 = vmatpush1.msra.mxu0 0.0
        %3080 = vmatprep.subr.mxu0 0.0
        %3081 = vmatpush1.msra.mxu0 0.0
        %3082 = vmatprep.subr.mxu0 0.0
        %3083 = vmatpush1.msra.mxu0 0.0
        %3084 = vmatprep.subr.mxu0 0.0
        %3085 = vmatpush1.msra.mxu0 0.0
        %3086 = vmatprep.mubr.f32.mxu0 0.0
        %3087 = vmatmul.mubr.f32.gmra.mrb[0].mxu0 %v3004
        %v3088 = vpop.f32.mrb[0].mxu0
        %v3089 = vadd.f32 0.0, %v3088
        %v3090 = vpop.f32.mrb[0].mxu0
        %v3091 = vadd.f32 0.0, %v3090
        %3092 = vdwg.mxu0
        %3093 = vmatprep.subr.mxu0 %v3012
        %3094 = vmatpush1.msra.mxu0 %v3010
        %3095 = vmatprep.subr.mxu0 0.0
        %3096 = vmatpush1.msra.mxu0 0.0
        %3097 = vmatprep.subr.mxu0 0.0
        %3098 = vmatpush1.msra.mxu0 0.0
        %3099 = vmatprep.subr.mxu0 0.0
        %3100 = vmatpush1.msra.mxu0 0.0
        %3101 = vmatprep.subr.mxu0 0.0
        %3102 = vmatpush1.msra.mxu0 0.0
        %3103 = vmatprep.subr.mxu0 0.0
        %3104 = vmatpush1.msra.mxu0 0.0
        %3105 = vmatprep.subr.mxu0 0.0
        %3106 = vmatpush1.msra.mxu0 0.0
        %3107 = vmatprep.subr.mxu0 0.0
        %3108 = vmatpush1.msra.mxu0 0.0
        %3109 = vmatprep.subr.mxu0 0.0
        %3110 = vmatpush1.msra.mxu0 0.0
        %3111 = vmatprep.subr.mxu0 0.0
        %3112 = vmatpush1.msra.mxu0 0.0
        %3113 = vmatprep.subr.mxu0 0.0
        %3114 = vmatpush1.msra.mxu0 0.0
        %3115 = vmatprep.subr.mxu0 0.0
        %3116 = vmatpush1.msra.mxu0 0.0
        %3117 = vmatprep.subr.mxu0 0.0
        %3118 = vmatpush1.msra.mxu0 0.0
        %3119 = vmatprep.subr.mxu0 0.0
        %3120 = vmatpush1.msra.mxu0 0.0
        %3121 = vmatprep.subr.mxu0 0.0
        %3122 = vmatpush1.msra.mxu0 0.0
        %3123 = vmatprep.subr.mxu0 0.0
        %3124 = vmatpush1.msra.mxu0 0.0
        %3125 = vmatprep.subr.mxu0 0.0
        %3126 = vmatpush1.msra.mxu0 0.0
        %3127 = vmatprep.subr.mxu0 0.0
        %3128 = vmatpush1.msra.mxu0 0.0
        %3129 = vmatprep.subr.mxu0 0.0
        %3130 = vmatpush1.msra.mxu0 0.0
        %3131 = vmatprep.subr.mxu0 0.0
        %3132 = vmatpush1.msra.mxu0 0.0
        %3133 = vmatprep.subr.mxu0 0.0
        %3134 = vmatpush1.msra.mxu0 0.0
        %3135 = vmatprep.subr.mxu0 0.0
        %3136 = vmatpush1.msra.mxu0 0.0
        %3137 = vmatprep.subr.mxu0 0.0
        %3138 = vmatpush1.msra.mxu0 0.0
        %3139 = vmatprep.subr.mxu0 0.0
        %3140 = vmatpush1.msra.mxu0 0.0
        %3141 = vmatprep.subr.mxu0 0.0
        %3142 = vmatpush1.msra.mxu0 0.0
        %3143 = vmatprep.subr.mxu0 0.0
        %3144 = vmatpush1.msra.mxu0 0.0
        %3145 = vmatprep.subr.mxu0 0.0
        %3146 = vmatpush1.msra.mxu0 0.0
        %3147 = vmatprep.subr.mxu0 0.0
        %3148 = vmatpush1.msra.mxu0 0.0
        %3149 = vmatprep.subr.mxu0 0.0
        %3150 = vmatpush1.msra.mxu0 0.0
        %3151 = vmatprep.subr.mxu0 0.0
        %3152 = vmatpush1.msra.mxu0 0.0
        %3153 = vmatprep.subr.mxu0 0.0
        %3154 = vmatpush1.msra.mxu0 0.0
        %3155 = vmatprep.subr.mxu0 0.0
        %3156 = vmatpush1.msra.mxu0 0.0
        %3157 = vmatprep.mubr.f32.mxu0 0.0
        %3158 = vmatmul.mubr.f32.gmra.mrb[0].mxu0 %v3004
        %v3159 = vpop.f32.mrb[0].mxu0
        %v3160 = vadd.f32 0.0, %v3159
        %v3161 = vpop.f32.mrb[0].mxu0
        %v3162 = vadd.f32 0.0, %v3161
        %3163 = vdwg.mxu0
        %3164 = vmatprep.subr.mxu0 %v3016
        %3165 = vmatpush1.msra.mxu0 %v3014
        %3166 = vmatprep.subr.mxu0 0.0
        %3167 = vmatpush1.msra.mxu0 0.0
        %3168 = vmatprep.subr.mxu0 0.0
        %3169 = vmatpush1.msra.mxu0 0.0
        %3170 = vmatprep.subr.mxu0 0.0
        %3171 = vmatpush1.msra.mxu0 0.0
        %3172 = vmatprep.subr.mxu0 0.0
        %3173 = vmatpush1.msra.mxu0 0.0
        %3174 = vmatprep.subr.mxu0 0.0
        %3175 = vmatpush1.msra.mxu0 0.0
        %3176 = vmatprep.subr.mxu0 0.0
        %3177 = vmatpush1.msra.mxu0 0.0
        %3178 = vmatprep.subr.mxu0 0.0
        %3179 = vmatpush1.msra.mxu0 0.0
        %3180 = vmatprep.subr.mxu0 0.0
        %3181 = vmatpush1.msra.mxu0 0.0
        %3182 = vmatprep.subr.mxu0 0.0
        %3183 = vmatpush1.msra.mxu0 0.0
        %3184 = vmatprep.subr.mxu0 0.0
        %3185 = vmatpush1.msra.mxu0 0.0
        %3186 = vmatprep.subr.mxu0 0.0
        %3187 = vmatpush1.msra.mxu0 0.0
        %3188 = vmatprep.subr.mxu0 0.0
        %3189 = vmatpush1.msra.mxu0 0.0
        %3190 = vmatprep.subr.mxu0 0.0
        %3191 = vmatpush1.msra.mxu0 0.0
        %3192 = vmatprep.subr.mxu0 0.0
        %3193 = vmatpush1.msra.mxu0 0.0
        %3194 = vmatprep.subr.mxu0 0.0
        %3195 = vmatpush1.msra.mxu0 0.0
        %3196 = vmatprep.subr.mxu0 0.0
        %3197 = vmatpush1.msra.mxu0 0.0
        %3198 = vmatprep.subr.mxu0 0.0
        %3199 = vmatpush1.msra.mxu0 0.0
        %3200 = vmatprep.subr.mxu0 0.0
        %3201 = vmatpush1.msra.mxu0 0.0
        %3202 = vmatprep.subr.mxu0 0.0
        %3203 = vmatpush1.msra.mxu0 0.0
        %3204 = vmatprep.subr.mxu0 0.0
        %3205 = vmatpush1.msra.mxu0 0.0
        %3206 = vmatprep.subr.mxu0 0.0
        %3207 = vmatpush1.msra.mxu0 0.0
        %3208 = vmatprep.subr.mxu0 0.0
        %3209 = vmatpush1.msra.mxu0 0.0
        %3210 = vmatprep.subr.mxu0 0.0
        %3211 = vmatpush1.msra.mxu0 0.0
        %3212 = vmatprep.subr.mxu0 0.0
        %3213 = vmatpush1.msra.mxu0 0.0
        %3214 = vmatprep.subr.mxu0 0.0
        %3215 = vmatpush1.msra.mxu0 0.0
        %3216 = vmatprep.subr.mxu0 0.0
        %3217 = vmatpush1.msra.mxu0 0.0
        %3218 = vmatprep.subr.mxu0 0.0
        %3219 = vmatpush1.msra.mxu0 0.0
        %3220 = vmatprep.subr.mxu0 0.0
        %3221 = vmatpush1.msra.mxu0 0.0
        %3222 = vmatprep.subr.mxu0 0.0
        %3223 = vmatpush1.msra.mxu0 0.0
        %3224 = vmatprep.subr.mxu0 0.0
        %3225 = vmatpush1.msra.mxu0 0.0
        %3226 = vmatprep.subr.mxu0 0.0
        %3227 = vmatpush1.msra.mxu0 0.0
        %3228 = vmatprep.mubr.f32.mxu0 0.0
        %3229 = vmatmul.mubr.f32.gmra.mrb[0].mxu0 %v3004
        %v3230 = vpop.f32.mrb[0].mxu0
        %v3231 = vadd.f32 0.0, %v3230
        %v3232 = vpop.f32.mrb[0].mxu0
        %v3233 = vadd.f32 0.0, %v3232
        %3234 = vdwg.mxu0
        %3235 = vmatprep.subr.mxu0 %v3020
        %3236 = vmatpush1.msra.mxu0 %v3018
        %3237 = vmatprep.subr.mxu0 0.0
        %3238 = vmatpush1.msra.mxu0 0.0
        %3239 = vmatprep.subr.mxu0 0.0
        %3240 = vmatpush1.msra.mxu0 0.0
        %3241 = vmatprep.subr.mxu0 0.0
        %3242 = vmatpush1.msra.mxu0 0.0
        %3243 = vmatprep.subr.mxu0 0.0
        %3244 = vmatpush1.msra.mxu0 0.0
        %3245 = vmatprep.subr.mxu0 0.0
        %3246 = vmatpush1.msra.mxu0 0.0
        %3247 = vmatprep.subr.mxu0 0.0
        %3248 = vmatpush1.msra.mxu0 0.0
        %3249 = vmatprep.subr.mxu0 0.0
        %3250 = vmatpush1.msra.mxu0 0.0
        %3251 = vmatprep.subr.mxu0 0.0
        %3252 = vmatpush1.msra.mxu0 0.0
        %3253 = vmatprep.subr.mxu0 0.0
        %3254 = vmatpush1.msra.mxu0 0.0
        %3255 = vmatprep.subr.mxu0 0.0
        %3256 = vmatpush1.msra.mxu0 0.0
        %3257 = vmatprep.subr.mxu0 0.0
        %3258 = vmatpush1.msra.mxu0 0.0
        %3259 = vmatprep.subr.mxu0 0.0
        %3260 = vmatpush1.msra.mxu0 0.0
        %3261 = vmatprep.subr.mxu0 0.0
        %3262 = vmatpush1.msra.mxu0 0.0
        %3263 = vmatprep.subr.mxu0 0.0
        %3264 = vmatpush1.msra.mxu0 0.0
        %3265 = vmatprep.subr.mxu0 0.0
        %3266 = vmatpush1.msra.mxu0 0.0
        %3267 = vmatprep.subr.mxu0 0.0
        %3268 = vmatpush1.msra.mxu0 0.0
        %3269 = vmatprep.subr.mxu0 0.0
        %3270 = vmatpush1.msra.mxu0 0.0
        %3271 = vmatprep.subr.mxu0 0.0
        %3272 = vmatpush1.msra.mxu0 0.0
        %3273 = vmatprep.subr.mxu0 0.0
        %3274 = vmatpush1.msra.mxu0 0.0
        %3275 = vmatprep.subr.mxu0 0.0
        %3276 = vmatpush1.msra.mxu0 0.0
        %3277 = vmatprep.subr.mxu0 0.0
        %3278 = vmatpush1.msra.mxu0 0.0
        %3279 = vmatprep.subr.mxu0 0.0
        %3280 = vmatpush1.msra.mxu0 0.0
        %3281 = vmatprep.subr.mxu0 0.0
        %3282 = vmatpush1.msra.mxu0 0.0
        %3283 = vmatprep.subr.mxu0 0.0
        %3284 = vmatpush1.msra.mxu0 0.0
        %3285 = vmatprep.subr.mxu0 0.0
        %3286 = vmatpush1.msra.mxu0 0.0
        %3287 = vmatprep.subr.mxu0 0.0
        %3288 = vmatpush1.msra.mxu0 0.0
        %3289 = vmatprep.subr.mxu0 0.0
        %3290 = vmatpush1.msra.mxu0 0.0
        %3291 = vmatprep.subr.mxu0 0.0
        %3292 = vmatpush1.msra.mxu0 0.0
        %3293 = vmatprep.subr.mxu0 0.0
        %3294 = vmatpush1.msra.mxu0 0.0
        %3295 = vmatprep.subr.mxu0 0.0
        %3296 = vmatpush1.msra.mxu0 0.0
        %3297 = vmatprep.subr.mxu0 0.0
        %3298 = vmatpush1.msra.mxu0 0.0
        %3299 = vmatprep.mubr.f32.mxu0 0.0
        %3300 = vmatmul.mubr.f32.gmra.mrb[0].mxu0 %v3004
        %v3301 = vpop.f32.mrb[0].mxu0
        %v3302 = vadd.f32 0.0, %v3301
        %v3303 = vpop.f32.mrb[0].mxu0
        %v3304 = vadd.f32 0.0, %v3303
        %3305 = vdwg.mxu0
        %v3306 = vadd.f32 %v2918, %v3089
        %v3307 = vadd.f32 %v2919, %v3091
        %v3308 = vadd.f32 %v2920, %v3160
        %v3309 = vadd.f32 %v2921, %v3162
        %v3310 = vadd.f32 %v2922, %v3231
        %v3311 = vadd.f32 %v2923, %v3233
        %v3312 = vadd.f32 %v2924, %v3302
        %v3313 = vadd.f32 %v2925, %v3304
        %3314 = vrot.lane.b32.xlu0 %v590, 32
        %v3315 = vpop.permute.xlu0 %3314
        %3316 = vrot.lane.b32.xlu0 %v594, 32
        %v3317 = vpop.permute.xlu0 %3316
        %3318 = vrot.lane.b32.xlu0 %v598, 32
        %v3319 = vpop.permute.xlu0 %3318
        %3320 = vrot.lane.b32.xlu0 %v602, 32
        %v3321 = vpop.permute.xlu0 %3320
        %3322 = vrot.lane.b32.xlu0 %v606, 32
        %v3323 = vpop.permute.xlu0 %3322
        %3324 = vrot.lane.b32.xlu0 %v610, 32
        %v3325 = vpop.permute.xlu0 %3324
        %3326 = vrot.lane.b32.xlu0 %v614, 32
        %v3327 = vpop.permute.xlu0 %3326
        %3328 = vrot.lane.b32.xlu0 %v618, 32
        %v3329 = vpop.permute.xlu0 %3328
        %v3330 = vsel %vm699, %v3315, %v3317
        %v3331 = vsel %vm699, %v3317, %v3319
        %v3332 = vsel %vm699, %v3319, %v3321
        %v3333 = vsel %vm699, %v3321, %v3323
        %v3334 = vsel %vm699, %v3323, %v3325
        %v3335 = vsel %vm699, %v3325, %v3327
        %v3336 = vsel %vm699, %v3327, %v3329
        %v3346 = vmul.f32 %v399, %v3315
        %v3347 = vmul.f32 %v413, %v3330
        %v3348 = vmul.f32 %v400, %v3331
        %v3349 = vmul.f32 %v414, %v3332
        %v3350 = vmul.f32 %v401, %v3333
        %v3351 = vmul.f32 %v415, %v3334
        %v3352 = vmul.f32 %v402, %v3335
        %v3353 = vmul.f32 %v416, %v3336
        %v3354 = vmul.f32 %v3329, 0.0
        %3355 = vrot.lane.b32.xlu0 %v403, 107
        %v3356 = vpop.permute.xlu0 %3355
        %3366 = vrot.lane.b32.xlu0 %v3346, 96
        %v3367 = vpop.permute.xlu0 %3366
        %3368 = vrot.lane.b32.xlu0 %v3347, 96
        %v3369 = vpop.permute.xlu0 %3368
        %3370 = vrot.lane.b32.xlu0 %v3348, 96
        %v3371 = vpop.permute.xlu0 %3370
        %3372 = vrot.lane.b32.xlu0 %v3349, 96
        %v3373 = vpop.permute.xlu0 %3372
        %3374 = vrot.lane.b32.xlu0 %v3350, 96
        %v3375 = vpop.permute.xlu0 %3374
        %3376 = vrot.lane.b32.xlu0 %v3351, 96
        %v3377 = vpop.permute.xlu0 %3376
        %3378 = vrot.lane.b32.xlu0 %v3352, 96
        %v3379 = vpop.permute.xlu0 %3378
        %3380 = vrot.lane.b32.xlu0 %v3353, 96
        %v3381 = vpop.permute.xlu0 %3380
        %3382 = vrot.lane.b32.xlu0 %v3354, 96
        %v3383 = vpop.permute.xlu0 %3382
        %v3384 = vsel %vm643, %v3367, %v3369
        %v3385 = vsel %vm643, %v3369, %v3371
        %v3386 = vsel %vm643, %v3371, %v3373
        %v3387 = vsel %vm643, %v3373, %v3375
        %v3388 = vsel %vm643, %v3375, %v3377
        %v3389 = vsel %vm643, %v3377, %v3379
        %v3390 = vsel %vm643, %v3379, %v3381
        %v3391 = vsel %vm643, %v3381, %v3383
        %v3392 = vsel %vm708, %v3356, 0
        %v3394 = vsel %vm711, %v3384, 0
        %v3396 = vsel %vm711, %v3385, 0
        %v3398 = vsel %vm711, %v3386, 0
        %v3400 = vsel %vm711, %v3387, 0
        %v3402 = vsel %vm711, %v3388, 0
        %v3404 = vsel %vm711, %v3389, 0
        %v3406 = vsel %vm711, %v3390, 0
        %v3408 = vsel %vm711, %v3391, 0
        %3410 = vmatprep.subr.mxu0 %v3396
        %3411 = vmatpush1.msra.mxu0 %v3394
        %3412 = vmatprep.subr.mxu0 0.0
        %3413 = vmatpush1.msra.mxu0 0.0
        %3414 = vmatprep.subr.mxu0 0.0
        %3415 = vmatpush1.msra.mxu0 0.0
        %3416 = vmatprep.subr.mxu0 0.0
        %3417 = vmatpush1.msra.mxu0 0.0
        %3418 = vmatprep.subr.mxu0 0.0
        %3419 = vmatpush1.msra.mxu0 0.0
        %3420 = vmatprep.subr.mxu0 0.0
        %3421 = vmatpush1.msra.mxu0 0.0
        %3422 = vmatprep.subr.mxu0 0.0
        %3423 = vmatpush1.msra.mxu0 0.0
        %3424 = vmatprep.subr.mxu0 0.0
        %3425 = vmatpush1.msra.mxu0 0.0
        %3426 = vmatprep.subr.mxu0 0.0
        %3427 = vmatpush1.msra.mxu0 0.0
        %3428 = vmatprep.subr.mxu0 0.0
        %3429 = vmatpush1.msra.mxu0 0.0
        %3430 = vmatprep.subr.mxu0 0.0
        %3431 = vmatpush1.msra.mxu0 0.0
        %3432 = vmatprep.subr.mxu0 0.0
        %3433 = vmatpush1.msra.mxu0 0.0
        %3434 = vmatprep.subr.mxu0 0.0
        %3435 = vmatpush1.msra.mxu0 0.0
        %3436 = vmatprep.subr.mxu0 0.0
        %3437 = vmatpush1.msra.mxu0 0.0
        %3438 = vmatprep.subr.mxu0 0.0
        %3439 = vmatpush1.msra.mxu0 0.0
        %3440 = vmatprep.subr.mxu0 0.0
        %3441 = vmatpush1.msra.mxu0 0.0
        %3442 = vmatprep.subr.mxu0 0.0
        %3443 = vmatpush1.msra.mxu0 0.0
        %3444 = vmatprep.subr.mxu0 0.0
        %3445 = vmatpush1.msra.mxu0 0.0
        %3446 = vmatprep.subr.mxu0 0.0
        %3447 = vmatpush1.msra.mxu0 0.0
        %3448 = vmatprep.subr.mxu0 0.0
        %3449 = vmatpush1.msra.mxu0 0.0
        %3450 = vmatprep.subr.mxu0 0.0
        %3451 = vmatpush1.msra.mxu0 0.0
        %3452 = vmatprep.subr.mxu0 0.0
        %3453 = vmatpush1.msra.mxu0 0.0
        %3454 = vmatprep.subr.mxu0 0.0
        %3455 = vmatpush1.msra.mxu0 0.0
        %3456 = vmatprep.subr.mxu0 0.0
        %3457 = vmatpush1.msra.mxu0 0.0
        %3458 = vmatprep.subr.mxu0 0.0
        %3459 = vmatpush1.msra.mxu0 0.0
        %3460 = vmatprep.subr.mxu0 0.0
        %3461 = vmatpush1.msra.mxu0 0.0
        %3462 = vmatprep.subr.mxu0 0.0
        %3463 = vmatpush1.msra.mxu0 0.0
        %3464 = vmatprep.subr.mxu0 0.0
        %3465 = vmatpush1.msra.mxu0 0.0
        %3466 = vmatprep.subr.mxu0 0.0
        %3467 = vmatpush1.msra.mxu0 0.0
        %3468 = vmatprep.subr.mxu0 0.0
        %3469 = vmatpush1.msra.mxu0 0.0
        %3470 = vmatprep.subr.mxu0 0.0
        %3471 = vmatpush1.msra.mxu0 0.0
        %3472 = vmatprep.subr.mxu0 0.0
        %3473 = vmatpush1.msra.mxu0 0.0
        %3474 = vmatprep.mubr.f32.mxu0 0.0
        %3475 = vmatmul.mubr.f32.gmra.mrb[0].mxu0 %v3392
        %v3476 = vpop.f32.mrb[0].mxu0
        %v3477 = vadd.f32 0.0, %v3476
        %v3478 = vpop.f32.mrb[0].mxu0
        %v3479 = vadd.f32 0.0, %v3478
        %3480 = vdwg.mxu0
        %3481 = vmatprep.subr.mxu0 %v3400
        %3482 = vmatpush1.msra.mxu0 %v3398
        %3483 = vmatprep.subr.mxu0 0.0
        %3484 = vmatpush1.msra.mxu0 0.0
        %3485 = vmatprep.subr.mxu0 0.0
        %3486 = vmatpush1.msra.mxu0 0.0
        %3487 = vmatprep.subr.mxu0 0.0
        %3488 = vmatpush1.msra.mxu0 0.0
        %3489 = vmatprep.subr.mxu0 0.0
        %3490 = vmatpush1.msra.mxu0 0.0
        %3491 = vmatprep.subr.mxu0 0.0
        %3492 = vmatpush1.msra.mxu0 0.0
        %3493 = vmatprep.subr.mxu0 0.0
        %3494 = vmatpush1.msra.mxu0 0.0
        %3495 = vmatprep.subr.mxu0 0.0
        %3496 = vmatpush1.msra.mxu0 0.0
        %3497 = vmatprep.subr.mxu0 0.0
        %3498 = vmatpush1.msra.mxu0 0.0
        %3499 = vmatprep.subr.mxu0 0.0
        %3500 = vmatpush1.msra.mxu0 0.0
        %3501 = vmatprep.subr.mxu0 0.0
        %3502 = vmatpush1.msra.mxu0 0.0
        %3503 = vmatprep.subr.mxu0 0.0
        %3504 = vmatpush1.msra.mxu0 0.0
        %3505 = vmatprep.subr.mxu0 0.0
        %3506 = vmatpush1.msra.mxu0 0.0
        %3507 = vmatprep.subr.mxu0 0.0
        %3508 = vmatpush1.msra.mxu0 0.0
        %3509 = vmatprep.subr.mxu0 0.0
        %3510 = vmatpush1.msra.mxu0 0.0
        %3511 = vmatprep.subr.mxu0 0.0
        %3512 = vmatpush1.msra.mxu0 0.0
        %3513 = vmatprep.subr.mxu0 0.0
        %3514 = vmatpush1.msra.mxu0 0.0
        %3515 = vmatprep.subr.mxu0 0.0
        %3516 = vmatpush1.msra.mxu0 0.0
        %3517 = vmatprep.subr.mxu0 0.0
        %3518 = vmatpush1.msra.mxu0 0.0
        %3519 = vmatprep.subr.mxu0 0.0
        %3520 = vmatpush1.msra.mxu0 0.0
        %3521 = vmatprep.subr.mxu0 0.0
        %3522 = vmatpush1.msra.mxu0 0.0
        %3523 = vmatprep.subr.mxu0 0.0
        %3524 = vmatpush1.msra.mxu0 0.0
        %3525 = vmatprep.subr.mxu0 0.0
        %3526 = vmatpush1.msra.mxu0 0.0
        %3527 = vmatprep.subr.mxu0 0.0
        %3528 = vmatpush1.msra.mxu0 0.0
        %3529 = vmatprep.subr.mxu0 0.0
        %3530 = vmatpush1.msra.mxu0 0.0
        %3531 = vmatprep.subr.mxu0 0.0
        %3532 = vmatpush1.msra.mxu0 0.0
        %3533 = vmatprep.subr.mxu0 0.0
        %3534 = vmatpush1.msra.mxu0 0.0
        %3535 = vmatprep.subr.mxu0 0.0
        %3536 = vmatpush1.msra.mxu0 0.0
        %3537 = vmatprep.subr.mxu0 0.0
        %3538 = vmatpush1.msra.mxu0 0.0
        %3539 = vmatprep.subr.mxu0 0.0
        %3540 = vmatpush1.msra.mxu0 0.0
        %3541 = vmatprep.subr.mxu0 0.0
        %3542 = vmatpush1.msra.mxu0 0.0
        %3543 = vmatprep.subr.mxu0 0.0
        %3544 = vmatpush1.msra.mxu0 0.0
        %3545 = vmatprep.mubr.f32.mxu0 0.0
        %3546 = vmatmul.mubr.f32.gmra.mrb[0].mxu0 %v3392
        %v3547 = vpop.f32.mrb[0].mxu0
        %v3548 = vadd.f32 0.0, %v3547
        %v3549 = vpop.f32.mrb[0].mxu0
        %v3550 = vadd.f32 0.0, %v3549
        %3551 = vdwg.mxu0
        %3552 = vmatprep.subr.mxu0 %v3404
        %3553 = vmatpush1.msra.mxu0 %v3402
        %3554 = vmatprep.subr.mxu0 0.0
        %3555 = vmatpush1.msra.mxu0 0.0
        %3556 = vmatprep.subr.mxu0 0.0
        %3557 = vmatpush1.msra.mxu0 0.0
        %3558 = vmatprep.subr.mxu0 0.0
        %3559 = vmatpush1.msra.mxu0 0.0
        %3560 = vmatprep.subr.mxu0 0.0
        %3561 = vmatpush1.msra.mxu0 0.0
        %3562 = vmatprep.subr.mxu0 0.0
        %3563 = vmatpush1.msra.mxu0 0.0
        %3564 = vmatprep.subr.mxu0 0.0
        %3565 = vmatpush1.msra.mxu0 0.0
        %3566 = vmatprep.subr.mxu0 0.0
        %3567 = vmatpush1.msra.mxu0 0.0
        %3568 = vmatprep.subr.mxu0 0.0
        %3569 = vmatpush1.msra.mxu0 0.0
        %3570 = vmatprep.subr.mxu0 0.0
        %3571 = vmatpush1.msra.mxu0 0.0
        %3572 = vmatprep.subr.mxu0 0.0
        %3573 = vmatpush1.msra.mxu0 0.0
        %3574 = vmatprep.subr.mxu0 0.0
        %3575 = vmatpush1.msra.mxu0 0.0
        %3576 = vmatprep.subr.mxu0 0.0
        %3577 = vmatpush1.msra.mxu0 0.0
        %3578 = vmatprep.subr.mxu0 0.0
        %3579 = vmatpush1.msra.mxu0 0.0
        %3580 = vmatprep.subr.mxu0 0.0
        %3581 = vmatpush1.msra.mxu0 0.0
        %3582 = vmatprep.subr.mxu0 0.0
        %3583 = vmatpush1.msra.mxu0 0.0
        %3584 = vmatprep.subr.mxu0 0.0
        %3585 = vmatpush1.msra.mxu0 0.0
        %3586 = vmatprep.subr.mxu0 0.0
        %3587 = vmatpush1.msra.mxu0 0.0
        %3588 = vmatprep.subr.mxu0 0.0
        %3589 = vmatpush1.msra.mxu0 0.0
        %3590 = vmatprep.subr.mxu0 0.0
        %3591 = vmatpush1.msra.mxu0 0.0
        %3592 = vmatprep.subr.mxu0 0.0
        %3593 = vmatpush1.msra.mxu0 0.0
        %3594 = vmatprep.subr.mxu0 0.0
        %3595 = vmatpush1.msra.mxu0 0.0
        %3596 = vmatprep.subr.mxu0 0.0
        %3597 = vmatpush1.msra.mxu0 0.0
        %3598 = vmatprep.subr.mxu0 0.0
        %3599 = vmatpush1.msra.mxu0 0.0
        %3600 = vmatprep.subr.mxu0 0.0
        %3601 = vmatpush1.msra.mxu0 0.0
        %3602 = vmatprep.subr.mxu0 0.0
        %3603 = vmatpush1.msra.mxu0 0.0
        %3604 = vmatprep.subr.mxu0 0.0
        %3605 = vmatpush1.msra.mxu0 0.0
        %3606 = vmatprep.subr.mxu0 0.0
        %3607 = vmatpush1.msra.mxu0 0.0
        %3608 = vmatprep.subr.mxu0 0.0
        %3609 = vmatpush1.msra.mxu0 0.0
        %3610 = vmatprep.subr.mxu0 0.0
        %3611 = vmatpush1.msra.mxu0 0.0
        %3612 = vmatprep.subr.mxu0 0.0
        %3613 = vmatpush1.msra.mxu0 0.0
        %3614 = vmatprep.subr.mxu0 0.0
        %3615 = vmatpush1.msra.mxu0 0.0
        %3616 = vmatprep.mubr.f32.mxu0 0.0
        %3617 = vmatmul.mubr.f32.gmra.mrb[0].mxu0 %v3392
        %v3618 = vpop.f32.mrb[0].mxu0
        %v3619 = vadd.f32 0.0, %v3618
        %v3620 = vpop.f32.mrb[0].mxu0
        %v3621 = vadd.f32 0.0, %v3620
        %3622 = vdwg.mxu0
        %3623 = vmatprep.subr.mxu0 %v3408
        %3624 = vmatpush1.msra.mxu0 %v3406
        %3625 = vmatprep.subr.mxu0 0.0
        %3626 = vmatpush1.msra.mxu0 0.0
        %3627 = vmatprep.subr.mxu0 0.0
        %3628 = vmatpush1.msra.mxu0 0.0
        %3629 = vmatprep.subr.mxu0 0.0
        %3630 = vmatpush1.msra.mxu0 0.0
        %3631 = vmatprep.subr.mxu0 0.0
        %3632 = vmatpush1.msra.mxu0 0.0
        %3633 = vmatprep.subr.mxu0 0.0
        %3634 = vmatpush1.msra.mxu0 0.0
        %3635 = vmatprep.subr.mxu0 0.0
        %3636 = vmatpush1.msra.mxu0 0.0
        %3637 = vmatprep.subr.mxu0 0.0
        %3638 = vmatpush1.msra.mxu0 0.0
        %3639 = vmatprep.subr.mxu0 0.0
        %3640 = vmatpush1.msra.mxu0 0.0
        %3641 = vmatprep.subr.mxu0 0.0
        %3642 = vmatpush1.msra.mxu0 0.0
        %3643 = vmatprep.subr.mxu0 0.0
        %3644 = vmatpush1.msra.mxu0 0.0
        %3645 = vmatprep.subr.mxu0 0.0
        %3646 = vmatpush1.msra.mxu0 0.0
        %3647 = vmatprep.subr.mxu0 0.0
        %3648 = vmatpush1.msra.mxu0 0.0
        %3649 = vmatprep.subr.mxu0 0.0
        %3650 = vmatpush1.msra.mxu0 0.0
        %3651 = vmatprep.subr.mxu0 0.0
        %3652 = vmatpush1.msra.mxu0 0.0
        %3653 = vmatprep.subr.mxu0 0.0
        %3654 = vmatpush1.msra.mxu0 0.0
        %3655 = vmatprep.subr.mxu0 0.0
        %3656 = vmatpush1.msra.mxu0 0.0
        %3657 = vmatprep.subr.mxu0 0.0
        %3658 = vmatpush1.msra.mxu0 0.0
        %3659 = vmatprep.subr.mxu0 0.0
        %3660 = vmatpush1.msra.mxu0 0.0
        %3661 = vmatprep.subr.mxu0 0.0
        %3662 = vmatpush1.msra.mxu0 0.0
        %3663 = vmatprep.subr.mxu0 0.0
        %3664 = vmatpush1.msra.mxu0 0.0
        %3665 = vmatprep.subr.mxu0 0.0
        %3666 = vmatpush1.msra.mxu0 0.0
        %3667 = vmatprep.subr.mxu0 0.0
        %3668 = vmatpush1.msra.mxu0 0.0
        %3669 = vmatprep.subr.mxu0 0.0
        %3670 = vmatpush1.msra.mxu0 0.0
        %3671 = vmatprep.subr.mxu0 0.0
        %3672 = vmatpush1.msra.mxu0 0.0
        %3673 = vmatprep.subr.mxu0 0.0
        %3674 = vmatpush1.msra.mxu0 0.0
        %3675 = vmatprep.subr.mxu0 0.0
        %3676 = vmatpush1.msra.mxu0 0.0
        %3677 = vmatprep.subr.mxu0 0.0
        %3678 = vmatpush1.msra.mxu0 0.0
        %3679 = vmatprep.subr.mxu0 0.0
        %3680 = vmatpush1.msra.mxu0 0.0
        %3681 = vmatprep.subr.mxu0 0.0
        %3682 = vmatpush1.msra.mxu0 0.0
        %3683 = vmatprep.subr.mxu0 0.0
        %3684 = vmatpush1.msra.mxu0 0.0
        %3685 = vmatprep.subr.mxu0 0.0
        %3686 = vmatpush1.msra.mxu0 0.0
        %3687 = vmatprep.mubr.f32.mxu0 0.0
        %3688 = vmatmul.mubr.f32.gmra.mrb[0].mxu0 %v3392
        %v3689 = vpop.f32.mrb[0].mxu0
        %v3690 = vadd.f32 0.0, %v3689
        %v3691 = vpop.f32.mrb[0].mxu0
        %v3692 = vadd.f32 0.0, %v3691
        %3693 = vdwg.mxu0
        %v3694 = vadd.f32 %v3306, %v3477
        %v3695 = vadd.f32 %v3307, %v3479
        %v3696 = vadd.f32 %v3308, %v3548
        %v3697 = vadd.f32 %v3309, %v3550
        %v3698 = vadd.f32 %v3310, %v3619
        %v3699 = vadd.f32 %v3311, %v3621
        %v3700 = vadd.f32 %v3312, %v3690
        %v3701 = vadd.f32 %v3313, %v3692
        %3702 = vrot.lane.b32.xlu0 %v1393, 33
        %v3703 = vpop.permute.xlu0 %3702
        %3704 = vrot.lane.b32.xlu0 %v1397, 33
        %v3705 = vpop.permute.xlu0 %3704
        %3706 = vrot.lane.b32.xlu0 %v1401, 33
        %v3707 = vpop.permute.xlu0 %3706
        %3708 = vrot.lane.b32.xlu0 %v1405, 33
        %v3709 = vpop.permute.xlu0 %3708
        %3710 = vrot.lane.b32.xlu0 %v1409, 33
        %v3711 = vpop.permute.xlu0 %3710
        %3712 = vrot.lane.b32.xlu0 %v1413, 33
        %v3713 = vpop.permute.xlu0 %3712
        %3714 = vrot.lane.b32.xlu0 %v1417, 33
        %v3715 = vpop.permute.xlu0 %3714
        %3716 = vrot.lane.b32.xlu0 %v1421, 33
        %v3717 = vpop.permute.xlu0 %3716
        %v3718 = vsel %vm1039, %v3703, %v3705
        %v3719 = vsel %vm1039, %v3705, %v3707
        %v3720 = vsel %vm1039, %v3707, %v3709
        %v3721 = vsel %vm1039, %v3709, %v3711
        %v3722 = vsel %vm1039, %v3711, %v3713
        %v3723 = vsel %vm1039, %v3713, %v3715
        %v3724 = vsel %vm1039, %v3715, %v3717
        %v3734 = vmul.f32 %v399, %v3703
        %v3735 = vmul.f32 %v413, %v3718
        %v3736 = vmul.f32 %v400, %v3719
        %v3737 = vmul.f32 %v414, %v3720
        %v3738 = vmul.f32 %v401, %v3721
        %v3739 = vmul.f32 %v415, %v3722
        %v3740 = vmul.f32 %v402, %v3723
        %v3741 = vmul.f32 %v416, %v3724
        %v3742 = vmul.f32 %v3717, 0.0
        %3743 = vrot.lane.b32.xlu0 %v403, 104
        %v3744 = vpop.permute.xlu0 %3743
        %3754 = vrot.lane.b32.xlu0 %v3734, 95
        %v3755 = vpop.permute.xlu0 %3754
        %3756 = vrot.lane.b32.xlu0 %v3735, 95
        %v3757 = vpop.permute.xlu0 %3756
        %3758 = vrot.lane.b32.xlu0 %v3736, 95
        %v3759 = vpop.permute.xlu0 %3758
        %3760 = vrot.lane.b32.xlu0 %v3737, 95
        %v3761 = vpop.permute.xlu0 %3760
        %3762 = vrot.lane.b32.xlu0 %v3738, 95
        %v3763 = vpop.permute.xlu0 %3762
        %3764 = vrot.lane.b32.xlu0 %v3739, 95
        %v3765 = vpop.permute.xlu0 %3764
        %3766 = vrot.lane.b32.xlu0 %v3740, 95
        %v3767 = vpop.permute.xlu0 %3766
        %3768 = vrot.lane.b32.xlu0 %v3741, 95
        %v3769 = vpop.permute.xlu0 %3768
        %3770 = vrot.lane.b32.xlu0 %v3742, 95
        %v3771 = vpop.permute.xlu0 %3770
        %v3772 = vsel %vm521, %v3755, %v3757
        %v3773 = vsel %vm521, %v3757, %v3759
        %v3774 = vsel %vm521, %v3759, %v3761
        %v3775 = vsel %vm521, %v3761, %v3763
        %v3776 = vsel %vm521, %v3763, %v3765
        %v3777 = vsel %vm521, %v3765, %v3767
        %v3778 = vsel %vm521, %v3767, %v3769
        %v3779 = vsel %vm521, %v3769, %v3771
        %v3780 = vsel %vm708, %v3744, 0
        %v3782 = vsel %vm711, %v3772, 0
        %v3784 = vsel %vm711, %v3773, 0
        %v3786 = vsel %vm711, %v3774, 0
        %v3788 = vsel %vm711, %v3775, 0
        %v3790 = vsel %vm711, %v3776, 0
        %v3792 = vsel %vm711, %v3777, 0
        %v3794 = vsel %vm711, %v3778, 0
        %v3796 = vsel %vm711, %v3779, 0
        %3798 = vmatprep.subr.mxu0 %v3784
        %3799 = vmatpush1.msra.mxu0 %v3782
        %3800 = vmatprep.subr.mxu0 0.0
        %3801 = vmatpush1.msra.mxu0 0.0
        %3802 = vmatprep.subr.mxu0 0.0
        %3803 = vmatpush1.msra.mxu0 0.0
        %3804 = vmatprep.subr.mxu0 0.0
        %3805 = vmatpush1.msra.mxu0 0.0
        %3806 = vmatprep.subr.mxu0 0.0
        %3807 = vmatpush1.msra.mxu0 0.0
        %3808 = vmatprep.subr.mxu0 0.0
        %3809 = vmatpush1.msra.mxu0 0.0
        %3810 = vmatprep.subr.mxu0 0.0
        %3811 = vmatpush1.msra.mxu0 0.0
        %3812 = vmatprep.subr.mxu0 0.0
        %3813 = vmatpush1.msra.mxu0 0.0
        %3814 = vmatprep.subr.mxu0 0.0
        %3815 = vmatpush1.msra.mxu0 0.0
        %3816 = vmatprep.subr.mxu0 0.0
        %3817 = vmatpush1.msra.mxu0 0.0
        %3818 = vmatprep.subr.mxu0 0.0
        %3819 = vmatpush1.msra.mxu0 0.0
        %3820 = vmatprep.subr.mxu0 0.0
        %3821 = vmatpush1.msra.mxu0 0.0
        %3822 = vmatprep.subr.mxu0 0.0
        %3823 = vmatpush1.msra.mxu0 0.0
        %3824 = vmatprep.subr.mxu0 0.0
        %3825 = vmatpush1.msra.mxu0 0.0
        %3826 = vmatprep.subr.mxu0 0.0
        %3827 = vmatpush1.msra.mxu0 0.0
        %3828 = vmatprep.subr.mxu0 0.0
        %3829 = vmatpush1.msra.mxu0 0.0
        %3830 = vmatprep.subr.mxu0 0.0
        %3831 = vmatpush1.msra.mxu0 0.0
        %3832 = vmatprep.subr.mxu0 0.0
        %3833 = vmatpush1.msra.mxu0 0.0
        %3834 = vmatprep.subr.mxu0 0.0
        %3835 = vmatpush1.msra.mxu0 0.0
        %3836 = vmatprep.subr.mxu0 0.0
        %3837 = vmatpush1.msra.mxu0 0.0
        %3838 = vmatprep.subr.mxu0 0.0
        %3839 = vmatpush1.msra.mxu0 0.0
        %3840 = vmatprep.subr.mxu0 0.0
        %3841 = vmatpush1.msra.mxu0 0.0
        %3842 = vmatprep.subr.mxu0 0.0
        %3843 = vmatpush1.msra.mxu0 0.0
        %3844 = vmatprep.subr.mxu0 0.0
        %3845 = vmatpush1.msra.mxu0 0.0
        %3846 = vmatprep.subr.mxu0 0.0
        %3847 = vmatpush1.msra.mxu0 0.0
        %3848 = vmatprep.subr.mxu0 0.0
        %3849 = vmatpush1.msra.mxu0 0.0
        %3850 = vmatprep.subr.mxu0 0.0
        %3851 = vmatpush1.msra.mxu0 0.0
        %3852 = vmatprep.subr.mxu0 0.0
        %3853 = vmatpush1.msra.mxu0 0.0
        %3854 = vmatprep.subr.mxu0 0.0
        %3855 = vmatpush1.msra.mxu0 0.0
        %3856 = vmatprep.subr.mxu0 0.0
        %3857 = vmatpush1.msra.mxu0 0.0
        %3858 = vmatprep.subr.mxu0 0.0
        %3859 = vmatpush1.msra.mxu0 0.0
        %3860 = vmatprep.subr.mxu0 0.0
        %3861 = vmatpush1.msra.mxu0 0.0
        %3862 = vmatprep.mubr.f32.mxu0 0.0
        %3863 = vmatmul.mubr.f32.gmra.mrb[0].mxu0 %v3780
        %v3864 = vpop.f32.mrb[0].mxu0
        %v3865 = vadd.f32 0.0, %v3864
        %v3866 = vpop.f32.mrb[0].mxu0
        %v3867 = vadd.f32 0.0, %v3866
        %3868 = vdwg.mxu0
        %3869 = vmatprep.subr.mxu0 %v3788
        %3870 = vmatpush1.msra.mxu0 %v3786
        %3871 = vmatprep.subr.mxu0 0.0
        %3872 = vmatpush1.msra.mxu0 0.0
        %3873 = vmatprep.subr.mxu0 0.0
        %3874 = vmatpush1.msra.mxu0 0.0
        %3875 = vmatprep.subr.mxu0 0.0
        %3876 = vmatpush1.msra.mxu0 0.0
        %3877 = vmatprep.subr.mxu0 0.0
        %3878 = vmatpush1.msra.mxu0 0.0
        %3879 = vmatprep.subr.mxu0 0.0
        %3880 = vmatpush1.msra.mxu0 0.0
        %3881 = vmatprep.subr.mxu0 0.0
        %3882 = vmatpush1.msra.mxu0 0.0
        %3883 = vmatprep.subr.mxu0 0.0
        %3884 = vmatpush1.msra.mxu0 0.0
        %3885 = vmatprep.subr.mxu0 0.0
        %3886 = vmatpush1.msra.mxu0 0.0
        %3887 = vmatprep.subr.mxu0 0.0
        %3888 = vmatpush1.msra.mxu0 0.0
        %3889 = vmatprep.subr.mxu0 0.0
        %3890 = vmatpush1.msra.mxu0 0.0
        %3891 = vmatprep.subr.mxu0 0.0
        %3892 = vmatpush1.msra.mxu0 0.0
        %3893 = vmatprep.subr.mxu0 0.0
        %3894 = vmatpush1.msra.mxu0 0.0
        %3895 = vmatprep.subr.mxu0 0.0
        %3896 = vmatpush1.msra.mxu0 0.0
        %3897 = vmatprep.subr.mxu0 0.0
        %3898 = vmatpush1.msra.mxu0 0.0
        %3899 = vmatprep.subr.mxu0 0.0
        %3900 = vmatpush1.msra.mxu0 0.0
        %3901 = vmatprep.subr.mxu0 0.0
        %3902 = vmatpush1.msra.mxu0 0.0
        %3903 = vmatprep.subr.mxu0 0.0
        %3904 = vmatpush1.msra.mxu0 0.0
        %3905 = vmatprep.subr.mxu0 0.0
        %3906 = vmatpush1.msra.mxu0 0.0
        %3907 = vmatprep.subr.mxu0 0.0
        %3908 = vmatpush1.msra.mxu0 0.0
        %3909 = vmatprep.subr.mxu0 0.0
        %3910 = vmatpush1.msra.mxu0 0.0
        %3911 = vmatprep.subr.mxu0 0.0
        %3912 = vmatpush1.msra.mxu0 0.0
        %3913 = vmatprep.subr.mxu0 0.0
        %3914 = vmatpush1.msra.mxu0 0.0
        %3915 = vmatprep.subr.mxu0 0.0
        %3916 = vmatpush1.msra.mxu0 0.0
        %3917 = vmatprep.subr.mxu0 0.0
        %3918 = vmatpush1.msra.mxu0 0.0
        %3919 = vmatprep.subr.mxu0 0.0
        %3920 = vmatpush1.msra.mxu0 0.0
        %3921 = vmatprep.subr.mxu0 0.0
        %3922 = vmatpush1.msra.mxu0 0.0
        %3923 = vmatprep.subr.mxu0 0.0
        %3924 = vmatpush1.msra.mxu0 0.0
        %3925 = vmatprep.subr.mxu0 0.0
        %3926 = vmatpush1.msra.mxu0 0.0
        %3927 = vmatprep.subr.mxu0 0.0
        %3928 = vmatpush1.msra.mxu0 0.0
        %3929 = vmatprep.subr.mxu0 0.0
        %3930 = vmatpush1.msra.mxu0 0.0
        %3931 = vmatprep.subr.mxu0 0.0
        %3932 = vmatpush1.msra.mxu0 0.0
        %3933 = vmatprep.mubr.f32.mxu0 0.0
        %3934 = vmatmul.mubr.f32.gmra.mrb[0].mxu0 %v3780
        %v3935 = vpop.f32.mrb[0].mxu0
        %v3936 = vadd.f32 0.0, %v3935
        %v3937 = vpop.f32.mrb[0].mxu0
        %v3938 = vadd.f32 0.0, %v3937
        %3939 = vdwg.mxu0
        %3940 = vmatprep.subr.mxu0 %v3792
        %3941 = vmatpush1.msra.mxu0 %v3790
        %3942 = vmatprep.subr.mxu0 0.0
        %3943 = vmatpush1.msra.mxu0 0.0
        %3944 = vmatprep.subr.mxu0 0.0
        %3945 = vmatpush1.msra.mxu0 0.0
        %3946 = vmatprep.subr.mxu0 0.0
        %3947 = vmatpush1.msra.mxu0 0.0
        %3948 = vmatprep.subr.mxu0 0.0
        %3949 = vmatpush1.msra.mxu0 0.0
        %3950 = vmatprep.subr.mxu0 0.0
        %3951 = vmatpush1.msra.mxu0 0.0
        %3952 = vmatprep.subr.mxu0 0.0
        %3953 = vmatpush1.msra.mxu0 0.0
        %3954 = vmatprep.subr.mxu0 0.0
        %3955 = vmatpush1.msra.mxu0 0.0
        %3956 = vmatprep.subr.mxu0 0.0
        %3957 = vmatpush1.msra.mxu0 0.0
        %3958 = vmatprep.subr.mxu0 0.0
        %3959 = vmatpush1.msra.mxu0 0.0
        %3960 = vmatprep.subr.mxu0 0.0
        %3961 = vmatpush1.msra.mxu0 0.0
        %3962 = vmatprep.subr.mxu0 0.0
        %3963 = vmatpush1.msra.mxu0 0.0
        %3964 = vmatprep.subr.mxu0 0.0
        %3965 = vmatpush1.msra.mxu0 0.0
        %3966 = vmatprep.subr.mxu0 0.0
        %3967 = vmatpush1.msra.mxu0 0.0
        %3968 = vmatprep.subr.mxu0 0.0
        %3969 = vmatpush1.msra.mxu0 0.0
        %3970 = vmatprep.subr.mxu0 0.0
        %3971 = vmatpush1.msra.mxu0 0.0
        %3972 = vmatprep.subr.mxu0 0.0
        %3973 = vmatpush1.msra.mxu0 0.0
        %3974 = vmatprep.subr.mxu0 0.0
        %3975 = vmatpush1.msra.mxu0 0.0
        %3976 = vmatprep.subr.mxu0 0.0
        %3977 = vmatpush1.msra.mxu0 0.0
        %3978 = vmatprep.subr.mxu0 0.0
        %3979 = vmatpush1.msra.mxu0 0.0
        %3980 = vmatprep.subr.mxu0 0.0
        %3981 = vmatpush1.msra.mxu0 0.0
        %3982 = vmatprep.subr.mxu0 0.0
        %3983 = vmatpush1.msra.mxu0 0.0
        %3984 = vmatprep.subr.mxu0 0.0
        %3985 = vmatpush1.msra.mxu0 0.0
        %3986 = vmatprep.subr.mxu0 0.0
        %3987 = vmatpush1.msra.mxu0 0.0
        %3988 = vmatprep.subr.mxu0 0.0
        %3989 = vmatpush1.msra.mxu0 0.0
        %3990 = vmatprep.subr.mxu0 0.0
        %3991 = vmatpush1.msra.mxu0 0.0
        %3992 = vmatprep.subr.mxu0 0.0
        %3993 = vmatpush1.msra.mxu0 0.0
        %3994 = vmatprep.subr.mxu0 0.0
        %3995 = vmatpush1.msra.mxu0 0.0
        %3996 = vmatprep.subr.mxu0 0.0
        %3997 = vmatpush1.msra.mxu0 0.0
        %3998 = vmatprep.subr.mxu0 0.0
        %3999 = vmatpush1.msra.mxu0 0.0
        %4000 = vmatprep.subr.mxu0 0.0
        %4001 = vmatpush1.msra.mxu0 0.0
        %4002 = vmatprep.subr.mxu0 0.0
        %4003 = vmatpush1.msra.mxu0 0.0
        %4004 = vmatprep.mubr.f32.mxu0 0.0
        %4005 = vmatmul.mubr.f32.gmra.mrb[0].mxu0 %v3780
        %v4006 = vpop.f32.mrb[0].mxu0
        %v4007 = vadd.f32 0.0, %v4006
        %v4008 = vpop.f32.mrb[0].mxu0
        %v4009 = vadd.f32 0.0, %v4008
        %4010 = vdwg.mxu0
        %4011 = vmatprep.subr.mxu0 %v3796
        %4012 = vmatpush1.msra.mxu0 %v3794
        %4013 = vmatprep.subr.mxu0 0.0
        %4014 = vmatpush1.msra.mxu0 0.0
        %4015 = vmatprep.subr.mxu0 0.0
        %4016 = vmatpush1.msra.mxu0 0.0
        %4017 = vmatprep.subr.mxu0 0.0
        %4018 = vmatpush1.msra.mxu0 0.0
        %4019 = vmatprep.subr.mxu0 0.0
        %4020 = vmatpush1.msra.mxu0 0.0
        %4021 = vmatprep.subr.mxu0 0.0
        %4022 = vmatpush1.msra.mxu0 0.0
        %4023 = vmatprep.subr.mxu0 0.0
        %4024 = vmatpush1.msra.mxu0 0.0
        %4025 = vmatprep.subr.mxu0 0.0
        %4026 = vmatpush1.msra.mxu0 0.0
        %4027 = vmatprep.subr.mxu0 0.0
        %4028 = vmatpush1.msra.mxu0 0.0
        %4029 = vmatprep.subr.mxu0 0.0
        %4030 = vmatpush1.msra.mxu0 0.0
        %4031 = vmatprep.subr.mxu0 0.0
        %4032 = vmatpush1.msra.mxu0 0.0
        %4033 = vmatprep.subr.mxu0 0.0
        %4034 = vmatpush1.msra.mxu0 0.0
        %4035 = vmatprep.subr.mxu0 0.0
        %4036 = vmatpush1.msra.mxu0 0.0
        %4037 = vmatprep.subr.mxu0 0.0
        %4038 = vmatpush1.msra.mxu0 0.0
        %4039 = vmatprep.subr.mxu0 0.0
        %4040 = vmatpush1.msra.mxu0 0.0
        %4041 = vmatprep.subr.mxu0 0.0
        %4042 = vmatpush1.msra.mxu0 0.0
        %4043 = vmatprep.subr.mxu0 0.0
        %4044 = vmatpush1.msra.mxu0 0.0
        %4045 = vmatprep.subr.mxu0 0.0
        %4046 = vmatpush1.msra.mxu0 0.0
        %4047 = vmatprep.subr.mxu0 0.0
        %4048 = vmatpush1.msra.mxu0 0.0
        %4049 = vmatprep.subr.mxu0 0.0
        %4050 = vmatpush1.msra.mxu0 0.0
        %4051 = vmatprep.subr.mxu0 0.0
        %4052 = vmatpush1.msra.mxu0 0.0
        %4053 = vmatprep.subr.mxu0 0.0
        %4054 = vmatpush1.msra.mxu0 0.0
        %4055 = vmatprep.subr.mxu0 0.0
        %4056 = vmatpush1.msra.mxu0 0.0
        %4057 = vmatprep.subr.mxu0 0.0
        %4058 = vmatpush1.msra.mxu0 0.0
        %4059 = vmatprep.subr.mxu0 0.0
        %4060 = vmatpush1.msra.mxu0 0.0
        %4061 = vmatprep.subr.mxu0 0.0
        %4062 = vmatpush1.msra.mxu0 0.0
        %4063 = vmatprep.subr.mxu0 0.0
        %4064 = vmatpush1.msra.mxu0 0.0
        %4065 = vmatprep.subr.mxu0 0.0
        %4066 = vmatpush1.msra.mxu0 0.0
        %4067 = vmatprep.subr.mxu0 0.0
        %4068 = vmatpush1.msra.mxu0 0.0
        %4069 = vmatprep.subr.mxu0 0.0
        %4070 = vmatpush1.msra.mxu0 0.0
        %4071 = vmatprep.subr.mxu0 0.0
        %4072 = vmatpush1.msra.mxu0 0.0
        %4073 = vmatprep.subr.mxu0 0.0
        %4074 = vmatpush1.msra.mxu0 0.0
        %4075 = vmatprep.mubr.f32.mxu0 0.0
        %4076 = vmatmul.mubr.f32.gmra.mrb[0].mxu0 %v3780
        %v4077 = vpop.f32.mrb[0].mxu0
        %v4078 = vadd.f32 0.0, %v4077
        %v4079 = vpop.f32.mrb[0].mxu0
        %v4080 = vadd.f32 0.0, %v4079
        %4081 = vdwg.mxu0
        %v4082 = vadd.f32 %v3694, %v3865
        %v4083 = vadd.f32 %v3695, %v3867
        %v4084 = vadd.f32 %v3696, %v3936
        %v4085 = vadd.f32 %v3697, %v3938
        %v4086 = vadd.f32 %v3698, %v4007
        %v4087 = vadd.f32 %v3699, %v4009
        %v4088 = vadd.f32 %v3700, %v4078
        %v4089 = vadd.f32 %v3701, %v4080
        %4091 = vset.pattern.permute.xlu0 0
        %4092 = vperm.xlu0 %4091, %v404
        %v4093 = vpop.permute.xlu0 %4092
        %v4095 = vadd.f32 %v4082, %v4093
        %v4096 = vadd.f32 %v4083, %v4093
        %v4097 = vadd.f32 %v4084, %v4093
        %v4098 = vadd.f32 %v4085, %v4093
        %v4099 = vadd.f32 %v4086, %v4093
        %v4100 = vadd.f32 %v4087, %v4093
        %v4101 = vadd.f32 %v4088, %v4093
        %v4102 = vadd.f32 %v4089, %v4093
        %v4103 = vmax.f32 %v4095, 0.0
        %v4104 = vmax.f32 %v4096, 0.0
        %v4105 = vmax.f32 %v4097, 0.0
        %v4106 = vmax.f32 %v4098, 0.0
        %v4107 = vmax.f32 %v4099, 0.0
        %v4108 = vmax.f32 %v4100, 0.0
        %v4109 = vmax.f32 %v4101, 0.0
        %v4110 = vmax.f32 %v4102, 0.0
        %v4111 = vld [vmem:[#allocation2] sm:$0xff]
        %v4112 = vld [vmem:[#allocation2 + $0x8] sm:$0xff]
        %v4113 = vld [vmem:[#allocation2 + $0x10] sm:$0xff]
        %v4114 = vld [vmem:[#allocation2 + $0x18] sm:$0xff]
        %v4115 = vld [vmem:[#allocation2 + $0x20] sm:$0xff]
        %v4116 = vld [vmem:[#allocation2 + $0x28] sm:$0xff]
        %v4117 = vld [vmem:[#allocation2 + $0x30] sm:$0xff]
        %v4118 = vld [vmem:[#allocation2 + $0x38] sm:$0xff]
        %v4119 = vld [vmem:[#allocation2 + $0x40] sm:$0xff]
        %v4120 = vld [vmem:[#allocation2 + $0x48] sm:$0xff]
        %v4121 = vld [vmem:[#allocation2 + $0x50] sm:$0xff]
        %v4122 = vld [vmem:[#allocation2 + $0x58] sm:$0xff]
        %v4123 = vld [vmem:[#allocation2 + $0x60] sm:$0xff]
        %v4124 = vld [vmem:[#allocation2 + $0x68] sm:$0xff]
        %v4125 = vld [vmem:[#allocation2 + $0x70] sm:$0xff]
        %v4126 = vld [vmem:[#allocation2 + $0x78] sm:$0xff]
        %v4127 = vld [vmem:[#allocation2 + $0x80] sm:$0xff]
        %v4128 = vld [vmem:[#allocation2 + $0x88] sm:$0xff]
        %v4129 = vld [vmem:[#allocation2 + $0x90] sm:$0xff]
        %v4130 = vld [vmem:[#allocation2 + $0x98] sm:$0xff]
        %v4131 = vld [vmem:[#allocation2 + $0xa0] sm:$0xff]
        %v4132 = vld [vmem:[#allocation2 + $0xa8] sm:$0xff]
        %v4133 = vld [vmem:[#allocation2 + $0xb0] sm:$0xff]
        %v4134 = vld [vmem:[#allocation2 + $0xb8] sm:$0xff]
        %v4135 = vld [vmem:[#allocation2 + $0xc0] sm:$0xff]
        %v4136 = vld [vmem:[#allocation2 + $0xc8] sm:$0xff]
        %v4137 = vld [vmem:[#allocation2 + $0xd0] sm:$0xff]
        %v4138 = vld [vmem:[#allocation2 + $0xd8] sm:$0xff]
        %v4139 = vld [vmem:[#allocation2 + $0xe0] sm:$0xff]
        %v4140 = vld [vmem:[#allocation2 + $0xe8] sm:$0xff]
        %v4141 = vld [vmem:[#allocation2 + $0xf0] sm:$0xff]
        %v4142 = vld [vmem:[#allocation2 + $0xf8] sm:$0xff]
        %v4143 = vld [vmem:[#allocation2 + $0x100] sm:$0xff]
        %v4144 = vld [vmem:[#allocation2 + $0x108] sm:$0xff]
        %v4145 = vld [vmem:[#allocation2 + $0x110] sm:$0xff]
        %v4146 = vld [vmem:[#allocation2 + $0x118] sm:$0xff]
        %v4147 = vld [vmem:[#allocation2 + $0x120] sm:$0xff]
        %v4148 = vld [vmem:[#allocation2 + $0x128] sm:$0xff]
        %v4149 = vld [vmem:[#allocation2 + $0x130] sm:$0xff]
        %v4150 = vld [vmem:[#allocation2 + $0x138] sm:$0xff]
        %v4151 = vld [vmem:[#allocation2 + $0x140] sm:$0xff]
        %v4152 = vld [vmem:[#allocation2 + $0x148] sm:$0xff]
        %v4153 = vld [vmem:[#allocation2 + $0x150] sm:$0xff]
        %v4154 = vld [vmem:[#allocation2 + $0x158] sm:$0xff]
        %v4155 = vld [vmem:[#allocation2 + $0x160] sm:$0xff]
        %v4156 = vld [vmem:[#allocation2 + $0x168] sm:$0xff]
        %v4157 = vld [vmem:[#allocation2 + $0x170] sm:$0xff]
        %v4158 = vld [vmem:[#allocation2 + $0x178] sm:$0xff]
        %v4159 = vld [vmem:[#allocation2 + $0x180] sm:$0xff]
        %v4160 = vld [vmem:[#allocation2 + $0x188] sm:$0xff]
        %v4161 = vld [vmem:[#allocation2 + $0x190] sm:$0xff]
        %v4162 = vld [vmem:[#allocation2 + $0x198] sm:$0xff]
        %v4163 = vld [vmem:[#allocation2 + $0x1a0] sm:$0xff]
        %v4164 = vld [vmem:[#allocation2 + $0x1a8] sm:$0xff]
        %v4165 = vld [vmem:[#allocation2 + $0x1b0] sm:$0xff]
        %v4166 = vld [vmem:[#allocation2 + $0x1b8] sm:$0xff]
        %v4167 = vld [vmem:[#allocation2 + $0x1c0] sm:$0xff]
        %v4168 = vld [vmem:[#allocation2 + $0x1c8] sm:$0xff]
        %v4169 = vld [vmem:[#allocation2 + $0x1d0] sm:$0xff]
        %v4170 = vld [vmem:[#allocation2 + $0x1d8] sm:$0xff]
        %v4171 = vld [vmem:[#allocation2 + $0x1e0] sm:$0xff]
        %v4172 = vld [vmem:[#allocation2 + $0x1e8] sm:$0xff]
        %v4173 = vld [vmem:[#allocation2 + $0x1f0] sm:$0xff]
        %v4174 = vld [vmem:[#allocation2 + $0x1f8] sm:$0xff]
        %v4175 = vld [vmem:[#allocation2 + $0x200] sm:$0xff]
        %v4176 = vld [vmem:[#allocation2 + $0x208] sm:$0xff]
        %v4177 = vld [vmem:[#allocation2 + $0x210] sm:$0xff]
        %v4178 = vld [vmem:[#allocation2 + $0x218] sm:$0xff]
        %v4179 = vld [vmem:[#allocation2 + $0x220] sm:$0xff]
        %v4180 = vld [vmem:[#allocation2 + $0x228] sm:$0xff]
        %v4181 = vld [vmem:[#allocation2 + $0x230] sm:$0xff]
        %v4182 = vld [vmem:[#allocation2 + $0x238] sm:$0xff]
        %v4183 = vld [vmem:[#allocation2 + $0x240] sm:$0xff]
        %v4184 = vld [vmem:[#allocation2 + $0x248] sm:$0xff]
        %v4185 = vld [vmem:[#allocation2 + $0x250] sm:$0xff]
        %v4186 = vld [vmem:[#allocation2 + $0x258] sm:$0xff]
        %v4187 = vld [vmem:[#allocation2 + $0x260] sm:$0xff]
        %v4188 = vld [vmem:[#allocation2 + $0x268] sm:$0xff]
        %v4189 = vld [vmem:[#allocation2 + $0x270] sm:$0xff]
        %v4190 = vld [vmem:[#allocation2 + $0x278] sm:$0xff]
        %v4191 = vld [vmem:[#allocation2 + $0x280] sm:$0xff]
        %v4192 = vld [vmem:[#allocation2 + $0x288] sm:$0xff]
        %v4193 = vld [vmem:[#allocation2 + $0x290] sm:$0xff]
        %v4194 = vld [vmem:[#allocation2 + $0x298] sm:$0xff]
        %v4195 = vld [vmem:[#allocation2 + $0x2a0] sm:$0xff]
        %v4196 = vld [vmem:[#allocation2 + $0x2a8] sm:$0xff]
        %v4197 = vld [vmem:[#allocation2 + $0x2b0] sm:$0xff]
        %v4198 = vld [vmem:[#allocation2 + $0x2b8] sm:$0xff]
        %v4199 = vld [vmem:[#allocation2 + $0x2c0] sm:$0xff]
        %v4200 = vld [vmem:[#allocation2 + $0x2c8] sm:$0xff]
        %v4201 = vld [vmem:[#allocation2 + $0x2d0] sm:$0xff]
        %v4202 = vld [vmem:[#allocation2 + $0x2d8] sm:$0xff]
        %v4203 = vld [vmem:[#allocation2 + $0x2e0] sm:$0xff]
        %v4204 = vld [vmem:[#allocation2 + $0x2e8] sm:$0xff]
        %v4205 = vld [vmem:[#allocation2 + $0x2f0] sm:$0xff]
        %v4206 = vld [vmem:[#allocation2 + $0x2f8] sm:$0xff]
        %v4207 = vld [vmem:[#allocation2 + $0x300] sm:$0xff]
        %v4208 = vld [vmem:[#allocation2 + $0x308] sm:$0xff]
        %v4209 = vld [vmem:[#allocation2 + $0x310] sm:$0xff]
        %v4210 = vld [vmem:[#allocation2 + $0x318] sm:$0xff]
        %v4211 = vld [vmem:[#allocation2 + $0x320] sm:$0xff]
        %v4212 = vld [vmem:[#allocation2 + $0x328] sm:$0xff]
        %v4213 = vld [vmem:[#allocation2 + $0x330] sm:$0xff]
        %v4214 = vld [vmem:[#allocation2 + $0x338] sm:$0xff]
        %v4215 = vld [vmem:[#allocation2 + $0x340] sm:$0xff]
        %v4216 = vld [vmem:[#allocation2 + $0x348] sm:$0xff]
        %v4217 = vld [vmem:[#allocation2 + $0x350] sm:$0xff]
        %v4218 = vld [vmem:[#allocation2 + $0x358] sm:$0xff]
        %v4219 = vld [vmem:[#allocation2 + $0x360] sm:$0xff]
        %v4220 = vld [vmem:[#allocation2 + $0x368] sm:$0xff]
        %v4221 = vld [vmem:[#allocation2 + $0x370] sm:$0xff]
        %v4222 = vld [vmem:[#allocation2 + $0x378] sm:$0xff]
        %v4223 = vld [vmem:[#allocation2 + $0x380] sm:$0xff]
        %v4224 = vld [vmem:[#allocation2 + $0x388] sm:$0xff]
        %v4225 = vld [vmem:[#allocation2 + $0x390] sm:$0xff]
        %v4226 = vld [vmem:[#allocation2 + $0x398] sm:$0xff]
        %v4227 = vld [vmem:[#allocation2 + $0x3a0] sm:$0xff]
        %v4228 = vld [vmem:[#allocation2 + $0x3a8] sm:$0xff]
        %v4229 = vld [vmem:[#allocation2 + $0x3b0] sm:$0xff]
        %v4230 = vld [vmem:[#allocation2 + $0x3b8] sm:$0xff]
        %v4231 = vld [vmem:[#allocation2 + $0x3c0] sm:$0xff]
        %v4232 = vld [vmem:[#allocation2 + $0x3c8] sm:$0xff]
        %v4233 = vld [vmem:[#allocation2 + $0x3d0] sm:$0xff]
        %v4234 = vld [vmem:[#allocation2 + $0x3d8] sm:$0xff]
        %v4235 = vld [vmem:[#allocation2 + $0x3e0] sm:$0xff]
        %v4236 = vld [vmem:[#allocation2 + $0x3e8] sm:$0xff]
        %v4237 = vld [vmem:[#allocation2 + $0x3f0] sm:$0xff]
        %v4238 = vld [vmem:[#allocation2 + $0x3f8] sm:$0xff]
        %v4239 = vld [vmem:[#allocation2 + $0x400] sm:$0xff]
        %v4240 = vld [vmem:[#allocation2 + $0x408] sm:$0xff]
        %v4241 = vld [vmem:[#allocation2 + $0x410] sm:$0xff]
        %v4242 = vld [vmem:[#allocation2 + $0x418] sm:$0xff]
        %v4243 = vld [vmem:[#allocation2 + $0x420] sm:$0xff]
        %v4244 = vld [vmem:[#allocation2 + $0x428] sm:$0xff]
        %v4245 = vld [vmem:[#allocation2 + $0x430] sm:$0xff]
        %v4246 = vld [vmem:[#allocation2 + $0x438] sm:$0xff]
        %v4247 = vld [vmem:[#allocation2 + $0x440] sm:$0xff]
        %v4248 = vld [vmem:[#allocation2 + $0x448] sm:$0xff]
        %v4249 = vld [vmem:[#allocation2 + $0x450] sm:$0xff]
        %v4250 = vld [vmem:[#allocation2 + $0x458] sm:$0xff]
        %v4251 = vld [vmem:[#allocation2 + $0x460] sm:$0xff]
        %v4252 = vld [vmem:[#allocation2 + $0x468] sm:$0xff]
        %v4253 = vld [vmem:[#allocation2 + $0x470] sm:$0xff]
        %v4254 = vld [vmem:[#allocation2 + $0x478] sm:$0xff]
        %v4255 = vld [vmem:[#allocation2 + $0x480] sm:$0xff]
        %v4256 = vld [vmem:[#allocation2 + $0x488] sm:$0xff]
        %v4257 = vld [vmem:[#allocation2 + $0x490] sm:$0xff]
        %v4258 = vld [vmem:[#allocation2 + $0x498] sm:$0xff]
        %v4259 = vld [vmem:[#allocation2 + $0x4a0] sm:$0xff]
        %v4260 = vld [vmem:[#allocation2 + $0x4a8] sm:$0xff]
        %v4261 = vld [vmem:[#allocation2 + $0x4b0] sm:$0xff]
        %v4262 = vld [vmem:[#allocation2 + $0x4b8] sm:$0xff]
        %v4263 = vld [vmem:[#allocation2 + $0x4c0] sm:$0xff]
        %v4264 = vld [vmem:[#allocation2 + $0x4c8] sm:$0xff]
        %v4265 = vld [vmem:[#allocation2 + $0x4d0] sm:$0xff]
        %v4266 = vld [vmem:[#allocation2 + $0x4d8] sm:$0xff]
        %v4267 = vld [vmem:[#allocation2 + $0x4e0] sm:$0xff]
        %v4268 = vld [vmem:[#allocation2 + $0x4e8] sm:$0xff]
        %v4269 = vld [vmem:[#allocation2 + $0x4f0] sm:$0xff]
        %v4270 = vld [vmem:[#allocation2 + $0x4f8] sm:$0xff]
        %v4271 = vld [vmem:[#allocation2 + $0x500] sm:$0xff]
        %v4272 = vld [vmem:[#allocation2 + $0x508] sm:$0xff]
        %v4273 = vld [vmem:[#allocation2 + $0x510] sm:$0xff]
        %v4274 = vld [vmem:[#allocation2 + $0x518] sm:$0xff]
        %v4275 = vld [vmem:[#allocation2 + $0x520] sm:$0xff]
        %v4276 = vld [vmem:[#allocation2 + $0x528] sm:$0xff]
        %v4277 = vld [vmem:[#allocation2 + $0x530] sm:$0xff]
        %v4278 = vld [vmem:[#allocation2 + $0x538] sm:$0xff]
        %v4279 = vld [vmem:[#allocation2 + $0x540] sm:$0xff]
        %v4280 = vld [vmem:[#allocation2 + $0x548] sm:$0xff]
        %v4281 = vld [vmem:[#allocation2 + $0x550] sm:$0xff]
        %v4282 = vld [vmem:[#allocation2 + $0x558] sm:$0xff]
        %v4283 = vld [vmem:[#allocation2 + $0x560] sm:$0xff]
        %v4284 = vld [vmem:[#allocation2 + $0x568] sm:$0xff]
        %v4285 = vld [vmem:[#allocation2 + $0x570] sm:$0xff]
        %v4286 = vld [vmem:[#allocation2 + $0x578] sm:$0xff]
        %v4287 = vld [vmem:[#allocation2 + $0x580] sm:$0xff]
        %v4288 = vld [vmem:[#allocation2 + $0x588] sm:$0xff]
        %v4289 = vld [vmem:[#allocation2 + $0x590] sm:$0xff]
        %v4290 = vld [vmem:[#allocation2 + $0x598] sm:$0xff]
        %v4291 = vld [vmem:[#allocation2 + $0x5a0] sm:$0xff]
        %v4292 = vld [vmem:[#allocation2 + $0x5a8] sm:$0xff]
        %v4293 = vld [vmem:[#allocation2 + $0x5b0] sm:$0xff]
        %v4294 = vld [vmem:[#allocation2 + $0x5b8] sm:$0xff]
        %v4295 = vld [vmem:[#allocation2 + $0x5c0] sm:$0xff]
        %v4296 = vld [vmem:[#allocation2 + $0x5c8] sm:$0xff]
        %v4297 = vld [vmem:[#allocation2 + $0x5d0] sm:$0xff]
        %v4298 = vld [vmem:[#allocation2 + $0x5d8] sm:$0xff]
        %v4299 = vld [vmem:[#allocation2 + $0x5e0] sm:$0xff]
        %v4300 = vld [vmem:[#allocation2 + $0x5e8] sm:$0xff]
        %v4301 = vld [vmem:[#allocation2 + $0x5f0] sm:$0xff]
        %v4302 = vld [vmem:[#allocation2 + $0x5f8] sm:$0xff]
        %v4303 = vld [vmem:[#allocation2 + $0x600] sm:$0xff]
        %v4304 = vld [vmem:[#allocation2 + $0x608] sm:$0xff]
        %v4305 = vld [vmem:[#allocation2 + $0x610] sm:$0xff]
        %v4306 = vld [vmem:[#allocation2 + $0x618] sm:$0xff]
        %v4307 = vld [vmem:[#allocation2 + $0x620] sm:$0xff]
        %v4308 = vld [vmem:[#allocation2 + $0x628] sm:$0xff]
        %v4309 = vld [vmem:[#allocation2 + $0x630] sm:$0xff]
        %v4310 = vld [vmem:[#allocation2 + $0x638] sm:$0xff]
        %v4311 = vld [vmem:[#allocation2 + $0x640] sm:$0xff]
        %v4312 = vld [vmem:[#allocation2 + $0x648] sm:$0xff]
        %v4313 = vld [vmem:[#allocation2 + $0x650] sm:$0xff]
        %v4314 = vld [vmem:[#allocation2 + $0x658] sm:$0xff]
        %v4315 = vld [vmem:[#allocation2 + $0x660] sm:$0xff]
        %v4316 = vld [vmem:[#allocation2 + $0x668] sm:$0xff]
        %v4317 = vld [vmem:[#allocation2 + $0x670] sm:$0xff]
        %v4318 = vld [vmem:[#allocation2 + $0x678] sm:$0xff]
        %v4319 = vld [vmem:[#allocation2 + $0x680] sm:$0xff]
        %v4320 = vld [vmem:[#allocation2 + $0x688] sm:$0xff]
        %v4321 = vld [vmem:[#allocation2 + $0x690] sm:$0xff]
        %v4322 = vld [vmem:[#allocation2 + $0x698] sm:$0xff]
        %v4323 = vld [vmem:[#allocation2 + $0x6a0] sm:$0xff]
        %v4324 = vld [vmem:[#allocation2 + $0x6a8] sm:$0xff]
        %v4325 = vld [vmem:[#allocation2 + $0x6b0] sm:$0xff]
        %v4326 = vld [vmem:[#allocation2 + $0x6b8] sm:$0xff]
        %v4327 = vld [vmem:[#allocation2 + $0x6c0] sm:$0xff]
        %v4328 = vld [vmem:[#allocation2 + $0x6c8] sm:$0xff]
        %v4329 = vld [vmem:[#allocation2 + $0x6d0] sm:$0xff]
        %v4330 = vld [vmem:[#allocation2 + $0x6d8] sm:$0xff]
        %v4331 = vld [vmem:[#allocation2 + $0x6e0] sm:$0xff]
        %v4332 = vld [vmem:[#allocation2 + $0x6e8] sm:$0xff]
        %v4333 = vld [vmem:[#allocation2 + $0x6f0] sm:$0xff]
        %v4334 = vld [vmem:[#allocation2 + $0x6f8] sm:$0xff]
        %v4335 = vld [vmem:[#allocation2 + $0x700] sm:$0xff]
        %v4336 = vld [vmem:[#allocation2 + $0x708] sm:$0xff]
        %v4337 = vld [vmem:[#allocation2 + $0x710] sm:$0xff]
        %v4338 = vld [vmem:[#allocation2 + $0x718] sm:$0xff]
        %v4339 = vld [vmem:[#allocation2 + $0x720] sm:$0xff]
        %v4340 = vld [vmem:[#allocation2 + $0x728] sm:$0xff]
        %v4341 = vld [vmem:[#allocation2 + $0x730] sm:$0xff]
        %v4342 = vld [vmem:[#allocation2 + $0x738] sm:$0xff]
        %v4343 = vld [vmem:[#allocation2 + $0x740] sm:$0xff]
        %v4344 = vld [vmem:[#allocation2 + $0x748] sm:$0xff]
        %v4345 = vld [vmem:[#allocation2 + $0x750] sm:$0xff]
        %v4346 = vld [vmem:[#allocation2 + $0x758] sm:$0xff]
        %v4347 = vld [vmem:[#allocation2 + $0x760] sm:$0xff]
        %v4348 = vld [vmem:[#allocation2 + $0x768] sm:$0xff]
        %v4349 = vld [vmem:[#allocation2 + $0x770] sm:$0xff]
        %v4350 = vld [vmem:[#allocation2 + $0x778] sm:$0xff]
        %v4351 = vld [vmem:[#allocation2 + $0x780] sm:$0xff]
        %v4352 = vld [vmem:[#allocation2 + $0x788] sm:$0xff]
        %v4353 = vld [vmem:[#allocation2 + $0x790] sm:$0xff]
        %v4354 = vld [vmem:[#allocation2 + $0x798] sm:$0xff]
        %v4355 = vld [vmem:[#allocation2 + $0x7a0] sm:$0xff]
        %v4356 = vld [vmem:[#allocation2 + $0x7a8] sm:$0xff]
        %v4357 = vld [vmem:[#allocation2 + $0x7b0] sm:$0xff]
        %v4358 = vld [vmem:[#allocation2 + $0x7b8] sm:$0xff]
        %v4359 = vld [vmem:[#allocation2 + $0x7c0] sm:$0xff]
        %v4360 = vld [vmem:[#allocation2 + $0x7c8] sm:$0xff]
        %v4361 = vld [vmem:[#allocation2 + $0x7d0] sm:$0xff]
        %v4362 = vld [vmem:[#allocation2 + $0x7d8] sm:$0xff]
        %v4363 = vld [vmem:[#allocation2 + $0x7e0] sm:$0xff]
        %v4364 = vld [vmem:[#allocation2 + $0x7e8] sm:$0xff]
        %v4365 = vld [vmem:[#allocation2 + $0x7f0] sm:$0xff]
        %v4366 = vld [vmem:[#allocation2 + $0x7f8] sm:$0xff]
        %4376 = vrot.lane.b32.xlu0 %v4103, 127
        %v4377 = vpop.permute.xlu0 %4376
        %4378 = vrot.lane.b32.xlu0 %v4104, 127
        %v4379 = vpop.permute.xlu0 %4378
        %4380 = vrot.lane.b32.xlu0 %v4105, 127
        %v4381 = vpop.permute.xlu0 %4380
        %4382 = vrot.lane.b32.xlu0 %v4106, 127
        %v4383 = vpop.permute.xlu0 %4382
        %4384 = vrot.lane.b32.xlu0 %v4107, 127
        %v4385 = vpop.permute.xlu0 %4384
        %4386 = vrot.lane.b32.xlu0 %v4108, 127
        %v4387 = vpop.permute.xlu0 %4386
        %4388 = vrot.lane.b32.xlu0 %v4109, 127
        %v4389 = vpop.permute.xlu0 %4388
        %4390 = vrot.lane.b32.xlu0 %v4110, 127
        %v4391 = vpop.permute.xlu0 %4390
        %4392 = vrot.lane.b32.xlu0 0.0, 127
        %v4393 = vpop.permute.xlu0 %4392
        %v4394 = vsel %vm1836, %v4377, %v4379
        %v4395 = vsel %vm1836, %v4379, %v4381
        %v4396 = vsel %vm1836, %v4381, %v4383
        %v4397 = vsel %vm1836, %v4383, %v4385
        %v4398 = vsel %vm1836, %v4385, %v4387
        %v4399 = vsel %vm1836, %v4387, %v4389
        %v4400 = vsel %vm1836, %v4389, %v4391
        %v4401 = vsel %vm1836, %v4391, %v4393
        %v4410 = vmax.f32 %v4103, %v4394
        %v4411 = vmax.f32 %v4104, %v4395
        %v4412 = vmax.f32 %v4105, %v4396
        %v4413 = vmax.f32 %v4106, %v4397
        %v4414 = vmax.f32 %v4107, %v4398
        %v4415 = vmax.f32 %v4108, %v4399
        %v4416 = vmax.f32 %v4109, %v4400
        %v4417 = vmax.f32 %v4110, %v4401
        %v4419 = vmax.f32 %v4393, 0.0
        %4429 = vrot.lane.b32.xlu0 %v4410, 96
        %v4430 = vpop.permute.xlu0 %4429
        %4431 = vrot.lane.b32.xlu0 %v4411, 96
        %v4432 = vpop.permute.xlu0 %4431
        %4433 = vrot.lane.b32.xlu0 %v4412, 96
        %v4434 = vpop.permute.xlu0 %4433
        %4435 = vrot.lane.b32.xlu0 %v4413, 96
        %v4436 = vpop.permute.xlu0 %4435
        %4437 = vrot.lane.b32.xlu0 %v4414, 96
        %v4438 = vpop.permute.xlu0 %4437
        %4439 = vrot.lane.b32.xlu0 %v4415, 96
        %v4440 = vpop.permute.xlu0 %4439
        %4441 = vrot.lane.b32.xlu0 %v4416, 96
        %v4442 = vpop.permute.xlu0 %4441
        %4443 = vrot.lane.b32.xlu0 %v4417, 96
        %v4444 = vpop.permute.xlu0 %4443
        %4445 = vrot.lane.b32.xlu0 %v4419, 96
        %v4446 = vpop.permute.xlu0 %4445
        %v4447 = vsel %vm643, %v4430, %v4432
        %v4448 = vsel %vm643, %v4432, %v4434
        %v4449 = vsel %vm643, %v4434, %v4436
        %v4450 = vsel %vm643, %v4436, %v4438
        %v4451 = vsel %vm643, %v4438, %v4440
        %v4452 = vsel %vm643, %v4440, %v4442
        %v4453 = vsel %vm643, %v4442, %v4444
        %v4454 = vsel %vm643, %v4444, %v4446
        %v4463 = vmax.f32 %v4410, %v4447
        %v4464 = vmax.f32 %v4411, %v4448
        %v4465 = vmax.f32 %v4412, %v4449
        %v4466 = vmax.f32 %v4413, %v4450
        %v4467 = vmax.f32 %v4414, %v4451
        %v4468 = vmax.f32 %v4415, %v4452
        %v4469 = vmax.f32 %v4416, %v4453
        %v4470 = vmax.f32 %v4417, %v4454
        %4471 = vmatprep.subr.mxu0 %v4112
        %4472 = vmatpush1.msra.mxu0 %v4111
        %4473 = vmatprep.subr.mxu0 %v4114
        %4474 = vmatpush1.msra.mxu0 %v4113
        %4475 = vmatprep.subr.mxu0 %v4116
        %4476 = vmatpush1.msra.mxu0 %v4115
        %4477 = vmatprep.subr.mxu0 %v4118
        %4478 = vmatpush1.msra.mxu0 %v4117
        %4479 = vmatprep.subr.mxu0 %v4120
        %4480 = vmatpush1.msra.mxu0 %v4119
        %4481 = vmatprep.subr.mxu0 %v4122
        %4482 = vmatpush1.msra.mxu0 %v4121
        %4483 = vmatprep.subr.mxu0 %v4124
        %4484 = vmatpush1.msra.mxu0 %v4123
        %4485 = vmatprep.subr.mxu0 %v4126
        %4486 = vmatpush1.msra.mxu0 %v4125
        %4487 = vmatprep.subr.mxu0 %v4128
        %4488 = vmatpush1.msra.mxu0 %v4127
        %4489 = vmatprep.subr.mxu0 %v4130
        %4490 = vmatpush1.msra.mxu0 %v4129
        %4491 = vmatprep.subr.mxu0 %v4132
        %4492 = vmatpush1.msra.mxu0 %v4131
        %4493 = vmatprep.subr.mxu0 %v4134
        %4494 = vmatpush1.msra.mxu0 %v4133
        %4495 = vmatprep.subr.mxu0 %v4136
        %4496 = vmatpush1.msra.mxu0 %v4135
        %4497 = vmatprep.subr.mxu0 %v4138
        %4498 = vmatpush1.msra.mxu0 %v4137
        %4499 = vmatprep.subr.mxu0 %v4140
        %4500 = vmatpush1.msra.mxu0 %v4139
        %4501 = vmatprep.subr.mxu0 %v4142
        %4502 = vmatpush1.msra.mxu0 %v4141
        %4503 = vmatprep.subr.mxu0 %v4144
        %4504 = vmatpush1.msra.mxu0 %v4143
        %4505 = vmatprep.subr.mxu0 %v4146
        %4506 = vmatpush1.msra.mxu0 %v4145
        %4507 = vmatprep.subr.mxu0 %v4148
        %4508 = vmatpush1.msra.mxu0 %v4147
        %4509 = vmatprep.subr.mxu0 %v4150
        %4510 = vmatpush1.msra.mxu0 %v4149
        %4511 = vmatprep.subr.mxu0 %v4152
        %4512 = vmatpush1.msra.mxu0 %v4151
        %4513 = vmatprep.subr.mxu0 %v4154
        %4514 = vmatpush1.msra.mxu0 %v4153
        %4515 = vmatprep.subr.mxu0 %v4156
        %4516 = vmatpush1.msra.mxu0 %v4155
        %4517 = vmatprep.subr.mxu0 %v4158
        %4518 = vmatpush1.msra.mxu0 %v4157
        %4519 = vmatprep.subr.mxu0 %v4160
        %4520 = vmatpush1.msra.mxu0 %v4159
        %4521 = vmatprep.subr.mxu0 %v4162
        %4522 = vmatpush1.msra.mxu0 %v4161
        %4523 = vmatprep.subr.mxu0 %v4164
        %4524 = vmatpush1.msra.mxu0 %v4163
        %4525 = vmatprep.subr.mxu0 %v4166
        %4526 = vmatpush1.msra.mxu0 %v4165
        %4527 = vmatprep.subr.mxu0 %v4168
        %4528 = vmatpush1.msra.mxu0 %v4167
        %4529 = vmatprep.subr.mxu0 %v4170
        %4530 = vmatpush1.msra.mxu0 %v4169
        %4531 = vmatprep.subr.mxu0 %v4172
        %4532 = vmatpush1.msra.mxu0 %v4171
        %4533 = vmatprep.subr.mxu0 %v4174
        %4534 = vmatpush1.msra.mxu0 %v4173
        %4535 = vmatprep.mubr.f32.mxu0 %v4464
        %4536 = vmatmul.mubr.f32.gmra.mrb[0].mxu0 %v4463
        %v4537 = vpop.f32.mrb[0].mxu0
        %v4538 = vadd.f32 0.0, %v4537
        %v4539 = vpop.f32.mrb[0].mxu0
        %v4540 = vadd.f32 0.0, %v4539
        %4541 = vdwg.mxu0
        %4542 = vmatprep.subr.mxu0 %v4176
        %4543 = vmatpush1.msra.mxu0 %v4175
        %4544 = vmatprep.subr.mxu0 %v4178
        %4545 = vmatpush1.msra.mxu0 %v4177
        %4546 = vmatprep.subr.mxu0 %v4180
        %4547 = vmatpush1.msra.mxu0 %v4179
        %4548 = vmatprep.subr.mxu0 %v4182
        %4549 = vmatpush1.msra.mxu0 %v4181
        %4550 = vmatprep.subr.mxu0 %v4184
        %4551 = vmatpush1.msra.mxu0 %v4183
        %4552 = vmatprep.subr.mxu0 %v4186
        %4553 = vmatpush1.msra.mxu0 %v4185
        %4554 = vmatprep.subr.mxu0 %v4188
        %4555 = vmatpush1.msra.mxu0 %v4187
        %4556 = vmatprep.subr.mxu0 %v4190
        %4557 = vmatpush1.msra.mxu0 %v4189
        %4558 = vmatprep.subr.mxu0 %v4192
        %4559 = vmatpush1.msra.mxu0 %v4191
        %4560 = vmatprep.subr.mxu0 %v4194
        %4561 = vmatpush1.msra.mxu0 %v4193
        %4562 = vmatprep.subr.mxu0 %v4196
        %4563 = vmatpush1.msra.mxu0 %v4195
        %4564 = vmatprep.subr.mxu0 %v4198
        %4565 = vmatpush1.msra.mxu0 %v4197
        %4566 = vmatprep.subr.mxu0 %v4200
        %4567 = vmatpush1.msra.mxu0 %v4199
        %4568 = vmatprep.subr.mxu0 %v4202
        %4569 = vmatpush1.msra.mxu0 %v4201
        %4570 = vmatprep.subr.mxu0 %v4204
        %4571 = vmatpush1.msra.mxu0 %v4203
        %4572 = vmatprep.subr.mxu0 %v4206
        %4573 = vmatpush1.msra.mxu0 %v4205
        %4574 = vmatprep.subr.mxu0 %v4208
        %4575 = vmatpush1.msra.mxu0 %v4207
        %4576 = vmatprep.subr.mxu0 %v4210
        %4577 = vmatpush1.msra.mxu0 %v4209
        %4578 = vmatprep.subr.mxu0 %v4212
        %4579 = vmatpush1.msra.mxu0 %v4211
        %4580 = vmatprep.subr.mxu0 %v4214
        %4581 = vmatpush1.msra.mxu0 %v4213
        %4582 = vmatprep.subr.mxu0 %v4216
        %4583 = vmatpush1.msra.mxu0 %v4215
        %4584 = vmatprep.subr.mxu0 %v4218
        %4585 = vmatpush1.msra.mxu0 %v4217
        %4586 = vmatprep.subr.mxu0 %v4220
        %4587 = vmatpush1.msra.mxu0 %v4219
        %4588 = vmatprep.subr.mxu0 %v4222
        %4589 = vmatpush1.msra.mxu0 %v4221
        %4590 = vmatprep.subr.mxu0 %v4224
        %4591 = vmatpush1.msra.mxu0 %v4223
        %4592 = vmatprep.subr.mxu0 %v4226
        %4593 = vmatpush1.msra.mxu0 %v4225
        %4594 = vmatprep.subr.mxu0 %v4228
        %4595 = vmatpush1.msra.mxu0 %v4227
        %4596 = vmatprep.subr.mxu0 %v4230
        %4597 = vmatpush1.msra.mxu0 %v4229
        %4598 = vmatprep.subr.mxu0 %v4232
        %4599 = vmatpush1.msra.mxu0 %v4231
        %4600 = vmatprep.subr.mxu0 %v4234
        %4601 = vmatpush1.msra.mxu0 %v4233
        %4602 = vmatprep.subr.mxu0 %v4236
        %4603 = vmatpush1.msra.mxu0 %v4235
        %4604 = vmatprep.subr.mxu0 %v4238
        %4605 = vmatpush1.msra.mxu0 %v4237
        %4606 = vmatprep.mubr.f32.mxu0 %v4466
        %4607 = vmatmul.mubr.f32.gmra.mrb[0].mxu0 %v4465
        %v4608 = vpop.f32.mrb[0].mxu0
        %v4609 = vadd.f32 %v4538, %v4608
        %v4610 = vpop.f32.mrb[0].mxu0
        %v4611 = vadd.f32 %v4540, %v4610
        %4612 = vdwg.mxu0
        %4613 = vmatprep.subr.mxu0 %v4240
        %4614 = vmatpush1.msra.mxu0 %v4239
        %4615 = vmatprep.subr.mxu0 %v4242
        %4616 = vmatpush1.msra.mxu0 %v4241
        %4617 = vmatprep.subr.mxu0 %v4244
        %4618 = vmatpush1.msra.mxu0 %v4243
        %4619 = vmatprep.subr.mxu0 %v4246
        %4620 = vmatpush1.msra.mxu0 %v4245
        %4621 = vmatprep.subr.mxu0 %v4248
        %4622 = vmatpush1.msra.mxu0 %v4247
        %4623 = vmatprep.subr.mxu0 %v4250
        %4624 = vmatpush1.msra.mxu0 %v4249
        %4625 = vmatprep.subr.mxu0 %v4252
        %4626 = vmatpush1.msra.mxu0 %v4251
        %4627 = vmatprep.subr.mxu0 %v4254
        %4628 = vmatpush1.msra.mxu0 %v4253
        %4629 = vmatprep.subr.mxu0 %v4256
        %4630 = vmatpush1.msra.mxu0 %v4255
        %4631 = vmatprep.subr.mxu0 %v4258
        %4632 = vmatpush1.msra.mxu0 %v4257
        %4633 = vmatprep.subr.mxu0 %v4260
        %4634 = vmatpush1.msra.mxu0 %v4259
        %4635 = vmatprep.subr.mxu0 %v4262
        %4636 = vmatpush1.msra.mxu0 %v4261
        %4637 = vmatprep.subr.mxu0 %v4264
        %4638 = vmatpush1.msra.mxu0 %v4263
        %4639 = vmatprep.subr.mxu0 %v4266
        %4640 = vmatpush1.msra.mxu0 %v4265
        %4641 = vmatprep.subr.mxu0 %v4268
        %4642 = vmatpush1.msra.mxu0 %v4267
        %4643 = vmatprep.subr.mxu0 %v4270
        %4644 = vmatpush1.msra.mxu0 %v4269
        %4645 = vmatprep.subr.mxu0 %v4272
        %4646 = vmatpush1.msra.mxu0 %v4271
        %4647 = vmatprep.subr.mxu0 %v4274
        %4648 = vmatpush1.msra.mxu0 %v4273
        %4649 = vmatprep.subr.mxu0 %v4276
        %4650 = vmatpush1.msra.mxu0 %v4275
        %4651 = vmatprep.subr.mxu0 %v4278
        %4652 = vmatpush1.msra.mxu0 %v4277
        %4653 = vmatprep.subr.mxu0 %v4280
        %4654 = vmatpush1.msra.mxu0 %v4279
        %4655 = vmatprep.subr.mxu0 %v4282
        %4656 = vmatpush1.msra.mxu0 %v4281
        %4657 = vmatprep.subr.mxu0 %v4284
        %4658 = vmatpush1.msra.mxu0 %v4283
        %4659 = vmatprep.subr.mxu0 %v4286
        %4660 = vmatpush1.msra.mxu0 %v4285
        %4661 = vmatprep.subr.mxu0 %v4288
        %4662 = vmatpush1.msra.mxu0 %v4287
        %4663 = vmatprep.subr.mxu0 %v4290
        %4664 = vmatpush1.msra.mxu0 %v4289
        %4665 = vmatprep.subr.mxu0 %v4292
        %4666 = vmatpush1.msra.mxu0 %v4291
        %4667 = vmatprep.subr.mxu0 %v4294
        %4668 = vmatpush1.msra.mxu0 %v4293
        %4669 = vmatprep.subr.mxu0 %v4296
        %4670 = vmatpush1.msra.mxu0 %v4295
        %4671 = vmatprep.subr.mxu0 %v4298
        %4672 = vmatpush1.msra.mxu0 %v4297
        %4673 = vmatprep.subr.mxu0 %v4300
        %4674 = vmatpush1.msra.mxu0 %v4299
        %4675 = vmatprep.subr.mxu0 %v4302
        %4676 = vmatpush1.msra.mxu0 %v4301
        %4677 = vmatprep.mubr.f32.mxu0 %v4468
        %4678 = vmatmul.mubr.f32.gmra.mrb[0].mxu0 %v4467
        %v4679 = vpop.f32.mrb[0].mxu0
        %v4680 = vadd.f32 %v4609, %v4679
        %v4681 = vpop.f32.mrb[0].mxu0
        %v4682 = vadd.f32 %v4611, %v4681
        %4683 = vdwg.mxu0
        %4684 = vmatprep.subr.mxu0 %v4304
        %4685 = vmatpush1.msra.mxu0 %v4303
        %4686 = vmatprep.subr.mxu0 %v4306
        %4687 = vmatpush1.msra.mxu0 %v4305
        %4688 = vmatprep.subr.mxu0 %v4308
        %4689 = vmatpush1.msra.mxu0 %v4307
        %4690 = vmatprep.subr.mxu0 %v4310
        %4691 = vmatpush1.msra.mxu0 %v4309
        %4692 = vmatprep.subr.mxu0 %v4312
        %4693 = vmatpush1.msra.mxu0 %v4311
        %4694 = vmatprep.subr.mxu0 %v4314
        %4695 = vmatpush1.msra.mxu0 %v4313
        %4696 = vmatprep.subr.mxu0 %v4316
        %4697 = vmatpush1.msra.mxu0 %v4315
        %4698 = vmatprep.subr.mxu0 %v4318
        %4699 = vmatpush1.msra.mxu0 %v4317
        %4700 = vmatprep.subr.mxu0 %v4320
        %4701 = vmatpush1.msra.mxu0 %v4319
        %4702 = vmatprep.subr.mxu0 %v4322
        %4703 = vmatpush1.msra.mxu0 %v4321
        %4704 = vmatprep.subr.mxu0 %v4324
        %4705 = vmatpush1.msra.mxu0 %v4323
        %4706 = vmatprep.subr.mxu0 %v4326
        %4707 = vmatpush1.msra.mxu0 %v4325
        %4708 = vmatprep.subr.mxu0 %v4328
        %4709 = vmatpush1.msra.mxu0 %v4327
        %4710 = vmatprep.subr.mxu0 %v4330
        %4711 = vmatpush1.msra.mxu0 %v4329
        %4712 = vmatprep.subr.mxu0 %v4332
        %4713 = vmatpush1.msra.mxu0 %v4331
        %4714 = vmatprep.subr.mxu0 %v4334
        %4715 = vmatpush1.msra.mxu0 %v4333
        %4716 = vmatprep.subr.mxu0 %v4336
        %4717 = vmatpush1.msra.mxu0 %v4335
        %4718 = vmatprep.subr.mxu0 %v4338
        %4719 = vmatpush1.msra.mxu0 %v4337
        %4720 = vmatprep.subr.mxu0 %v4340
        %4721 = vmatpush1.msra.mxu0 %v4339
        %4722 = vmatprep.subr.mxu0 %v4342
        %4723 = vmatpush1.msra.mxu0 %v4341
        %4724 = vmatprep.subr.mxu0 %v4344
        %4725 = vmatpush1.msra.mxu0 %v4343
        %4726 = vmatprep.subr.mxu0 %v4346
        %4727 = vmatpush1.msra.mxu0 %v4345
        %4728 = vmatprep.subr.mxu0 %v4348
        %4729 = vmatpush1.msra.mxu0 %v4347
        %4730 = vmatprep.subr.mxu0 %v4350
        %4731 = vmatpush1.msra.mxu0 %v4349
        %4732 = vmatprep.subr.mxu0 %v4352
        %4733 = vmatpush1.msra.mxu0 %v4351
        %4734 = vmatprep.subr.mxu0 %v4354
        %4735 = vmatpush1.msra.mxu0 %v4353
        %4736 = vmatprep.subr.mxu0 %v4356
        %4737 = vmatpush1.msra.mxu0 %v4355
        %4738 = vmatprep.subr.mxu0 %v4358
        %4739 = vmatpush1.msra.mxu0 %v4357
        %4740 = vmatprep.subr.mxu0 %v4360
        %4741 = vmatpush1.msra.mxu0 %v4359
        %4742 = vmatprep.subr.mxu0 %v4362
        %4743 = vmatpush1.msra.mxu0 %v4361
        %4744 = vmatprep.subr.mxu0 %v4364
        %4745 = vmatpush1.msra.mxu0 %v4363
        %4746 = vmatprep.subr.mxu0 %v4366
        %4747 = vmatpush1.msra.mxu0 %v4365
        %4748 = vmatprep.mubr.f32.mxu0 %v4470
        %4749 = vmatmul.mubr.f32.gmra.mrb[0].mxu0 %v4469
        %v4750 = vpop.f32.mrb[0].mxu0
        %v4751 = vadd.f32 %v4680, %v4750
        %v4752 = vpop.f32.mrb[0].mxu0
        %v4753 = vadd.f32 %v4682, %v4752
        %4754 = vdwg.mxu0
        %v4755 = vld [vmem:[%s5] sm:$0xff]
        %v4756 = vld [vmem:[%s6] sm:$0xff]
        %v4757 = vld [vmem:[%s7] sm:$0x77]
        %v4759 = vlaneseq
        %v4760 = vshrl.u32 %v4759, 7
        %v4761 = vsub.s32 0, %v4760
        %v4762 = vrot.slane %v4757, %v4761
        %v4763 = vlaneseq
        %v4764 = vshrl.u32 %v4763, 7
        %v4765 = vsub.s32 4, %v4764
        %v4766 = vrot.slane %v4757, %v4765
        %v4769 = vlaneseq
        %v4770 = vshrl.u32 %v4769, 7
        %v4771 = vsub.s32 0, %v4770
        %v4772 = vrot.slane %v4762, %v4771
        %v4773 = vlaneseq
        %v4774 = vshrl.u32 %v4773, 7
        %v4775 = vsub.s32 0, %v4774
        %v4776 = vrot.slane %v4766, %v4775
        %4779 = vrot.lane.b32.xlu0 %v4772, 111
        %v4780 = vpop.permute.xlu0 %4779
        %4781 = vrot.lane.b32.xlu0 %v4776, 111
        %v4782 = vpop.permute.xlu0 %4781
        %vm4783 = vcmask 908288
        %v4784 = vsel %vm4783, %v4780, %v4782
        %v4788 = vmul.f32 %v4780, 0.0
        %v4789 = vmul.f32 %v4751, %v4784
        %v4790 = vmul.f32 %v4753, %v4782
        %v4791 = vlaneseq
        %v4792 = vshrl.u32 %v4791, 7
        %v4793 = vsub.s32 1, %v4792
        %v4794 = vrot.slane %v4757, %v4793
        %v4795 = vlaneseq
        %v4796 = vshrl.u32 %v4795, 7
        %v4797 = vsub.s32 5, %v4796
        %v4798 = vrot.slane %v4757, %v4797
        %v4801 = vlaneseq
        %v4802 = vshrl.u32 %v4801, 7
        %v4803 = vsub.s32 1, %v4802
        %v4804 = vrot.slane %v4794, %v4803
        %v4805 = vlaneseq
        %v4806 = vshrl.u32 %v4805, 7
        %v4807 = vsub.s32 1, %v4806
        %v4808 = vrot.slane %v4798, %v4807
        %4811 = vrot.lane.b32.xlu0 %v4804, 112
        %v4812 = vpop.permute.xlu0 %4811
        %4813 = vrot.lane.b32.xlu0 %v4808, 112
        %v4814 = vpop.permute.xlu0 %4813
        %vm4815 = vcmask 916480
        %v4816 = vsel %vm4815, %v4812, %v4814
        %v4820 = vmul.f32 %v4812, 0.0
        %v4821 = vmul.f32 %v4751, %v4816
        %v4822 = vmul.f32 %v4753, %v4814
        %4824 = vrot.lane.b32.xlu0 %v4755, 124
        %v4825 = vpop.permute.xlu0 %4824
        %4829 = vrot.lane.b32.xlu0 %v4820, 16
        %v4830 = vpop.permute.xlu0 %4829
        %4831 = vrot.lane.b32.xlu0 %v4821, 16
        %v4832 = vpop.permute.xlu0 %4831
        %4833 = vrot.lane.b32.xlu0 %v4822, 16
        %v4834 = vpop.permute.xlu0 %4833
        %vm4835 = vcmask 130048
        %v4836 = vsel %vm4835, %v4830, %v4832
        %v4837 = vsel %vm4835, %v4832, %v4834
        %vm4838 = vcmask 31744
        %v4839 = vsel %vm4838, %v4825, 0
        %vm4841 = vcmask 1043456
        %v4842 = vsel %vm4841, %v4836, 0
        %v4844 = vsel %vm4841, %v4837, 0
        %4846 = vmatprep.subr.mxu0 %v4844
        %4847 = vmatpush1.msra.mxu0 %v4842
        %4848 = vmatprep.subr.mxu0 0.0
        %4849 = vmatpush1.msra.mxu0 0.0
        %4850 = vmatprep.subr.mxu0 0.0
        %4851 = vmatpush1.msra.mxu0 0.0
        %4852 = vmatprep.subr.mxu0 0.0
        %4853 = vmatpush1.msra.mxu0 0.0
        %4854 = vmatprep.subr.mxu0 0.0
        %4855 = vmatpush1.msra.mxu0 0.0
        %4856 = vmatprep.subr.mxu0 0.0
        %4857 = vmatpush1.msra.mxu0 0.0
        %4858 = vmatprep.subr.mxu0 0.0
        %4859 = vmatpush1.msra.mxu0 0.0
        %4860 = vmatprep.subr.mxu0 0.0
        %4861 = vmatpush1.msra.mxu0 0.0
        %4862 = vmatprep.subr.mxu0 0.0
        %4863 = vmatpush1.msra.mxu0 0.0
        %4864 = vmatprep.subr.mxu0 0.0
        %4865 = vmatpush1.msra.mxu0 0.0
        %4866 = vmatprep.subr.mxu0 0.0
        %4867 = vmatpush1.msra.mxu0 0.0
        %4868 = vmatprep.subr.mxu0 0.0
        %4869 = vmatpush1.msra.mxu0 0.0
        %4870 = vmatprep.subr.mxu0 0.0
        %4871 = vmatpush1.msra.mxu0 0.0
        %4872 = vmatprep.subr.mxu0 0.0
        %4873 = vmatpush1.msra.mxu0 0.0
        %4874 = vmatprep.subr.mxu0 0.0
        %4875 = vmatpush1.msra.mxu0 0.0
        %4876 = vmatprep.subr.mxu0 0.0
        %4877 = vmatpush1.msra.mxu0 0.0
        %4878 = vmatprep.subr.mxu0 0.0
        %4879 = vmatpush1.msra.mxu0 0.0
        %4880 = vmatprep.subr.mxu0 0.0
        %4881 = vmatpush1.msra.mxu0 0.0
        %4882 = vmatprep.subr.mxu0 0.0
        %4883 = vmatpush1.msra.mxu0 0.0
        %4884 = vmatprep.subr.mxu0 0.0
        %4885 = vmatpush1.msra.mxu0 0.0
        %4886 = vmatprep.subr.mxu0 0.0
        %4887 = vmatpush1.msra.mxu0 0.0
        %4888 = vmatprep.subr.mxu0 0.0
        %4889 = vmatpush1.msra.mxu0 0.0
        %4890 = vmatprep.subr.mxu0 0.0
        %4891 = vmatpush1.msra.mxu0 0.0
        %4892 = vmatprep.subr.mxu0 0.0
        %4893 = vmatpush1.msra.mxu0 0.0
        %4894 = vmatprep.subr.mxu0 0.0
        %4895 = vmatpush1.msra.mxu0 0.0
        %4896 = vmatprep.subr.mxu0 0.0
        %4897 = vmatpush1.msra.mxu0 0.0
        %4898 = vmatprep.subr.mxu0 0.0
        %4899 = vmatpush1.msra.mxu0 0.0
        %4900 = vmatprep.subr.mxu0 0.0
        %4901 = vmatpush1.msra.mxu0 0.0
        %4902 = vmatprep.subr.mxu0 0.0
        %4903 = vmatpush1.msra.mxu0 0.0
        %4904 = vmatprep.subr.mxu0 0.0
        %4905 = vmatpush1.msra.mxu0 0.0
        %4906 = vmatprep.subr.mxu0 0.0
        %4907 = vmatpush1.msra.mxu0 0.0
        %4908 = vmatprep.subr.mxu0 0.0
        %4909 = vmatpush1.msra.mxu0 0.0
        %4910 = vmatprep.mubr.f32.mxu0 0.0
        %4911 = vmatmul.mubr.f32.gmra.mrb[0].mxu0 %v4839
        %v4912 = vpop.f32.mrb[0].mxu0
        %v4913 = vadd.f32 0.0, %v4912
        %v4914 = vpop.f32.mrb[0].mxu0
        %v4915 = vadd.f32 0.0, %v4914
        %4916 = vdwg.mxu0
        %4920 = vrot.lane.b32.xlu0 %v4788, 17
        %v4921 = vpop.permute.xlu0 %4920
        %4922 = vrot.lane.b32.xlu0 %v4789, 17
        %v4923 = vpop.permute.xlu0 %4922
        %4924 = vrot.lane.b32.xlu0 %v4790, 17
        %v4925 = vpop.permute.xlu0 %4924
        %vm4926 = vcmask 138240
        %v4927 = vsel %vm4926, %v4921, %v4923
        %v4928 = vsel %vm4926, %v4923, %v4925
        %v4929 = vsel %vm4838, %v4755, 0
        %v4931 = vsel %vm4841, %v4927, 0
        %v4933 = vsel %vm4841, %v4928, 0
        %4935 = vmatprep.subr.mxu0 %v4933
        %4936 = vmatpush1.msra.mxu0 %v4931
        %4937 = vmatprep.subr.mxu0 0.0
        %4938 = vmatpush1.msra.mxu0 0.0
        %4939 = vmatprep.subr.mxu0 0.0
        %4940 = vmatpush1.msra.mxu0 0.0
        %4941 = vmatprep.subr.mxu0 0.0
        %4942 = vmatpush1.msra.mxu0 0.0
        %4943 = vmatprep.subr.mxu0 0.0
        %4944 = vmatpush1.msra.mxu0 0.0
        %4945 = vmatprep.subr.mxu0 0.0
        %4946 = vmatpush1.msra.mxu0 0.0
        %4947 = vmatprep.subr.mxu0 0.0
        %4948 = vmatpush1.msra.mxu0 0.0
        %4949 = vmatprep.subr.mxu0 0.0
        %4950 = vmatpush1.msra.mxu0 0.0
        %4951 = vmatprep.subr.mxu0 0.0
        %4952 = vmatpush1.msra.mxu0 0.0
        %4953 = vmatprep.subr.mxu0 0.0
        %4954 = vmatpush1.msra.mxu0 0.0
        %4955 = vmatprep.subr.mxu0 0.0
        %4956 = vmatpush1.msra.mxu0 0.0
        %4957 = vmatprep.subr.mxu0 0.0
        %4958 = vmatpush1.msra.mxu0 0.0
        %4959 = vmatprep.subr.mxu0 0.0
        %4960 = vmatpush1.msra.mxu0 0.0
        %4961 = vmatprep.subr.mxu0 0.0
        %4962 = vmatpush1.msra.mxu0 0.0
        %4963 = vmatprep.subr.mxu0 0.0
        %4964 = vmatpush1.msra.mxu0 0.0
        %4965 = vmatprep.subr.mxu0 0.0
        %4966 = vmatpush1.msra.mxu0 0.0
        %4967 = vmatprep.subr.mxu0 0.0
        %4968 = vmatpush1.msra.mxu0 0.0
        %4969 = vmatprep.subr.mxu0 0.0
        %4970 = vmatpush1.msra.mxu0 0.0
        %4971 = vmatprep.subr.mxu0 0.0
        %4972 = vmatpush1.msra.mxu0 0.0
        %4973 = vmatprep.subr.mxu0 0.0
        %4974 = vmatpush1.msra.mxu0 0.0
        %4975 = vmatprep.subr.mxu0 0.0
        %4976 = vmatpush1.msra.mxu0 0.0
        %4977 = vmatprep.subr.mxu0 0.0
        %4978 = vmatpush1.msra.mxu0 0.0
        %4979 = vmatprep.subr.mxu0 0.0
        %4980 = vmatpush1.msra.mxu0 0.0
        %4981 = vmatprep.subr.mxu0 0.0
        %4982 = vmatpush1.msra.mxu0 0.0
        %4983 = vmatprep.subr.mxu0 0.0
        %4984 = vmatpush1.msra.mxu0 0.0
        %4985 = vmatprep.subr.mxu0 0.0
        %4986 = vmatpush1.msra.mxu0 0.0
        %4987 = vmatprep.subr.mxu0 0.0
        %4988 = vmatpush1.msra.mxu0 0.0
        %4989 = vmatprep.subr.mxu0 0.0
        %4990 = vmatpush1.msra.mxu0 0.0
        %4991 = vmatprep.subr.mxu0 0.0
        %4992 = vmatpush1.msra.mxu0 0.0
        %4993 = vmatprep.subr.mxu0 0.0
        %4994 = vmatpush1.msra.mxu0 0.0
        %4995 = vmatprep.subr.mxu0 0.0
        %4996 = vmatpush1.msra.mxu0 0.0
        %4997 = vmatprep.subr.mxu0 0.0
        %4998 = vmatpush1.msra.mxu0 0.0
        %4999 = vmatprep.mubr.f32.mxu0 0.0
        %5000 = vmatmul.mubr.f32.gmra.mrb[0].mxu0 %v4929
        %v5001 = vpop.f32.mrb[0].mxu0
        %v5002 = vadd.f32 %v4913, %v5001
        %v5003 = vpop.f32.mrb[0].mxu0
        %v5004 = vadd.f32 %v4915, %v5003
        %5005 = vdwg.mxu0
        %v5006 = vlaneseq
        %v5007 = vshrl.u32 %v5006, 7
        %v5008 = vsub.s32 2, %v5007
        %v5009 = vrot.slane %v4757, %v5008
        %v5010 = vlaneseq
        %v5011 = vshrl.u32 %v5010, 7
        %v5012 = vsub.s32 6, %v5011
        %v5013 = vrot.slane %v4757, %v5012
        %v5016 = vlaneseq
        %v5017 = vshrl.u32 %v5016, 7
        %v5018 = vsub.s32 2, %v5017
        %v5019 = vrot.slane %v5009, %v5018
        %v5020 = vlaneseq
        %v5021 = vshrl.u32 %v5020, 7
        %v5022 = vsub.s32 2, %v5021
        %v5023 = vrot.slane %v5013, %v5022
        %5026 = vrot.lane.b32.xlu0 %v5019, 113
        %v5027 = vpop.permute.xlu0 %5026
        %5028 = vrot.lane.b32.xlu0 %v5023, 113
        %v5029 = vpop.permute.xlu0 %5028
        %vm5030 = vcmask 924672
        %v5031 = vsel %vm5030, %v5027, %v5029
        %v5035 = vmul.f32 %v5027, 0.0
        %v5036 = vmul.f32 %v4751, %v5031
        %v5037 = vmul.f32 %v4753, %v5029
        %5038 = vrot.lane.b32.xlu0 %v4755, 120
        %v5039 = vpop.permute.xlu0 %5038
        %5043 = vrot.lane.b32.xlu0 %v5035, 15
        %v5044 = vpop.permute.xlu0 %5043
        %5045 = vrot.lane.b32.xlu0 %v5036, 15
        %v5046 = vpop.permute.xlu0 %5045
        %5047 = vrot.lane.b32.xlu0 %v5037, 15
        %v5048 = vpop.permute.xlu0 %5047
        %vm5049 = vcmask 121856
        %v5050 = vsel %vm5049, %v5044, %v5046
        %v5051 = vsel %vm5049, %v5046, %v5048
        %v5052 = vsel %vm4838, %v5039, 0
        %v5054 = vsel %vm4841, %v5050, 0
        %v5056 = vsel %vm4841, %v5051, 0
        %5058 = vmatprep.subr.mxu0 %v5056
        %5059 = vmatpush1.msra.mxu0 %v5054
        %5060 = vmatprep.subr.mxu0 0.0
        %5061 = vmatpush1.msra.mxu0 0.0
        %5062 = vmatprep.subr.mxu0 0.0
        %5063 = vmatpush1.msra.mxu0 0.0
        %5064 = vmatprep.subr.mxu0 0.0
        %5065 = vmatpush1.msra.mxu0 0.0
        %5066 = vmatprep.subr.mxu0 0.0
        %5067 = vmatpush1.msra.mxu0 0.0
        %5068 = vmatprep.subr.mxu0 0.0
        %5069 = vmatpush1.msra.mxu0 0.0
        %5070 = vmatprep.subr.mxu0 0.0
        %5071 = vmatpush1.msra.mxu0 0.0
        %5072 = vmatprep.subr.mxu0 0.0
        %5073 = vmatpush1.msra.mxu0 0.0
        %5074 = vmatprep.subr.mxu0 0.0
        %5075 = vmatpush1.msra.mxu0 0.0
        %5076 = vmatprep.subr.mxu0 0.0
        %5077 = vmatpush1.msra.mxu0 0.0
        %5078 = vmatprep.subr.mxu0 0.0
        %5079 = vmatpush1.msra.mxu0 0.0
        %5080 = vmatprep.subr.mxu0 0.0
        %5081 = vmatpush1.msra.mxu0 0.0
        %5082 = vmatprep.subr.mxu0 0.0
        %5083 = vmatpush1.msra.mxu0 0.0
        %5084 = vmatprep.subr.mxu0 0.0
        %5085 = vmatpush1.msra.mxu0 0.0
        %5086 = vmatprep.subr.mxu0 0.0
        %5087 = vmatpush1.msra.mxu0 0.0
        %5088 = vmatprep.subr.mxu0 0.0
        %5089 = vmatpush1.msra.mxu0 0.0
        %5090 = vmatprep.subr.mxu0 0.0
        %5091 = vmatpush1.msra.mxu0 0.0
        %5092 = vmatprep.subr.mxu0 0.0
        %5093 = vmatpush1.msra.mxu0 0.0
        %5094 = vmatprep.subr.mxu0 0.0
        %5095 = vmatpush1.msra.mxu0 0.0
        %5096 = vmatprep.subr.mxu0 0.0
        %5097 = vmatpush1.msra.mxu0 0.0
        %5098 = vmatprep.subr.mxu0 0.0
        %5099 = vmatpush1.msra.mxu0 0.0
        %5100 = vmatprep.subr.mxu0 0.0
        %5101 = vmatpush1.msra.mxu0 0.0
        %5102 = vmatprep.subr.mxu0 0.0
        %5103 = vmatpush1.msra.mxu0 0.0
        %5104 = vmatprep.subr.mxu0 0.0
        %5105 = vmatpush1.msra.mxu0 0.0
        %5106 = vmatprep.subr.mxu0 0.0
        %5107 = vmatpush1.msra.mxu0 0.0
        %5108 = vmatprep.subr.mxu0 0.0
        %5109 = vmatpush1.msra.mxu0 0.0
        %5110 = vmatprep.subr.mxu0 0.0
        %5111 = vmatpush1.msra.mxu0 0.0
        %5112 = vmatprep.subr.mxu0 0.0
        %5113 = vmatpush1.msra.mxu0 0.0
        %5114 = vmatprep.subr.mxu0 0.0
        %5115 = vmatpush1.msra.mxu0 0.0
        %5116 = vmatprep.subr.mxu0 0.0
        %5117 = vmatpush1.msra.mxu0 0.0
        %5118 = vmatprep.subr.mxu0 0.0
        %5119 = vmatpush1.msra.mxu0 0.0
        %5120 = vmatprep.subr.mxu0 0.0
        %5121 = vmatpush1.msra.mxu0 0.0
        %5122 = vmatprep.mubr.f32.mxu0 0.0
        %5123 = vmatmul.mubr.f32.gmra.mrb[0].mxu0 %v5052
        %v5124 = vpop.f32.mrb[0].mxu0
        %v5125 = vadd.f32 0.0, %v5124
        %v5126 = vpop.f32.mrb[0].mxu0
        %v5127 = vadd.f32 0.0, %v5126
        %5128 = vdwg.mxu0
        %v5129 = vadd.f32 %v5002, %v5125
        %v5130 = vadd.f32 %v5004, %v5127
        %5131 = vrot.lane.b32.xlu0 %v4772, 127
        %v5132 = vpop.permute.xlu0 %5131
        %5133 = vrot.lane.b32.xlu0 %v4776, 127
        %v5134 = vpop.permute.xlu0 %5133
        %v5135 = vsel %vm1836, %v5132, %v5134
        %v5139 = vmul.f32 %v5132, 0.0
        %v5140 = vmul.f32 %v4751, %v5135
        %v5141 = vmul.f32 %v4753, %v5134
        %5142 = vrot.lane.b32.xlu0 %v4755, 116
        %v5143 = vpop.permute.xlu0 %5142
        %5147 = vrot.lane.b32.xlu0 %v5139, 1
        %v5148 = vpop.permute.xlu0 %5147
        %5149 = vrot.lane.b32.xlu0 %v5140, 1
        %v5150 = vpop.permute.xlu0 %5149
        %5151 = vrot.lane.b32.xlu0 %v5141, 1
        %v5152 = vpop.permute.xlu0 %5151
        %v5153 = vsel %vm1891, %v5148, %v5150
        %v5154 = vsel %vm1891, %v5150, %v5152
        %v5155 = vsel %vm4838, %v5143, 0
        %v5157 = vsel %vm4841, %v5153, 0
        %v5159 = vsel %vm4841, %v5154, 0
        %5161 = vmatprep.subr.mxu0 %v5159
        %5162 = vmatpush1.msra.mxu0 %v5157
        %5163 = vmatprep.subr.mxu0 0.0
        %5164 = vmatpush1.msra.mxu0 0.0
        %5165 = vmatprep.subr.mxu0 0.0
        %5166 = vmatpush1.msra.mxu0 0.0
        %5167 = vmatprep.subr.mxu0 0.0
        %5168 = vmatpush1.msra.mxu0 0.0
        %5169 = vmatprep.subr.mxu0 0.0
        %5170 = vmatpush1.msra.mxu0 0.0
        %5171 = vmatprep.subr.mxu0 0.0
        %5172 = vmatpush1.msra.mxu0 0.0
        %5173 = vmatprep.subr.mxu0 0.0
        %5174 = vmatpush1.msra.mxu0 0.0
        %5175 = vmatprep.subr.mxu0 0.0
        %5176 = vmatpush1.msra.mxu0 0.0
        %5177 = vmatprep.subr.mxu0 0.0
        %5178 = vmatpush1.msra.mxu0 0.0
        %5179 = vmatprep.subr.mxu0 0.0
        %5180 = vmatpush1.msra.mxu0 0.0
        %5181 = vmatprep.subr.mxu0 0.0
        %5182 = vmatpush1.msra.mxu0 0.0
        %5183 = vmatprep.subr.mxu0 0.0
        %5184 = vmatpush1.msra.mxu0 0.0
        %5185 = vmatprep.subr.mxu0 0.0
        %5186 = vmatpush1.msra.mxu0 0.0
        %5187 = vmatprep.subr.mxu0 0.0
        %5188 = vmatpush1.msra.mxu0 0.0
        %5189 = vmatprep.subr.mxu0 0.0
        %5190 = vmatpush1.msra.mxu0 0.0
        %5191 = vmatprep.subr.mxu0 0.0
        %5192 = vmatpush1.msra.mxu0 0.0
        %5193 = vmatprep.subr.mxu0 0.0
        %5194 = vmatpush1.msra.mxu0 0.0
        %5195 = vmatprep.subr.mxu0 0.0
        %5196 = vmatpush1.msra.mxu0 0.0
        %5197 = vmatprep.subr.mxu0 0.0
        %5198 = vmatpush1.msra.mxu0 0.0
        %5199 = vmatprep.subr.mxu0 0.0
        %5200 = vmatpush1.msra.mxu0 0.0
        %5201 = vmatprep.subr.mxu0 0.0
        %5202 = vmatpush1.msra.mxu0 0.0
        %5203 = vmatprep.subr.mxu0 0.0
        %5204 = vmatpush1.msra.mxu0 0.0
        %5205 = vmatprep.subr.mxu0 0.0
        %5206 = vmatpush1.msra.mxu0 0.0
        %5207 = vmatprep.subr.mxu0 0.0
        %5208 = vmatpush1.msra.mxu0 0.0
        %5209 = vmatprep.subr.mxu0 0.0
        %5210 = vmatpush1.msra.mxu0 0.0
        %5211 = vmatprep.subr.mxu0 0.0
        %5212 = vmatpush1.msra.mxu0 0.0
        %5213 = vmatprep.subr.mxu0 0.0
        %5214 = vmatpush1.msra.mxu0 0.0
        %5215 = vmatprep.subr.mxu0 0.0
        %5216 = vmatpush1.msra.mxu0 0.0
        %5217 = vmatprep.subr.mxu0 0.0
        %5218 = vmatpush1.msra.mxu0 0.0
        %5219 = vmatprep.subr.mxu0 0.0
        %5220 = vmatpush1.msra.mxu0 0.0
        %5221 = vmatprep.subr.mxu0 0.0
        %5222 = vmatpush1.msra.mxu0 0.0
        %5223 = vmatprep.subr.mxu0 0.0
        %5224 = vmatpush1.msra.mxu0 0.0
        %5225 = vmatprep.mubr.f32.mxu0 0.0
        %5226 = vmatmul.mubr.f32.gmra.mrb[0].mxu0 %v5155
        %v5227 = vpop.f32.mrb[0].mxu0
        %v5228 = vadd.f32 0.0, %v5227
        %v5229 = vpop.f32.mrb[0].mxu0
        %v5230 = vadd.f32 0.0, %v5229
        %5231 = vdwg.mxu0
        %v5232 = vadd.f32 %v5129, %v5228
        %v5233 = vadd.f32 %v5130, %v5230
        %v5234 = vmul.f32 %v4751, %v4804
        %v5235 = vmul.f32 %v4753, %v4808
        %5236 = vrot.lane.b32.xlu0 %v4755, 112
        %v5237 = vpop.permute.xlu0 %5236
        %v5238 = vsel %vm4838, %v5237, 0
        %v5241 = vsel %vm4841, %v5234, 0
        %v5244 = vsel %vm4841, %v5235, 0
        %5246 = vmatprep.subr.mxu0 %v5244
        %5247 = vmatpush1.msra.mxu0 %v5241
        %5248 = vmatprep.subr.mxu0 0.0
        %5249 = vmatpush1.msra.mxu0 0.0
        %5250 = vmatprep.subr.mxu0 0.0
        %5251 = vmatpush1.msra.mxu0 0.0
        %5252 = vmatprep.subr.mxu0 0.0
        %5253 = vmatpush1.msra.mxu0 0.0
        %5254 = vmatprep.subr.mxu0 0.0
        %5255 = vmatpush1.msra.mxu0 0.0
        %5256 = vmatprep.subr.mxu0 0.0
        %5257 = vmatpush1.msra.mxu0 0.0
        %5258 = vmatprep.subr.mxu0 0.0
        %5259 = vmatpush1.msra.mxu0 0.0
        %5260 = vmatprep.subr.mxu0 0.0
        %5261 = vmatpush1.msra.mxu0 0.0
        %5262 = vmatprep.subr.mxu0 0.0
        %5263 = vmatpush1.msra.mxu0 0.0
        %5264 = vmatprep.subr.mxu0 0.0
        %5265 = vmatpush1.msra.mxu0 0.0
        %5266 = vmatprep.subr.mxu0 0.0
        %5267 = vmatpush1.msra.mxu0 0.0
        %5268 = vmatprep.subr.mxu0 0.0
        %5269 = vmatpush1.msra.mxu0 0.0
        %5270 = vmatprep.subr.mxu0 0.0
        %5271 = vmatpush1.msra.mxu0 0.0
        %5272 = vmatprep.subr.mxu0 0.0
        %5273 = vmatpush1.msra.mxu0 0.0
        %5274 = vmatprep.subr.mxu0 0.0
        %5275 = vmatpush1.msra.mxu0 0.0
        %5276 = vmatprep.subr.mxu0 0.0
        %5277 = vmatpush1.msra.mxu0 0.0
        %5278 = vmatprep.subr.mxu0 0.0
        %5279 = vmatpush1.msra.mxu0 0.0
        %5280 = vmatprep.subr.mxu0 0.0
        %5281 = vmatpush1.msra.mxu0 0.0
        %5282 = vmatprep.subr.mxu0 0.0
        %5283 = vmatpush1.msra.mxu0 0.0
        %5284 = vmatprep.subr.mxu0 0.0
        %5285 = vmatpush1.msra.mxu0 0.0
        %5286 = vmatprep.subr.mxu0 0.0
        %5287 = vmatpush1.msra.mxu0 0.0
        %5288 = vmatprep.subr.mxu0 0.0
        %5289 = vmatpush1.msra.mxu0 0.0
        %5290 = vmatprep.subr.mxu0 0.0
        %5291 = vmatpush1.msra.mxu0 0.0
        %5292 = vmatprep.subr.mxu0 0.0
        %5293 = vmatpush1.msra.mxu0 0.0
        %5294 = vmatprep.subr.mxu0 0.0
        %5295 = vmatpush1.msra.mxu0 0.0
        %5296 = vmatprep.subr.mxu0 0.0
        %5297 = vmatpush1.msra.mxu0 0.0
        %5298 = vmatprep.subr.mxu0 0.0
        %5299 = vmatpush1.msra.mxu0 0.0
        %5300 = vmatprep.subr.mxu0 0.0
        %5301 = vmatpush1.msra.mxu0 0.0
        %5302 = vmatprep.subr.mxu0 0.0
        %5303 = vmatpush1.msra.mxu0 0.0
        %5304 = vmatprep.subr.mxu0 0.0
        %5305 = vmatpush1.msra.mxu0 0.0
        %5306 = vmatprep.subr.mxu0 0.0
        %5307 = vmatpush1.msra.mxu0 0.0
        %5308 = vmatprep.subr.mxu0 0.0
        %5309 = vmatpush1.msra.mxu0 0.0
        %5310 = vmatprep.mubr.f32.mxu0 0.0
        %5311 = vmatmul.mubr.f32.gmra.mrb[0].mxu0 %v5238
        %v5312 = vpop.f32.mrb[0].mxu0
        %v5313 = vadd.f32 0.0, %v5312
        %v5314 = vpop.f32.mrb[0].mxu0
        %v5315 = vadd.f32 0.0, %v5314
        %5316 = vdwg.mxu0
        %v5317 = vadd.f32 %v5232, %v5313
        %v5318 = vadd.f32 %v5233, %v5315
        %5319 = vrot.lane.b32.xlu0 %v5019, 1
        %v5320 = vpop.permute.xlu0 %5319
        %5321 = vrot.lane.b32.xlu0 %v5023, 1
        %v5322 = vpop.permute.xlu0 %5321
        %v5323 = vsel %vm1891, %v5320, %v5322
        %v5327 = vmul.f32 %v4751, %v5320
        %v5328 = vmul.f32 %v4753, %v5323
        %v5329 = vmul.f32 %v5322, 0.0
        %5330 = vrot.lane.b32.xlu0 %v4755, 108
        %v5331 = vpop.permute.xlu0 %5330
        %5335 = vrot.lane.b32.xlu0 %v5327, 127
        %v5336 = vpop.permute.xlu0 %5335
        %5337 = vrot.lane.b32.xlu0 %v5328, 127
        %v5338 = vpop.permute.xlu0 %5337
        %5339 = vrot.lane.b32.xlu0 %v5329, 127
        %v5340 = vpop.permute.xlu0 %5339
        %v5341 = vsel %vm1836, %v5336, %v5338
        %v5342 = vsel %vm1836, %v5338, %v5340
        %v5343 = vsel %vm4838, %v5331, 0
        %v5345 = vsel %vm4841, %v5341, 0
        %v5347 = vsel %vm4841, %v5342, 0
        %5349 = vmatprep.subr.mxu0 %v5347
        %5350 = vmatpush1.msra.mxu0 %v5345
        %5351 = vmatprep.subr.mxu0 0.0
        %5352 = vmatpush1.msra.mxu0 0.0
        %5353 = vmatprep.subr.mxu0 0.0
        %5354 = vmatpush1.msra.mxu0 0.0
        %5355 = vmatprep.subr.mxu0 0.0
        %5356 = vmatpush1.msra.mxu0 0.0
        %5357 = vmatprep.subr.mxu0 0.0
        %5358 = vmatpush1.msra.mxu0 0.0
        %5359 = vmatprep.subr.mxu0 0.0
        %5360 = vmatpush1.msra.mxu0 0.0
        %5361 = vmatprep.subr.mxu0 0.0
        %5362 = vmatpush1.msra.mxu0 0.0
        %5363 = vmatprep.subr.mxu0 0.0
        %5364 = vmatpush1.msra.mxu0 0.0
        %5365 = vmatprep.subr.mxu0 0.0
        %5366 = vmatpush1.msra.mxu0 0.0
        %5367 = vmatprep.subr.mxu0 0.0
        %5368 = vmatpush1.msra.mxu0 0.0
        %5369 = vmatprep.subr.mxu0 0.0
        %5370 = vmatpush1.msra.mxu0 0.0
        %5371 = vmatprep.subr.mxu0 0.0
        %5372 = vmatpush1.msra.mxu0 0.0
        %5373 = vmatprep.subr.mxu0 0.0
        %5374 = vmatpush1.msra.mxu0 0.0
        %5375 = vmatprep.subr.mxu0 0.0
        %5376 = vmatpush1.msra.mxu0 0.0
        %5377 = vmatprep.subr.mxu0 0.0
        %5378 = vmatpush1.msra.mxu0 0.0
        %5379 = vmatprep.subr.mxu0 0.0
        %5380 = vmatpush1.msra.mxu0 0.0
        %5381 = vmatprep.subr.mxu0 0.0
        %5382 = vmatpush1.msra.mxu0 0.0
        %5383 = vmatprep.subr.mxu0 0.0
        %5384 = vmatpush1.msra.mxu0 0.0
        %5385 = vmatprep.subr.mxu0 0.0
        %5386 = vmatpush1.msra.mxu0 0.0
        %5387 = vmatprep.subr.mxu0 0.0
        %5388 = vmatpush1.msra.mxu0 0.0
        %5389 = vmatprep.subr.mxu0 0.0
        %5390 = vmatpush1.msra.mxu0 0.0
        %5391 = vmatprep.subr.mxu0 0.0
        %5392 = vmatpush1.msra.mxu0 0.0
        %5393 = vmatprep.subr.mxu0 0.0
        %5394 = vmatpush1.msra.mxu0 0.0
        %5395 = vmatprep.subr.mxu0 0.0
        %5396 = vmatpush1.msra.mxu0 0.0
        %5397 = vmatprep.subr.mxu0 0.0
        %5398 = vmatpush1.msra.mxu0 0.0
        %5399 = vmatprep.subr.mxu0 0.0
        %5400 = vmatpush1.msra.mxu0 0.0
        %5401 = vmatprep.subr.mxu0 0.0
        %5402 = vmatpush1.msra.mxu0 0.0
        %5403 = vmatprep.subr.mxu0 0.0
        %5404 = vmatpush1.msra.mxu0 0.0
        %5405 = vmatprep.subr.mxu0 0.0
        %5406 = vmatpush1.msra.mxu0 0.0
        %5407 = vmatprep.subr.mxu0 0.0
        %5408 = vmatpush1.msra.mxu0 0.0
        %5409 = vmatprep.subr.mxu0 0.0
        %5410 = vmatpush1.msra.mxu0 0.0
        %5411 = vmatprep.subr.mxu0 0.0
        %5412 = vmatpush1.msra.mxu0 0.0
        %5413 = vmatprep.mubr.f32.mxu0 0.0
        %5414 = vmatmul.mubr.f32.gmra.mrb[0].mxu0 %v5343
        %v5415 = vpop.f32.mrb[0].mxu0
        %v5416 = vadd.f32 0.0, %v5415
        %v5417 = vpop.f32.mrb[0].mxu0
        %v5418 = vadd.f32 0.0, %v5417
        %5419 = vdwg.mxu0
        %v5420 = vadd.f32 %v5317, %v5416
        %v5421 = vadd.f32 %v5318, %v5418
        %5422 = vrot.lane.b32.xlu0 %v4772, 15
        %v5423 = vpop.permute.xlu0 %5422
        %5424 = vrot.lane.b32.xlu0 %v4776, 15
        %v5425 = vpop.permute.xlu0 %5424
        %v5426 = vsel %vm5049, %v5423, %v5425
        %v5430 = vmul.f32 %v4751, %v5423
        %v5431 = vmul.f32 %v4753, %v5426
        %v5432 = vmul.f32 %v5425, 0.0
        %5433 = vrot.lane.b32.xlu0 %v4755, 104
        %v5434 = vpop.permute.xlu0 %5433
        %5438 = vrot.lane.b32.xlu0 %v5430, 113
        %v5439 = vpop.permute.xlu0 %5438
        %5440 = vrot.lane.b32.xlu0 %v5431, 113
        %v5441 = vpop.permute.xlu0 %5440
        %5442 = vrot.lane.b32.xlu0 %v5432, 113
        %v5443 = vpop.permute.xlu0 %5442
        %v5444 = vsel %vm5030, %v5439, %v5441
        %v5445 = vsel %vm5030, %v5441, %v5443
        %v5446 = vsel %vm4838, %v5434, 0
        %v5448 = vsel %vm4841, %v5444, 0
        %v5450 = vsel %vm4841, %v5445, 0
        %5452 = vmatprep.subr.mxu0 %v5450
        %5453 = vmatpush1.msra.mxu0 %v5448
        %5454 = vmatprep.subr.mxu0 0.0
        %5455 = vmatpush1.msra.mxu0 0.0
        %5456 = vmatprep.subr.mxu0 0.0
        %5457 = vmatpush1.msra.mxu0 0.0
        %5458 = vmatprep.subr.mxu0 0.0
        %5459 = vmatpush1.msra.mxu0 0.0
        %5460 = vmatprep.subr.mxu0 0.0
        %5461 = vmatpush1.msra.mxu0 0.0
        %5462 = vmatprep.subr.mxu0 0.0
        %5463 = vmatpush1.msra.mxu0 0.0
        %5464 = vmatprep.subr.mxu0 0.0
        %5465 = vmatpush1.msra.mxu0 0.0
        %5466 = vmatprep.subr.mxu0 0.0
        %5467 = vmatpush1.msra.mxu0 0.0
        %5468 = vmatprep.subr.mxu0 0.0
        %5469 = vmatpush1.msra.mxu0 0.0
        %5470 = vmatprep.subr.mxu0 0.0
        %5471 = vmatpush1.msra.mxu0 0.0
        %5472 = vmatprep.subr.mxu0 0.0
        %5473 = vmatpush1.msra.mxu0 0.0
        %5474 = vmatprep.subr.mxu0 0.0
        %5475 = vmatpush1.msra.mxu0 0.0
        %5476 = vmatprep.subr.mxu0 0.0
        %5477 = vmatpush1.msra.mxu0 0.0
        %5478 = vmatprep.subr.mxu0 0.0
        %5479 = vmatpush1.msra.mxu0 0.0
        %5480 = vmatprep.subr.mxu0 0.0
        %5481 = vmatpush1.msra.mxu0 0.0
        %5482 = vmatprep.subr.mxu0 0.0
        %5483 = vmatpush1.msra.mxu0 0.0
        %5484 = vmatprep.subr.mxu0 0.0
        %5485 = vmatpush1.msra.mxu0 0.0
        %5486 = vmatprep.subr.mxu0 0.0
        %5487 = vmatpush1.msra.mxu0 0.0
        %5488 = vmatprep.subr.mxu0 0.0
        %5489 = vmatpush1.msra.mxu0 0.0
        %5490 = vmatprep.subr.mxu0 0.0
        %5491 = vmatpush1.msra.mxu0 0.0
        %5492 = vmatprep.subr.mxu0 0.0
        %5493 = vmatpush1.msra.mxu0 0.0
        %5494 = vmatprep.subr.mxu0 0.0
        %5495 = vmatpush1.msra.mxu0 0.0
        %5496 = vmatprep.subr.mxu0 0.0
        %5497 = vmatpush1.msra.mxu0 0.0
        %5498 = vmatprep.subr.mxu0 0.0
        %5499 = vmatpush1.msra.mxu0 0.0
        %5500 = vmatprep.subr.mxu0 0.0
        %5501 = vmatpush1.msra.mxu0 0.0
        %5502 = vmatprep.subr.mxu0 0.0
        %5503 = vmatpush1.msra.mxu0 0.0
        %5504 = vmatprep.subr.mxu0 0.0
        %5505 = vmatpush1.msra.mxu0 0.0
        %5506 = vmatprep.subr.mxu0 0.0
        %5507 = vmatpush1.msra.mxu0 0.0
        %5508 = vmatprep.subr.mxu0 0.0
        %5509 = vmatpush1.msra.mxu0 0.0
        %5510 = vmatprep.subr.mxu0 0.0
        %5511 = vmatpush1.msra.mxu0 0.0
        %5512 = vmatprep.subr.mxu0 0.0
        %5513 = vmatpush1.msra.mxu0 0.0
        %5514 = vmatprep.subr.mxu0 0.0
        %5515 = vmatpush1.msra.mxu0 0.0
        %5516 = vmatprep.mubr.f32.mxu0 0.0
        %5517 = vmatmul.mubr.f32.gmra.mrb[0].mxu0 %v5446
        %v5518 = vpop.f32.mrb[0].mxu0
        %v5519 = vadd.f32 0.0, %v5518
        %v5520 = vpop.f32.mrb[0].mxu0
        %v5521 = vadd.f32 0.0, %v5520
        %5522 = vdwg.mxu0
        %v5523 = vadd.f32 %v5420, %v5519
        %v5524 = vadd.f32 %v5421, %v5521
        %5525 = vrot.lane.b32.xlu0 %v4804, 16
        %v5526 = vpop.permute.xlu0 %5525
        %5527 = vrot.lane.b32.xlu0 %v4808, 16
        %v5528 = vpop.permute.xlu0 %5527
        %v5529 = vsel %vm4835, %v5526, %v5528
        %v5533 = vmul.f32 %v4751, %v5526
        %v5534 = vmul.f32 %v4753, %v5529
        %v5535 = vmul.f32 %v5528, 0.0
        %5536 = vrot.lane.b32.xlu0 %v4755, 100
        %v5537 = vpop.permute.xlu0 %5536
        %5541 = vrot.lane.b32.xlu0 %v5533, 112
        %v5542 = vpop.permute.xlu0 %5541
        %5543 = vrot.lane.b32.xlu0 %v5534, 112
        %v5544 = vpop.permute.xlu0 %5543
        %5545 = vrot.lane.b32.xlu0 %v5535, 112
        %v5546 = vpop.permute.xlu0 %5545
        %v5547 = vsel %vm4815, %v5542, %v5544
        %v5548 = vsel %vm4815, %v5544, %v5546
        %v5549 = vsel %vm4838, %v5537, 0
        %v5551 = vsel %vm4841, %v5547, 0
        %v5553 = vsel %vm4841, %v5548, 0
        %5555 = vmatprep.subr.mxu0 %v5553
        %5556 = vmatpush1.msra.mxu0 %v5551
        %5557 = vmatprep.subr.mxu0 0.0
        %5558 = vmatpush1.msra.mxu0 0.0
        %5559 = vmatprep.subr.mxu0 0.0
        %5560 = vmatpush1.msra.mxu0 0.0
        %5561 = vmatprep.subr.mxu0 0.0
        %5562 = vmatpush1.msra.mxu0 0.0
        %5563 = vmatprep.subr.mxu0 0.0
        %5564 = vmatpush1.msra.mxu0 0.0
        %5565 = vmatprep.subr.mxu0 0.0
        %5566 = vmatpush1.msra.mxu0 0.0
        %5567 = vmatprep.subr.mxu0 0.0
        %5568 = vmatpush1.msra.mxu0 0.0
        %5569 = vmatprep.subr.mxu0 0.0
        %5570 = vmatpush1.msra.mxu0 0.0
        %5571 = vmatprep.subr.mxu0 0.0
        %5572 = vmatpush1.msra.mxu0 0.0
        %5573 = vmatprep.subr.mxu0 0.0
        %5574 = vmatpush1.msra.mxu0 0.0
        %5575 = vmatprep.subr.mxu0 0.0
        %5576 = vmatpush1.msra.mxu0 0.0
        %5577 = vmatprep.subr.mxu0 0.0
        %5578 = vmatpush1.msra.mxu0 0.0
        %5579 = vmatprep.subr.mxu0 0.0
        %5580 = vmatpush1.msra.mxu0 0.0
        %5581 = vmatprep.subr.mxu0 0.0
        %5582 = vmatpush1.msra.mxu0 0.0
        %5583 = vmatprep.subr.mxu0 0.0
        %5584 = vmatpush1.msra.mxu0 0.0
        %5585 = vmatprep.subr.mxu0 0.0
        %5586 = vmatpush1.msra.mxu0 0.0
        %5587 = vmatprep.subr.mxu0 0.0
        %5588 = vmatpush1.msra.mxu0 0.0
        %5589 = vmatprep.subr.mxu0 0.0
        %5590 = vmatpush1.msra.mxu0 0.0
        %5591 = vmatprep.subr.mxu0 0.0
        %5592 = vmatpush1.msra.mxu0 0.0
        %5593 = vmatprep.subr.mxu0 0.0
        %5594 = vmatpush1.msra.mxu0 0.0
        %5595 = vmatprep.subr.mxu0 0.0
        %5596 = vmatpush1.msra.mxu0 0.0
        %5597 = vmatprep.subr.mxu0 0.0
        %5598 = vmatpush1.msra.mxu0 0.0
        %5599 = vmatprep.subr.mxu0 0.0
        %5600 = vmatpush1.msra.mxu0 0.0
        %5601 = vmatprep.subr.mxu0 0.0
        %5602 = vmatpush1.msra.mxu0 0.0
        %5603 = vmatprep.subr.mxu0 0.0
        %5604 = vmatpush1.msra.mxu0 0.0
        %5605 = vmatprep.subr.mxu0 0.0
        %5606 = vmatpush1.msra.mxu0 0.0
        %5607 = vmatprep.subr.mxu0 0.0
        %5608 = vmatpush1.msra.mxu0 0.0
        %5609 = vmatprep.subr.mxu0 0.0
        %5610 = vmatpush1.msra.mxu0 0.0
        %5611 = vmatprep.subr.mxu0 0.0
        %5612 = vmatpush1.msra.mxu0 0.0
        %5613 = vmatprep.subr.mxu0 0.0
        %5614 = vmatpush1.msra.mxu0 0.0
        %5615 = vmatprep.subr.mxu0 0.0
        %5616 = vmatpush1.msra.mxu0 0.0
        %5617 = vmatprep.subr.mxu0 0.0
        %5618 = vmatpush1.msra.mxu0 0.0
        %5619 = vmatprep.mubr.f32.mxu0 0.0
        %5620 = vmatmul.mubr.f32.gmra.mrb[0].mxu0 %v5549
        %v5621 = vpop.f32.mrb[0].mxu0
        %v5622 = vadd.f32 0.0, %v5621
        %v5623 = vpop.f32.mrb[0].mxu0
        %v5624 = vadd.f32 0.0, %v5623
        %5625 = vdwg.mxu0
        %v5626 = vadd.f32 %v5523, %v5622
        %v5627 = vadd.f32 %v5524, %v5624
        %5628 = vrot.lane.b32.xlu0 %v5019, 17
        %v5629 = vpop.permute.xlu0 %5628
        %5630 = vrot.lane.b32.xlu0 %v5023, 17
        %v5631 = vpop.permute.xlu0 %5630
        %v5632 = vsel %vm4926, %v5629, %v5631
        %v5636 = vmul.f32 %v4751, %v5629
        %v5637 = vmul.f32 %v4753, %v5632
        %v5638 = vmul.f32 %v5631, 0.0
        %5639 = vrot.lane.b32.xlu0 %v4755, 96
        %v5640 = vpop.permute.xlu0 %5639
        %5644 = vrot.lane.b32.xlu0 %v5636, 111
        %v5645 = vpop.permute.xlu0 %5644
        %5646 = vrot.lane.b32.xlu0 %v5637, 111
        %v5647 = vpop.permute.xlu0 %5646
        %5648 = vrot.lane.b32.xlu0 %v5638, 111
        %v5649 = vpop.permute.xlu0 %5648
        %v5650 = vsel %vm4783, %v5645, %v5647
        %v5651 = vsel %vm4783, %v5647, %v5649
        %v5652 = vsel %vm4838, %v5640, 0
        %v5654 = vsel %vm4841, %v5650, 0
        %v5656 = vsel %vm4841, %v5651, 0
        %5658 = vmatprep.subr.mxu0 %v5656
        %5659 = vmatpush1.msra.mxu0 %v5654
        %5660 = vmatprep.subr.mxu0 0.0
        %5661 = vmatpush1.msra.mxu0 0.0
        %5662 = vmatprep.subr.mxu0 0.0
        %5663 = vmatpush1.msra.mxu0 0.0
        %5664 = vmatprep.subr.mxu0 0.0
        %5665 = vmatpush1.msra.mxu0 0.0
        %5666 = vmatprep.subr.mxu0 0.0
        %5667 = vmatpush1.msra.mxu0 0.0
        %5668 = vmatprep.subr.mxu0 0.0
        %5669 = vmatpush1.msra.mxu0 0.0
        %5670 = vmatprep.subr.mxu0 0.0
        %5671 = vmatpush1.msra.mxu0 0.0
        %5672 = vmatprep.subr.mxu0 0.0
        %5673 = vmatpush1.msra.mxu0 0.0
        %5674 = vmatprep.subr.mxu0 0.0
        %5675 = vmatpush1.msra.mxu0 0.0
        %5676 = vmatprep.subr.mxu0 0.0
        %5677 = vmatpush1.msra.mxu0 0.0
        %5678 = vmatprep.subr.mxu0 0.0
        %5679 = vmatpush1.msra.mxu0 0.0
        %5680 = vmatprep.subr.mxu0 0.0
        %5681 = vmatpush1.msra.mxu0 0.0
        %5682 = vmatprep.subr.mxu0 0.0
        %5683 = vmatpush1.msra.mxu0 0.0
        %5684 = vmatprep.subr.mxu0 0.0
        %5685 = vmatpush1.msra.mxu0 0.0
        %5686 = vmatprep.subr.mxu0 0.0
        %5687 = vmatpush1.msra.mxu0 0.0
        %5688 = vmatprep.subr.mxu0 0.0
        %5689 = vmatpush1.msra.mxu0 0.0
        %5690 = vmatprep.subr.mxu0 0.0
        %5691 = vmatpush1.msra.mxu0 0.0
        %5692 = vmatprep.subr.mxu0 0.0
        %5693 = vmatpush1.msra.mxu0 0.0
        %5694 = vmatprep.subr.mxu0 0.0
        %5695 = vmatpush1.msra.mxu0 0.0
        %5696 = vmatprep.subr.mxu0 0.0
        %5697 = vmatpush1.msra.mxu0 0.0
        %5698 = vmatprep.subr.mxu0 0.0
        %5699 = vmatpush1.msra.mxu0 0.0
        %5700 = vmatprep.subr.mxu0 0.0
        %5701 = vmatpush1.msra.mxu0 0.0
        %5702 = vmatprep.subr.mxu0 0.0
        %5703 = vmatpush1.msra.mxu0 0.0
        %5704 = vmatprep.subr.mxu0 0.0
        %5705 = vmatpush1.msra.mxu0 0.0
        %5706 = vmatprep.subr.mxu0 0.0
        %5707 = vmatpush1.msra.mxu0 0.0
        %5708 = vmatprep.subr.mxu0 0.0
        %5709 = vmatpush1.msra.mxu0 0.0
        %5710 = vmatprep.subr.mxu0 0.0
        %5711 = vmatpush1.msra.mxu0 0.0
        %5712 = vmatprep.subr.mxu0 0.0
        %5713 = vmatpush1.msra.mxu0 0.0
        %5714 = vmatprep.subr.mxu0 0.0
        %5715 = vmatpush1.msra.mxu0 0.0
        %5716 = vmatprep.subr.mxu0 0.0
        %5717 = vmatpush1.msra.mxu0 0.0
        %5718 = vmatprep.subr.mxu0 0.0
        %5719 = vmatpush1.msra.mxu0 0.0
        %5720 = vmatprep.subr.mxu0 0.0
        %5721 = vmatpush1.msra.mxu0 0.0
        %5722 = vmatprep.mubr.f32.mxu0 0.0
        %5723 = vmatmul.mubr.f32.gmra.mrb[0].mxu0 %v5652
        %v5724 = vpop.f32.mrb[0].mxu0
        %v5725 = vadd.f32 0.0, %v5724
        %v5726 = vpop.f32.mrb[0].mxu0
        %v5727 = vadd.f32 0.0, %v5726
        %5728 = vdwg.mxu0
        %v5729 = vadd.f32 %v5626, %v5725
        %v5730 = vadd.f32 %v5627, %v5727
        %5732 = vset.pattern.permute.xlu0 0
        %5733 = vperm.xlu0 %5732, %v4756
        %v5734 = vpop.permute.xlu0 %5733
        %v5736 = vadd.f32 %v5729, %v5734
        %v5737 = vadd.f32 %v5730, %v5734
        %v5738 = vmax.f32 %v5736, 0.0
        %v5739 = vmax.f32 %v5737, 0.0
        %v5740 = vld [vmem:[%s8] sm:$0xff]
        %v5741 = vld [vmem:[%s8 + $0x8] sm:$0xff]
        %v5742 = vld [vmem:[%s8 + $0x10] sm:$0xff]
        %v5743 = vld [vmem:[%s8 + $0x18] sm:$0xff]
        %v5744 = vld [vmem:[%s8 + $0x20] sm:$0xff]
        %v5745 = vld [vmem:[%s8 + $0x28] sm:$0xff]
        %v5746 = vld [vmem:[%s8 + $0x30] sm:$0xff]
        %v5747 = vld [vmem:[%s8 + $0x38] sm:$0xff]
        %v5748 = vld [vmem:[%s8 + $0x40] sm:$0xff]
        %v5749 = vld [vmem:[%s8 + $0x48] sm:$0xff]
        %v5750 = vld [vmem:[%s8 + $0x50] sm:$0xff]
        %v5751 = vld [vmem:[%s8 + $0x58] sm:$0xff]
        %v5752 = vld [vmem:[%s8 + $0x60] sm:$0xff]
        %v5753 = vld [vmem:[%s8 + $0x68] sm:$0xff]
        %v5754 = vld [vmem:[%s8 + $0x70] sm:$0xff]
        %v5755 = vld [vmem:[%s8 + $0x78] sm:$0xff]
        %v5756 = vld [vmem:[%s8 + $0x80] sm:$0xff]
        %v5757 = vld [vmem:[%s8 + $0x88] sm:$0xff]
        %v5758 = vld [vmem:[%s8 + $0x90] sm:$0xff]
        %v5759 = vld [vmem:[%s8 + $0x98] sm:$0xff]
        %v5760 = vld [vmem:[%s8 + $0xa0] sm:$0xff]
        %v5761 = vld [vmem:[%s8 + $0xa8] sm:$0xff]
        %v5762 = vld [vmem:[%s8 + $0xb0] sm:$0xff]
        %v5763 = vld [vmem:[%s8 + $0xb8] sm:$0xff]
        %v5764 = vld [vmem:[%s8 + $0xc0] sm:$0xff]
        %v5765 = vld [vmem:[%s8 + $0xc8] sm:$0xff]
        %v5766 = vld [vmem:[%s8 + $0xd0] sm:$0xff]
        %v5767 = vld [vmem:[%s8 + $0xd8] sm:$0xff]
        %v5768 = vld [vmem:[%s8 + $0xe0] sm:$0xff]
        %v5769 = vld [vmem:[%s8 + $0xe8] sm:$0xff]
        %v5770 = vld [vmem:[%s8 + $0xf0] sm:$0xff]
        %v5771 = vld [vmem:[%s8 + $0xf8] sm:$0xff]
        %5774 = vrot.lane.b32.xlu0 %v5738, 127
        %v5775 = vpop.permute.xlu0 %5774
        %5776 = vrot.lane.b32.xlu0 %v5739, 127
        %v5777 = vpop.permute.xlu0 %5776
        %v5778 = vsel %vm1836, %v5775, %v5777
        %v5779 = vsel %vm1836, %v5777, %v4393
        %v5782 = vmax.f32 %v5738, %v5778
        %v5783 = vmax.f32 %v5739, %v5779
        %5786 = vrot.lane.b32.xlu0 %v5782, 112
        %v5787 = vpop.permute.xlu0 %5786
        %5788 = vrot.lane.b32.xlu0 %v5783, 112
        %v5789 = vpop.permute.xlu0 %5788
        %5790 = vrot.lane.b32.xlu0 %v4419, 112
        %v5791 = vpop.permute.xlu0 %5790
        %v5792 = vsel %vm4815, %v5787, %v5789
        %v5793 = vsel %vm4815, %v5789, %v5791
        %v5796 = vmax.f32 %v5782, %v5792
        %v5797 = vmax.f32 %v5783, %v5793
        %5798 = vmatprep.subr.mxu0 0.0
        %5799 = vmatpush1.msra.mxu0 %v5740
        %5800 = vmatprep.subr.mxu0 0.0
        %5801 = vmatpush1.msra.mxu0 %v5741
        %5802 = vmatprep.subr.mxu0 0.0
        %5803 = vmatpush1.msra.mxu0 %v5742
        %5804 = vmatprep.subr.mxu0 0.0
        %5805 = vmatpush1.msra.mxu0 %v5743
        %5806 = vmatprep.subr.mxu0 0.0
        %5807 = vmatpush1.msra.mxu0 %v5744
        %5808 = vmatprep.subr.mxu0 0.0
        %5809 = vmatpush1.msra.mxu0 %v5745
        %5810 = vmatprep.subr.mxu0 0.0
        %5811 = vmatpush1.msra.mxu0 %v5746
        %5812 = vmatprep.subr.mxu0 0.0
        %5813 = vmatpush1.msra.mxu0 %v5747
        %5814 = vmatprep.subr.mxu0 0.0
        %5815 = vmatpush1.msra.mxu0 %v5748
        %5816 = vmatprep.subr.mxu0 0.0
        %5817 = vmatpush1.msra.mxu0 %v5749
        %5818 = vmatprep.subr.mxu0 0.0
        %5819 = vmatpush1.msra.mxu0 %v5750
        %5820 = vmatprep.subr.mxu0 0.0
        %5821 = vmatpush1.msra.mxu0 %v5751
        %5822 = vmatprep.subr.mxu0 0.0
        %5823 = vmatpush1.msra.mxu0 %v5752
        %5824 = vmatprep.subr.mxu0 0.0
        %5825 = vmatpush1.msra.mxu0 %v5753
        %5826 = vmatprep.subr.mxu0 0.0
        %5827 = vmatpush1.msra.mxu0 %v5754
        %5828 = vmatprep.subr.mxu0 0.0
        %5829 = vmatpush1.msra.mxu0 %v5755
        %5830 = vmatprep.subr.mxu0 0.0
        %5831 = vmatpush1.msra.mxu0 %v5756
        %5832 = vmatprep.subr.mxu0 0.0
        %5833 = vmatpush1.msra.mxu0 %v5757
        %5834 = vmatprep.subr.mxu0 0.0
        %5835 = vmatpush1.msra.mxu0 %v5758
        %5836 = vmatprep.subr.mxu0 0.0
        %5837 = vmatpush1.msra.mxu0 %v5759
        %5838 = vmatprep.subr.mxu0 0.0
        %5839 = vmatpush1.msra.mxu0 %v5760
        %5840 = vmatprep.subr.mxu0 0.0
        %5841 = vmatpush1.msra.mxu0 %v5761
        %5842 = vmatprep.subr.mxu0 0.0
        %5843 = vmatpush1.msra.mxu0 %v5762
        %5844 = vmatprep.subr.mxu0 0.0
        %5845 = vmatpush1.msra.mxu0 %v5763
        %5846 = vmatprep.subr.mxu0 0.0
        %5847 = vmatpush1.msra.mxu0 %v5764
        %5848 = vmatprep.subr.mxu0 0.0
        %5849 = vmatpush1.msra.mxu0 %v5765
        %5850 = vmatprep.subr.mxu0 0.0
        %5851 = vmatpush1.msra.mxu0 %v5766
        %5852 = vmatprep.subr.mxu0 0.0
        %5853 = vmatpush1.msra.mxu0 %v5767
        %5854 = vmatprep.subr.mxu0 0.0
        %5855 = vmatpush1.msra.mxu0 %v5768
        %5856 = vmatprep.subr.mxu0 0.0
        %5857 = vmatpush1.msra.mxu0 %v5769
        %5858 = vmatprep.subr.mxu0 0.0
        %5859 = vmatpush1.msra.mxu0 %v5770
        %5860 = vmatprep.subr.mxu0 0.0
        %5861 = vmatpush1.msra.mxu0 %v5771
        %5862 = vmatprep.mubr.f32.mxu0 %v5797
        %5863 = vmatmul.mubr.f32.gmra.mrb[0].mxu0 %v5796
        %v5864 = vpop.f32.mrb[0].mxu0
        %v5865 = vadd.f32 0.0, %v5864
        %v5866 = vpop.f32.mrb[0].mxu0
        %5867 = vdwg.mxu0
        %v5868 = vld [vmem:[%s10] sm:$0x1]
        %v5869 = vld [vmem:[%s9] sm:$0xff]
        %v5870 = vld [vmem:[%s9 + $0x8] sm:$0xff]
        %v5871 = vld [vmem:[%s9 + $0x10] sm:$0xff]
        %v5872 = vld [vmem:[%s9 + $0x18] sm:$0xff]
        %v5873 = vld [vmem:[%s9 + $0x20] sm:$0xff]
        %v5874 = vld [vmem:[%s9 + $0x28] sm:$0xff]
        %v5875 = vld [vmem:[%s9 + $0x30] sm:$0xff]
        %v5876 = vld [vmem:[%s9 + $0x38] sm:$0xff]
        %vm5877 = vcmask 523264
        %v5879 = vsel %vm5877, %v5865, 0
        %5881 = vmatprep.subr.mxu0 0.0
        %5882 = vmatpush1.msra.mxu0 %v5869
        %5883 = vmatprep.subr.mxu0 0.0
        %5884 = vmatpush1.msra.mxu0 %v5870
        %5885 = vmatprep.subr.mxu0 0.0
        %5886 = vmatpush1.msra.mxu0 %v5871
        %5887 = vmatprep.subr.mxu0 0.0
        %5888 = vmatpush1.msra.mxu0 %v5872
        %5889 = vmatprep.subr.mxu0 0.0
        %5890 = vmatpush1.msra.mxu0 %v5873
        %5891 = vmatprep.subr.mxu0 0.0
        %5892 = vmatpush1.msra.mxu0 %v5874
        %5893 = vmatprep.subr.mxu0 0.0
        %5894 = vmatpush1.msra.mxu0 %v5875
        %5895 = vmatprep.subr.mxu0 0.0
        %5896 = vmatpush1.msra.mxu0 %v5876
        %5897 = vmatprep.subr.mxu0 0.0
        %5898 = vmatpush1.msra.mxu0 0.0
        %5899 = vmatprep.subr.mxu0 0.0
        %5900 = vmatpush1.msra.mxu0 0.0
        %5901 = vmatprep.subr.mxu0 0.0
        %5902 = vmatpush1.msra.mxu0 0.0
        %5903 = vmatprep.subr.mxu0 0.0
        %5904 = vmatpush1.msra.mxu0 0.0
        %5905 = vmatprep.subr.mxu0 0.0
        %5906 = vmatpush1.msra.mxu0 0.0
        %5907 = vmatprep.subr.mxu0 0.0
        %5908 = vmatpush1.msra.mxu0 0.0
        %5909 = vmatprep.subr.mxu0 0.0
        %5910 = vmatpush1.msra.mxu0 0.0
        %5911 = vmatprep.subr.mxu0 0.0
        %5912 = vmatpush1.msra.mxu0 0.0
        %5913 = vmatprep.subr.mxu0 0.0
        %5914 = vmatpush1.msra.mxu0 0.0
        %5915 = vmatprep.subr.mxu0 0.0
        %5916 = vmatpush1.msra.mxu0 0.0
        %5917 = vmatprep.subr.mxu0 0.0
        %5918 = vmatpush1.msra.mxu0 0.0
        %5919 = vmatprep.subr.mxu0 0.0
        %5920 = vmatpush1.msra.mxu0 0.0
        %5921 = vmatprep.subr.mxu0 0.0
        %5922 = vmatpush1.msra.mxu0 0.0
        %5923 = vmatprep.subr.mxu0 0.0
        %5924 = vmatpush1.msra.mxu0 0.0
        %5925 = vmatprep.subr.mxu0 0.0
        %5926 = vmatpush1.msra.mxu0 0.0
        %5927 = vmatprep.subr.mxu0 0.0
        %5928 = vmatpush1.msra.mxu0 0.0
        %5929 = vmatprep.subr.mxu0 0.0
        %5930 = vmatpush1.msra.mxu0 0.0
        %5931 = vmatprep.subr.mxu0 0.0
        %5932 = vmatpush1.msra.mxu0 0.0
        %5933 = vmatprep.subr.mxu0 0.0
        %5934 = vmatpush1.msra.mxu0 0.0
        %5935 = vmatprep.subr.mxu0 0.0
        %5936 = vmatpush1.msra.mxu0 0.0
        %5937 = vmatprep.subr.mxu0 0.0
        %5938 = vmatpush1.msra.mxu0 0.0
        %5939 = vmatprep.subr.mxu0 0.0
        %5940 = vmatpush1.msra.mxu0 0.0
        %5941 = vmatprep.subr.mxu0 0.0
        %5942 = vmatpush1.msra.mxu0 0.0
        %5943 = vmatprep.subr.mxu0 0.0
        %5944 = vmatpush1.msra.mxu0 0.0
        %5945 = vmatprep.mubr.f32.mxu0 0.0
        %5946 = vmatmul.mubr.f32.gmra.mrb[0].mxu0 %v5879
        %v5947 = vpop.f32.mrb[0].mxu0
        %v5948 = vadd.f32 0.0, %v5947
        %v5949 = vpop.f32.mrb[0].mxu0
        %5950 = vdwg.mxu0
        %v5951 = vadd.f32 %v5868, %v5948
        %s5952 = scalar_lea.vmem %s9, 64
        %v5953 = vld [vmem:[%s5952] sm:$0xff]
        %v5954 = vld [vmem:[%s5952 + $0x8] sm:$0xff]
        %v5955 = vld [vmem:[%s5952 + $0x10] sm:$0xff]
        %v5956 = vld [vmem:[%s5952 + $0x18] sm:$0xff]
        %v5957 = vld [vmem:[%s5952 + $0x20] sm:$0xff]
        %v5958 = vld [vmem:[%s5952 + $0x28] sm:$0xff]
        %v5959 = vld [vmem:[%s5952 + $0x30] sm:$0xff]
        %v5960 = vld [vmem:[%s5952 + $0x38] sm:$0xff]
        %5961 = vmatprep.subr.mxu0 0.0
        %5962 = vmatpush1.msra.mxu0 %v5953
        %5963 = vmatprep.subr.mxu0 0.0
        %5964 = vmatpush1.msra.mxu0 %v5954
        %5965 = vmatprep.subr.mxu0 0.0
        %5966 = vmatpush1.msra.mxu0 %v5955
        %5967 = vmatprep.subr.mxu0 0.0
        %5968 = vmatpush1.msra.mxu0 %v5956
        %5969 = vmatprep.subr.mxu0 0.0
        %5970 = vmatpush1.msra.mxu0 %v5957
        %5971 = vmatprep.subr.mxu0 0.0
        %5972 = vmatpush1.msra.mxu0 %v5958
        %5973 = vmatprep.subr.mxu0 0.0
        %5974 = vmatpush1.msra.mxu0 %v5959
        %5975 = vmatprep.subr.mxu0 0.0
        %5976 = vmatpush1.msra.mxu0 %v5960
        %5977 = vmatprep.subr.mxu0 0.0
        %5978 = vmatpush1.msra.mxu0 0.0
        %5979 = vmatprep.subr.mxu0 0.0
        %5980 = vmatpush1.msra.mxu0 0.0
        %5981 = vmatprep.subr.mxu0 0.0
        %5982 = vmatpush1.msra.mxu0 0.0
        %5983 = vmatprep.subr.mxu0 0.0
        %5984 = vmatpush1.msra.mxu0 0.0
        %5985 = vmatprep.subr.mxu0 0.0
        %5986 = vmatpush1.msra.mxu0 0.0
        %5987 = vmatprep.subr.mxu0 0.0
        %5988 = vmatpush1.msra.mxu0 0.0
        %5989 = vmatprep.subr.mxu0 0.0
        %5990 = vmatpush1.msra.mxu0 0.0
        %5991 = vmatprep.subr.mxu0 0.0
        %5992 = vmatpush1.msra.mxu0 0.0
        %5993 = vmatprep.subr.mxu0 0.0
        %5994 = vmatpush1.msra.mxu0 0.0
        %5995 = vmatprep.subr.mxu0 0.0
        %5996 = vmatpush1.msra.mxu0 0.0
        %5997 = vmatprep.subr.mxu0 0.0
        %5998 = vmatpush1.msra.mxu0 0.0
        %5999 = vmatprep.subr.mxu0 0.0
        %6000 = vmatpush1.msra.mxu0 0.0
        %6001 = vmatprep.subr.mxu0 0.0
        %6002 = vmatpush1.msra.mxu0 0.0
        %6003 = vmatprep.subr.mxu0 0.0
        %6004 = vmatpush1.msra.mxu0 0.0
        %6005 = vmatprep.subr.mxu0 0.0
        %6006 = vmatpush1.msra.mxu0 0.0
        %6007 = vmatprep.subr.mxu0 0.0
        %6008 = vmatpush1.msra.mxu0 0.0
        %6009 = vmatprep.subr.mxu0 0.0
        %6010 = vmatpush1.msra.mxu0 0.0
        %6011 = vmatprep.subr.mxu0 0.0
        %6012 = vmatpush1.msra.mxu0 0.0
        %6013 = vmatprep.subr.mxu0 0.0
        %6014 = vmatpush1.msra.mxu0 0.0
        %6015 = vmatprep.subr.mxu0 0.0
        %6016 = vmatpush1.msra.mxu0 0.0
        %6017 = vmatprep.subr.mxu0 0.0
        %6018 = vmatpush1.msra.mxu0 0.0
        %6019 = vmatprep.subr.mxu0 0.0
        %6020 = vmatpush1.msra.mxu0 0.0
        %6021 = vmatprep.subr.mxu0 0.0
        %6022 = vmatpush1.msra.mxu0 0.0
        %6023 = vmatprep.subr.mxu0 0.0
        %6024 = vmatpush1.msra.mxu0 0.0
        %6025 = vmatprep.mubr.f32.mxu0 0.0
        %6026 = vmatmul.mubr.f32.gmra.mrb[0].mxu0 %v5879
        %v6027 = vpop.f32.mrb[0].mxu0
        %v6028 = vadd.f32 0.0, %v6027
        %v6029 = vpop.f32.mrb[0].mxu0
        %6030 = vdwg.mxu0
        %v6033 = vunpack.c.l.s4 1966171168
        %v6034 = vunpack.c.0.s8 %v6033
        %v6035 = vlaneseq
        %v6036 = vshrl.u32 %v6035, 7
        %v6037 = vsub.s32 %v6034, %v6036
        %v6038 = vrot.slane %v6028, %v6037
        %v6039 = vcombine.high %v6038, %v6038
        %v6041 = vunpack.c.l.s4 1966171168
        %v6042 = vunpack.c.0.s8 %v6041
        %v6043 = vlaneseq
        %v6044 = vshrl.u32 %v6043, 7
        %v6045 = vsub.s32 %v6042, %v6044
        %v6046 = vrot.slane %v6039, %v6045
        %v6048 = vadd.f32 %v5951, %v6046
        %s6049 = scalar_lea.vmem %s9, 128
        %v6050 = vld [vmem:[%s6049] sm:$0xff]
        %v6051 = vld [vmem:[%s6049 + $0x8] sm:$0xff]
        %v6052 = vld [vmem:[%s6049 + $0x10] sm:$0xff]
        %v6053 = vld [vmem:[%s6049 + $0x18] sm:$0xff]
        %v6054 = vld [vmem:[%s6049 + $0x20] sm:$0xff]
        %v6055 = vld [vmem:[%s6049 + $0x28] sm:$0xff]
        %v6056 = vld [vmem:[%s6049 + $0x30] sm:$0xff]
        %v6057 = vld [vmem:[%s6049 + $0x38] sm:$0xff]
        %6058 = vmatprep.subr.mxu0 0.0
        %6059 = vmatpush1.msra.mxu0 %v6050
        %6060 = vmatprep.subr.mxu0 0.0
        %6061 = vmatpush1.msra.mxu0 %v6051
        %6062 = vmatprep.subr.mxu0 0.0
        %6063 = vmatpush1.msra.mxu0 %v6052
        %6064 = vmatprep.subr.mxu0 0.0
        %6065 = vmatpush1.msra.mxu0 %v6053
        %6066 = vmatprep.subr.mxu0 0.0
        %6067 = vmatpush1.msra.mxu0 %v6054
        %6068 = vmatprep.subr.mxu0 0.0
        %6069 = vmatpush1.msra.mxu0 %v6055
        %6070 = vmatprep.subr.mxu0 0.0
        %6071 = vmatpush1.msra.mxu0 %v6056
        %6072 = vmatprep.subr.mxu0 0.0
        %6073 = vmatpush1.msra.mxu0 %v6057
        %6074 = vmatprep.subr.mxu0 0.0
        %6075 = vmatpush1.msra.mxu0 0.0
        %6076 = vmatprep.subr.mxu0 0.0
        %6077 = vmatpush1.msra.mxu0 0.0
        %6078 = vmatprep.subr.mxu0 0.0
        %6079 = vmatpush1.msra.mxu0 0.0
        %6080 = vmatprep.subr.mxu0 0.0
        %6081 = vmatpush1.msra.mxu0 0.0
        %6082 = vmatprep.subr.mxu0 0.0
        %6083 = vmatpush1.msra.mxu0 0.0
        %6084 = vmatprep.subr.mxu0 0.0
        %6085 = vmatpush1.msra.mxu0 0.0
        %6086 = vmatprep.subr.mxu0 0.0
        %6087 = vmatpush1.msra.mxu0 0.0
        %6088 = vmatprep.subr.mxu0 0.0
        %6089 = vmatpush1.msra.mxu0 0.0
        %6090 = vmatprep.subr.mxu0 0.0
        %6091 = vmatpush1.msra.mxu0 0.0
        %6092 = vmatprep.subr.mxu0 0.0
        %6093 = vmatpush1.msra.mxu0 0.0
        %6094 = vmatprep.subr.mxu0 0.0
        %6095 = vmatpush1.msra.mxu0 0.0
        %6096 = vmatprep.subr.mxu0 0.0
        %6097 = vmatpush1.msra.mxu0 0.0
        %6098 = vmatprep.subr.mxu0 0.0
        %6099 = vmatpush1.msra.mxu0 0.0
        %6100 = vmatprep.subr.mxu0 0.0
        %6101 = vmatpush1.msra.mxu0 0.0
        %6102 = vmatprep.subr.mxu0 0.0
        %6103 = vmatpush1.msra.mxu0 0.0
        %6104 = vmatprep.subr.mxu0 0.0
        %6105 = vmatpush1.msra.mxu0 0.0
        %6106 = vmatprep.subr.mxu0 0.0
        %6107 = vmatpush1.msra.mxu0 0.0
        %6108 = vmatprep.subr.mxu0 0.0
        %6109 = vmatpush1.msra.mxu0 0.0
        %6110 = vmatprep.subr.mxu0 0.0
        %6111 = vmatpush1.msra.mxu0 0.0
        %6112 = vmatprep.subr.mxu0 0.0
        %6113 = vmatpush1.msra.mxu0 0.0
        %6114 = vmatprep.subr.mxu0 0.0
        %6115 = vmatpush1.msra.mxu0 0.0
        %6116 = vmatprep.subr.mxu0 0.0
        %6117 = vmatpush1.msra.mxu0 0.0
        %6118 = vmatprep.subr.mxu0 0.0
        %6119 = vmatpush1.msra.mxu0 0.0
        %6120 = vmatprep.subr.mxu0 0.0
        %6121 = vmatpush1.msra.mxu0 0.0
        %6122 = vmatprep.mubr.f32.mxu0 0.0
        %6123 = vmatmul.mubr.f32.gmra.mrb[0].mxu0 %v5879
        %v6124 = vpop.f32.mrb[0].mxu0
        %v6125 = vadd.f32 0.0, %v6124
        %v6126 = vpop.f32.mrb[0].mxu0
        %6127 = vdwg.mxu0
        %v6130 = vunpack.c.l.s4 1966171168
        %v6131 = vunpack.c.0.s8 %v6130
        %v6132 = vlaneseq
        %v6133 = vshrl.u32 %v6132, 7
        %v6134 = vsub.s32 %v6131, %v6133
        %v6135 = vrot.slane %v6125, %v6134
        %v6137 = vunpack.c.l.s4 1966171168
        %v6138 = vunpack.c.0.s8 %v6137
        %v6139 = vlaneseq
        %v6140 = vshrl.u32 %v6139, 7
        %v6141 = vsub.s32 %v6138, %v6140
        %v6142 = vrot.slane %v6135, %v6141
        %v6143 = vcombine.high %v6142, %v6142
        %v6145 = vadd.f32 %v6048, %v6143
        %s6146 = scalar_lea.vmem %s9, 192
        %v6147 = vld [vmem:[%s6146] sm:$0xff]
        %v6148 = vld [vmem:[%s6146 + $0x8] sm:$0xff]
        %v6149 = vld [vmem:[%s6146 + $0x10] sm:$0xff]
        %v6150 = vld [vmem:[%s6146 + $0x18] sm:$0xff]
        %v6151 = vld [vmem:[%s6146 + $0x20] sm:$0xff]
        %v6152 = vld [vmem:[%s6146 + $0x28] sm:$0xff]
        %v6153 = vld [vmem:[%s6146 + $0x30] sm:$0xff]
        %v6154 = vld [vmem:[%s6146 + $0x38] sm:$0xff]
        %6155 = vmatprep.subr.mxu0 0.0
        %6156 = vmatpush1.msra.mxu0 %v6147
        %6157 = vmatprep.subr.mxu0 0.0
        %6158 = vmatpush1.msra.mxu0 %v6148
        %6159 = vmatprep.subr.mxu0 0.0
        %6160 = vmatpush1.msra.mxu0 %v6149
        %6161 = vmatprep.subr.mxu0 0.0
        %6162 = vmatpush1.msra.mxu0 %v6150
        %6163 = vmatprep.subr.mxu0 0.0
        %6164 = vmatpush1.msra.mxu0 %v6151
        %6165 = vmatprep.subr.mxu0 0.0
        %6166 = vmatpush1.msra.mxu0 %v6152
        %6167 = vmatprep.subr.mxu0 0.0
        %6168 = vmatpush1.msra.mxu0 %v6153
        %6169 = vmatprep.subr.mxu0 0.0
        %6170 = vmatpush1.msra.mxu0 %v6154
        %6171 = vmatprep.subr.mxu0 0.0
        %6172 = vmatpush1.msra.mxu0 0.0
        %6173 = vmatprep.subr.mxu0 0.0
        %6174 = vmatpush1.msra.mxu0 0.0
        %6175 = vmatprep.subr.mxu0 0.0
        %6176 = vmatpush1.msra.mxu0 0.0
        %6177 = vmatprep.subr.mxu0 0.0
        %6178 = vmatpush1.msra.mxu0 0.0
        %6179 = vmatprep.subr.mxu0 0.0
        %6180 = vmatpush1.msra.mxu0 0.0
        %6181 = vmatprep.subr.mxu0 0.0
        %6182 = vmatpush1.msra.mxu0 0.0
        %6183 = vmatprep.subr.mxu0 0.0
        %6184 = vmatpush1.msra.mxu0 0.0
        %6185 = vmatprep.subr.mxu0 0.0
        %6186 = vmatpush1.msra.mxu0 0.0
        %6187 = vmatprep.subr.mxu0 0.0
        %6188 = vmatpush1.msra.mxu0 0.0
        %6189 = vmatprep.subr.mxu0 0.0
        %6190 = vmatpush1.msra.mxu0 0.0
        %6191 = vmatprep.subr.mxu0 0.0
        %6192 = vmatpush1.msra.mxu0 0.0
        %6193 = vmatprep.subr.mxu0 0.0
        %6194 = vmatpush1.msra.mxu0 0.0
        %6195 = vmatprep.subr.mxu0 0.0
        %6196 = vmatpush1.msra.mxu0 0.0
        %6197 = vmatprep.subr.mxu0 0.0
        %6198 = vmatpush1.msra.mxu0 0.0
        %6199 = vmatprep.subr.mxu0 0.0
        %6200 = vmatpush1.msra.mxu0 0.0
        %6201 = vmatprep.subr.mxu0 0.0
        %6202 = vmatpush1.msra.mxu0 0.0
        %6203 = vmatprep.subr.mxu0 0.0
        %6204 = vmatpush1.msra.mxu0 0.0
        %6205 = vmatprep.subr.mxu0 0.0
        %6206 = vmatpush1.msra.mxu0 0.0
        %6207 = vmatprep.subr.mxu0 0.0
        %6208 = vmatpush1.msra.mxu0 0.0
        %6209 = vmatprep.subr.mxu0 0.0
        %6210 = vmatpush1.msra.mxu0 0.0
        %6211 = vmatprep.subr.mxu0 0.0
        %6212 = vmatpush1.msra.mxu0 0.0
        %6213 = vmatprep.subr.mxu0 0.0
        %6214 = vmatpush1.msra.mxu0 0.0
        %6215 = vmatprep.subr.mxu0 0.0
        %6216 = vmatpush1.msra.mxu0 0.0
        %6217 = vmatprep.subr.mxu0 0.0
        %6218 = vmatpush1.msra.mxu0 0.0
        %6219 = vmatprep.mubr.f32.mxu0 0.0
        %6220 = vmatmul.mubr.f32.gmra.mrb[0].mxu0 %v5879
        %v6221 = vpop.f32.mrb[0].mxu0
        %v6222 = vadd.f32 0.0, %v6221
        %v6223 = vpop.f32.mrb[0].mxu0
        %6224 = vdwg.mxu0
        %v6227 = vunpack.c.l.s4 1966171168
        %v6228 = vunpack.c.0.s8 %v6227
        %v6229 = vlaneseq
        %v6230 = vshrl.u32 %v6229, 7
        %v6231 = vsub.s32 %v6228, %v6230
        %v6232 = vrot.slane %v6222, %v6231
        %v6233 = vcombine.high %v6232, %v6232
        %v6235 = vunpack.c.l.s4 1966171168
        %v6236 = vunpack.c.0.s8 %v6235
        %v6237 = vlaneseq
        %v6238 = vshrl.u32 %v6237, 7
        %v6239 = vsub.s32 %v6236, %v6238
        %v6240 = vrot.slane %v6233, %v6239
        %v6241 = vcombine.high %v6240, %v6240
        %v6243 = vadd.f32 %v6145, %v6241
        %s6244 = scalar_lea.vmem %s9, 256
        %v6245 = vld [vmem:[%s6244] sm:$0xff]
        %v6246 = vld [vmem:[%s6244 + $0x8] sm:$0xff]
        %v6247 = vld [vmem:[%s6244 + $0x10] sm:$0xff]
        %v6248 = vld [vmem:[%s6244 + $0x18] sm:$0xff]
        %v6249 = vld [vmem:[%s6244 + $0x20] sm:$0xff]
        %v6250 = vld [vmem:[%s6244 + $0x28] sm:$0xff]
        %v6251 = vld [vmem:[%s6244 + $0x30] sm:$0xff]
        %v6252 = vld [vmem:[%s6244 + $0x38] sm:$0xff]
        %6253 = vmatprep.subr.mxu0 0.0
        %6254 = vmatpush1.msra.mxu0 %v6245
        %6255 = vmatprep.subr.mxu0 0.0
        %6256 = vmatpush1.msra.mxu0 %v6246
        %6257 = vmatprep.subr.mxu0 0.0
        %6258 = vmatpush1.msra.mxu0 %v6247
        %6259 = vmatprep.subr.mxu0 0.0
        %6260 = vmatpush1.msra.mxu0 %v6248
        %6261 = vmatprep.subr.mxu0 0.0
        %6262 = vmatpush1.msra.mxu0 %v6249
        %6263 = vmatprep.subr.mxu0 0.0
        %6264 = vmatpush1.msra.mxu0 %v6250
        %6265 = vmatprep.subr.mxu0 0.0
        %6266 = vmatpush1.msra.mxu0 %v6251
        %6267 = vmatprep.subr.mxu0 0.0
        %6268 = vmatpush1.msra.mxu0 %v6252
        %6269 = vmatprep.subr.mxu0 0.0
        %6270 = vmatpush1.msra.mxu0 0.0
        %6271 = vmatprep.subr.mxu0 0.0
        %6272 = vmatpush1.msra.mxu0 0.0
        %6273 = vmatprep.subr.mxu0 0.0
        %6274 = vmatpush1.msra.mxu0 0.0
        %6275 = vmatprep.subr.mxu0 0.0
        %6276 = vmatpush1.msra.mxu0 0.0
        %6277 = vmatprep.subr.mxu0 0.0
        %6278 = vmatpush1.msra.mxu0 0.0
        %6279 = vmatprep.subr.mxu0 0.0
        %6280 = vmatpush1.msra.mxu0 0.0
        %6281 = vmatprep.subr.mxu0 0.0
        %6282 = vmatpush1.msra.mxu0 0.0
        %6283 = vmatprep.subr.mxu0 0.0
        %6284 = vmatpush1.msra.mxu0 0.0
        %6285 = vmatprep.subr.mxu0 0.0
        %6286 = vmatpush1.msra.mxu0 0.0
        %6287 = vmatprep.subr.mxu0 0.0
        %6288 = vmatpush1.msra.mxu0 0.0
        %6289 = vmatprep.subr.mxu0 0.0
        %6290 = vmatpush1.msra.mxu0 0.0
        %6291 = vmatprep.subr.mxu0 0.0
        %6292 = vmatpush1.msra.mxu0 0.0
        %6293 = vmatprep.subr.mxu0 0.0
        %6294 = vmatpush1.msra.mxu0 0.0
        %6295 = vmatprep.subr.mxu0 0.0
        %6296 = vmatpush1.msra.mxu0 0.0
        %6297 = vmatprep.subr.mxu0 0.0
        %6298 = vmatpush1.msra.mxu0 0.0
        %6299 = vmatprep.subr.mxu0 0.0
        %6300 = vmatpush1.msra.mxu0 0.0
        %6301 = vmatprep.subr.mxu0 0.0
        %6302 = vmatpush1.msra.mxu0 0.0
        %6303 = vmatprep.subr.mxu0 0.0
        %6304 = vmatpush1.msra.mxu0 0.0
        %6305 = vmatprep.subr.mxu0 0.0
        %6306 = vmatpush1.msra.mxu0 0.0
        %6307 = vmatprep.subr.mxu0 0.0
        %6308 = vmatpush1.msra.mxu0 0.0
        %6309 = vmatprep.subr.mxu0 0.0
        %6310 = vmatpush1.msra.mxu0 0.0
        %6311 = vmatprep.subr.mxu0 0.0
        %6312 = vmatpush1.msra.mxu0 0.0
        %6313 = vmatprep.subr.mxu0 0.0
        %6314 = vmatpush1.msra.mxu0 0.0
        %6315 = vmatprep.subr.mxu0 0.0
        %6316 = vmatpush1.msra.mxu0 0.0
        %6317 = vmatprep.mubr.f32.mxu0 0.0
        %6318 = vmatmul.mubr.f32.gmra.mrb[0].mxu0 %v5879
        %v6319 = vpop.f32.mrb[0].mxu0
        %v6320 = vadd.f32 0.0, %v6319
        %v6321 = vpop.f32.mrb[0].mxu0
        %6322 = vdwg.mxu0
        %v6324 = vcombine.high %v6320, %v6320
        %v6326 = vunpack.c.l.s4 1966171168
        %v6327 = vunpack.c.0.s8 %v6326
        %v6328 = vlaneseq
        %v6329 = vshrl.u32 %v6328, 7
        %v6330 = vsub.s32 %v6327, %v6329
        %v6331 = vrot.slane %v6324, %v6330
        %v6333 = vunpack.c.l.s4 1966171168
        %v6334 = vunpack.c.0.s8 %v6333
        %v6335 = vlaneseq
        %v6336 = vshrl.u32 %v6335, 7
        %v6337 = vsub.s32 %v6334, %v6336
        %v6338 = vrot.slane %v6331, %v6337
        %v6340 = vadd.f32 %v6243, %v6338
        %s6341 = scalar_lea.vmem %s9, 320
        %v6342 = vld [vmem:[%s6341] sm:$0xff]
        %v6343 = vld [vmem:[%s6341 + $0x8] sm:$0xff]
        %v6344 = vld [vmem:[%s6341 + $0x10] sm:$0xff]
        %v6345 = vld [vmem:[%s6341 + $0x18] sm:$0xff]
        %v6346 = vld [vmem:[%s6341 + $0x20] sm:$0xff]
        %v6347 = vld [vmem:[%s6341 + $0x28] sm:$0xff]
        %v6348 = vld [vmem:[%s6341 + $0x30] sm:$0xff]
        %v6349 = vld [vmem:[%s6341 + $0x38] sm:$0xff]
        %6350 = vmatprep.subr.mxu0 0.0
        %6351 = vmatpush1.msra.mxu0 %v6342
        %6352 = vmatprep.subr.mxu0 0.0
        %6353 = vmatpush1.msra.mxu0 %v6343
        %6354 = vmatprep.subr.mxu0 0.0
        %6355 = vmatpush1.msra.mxu0 %v6344
        %6356 = vmatprep.subr.mxu0 0.0
        %6357 = vmatpush1.msra.mxu0 %v6345
        %6358 = vmatprep.subr.mxu0 0.0
        %6359 = vmatpush1.msra.mxu0 %v6346
        %6360 = vmatprep.subr.mxu0 0.0
        %6361 = vmatpush1.msra.mxu0 %v6347
        %6362 = vmatprep.subr.mxu0 0.0
        %6363 = vmatpush1.msra.mxu0 %v6348
        %6364 = vmatprep.subr.mxu0 0.0
        %6365 = vmatpush1.msra.mxu0 %v6349
        %6366 = vmatprep.subr.mxu0 0.0
        %6367 = vmatpush1.msra.mxu0 0.0
        %6368 = vmatprep.subr.mxu0 0.0
        %6369 = vmatpush1.msra.mxu0 0.0
        %6370 = vmatprep.subr.mxu0 0.0
        %6371 = vmatpush1.msra.mxu0 0.0
        %6372 = vmatprep.subr.mxu0 0.0
        %6373 = vmatpush1.msra.mxu0 0.0
        %6374 = vmatprep.subr.mxu0 0.0
        %6375 = vmatpush1.msra.mxu0 0.0
        %6376 = vmatprep.subr.mxu0 0.0
        %6377 = vmatpush1.msra.mxu0 0.0
        %6378 = vmatprep.subr.mxu0 0.0
        %6379 = vmatpush1.msra.mxu0 0.0
        %6380 = vmatprep.subr.mxu0 0.0
        %6381 = vmatpush1.msra.mxu0 0.0
        %6382 = vmatprep.subr.mxu0 0.0
        %6383 = vmatpush1.msra.mxu0 0.0
        %6384 = vmatprep.subr.mxu0 0.0
        %6385 = vmatpush1.msra.mxu0 0.0
        %6386 = vmatprep.subr.mxu0 0.0
        %6387 = vmatpush1.msra.mxu0 0.0
        %6388 = vmatprep.subr.mxu0 0.0
        %6389 = vmatpush1.msra.mxu0 0.0
        %6390 = vmatprep.subr.mxu0 0.0
        %6391 = vmatpush1.msra.mxu0 0.0
        %6392 = vmatprep.subr.mxu0 0.0
        %6393 = vmatpush1.msra.mxu0 0.0
        %6394 = vmatprep.subr.mxu0 0.0
        %6395 = vmatpush1.msra.mxu0 0.0
        %6396 = vmatprep.subr.mxu0 0.0
        %6397 = vmatpush1.msra.mxu0 0.0
        %6398 = vmatprep.subr.mxu0 0.0
        %6399 = vmatpush1.msra.mxu0 0.0
        %6400 = vmatprep.subr.mxu0 0.0
        %6401 = vmatpush1.msra.mxu0 0.0
        %6402 = vmatprep.subr.mxu0 0.0
        %6403 = vmatpush1.msra.mxu0 0.0
        %6404 = vmatprep.subr.mxu0 0.0
        %6405 = vmatpush1.msra.mxu0 0.0
        %6406 = vmatprep.subr.mxu0 0.0
        %6407 = vmatpush1.msra.mxu0 0.0
        %6408 = vmatprep.subr.mxu0 0.0
        %6409 = vmatpush1.msra.mxu0 0.0
        %6410 = vmatprep.subr.mxu0 0.0
        %6411 = vmatpush1.msra.mxu0 0.0
        %6412 = vmatprep.subr.mxu0 0.0
        %6413 = vmatpush1.msra.mxu0 0.0
        %6414 = vmatprep.mubr.f32.mxu0 0.0
        %6415 = vmatmul.mubr.f32.gmra.mrb[0].mxu0 %v5879
        %v6416 = vpop.f32.mrb[0].mxu0
        %v6417 = vadd.f32 0.0, %v6416
        %v6418 = vpop.f32.mrb[0].mxu0
        %6419 = vdwg.mxu0
        %v6421 = vcombine.high %v6417, %v6417
        %v6423 = vunpack.c.l.s4 1966171168
        %v6424 = vunpack.c.0.s8 %v6423
        %v6425 = vlaneseq
        %v6426 = vshrl.u32 %v6425, 7
        %v6427 = vsub.s32 %v6424, %v6426
        %v6428 = vrot.slane %v6421, %v6427
        %v6429 = vcombine.high %v6428, %v6428
        %v6431 = vunpack.c.l.s4 1966171168
        %v6432 = vunpack.c.0.s8 %v6431
        %v6433 = vlaneseq
        %v6434 = vshrl.u32 %v6433, 7
        %v6435 = vsub.s32 %v6432, %v6434
        %v6436 = vrot.slane %v6429, %v6435
        %v6438 = vadd.f32 %v6340, %v6436
        %s6439 = scalar_lea.vmem %s9, 384
        %v6440 = vld [vmem:[%s6439] sm:$0xff]
        %v6441 = vld [vmem:[%s6439 + $0x8] sm:$0xff]
        %v6442 = vld [vmem:[%s6439 + $0x10] sm:$0xff]
        %v6443 = vld [vmem:[%s6439 + $0x18] sm:$0xff]
        %v6444 = vld [vmem:[%s6439 + $0x20] sm:$0xff]
        %v6445 = vld [vmem:[%s6439 + $0x28] sm:$0xff]
        %v6446 = vld [vmem:[%s6439 + $0x30] sm:$0xff]
        %v6447 = vld [vmem:[%s6439 + $0x38] sm:$0xff]
        %6448 = vmatprep.subr.mxu0 0.0
        %6449 = vmatpush1.msra.mxu0 %v6440
        %6450 = vmatprep.subr.mxu0 0.0
        %6451 = vmatpush1.msra.mxu0 %v6441
        %6452 = vmatprep.subr.mxu0 0.0
        %6453 = vmatpush1.msra.mxu0 %v6442
        %6454 = vmatprep.subr.mxu0 0.0
        %6455 = vmatpush1.msra.mxu0 %v6443
        %6456 = vmatprep.subr.mxu0 0.0
        %6457 = vmatpush1.msra.mxu0 %v6444
        %6458 = vmatprep.subr.mxu0 0.0
        %6459 = vmatpush1.msra.mxu0 %v6445
        %6460 = vmatprep.subr.mxu0 0.0
        %6461 = vmatpush1.msra.mxu0 %v6446
        %6462 = vmatprep.subr.mxu0 0.0
        %6463 = vmatpush1.msra.mxu0 %v6447
        %6464 = vmatprep.subr.mxu0 0.0
        %6465 = vmatpush1.msra.mxu0 0.0
        %6466 = vmatprep.subr.mxu0 0.0
        %6467 = vmatpush1.msra.mxu0 0.0
        %6468 = vmatprep.subr.mxu0 0.0
        %6469 = vmatpush1.msra.mxu0 0.0
        %6470 = vmatprep.subr.mxu0 0.0
        %6471 = vmatpush1.msra.mxu0 0.0
        %6472 = vmatprep.subr.mxu0 0.0
        %6473 = vmatpush1.msra.mxu0 0.0
        %6474 = vmatprep.subr.mxu0 0.0
        %6475 = vmatpush1.msra.mxu0 0.0
        %6476 = vmatprep.subr.mxu0 0.0
        %6477 = vmatpush1.msra.mxu0 0.0
        %6478 = vmatprep.subr.mxu0 0.0
        %6479 = vmatpush1.msra.mxu0 0.0
        %6480 = vmatprep.subr.mxu0 0.0
        %6481 = vmatpush1.msra.mxu0 0.0
        %6482 = vmatprep.subr.mxu0 0.0
        %6483 = vmatpush1.msra.mxu0 0.0
        %6484 = vmatprep.subr.mxu0 0.0
        %6485 = vmatpush1.msra.mxu0 0.0
        %6486 = vmatprep.subr.mxu0 0.0
        %6487 = vmatpush1.msra.mxu0 0.0
        %6488 = vmatprep.subr.mxu0 0.0
        %6489 = vmatpush1.msra.mxu0 0.0
        %6490 = vmatprep.subr.mxu0 0.0
        %6491 = vmatpush1.msra.mxu0 0.0
        %6492 = vmatprep.subr.mxu0 0.0
        %6493 = vmatpush1.msra.mxu0 0.0
        %6494 = vmatprep.subr.mxu0 0.0
        %6495 = vmatpush1.msra.mxu0 0.0
        %6496 = vmatprep.subr.mxu0 0.0
        %6497 = vmatpush1.msra.mxu0 0.0
        %6498 = vmatprep.subr.mxu0 0.0
        %6499 = vmatpush1.msra.mxu0 0.0
        %6500 = vmatprep.subr.mxu0 0.0
        %6501 = vmatpush1.msra.mxu0 0.0
        %6502 = vmatprep.subr.mxu0 0.0
        %6503 = vmatpush1.msra.mxu0 0.0
        %6504 = vmatprep.subr.mxu0 0.0
        %6505 = vmatpush1.msra.mxu0 0.0
        %6506 = vmatprep.subr.mxu0 0.0
        %6507 = vmatpush1.msra.mxu0 0.0
        %6508 = vmatprep.subr.mxu0 0.0
        %6509 = vmatpush1.msra.mxu0 0.0
        %6510 = vmatprep.subr.mxu0 0.0
        %6511 = vmatpush1.msra.mxu0 0.0
        %6512 = vmatprep.mubr.f32.mxu0 0.0
        %6513 = vmatmul.mubr.f32.gmra.mrb[0].mxu0 %v5879
        %v6514 = vpop.f32.mrb[0].mxu0
        %v6515 = vadd.f32 0.0, %v6514
        %v6516 = vpop.f32.mrb[0].mxu0
        %6517 = vdwg.mxu0
        %v6519 = vcombine.high %v6515, %v6515
        %v6521 = vunpack.c.l.s4 1966171168
        %v6522 = vunpack.c.0.s8 %v6521
        %v6523 = vlaneseq
        %v6524 = vshrl.u32 %v6523, 7
        %v6525 = vsub.s32 %v6522, %v6524
        %v6526 = vrot.slane %v6519, %v6525
        %v6528 = vunpack.c.l.s4 1966171168
        %v6529 = vunpack.c.0.s8 %v6528
        %v6530 = vlaneseq
        %v6531 = vshrl.u32 %v6530, 7
        %v6532 = vsub.s32 %v6529, %v6531
        %v6533 = vrot.slane %v6526, %v6532
        %v6534 = vcombine.high %v6533, %v6533
        %v6536 = vadd.f32 %v6438, %v6534
        %s6537 = scalar_lea.vmem %s9, 448
        %v6538 = vld [vmem:[%s6537] sm:$0xff]
        %v6539 = vld [vmem:[%s6537 + $0x8] sm:$0xff]
        %v6540 = vld [vmem:[%s6537 + $0x10] sm:$0xff]
        %v6541 = vld [vmem:[%s6537 + $0x18] sm:$0xff]
        %v6542 = vld [vmem:[%s6537 + $0x20] sm:$0xff]
        %v6543 = vld [vmem:[%s6537 + $0x28] sm:$0xff]
        %v6544 = vld [vmem:[%s6537 + $0x30] sm:$0xff]
        %v6545 = vld [vmem:[%s6537 + $0x38] sm:$0xff]
        %6546 = vmatprep.subr.mxu0 0.0
        %6547 = vmatpush1.msra.mxu0 %v6538
        %6548 = vmatprep.subr.mxu0 0.0
        %6549 = vmatpush1.msra.mxu0 %v6539
        %6550 = vmatprep.subr.mxu0 0.0
        %6551 = vmatpush1.msra.mxu0 %v6540
        %6552 = vmatprep.subr.mxu0 0.0
        %6553 = vmatpush1.msra.mxu0 %v6541
        %6554 = vmatprep.subr.mxu0 0.0
        %6555 = vmatpush1.msra.mxu0 %v6542
        %6556 = vmatprep.subr.mxu0 0.0
        %6557 = vmatpush1.msra.mxu0 %v6543
        %6558 = vmatprep.subr.mxu0 0.0
        %6559 = vmatpush1.msra.mxu0 %v6544
        %6560 = vmatprep.subr.mxu0 0.0
        %6561 = vmatpush1.msra.mxu0 %v6545
        %6562 = vmatprep.subr.mxu0 0.0
        %6563 = vmatpush1.msra.mxu0 0.0
        %6564 = vmatprep.subr.mxu0 0.0
        %6565 = vmatpush1.msra.mxu0 0.0
        %6566 = vmatprep.subr.mxu0 0.0
        %6567 = vmatpush1.msra.mxu0 0.0
        %6568 = vmatprep.subr.mxu0 0.0
        %6569 = vmatpush1.msra.mxu0 0.0
        %6570 = vmatprep.subr.mxu0 0.0
        %6571 = vmatpush1.msra.mxu0 0.0
        %6572 = vmatprep.subr.mxu0 0.0
        %6573 = vmatpush1.msra.mxu0 0.0
        %6574 = vmatprep.subr.mxu0 0.0
        %6575 = vmatpush1.msra.mxu0 0.0
        %6576 = vmatprep.subr.mxu0 0.0
        %6577 = vmatpush1.msra.mxu0 0.0
        %6578 = vmatprep.subr.mxu0 0.0
        %6579 = vmatpush1.msra.mxu0 0.0
        %6580 = vmatprep.subr.mxu0 0.0
        %6581 = vmatpush1.msra.mxu0 0.0
        %6582 = vmatprep.subr.mxu0 0.0
        %6583 = vmatpush1.msra.mxu0 0.0
        %6584 = vmatprep.subr.mxu0 0.0
        %6585 = vmatpush1.msra.mxu0 0.0
        %6586 = vmatprep.subr.mxu0 0.0
        %6587 = vmatpush1.msra.mxu0 0.0
        %6588 = vmatprep.subr.mxu0 0.0
        %6589 = vmatpush1.msra.mxu0 0.0
        %6590 = vmatprep.subr.mxu0 0.0
        %6591 = vmatpush1.msra.mxu0 0.0
        %6592 = vmatprep.subr.mxu0 0.0
        %6593 = vmatpush1.msra.mxu0 0.0
        %6594 = vmatprep.subr.mxu0 0.0
        %6595 = vmatpush1.msra.mxu0 0.0
        %6596 = vmatprep.subr.mxu0 0.0
        %6597 = vmatpush1.msra.mxu0 0.0
        %6598 = vmatprep.subr.mxu0 0.0
        %6599 = vmatpush1.msra.mxu0 0.0
        %6600 = vmatprep.subr.mxu0 0.0
        %6601 = vmatpush1.msra.mxu0 0.0
        %6602 = vmatprep.subr.mxu0 0.0
        %6603 = vmatpush1.msra.mxu0 0.0
        %6604 = vmatprep.subr.mxu0 0.0
        %6605 = vmatpush1.msra.mxu0 0.0
        %6606 = vmatprep.subr.mxu0 0.0
        %6607 = vmatpush1.msra.mxu0 0.0
        %6608 = vmatprep.subr.mxu0 0.0
        %6609 = vmatpush1.msra.mxu0 0.0
        %6610 = vmatprep.mubr.f32.mxu0 0.0
        %6611 = vmatmul.mubr.f32.gmra.mrb[0].mxu0 %v5879
        %v6612 = vpop.f32.mrb[0].mxu0
        %v6613 = vadd.f32 0.0, %v6612
        %v6614 = vpop.f32.mrb[0].mxu0
        %6615 = vdwg.mxu0
        %v6617 = vcombine.high %v6613, %v6613
        %v6619 = vunpack.c.l.s4 1966171168
        %v6620 = vunpack.c.0.s8 %v6619
        %v6621 = vlaneseq
        %v6622 = vshrl.u32 %v6621, 7
        %v6623 = vsub.s32 %v6620, %v6622
        %v6624 = vrot.slane %v6617, %v6623
        %v6625 = vcombine.high %v6624, %v6624
        %v6627 = vunpack.c.l.s4 1966171168
        %v6628 = vunpack.c.0.s8 %v6627
        %v6629 = vlaneseq
        %v6630 = vshrl.u32 %v6629, 7
        %v6631 = vsub.s32 %v6628, %v6630
        %v6632 = vrot.slane %v6625, %v6631
        %v6633 = vcombine.high %v6632, %v6632
        %v6635 = vadd.f32 %v6536, %v6633
        %vm6636 = vcmask 73728
        %6637 = vst.msk [vmem:[%s393] sm:$0x1] %vm6636, %v6635
        %s6638 = sand.u32 %s270, 1
        %s6639 = scalar_lea.sflag [#allocation4], %s6638
        %s6640 = sand.u32 %s270, 1
        %s6641 = scalar_lea.vmem [#allocation5], %s6640
        // Predicated region
        $region69: #{cnn_forward.1} parent=63 // pred_check
          %p6642 = pneg %p280
        $region70: #{cnn_forward.1} parent=63 // pred_check_branch
          %6644 = sbr.rel (%p6642) target = $region72
        $region71: #{cnn_forward.1} parent=63 // pred_region
          %s6646 = ssub.s32 16, 16
          %6647 = vsyncadd %s6639, %s6646
          %s6648 = smul.addr %s26, 16
          %s6649 = scalar_lea.hbm %s11, %s6648
          %s6651 = sshll.u32 %s6641, 4
          %s6652 = int_to_ptr.vmem [resolvable:$true] %s6651
          %6654 = dma.vmem_to_hbm [thread:$0]  %s6652, 16, %s6649, %s6639
        $region72: #{cnn_forward.1} parent=63 // pred_fallthru
          _
      $region64: #{cnn_forward.1} parent=5 // pred_fallthru
        _
      %p6655 = scmp.le.s32.totalorder 2, %s21
      // Predicated region
      $region73: #{cnn_forward.1} parent=5 // pred_check
        %p6656 = pneg %p6655
      $region74: #{cnn_forward.1} parent=5 // pred_check_branch
        %6658 = sbr.rel (%p6656) target = $region76
      $region75: #{cnn_forward.1} parent=5 // pred_region
        %s6659 = ssub.s32 %s21, 2
        // Predicated region
        $region77: #{cnn_forward.1} parent=75 // pred_check
          %p6660 = pneg %p286
        $region78: #{cnn_forward.1} parent=75 // pred_check_branch
          %6662 = sbr.rel (%p6660) target = $region80
        $region79: #{cnn_forward.1} parent=75 // pred_region
          %s6663 = sand.u32 %s271, 1
          %s6664 = scalar_lea.sflag [#allocation4], %s6663
          %s6665 = sand.u32 %s271, 1
          %s6666 = scalar_lea.vmem [#allocation5], %s6665
          %6667 = dma.done %s6664, 16
        $region80: #{cnn_forward.1} parent=75 // pred_fallthru
          _
      $region76: #{cnn_forward.1} parent=5 // pred_fallthru
        _
    $region6: #{cnn_forward.1} parent=1 // loop_footer
      %s25 = sadd.s32 1, %s21
    $region7: #{cnn_forward.1} parent=1 // loop_footer_branch
      %20 = sbr.rel target = $region3
    $region8: #{cnn_forward.1} parent=1 // loop_exit
      _
    %6668 = vsyncpa [#allocation3], 1
    %s6669 = scalar_lea.sflag [#allocation3], 1
    %6670 = vsyncpa %s6669, 1
    %6671 = vsyncpa [#allocation4], 1
    %s6672 = scalar_lea.sflag [#allocation4], 1
    %6673 = vsyncpa %s6672, 1

</llo_original>
